<compile_context>
chip_gen: v7x
topology: tpu7x:2x2x1
jax: 0.10.0
libtpu: 0.0.40
codegen_flags: <defaults>
</compile_context>

<pallas_src>
import functools

import jax
import jax.numpy as jnp
from jax.experimental import pallas as pl
from jax.experimental.pallas import tpu as pltpu


_KW = 7  # folded kernel height/width


def _multiscale_kernel(xp_hbm, w_hbm, o_ref, xbuf, stk, wbuf, acc, sem):
    # xp_hbm : (N, H+6, W+6, Cp)      padded input, resident in HBM (pl.ANY)
    # w_hbm  : (7, 7*Cp, Cp)          folded + kw-stacked weight, HBM (pl.ANY)
    # o_ref  : (1, tH, W, Cp)         output block for this grid step
    # xbuf   : (2, tH+6, W+6, Cp)     double-buffered input strip (VMEM)
    # stk    : (tH+6, W, 7*Cp)        kw-packed strip (VMEM)
    # wbuf   : (7, 7*Cp, Cp)          single-buffered weight (VMEM)
    # acc    : (tH, W, Cp) f32        accumulator (VMEM)
    # sem    : (3,) DMA semaphores    [0],[1] strip slots, [2] weight
    n = pl.program_id(0)
    h = pl.program_id(1)
    n_h = pl.num_programs(1)

    tH = o_ref.shape[1]
    W = o_ref.shape[2]
    Cp = o_ref.shape[3]

    def strip_copy(batch, h_tile, slot):
        row0 = h_tile * tH
        if tH % 8 == 0:
            row0 = pl.multiple_of(row0, 8)
        return pltpu.make_async_copy(
            xp_hbm.at[batch, pl.ds(row0, tH + 6)], xbuf.at[slot], sem.at[slot])

    def weight_copy():
        return pltpu.make_async_copy(w_hbm, wbuf, sem.at[2])

    slot = h % 2

    # ---- DMA starts (all issued before any wait so they overlap) ----------
    @pl.when(h == 0)
    def _():
        # Prime this batch element's first strip and (re)load the weight.
        # TODO(synk): cross-batch strip prefetch (start (n+1, 0) at h==n_h-1)
        # would hide this first DMA, but with a "parallel" batch axis the last
        # step of a core's range cannot be identified in-kernel and the
        # resulting un-waited DMA at kernel exit is unsafe -- left out.
        strip_copy(n, h, slot).start()
        weight_copy().start()

    @pl.when(h + 1 < n_h)
    def _():
        strip_copy(n, h + 1, 1 - slot).start()       # prefetch next strip

    # ---- DMA waits (exact same descriptors as the starts) -----------------
    strip_copy(n, h, slot).wait()

    @pl.when(h == 0)
    def _():
        weight_copy().wait()

    cur = xbuf.at[slot]                              # (tH+6, W+6, Cp) live strip

    # ---- pack the 7 column shifts along lanes, once per step --------------
    # stk[r, x, j*Cp:(j+1)*Cp] = cur[r, x+j, :].  Each piece is a full
    # 128-lane tile so the stores are lane-aligned; the unaligned
    # sublane-shifted loads happen 7x per step here instead of 49x on the
    # matmul path.
    for j in range(_KW):
        stk[:, :, j * Cp:(j + 1) * Cp] = cur[:, pl.ds(j, W), :]

    # ---- 7 matmuls with K = 7*Cp, accumulated in an f32 VMEM scratch ------
    for i in range(_KW):
        contrib = jax.lax.dot_general(
            stk[i:i + tH], wbuf[i],
            dimension_numbers=(((2,), (0,)), ((), ())),
            preferred_element_type=jnp.float32)
        if i == 0:
            acc[...] = contrib
        else:
            acc[...] += contrib

    o_ref[0] = acc[...].astype(o_ref.dtype)          # Cp % 128 == 0 -> unmasked vst


def _round_up(x, m):
    return -(-x // m) * m


def _vmem_capacity_bytes():
    # Generation-aware budget (v5e/v6e: 128 MiB, v7x: 64 MiB per TensorCore).
    try:
        return int(pltpu.get_tpu_info().vmem_capacity_bytes)
    except Exception:
        return 64 * 1024 * 1024          # conservative fallback (v7x per-core)


def _vmem_ledger_bytes(tile_h, W, Cp, comp_bytes, out_bytes):
    """Approximate VMEM footprint of one grid step's buffers (second-to-last
    dims rounded to a worst-case sublane tile; last dims are 128 multiples)."""
    r = lambda v: _round_up(v, 16)
    strip = 2 * (tile_h + 6) * r(W + 6) * Cp * comp_bytes    # double-buffered input
    stack = (tile_h + 6) * r(W) * (_KW * Cp) * comp_bytes    # kw-packed strip
    weight = _KW * r(_KW * Cp) * Cp * comp_bytes             # single-buffered weight
    accum = tile_h * r(W) * Cp * 4                           # f32 accumulator
    outbuf = 2 * tile_h * r(W) * Cp * out_bytes              # pipelined output
    return strip + stack + weight + accum + outbuf


def _pick_tile_h(H, W, Cp, comp_bytes, out_bytes, budget_bytes):
    """Largest divisor of H (preferring multiples of 8) whose buffer ledger
    fits the budget; falls back to the smallest divisor if nothing fits."""
    divisors = [d for d in range(1, H + 1) if H % d == 0]
    fits = [d for d in divisors
            if _vmem_ledger_bytes(d, W, Cp, comp_bytes, out_bytes) <= budget_bytes]
    preferred = [d for d in fits if d % 8 == 0 or d == H]
    if preferred:
        return max(preferred)
    if fits:
        return max(fits)
    return min(divisors)


@functools.partial(jax.jit, static_argnames=("tile_h", "compute_dtype"))
def multiscale_conv(x_nchw, w3, w5, w7, *, tile_h=None, compute_dtype=jnp.bfloat16):
    """MultiScaleConv forward: conv3x3(x) + conv5x5(x) + conv7x7(x).

    x_nchw: (N, C, H, W); w3/w5/w7: PyTorch Conv2d weights (C, C, k, k), bias=False.
    Returns (N, C, H, W) in x's dtype.
    """
    N, C, H, W = x_nchw.shape
    # TODO(synk): for C << 128 an im2col-style contraction (K = 49*C, only Cout
    # padded to a lane multiple) would avoid doing ~(128/C)^2 of the MXU work
    # on zero padding; kept on the lane-aligned Cp x Cp path here so every
    # lane-axis op stays tile-aligned.
    Cp = _round_up(C, 128)
    comp_bytes = jnp.dtype(compute_dtype).itemsize
    out_bytes = comp_bytes                           # kernel emits compute_dtype

    vmem_cap = _vmem_capacity_bytes()
    if tile_h is None:
        tile_h = _pick_tile_h(H, W, Cp, comp_bytes, out_bytes,
                              budget_bytes=int(0.70 * vmem_cap))
    assert H % tile_h == 0, "tile_h must divide H"
    n_h = H // tile_h
    vmem_limit = min(int(0.90 * vmem_cap), 128 * 1024 * 1024)

    # ---- wrapper-side data prep ------------------------------------------
    # TODO(synk): the NCHW<->NHWC transposes and the final channel slice are
    # extra HBM passes; they disappear if the surrounding pipeline stays NHWC.
    x = jnp.transpose(x_nchw, (0, 2, 3, 1))                                   # NHWC
    xp = jnp.pad(x, ((0, 0), (3, 3), (3, 3), (0, Cp - C))).astype(compute_dtype)

    # Fold the 3/5/7 kernels into one 7x7 weight (same math, 49 taps not 83),
    # then stack the kw taps into the contraction so that
    # w_stk[i, j*Cp + cin, cout] == W7x7[i, j, cin, cout].
    w_comb = (w7
              + jnp.pad(w5, ((0, 0), (0, 0), (1, 1), (1, 1)))
              + jnp.pad(w3, ((0, 0), (0, 0), (2, 2), (2, 2))))                # (Cout, Cin, 7, 7)
    w_hwio = jnp.transpose(w_comb, (2, 3, 1, 0))                              # (7, 7, Cin, Cout)
    w_hwio = jnp.pad(w_hwio, ((0, 0), (0, 0), (0, Cp - C), (0, Cp - C)))
    w_stk = w_hwio.reshape(_KW, _KW * Cp, Cp).astype(compute_dtype)

    # Advisory scheduler hint in terms of the real (unpadded) work.
    cost = pl.CostEstimate(
        flops=2 * N * H * W * C * C * (9 + 25 + 49),
        transcendentals=0,
        bytes_accessed=(N * (H + 6) * (W + 6) * C * comp_bytes
                        + (9 + 25 + 49) * C * C * comp_bytes
                        + N * H * W * C * out_bytes),
    )

    out_nhwc = pl.pallas_call(
        _multiscale_kernel,
        out_shape=jax.ShapeDtypeStruct((N, H, W, Cp), compute_dtype),
        grid_spec=pltpu.PrefetchScalarGridSpec(
            num_scalar_prefetch=0,
            # TODO(synk): for N == 1 on v7x (2 TensorCores) an extra leading
            # "parallel" axis splitting H would keep the second core busy; it
            # requires re-deriving the strip-DMA prime condition, so the batch
            # axis is the only parallel axis here.
            grid=(N, n_h),
            in_specs=[
                pl.BlockSpec(memory_space=pl.ANY),   # padded input, stays in HBM
                pl.BlockSpec(memory_space=pl.ANY),   # folded weight, stays in HBM
            ],
            out_specs=pl.BlockSpec((1, tile_h, W, Cp), lambda n, h: (n, h, 0, 0)),
            scratch_shapes=[
                pltpu.VMEM((2, tile_h + 6, W + 6, Cp), compute_dtype),  # strips
                pltpu.VMEM((tile_h + 6, W, _KW * Cp), compute_dtype),   # packed strip
                pltpu.VMEM((_KW, _KW * Cp, Cp), compute_dtype),         # weight
                pltpu.VMEM((tile_h, W, Cp), jnp.float32),               # accumulator
                pltpu.SemaphoreType.DMA((3,)),
            ],
        ),
        compiler_params=pltpu.CompilerParams(
            # h carries the manual double-buffered DMA chain -> sequential;
            # the batch axis is parallel (megacore / v7x dual TensorCores).
            dimension_semantics=("parallel", "arbitrary"),
            vmem_limit_bytes=vmem_limit,
        ),
        cost_estimate=cost,
    )(xp, w_stk)

    out = out_nhwc[..., :C].astype(x_nchw.dtype)     # drop channel padding, up-cast
    return jnp.transpose(out, (0, 3, 1, 2))          # back to NCHW


def _ref_conv(x, w, pad):
    return jax.lax.conv_general_dilated(
        x, w, window_strides=(1, 1), padding=[(pad, pad), (pad, pad)],
        dimension_numbers=("NCHW", "OIHW", "NCHW"))


if __name__ == "__main__":
    key = jax.random.PRNGKey(0)
    N, C, H, W = 2, 4, 16, 16
    k_x, k3, k5, k7 = jax.random.split(key, 4)

    x = jax.random.normal(k_x, (N, C, H, W), jnp.float32)
    # Deterministic synthetic weights (PyTorch Conv2d shapes, bias=False).
    w3 = jax.random.normal(k3, (C, C, 3, 3), jnp.float32) * (1.0 / (C * 9)) ** 0.5
    w5 = jax.random.normal(k5, (C, C, 5, 5), jnp.float32) * (1.0 / (C * 25)) ** 0.5
    w7 = jax.random.normal(k7, (C, C, 7, 7), jnp.float32) * (1.0 / (C * 49)) ** 0.5

    ref = _ref_conv(x, w3, 1) + _ref_conv(x, w5, 2) + _ref_conv(x, w7, 3)

    # 1) f32 path with H tiled into two halo'd strips: structural check that
    #    exercises the double-buffered manual DMA chain across grid steps.
    out_f32 = jax.block_until_ready(
        multiscale_conv(x, w3, w5, w7, tile_h=8, compute_dtype=jnp.float32))
    assert out_f32.shape == (N, C, H, W)
    assert jnp.allclose(out_f32, ref, atol=2e-3, rtol=2e-3), \
        float(jnp.max(jnp.abs(out_f32 - ref)))

    # 2) bf16 fast path (default), auto-tiled from the VMEM ledger.
    out_bf16 = jax.block_until_ready(multiscale_conv(x, w3, w5, w7))
    assert out_bf16.shape == (N, C, H, W)
    assert jnp.allclose(out_bf16, ref, atol=1.5e-1, rtol=1.5e-1), \
        float(jnp.max(jnp.abs(out_bf16 - ref)))

    print("KERNEL_OK")
</pallas_src>

<mosaic_0001>
module attributes {stable_mosaic.version = 11 : i64} {
  func.func @_multiscale_kernel(%arg0: i32, %arg1: i32, %arg2: memref<2x22x22x128xf32, #tpu.memory_space<any>>, %arg3: memref<7x896x128xf32, #tpu.memory_space<any>>, %arg4: memref<1x8x16x128xf32, #tpu.memory_space<vmem>>, %arg5: memref<2x14x22x128xf32, #tpu.memory_space<vmem>>, %arg6: memref<14x16x896xf32, #tpu.memory_space<vmem>>, %arg7: memref<7x896x128xf32, #tpu.memory_space<vmem>>, %arg8: memref<8x16x128xf32, #tpu.memory_space<vmem>>, %arg9: memref<3x!tpu.dma_semaphore, #tpu.memory_space<semaphore_mem>>) attributes {dimension_semantics = [#tpu.dimension_semantics<parallel>, #tpu.dimension_semantics<arbitrary>], iteration_bounds = array<i64: 2, 2>, scalar_prefetch = 0 : i64, scratch_operands = 5 : i64, tpu.core_type = #tpu.core_type<tc>, window_params = [{}, {}, {transform_indices = @transform_2, window_bounds = array<i64: 1, 8, 16, 128>}]} {
    %c2_i32 = arith.constant 2 : i32
    %c0_i32 = arith.constant 0 : i32
    %0 = arith.cmpi eq, %c2_i32, %c0_i32 : i32
    %c1_i32 = arith.constant 1 : i32
    %1 = arith.select %0, %c1_i32, %c2_i32 : i32
    %2 = arith.remsi %arg1, %1 : i32
    %c0_i32_0 = arith.constant 0 : i32
    %3 = arith.cmpi ne, %2, %c0_i32_0 : i32
    %c0_i32_1 = arith.constant 0 : i32
    %4 = arith.cmpi slt, %2, %c0_i32_1 : i32
    %c0_i32_2 = arith.constant 0 : i32
    %5 = arith.cmpi slt, %1, %c0_i32_2 : i32
    %6 = arith.xori %4, %5 : i1
    %7 = arith.andi %6, %3 : i1
    %8 = arith.addi %2, %1 : i32
    %9 = arith.select %7, %8, %2 : i32
    %c0_i32_3 = arith.constant 0 : i32
    %10 = arith.cmpi eq, %arg1, %c0_i32_3 : i32
    %11 = arith.extui %10 : i1 to i32
    %c0_i32_4 = arith.constant 0 : i32
    %12 = arith.cmpi ne, %11, %c0_i32_4 : i32
    scf.if %12 {
      %c8_i32_159 = arith.constant 8 : i32
      %107 = arith.muli %arg1, %c8_i32_159 : i32
      %108 = tpu.assume_multiple %107, 8 : i32
      %c0_i32_160 = arith.constant 0 : i32
      %c0_i32_161 = arith.constant 0 : i32
      %109 = tpu.memref_slice %arg2[%arg0, %108, %c0_i32_160, %c0_i32_161] : memref<2x22x22x128xf32, #tpu.memory_space<any>> -> memref<1x14x22x128xf32, #tpu.memory_space<any>>
      %110 = tpu.memref_squeeze %109 : memref<1x14x22x128xf32, #tpu.memory_space<any>> -> memref<14x22x128xf32, #tpu.memory_space<any>>
      %c0_i32_162 = arith.constant 0 : i32
      %c0_i32_163 = arith.constant 0 : i32
      %c0_i32_164 = arith.constant 0 : i32
      %111 = tpu.memref_slice %arg5[%9, %c0_i32_162, %c0_i32_163, %c0_i32_164] : memref<2x14x22x128xf32, #tpu.memory_space<vmem>> -> memref<1x14x22x128xf32, #tpu.memory_space<vmem>>
      %112 = tpu.memref_squeeze %111 : memref<1x14x22x128xf32, #tpu.memory_space<vmem>> -> memref<14x22x128xf32, #tpu.memory_space<vmem>>
      %113 = tpu.memref_slice %arg9[%9] : memref<3x!tpu.dma_semaphore, #tpu.memory_space<semaphore_mem>> -> memref<1x!tpu.dma_semaphore, #tpu.memory_space<semaphore_mem>>
      %114 = tpu.memref_squeeze %113 : memref<1x!tpu.dma_semaphore, #tpu.memory_space<semaphore_mem>> -> memref<!tpu.dma_semaphore, #tpu.memory_space<semaphore_mem>>
      tpu.enqueue_dma source(%110 : memref<14x22x128xf32, #tpu.memory_space<any>>) target(%112 : memref<14x22x128xf32, #tpu.memory_space<vmem>>) target_semaphore(%114 : memref<!tpu.dma_semaphore, #tpu.memory_space<semaphore_mem>>)
      %c2_i32_165 = arith.constant 2 : i32
      %115 = tpu.memref_slice %arg9[%c2_i32_165] : memref<3x!tpu.dma_semaphore, #tpu.memory_space<semaphore_mem>> -> memref<1x!tpu.dma_semaphore, #tpu.memory_space<semaphore_mem>>
      %116 = tpu.memref_squeeze %115 : memref<1x!tpu.dma_semaphore, #tpu.memory_space<semaphore_mem>> -> memref<!tpu.dma_semaphore, #tpu.memory_space<semaphore_mem>>
      tpu.enqueue_dma source(%arg3 : memref<7x896x128xf32, #tpu.memory_space<any>>) target(%arg7 : memref<7x896x128xf32, #tpu.memory_space<vmem>>) target_semaphore(%116 : memref<!tpu.dma_semaphore, #tpu.memory_space<semaphore_mem>>)
    } else {
    }
    %c1_i32_5 = arith.constant 1 : i32
    %13 = arith.addi %arg1, %c1_i32_5 : i32
    %c2_i32_6 = arith.constant 2 : i32
    %14 = arith.cmpi slt, %13, %c2_i32_6 : i32
    %15 = arith.extui %14 : i1 to i32
    %c0_i32_7 = arith.constant 0 : i32
    %16 = arith.cmpi ne, %15, %c0_i32_7 : i32
    scf.if %16 {
      %c1_i32_159 = arith.constant 1 : i32
      %107 = arith.addi %arg1, %c1_i32_159 : i32
      %c1_i32_160 = arith.constant 1 : i32
      %108 = arith.subi %c1_i32_160, %9 : i32
      %c8_i32_161 = arith.constant 8 : i32
      %109 = arith.muli %107, %c8_i32_161 : i32
      %110 = tpu.assume_multiple %109, 8 : i32
      %c0_i32_162 = arith.constant 0 : i32
      %c0_i32_163 = arith.constant 0 : i32
      %111 = tpu.memref_slice %arg2[%arg0, %110, %c0_i32_162, %c0_i32_163] : memref<2x22x22x128xf32, #tpu.memory_space<any>> -> memref<1x14x22x128xf32, #tpu.memory_space<any>>
      %112 = tpu.memref_squeeze %111 : memref<1x14x22x128xf32, #tpu.memory_space<any>> -> memref<14x22x128xf32, #tpu.memory_space<any>>
      %c0_i32_164 = arith.constant 0 : i32
      %c0_i32_165 = arith.constant 0 : i32
      %c0_i32_166 = arith.constant 0 : i32
      %113 = tpu.memref_slice %arg5[%108, %c0_i32_164, %c0_i32_165, %c0_i32_166] : memref<2x14x22x128xf32, #tpu.memory_space<vmem>> -> memref<1x14x22x128xf32, #tpu.memory_space<vmem>>
      %114 = tpu.memref_squeeze %113 : memref<1x14x22x128xf32, #tpu.memory_space<vmem>> -> memref<14x22x128xf32, #tpu.memory_space<vmem>>
      %115 = tpu.memref_slice %arg9[%108] : memref<3x!tpu.dma_semaphore, #tpu.memory_space<semaphore_mem>> -> memref<1x!tpu.dma_semaphore, #tpu.memory_space<semaphore_mem>>
      %116 = tpu.memref_squeeze %115 : memref<1x!tpu.dma_semaphore, #tpu.memory_space<semaphore_mem>> -> memref<!tpu.dma_semaphore, #tpu.memory_space<semaphore_mem>>
      tpu.enqueue_dma source(%112 : memref<14x22x128xf32, #tpu.memory_space<any>>) target(%114 : memref<14x22x128xf32, #tpu.memory_space<vmem>>) target_semaphore(%116 : memref<!tpu.dma_semaphore, #tpu.memory_space<semaphore_mem>>)
    } else {
    }
    %c8_i32 = arith.constant 8 : i32
    %17 = arith.muli %arg1, %c8_i32 : i32
    %18 = tpu.assume_multiple %17, 8 : i32
    %c0_i32_8 = arith.constant 0 : i32
    %c0_i32_9 = arith.constant 0 : i32
    %19 = tpu.memref_slice %arg2[%arg0, %18, %c0_i32_8, %c0_i32_9] : memref<2x22x22x128xf32, #tpu.memory_space<any>> -> memref<1x14x22x128xf32, #tpu.memory_space<any>>
    %20 = tpu.memref_squeeze %19 : memref<1x14x22x128xf32, #tpu.memory_space<any>> -> memref<14x22x128xf32, #tpu.memory_space<any>>
    %c0_i32_10 = arith.constant 0 : i32
    %c0_i32_11 = arith.constant 0 : i32
    %c0_i32_12 = arith.constant 0 : i32
    %21 = tpu.memref_slice %arg5[%9, %c0_i32_10, %c0_i32_11, %c0_i32_12] : memref<2x14x22x128xf32, #tpu.memory_space<vmem>> -> memref<1x14x22x128xf32, #tpu.memory_space<vmem>>
    %22 = tpu.memref_squeeze %21 : memref<1x14x22x128xf32, #tpu.memory_space<vmem>> -> memref<14x22x128xf32, #tpu.memory_space<vmem>>
    %23 = tpu.memref_slice %arg9[%9] : memref<3x!tpu.dma_semaphore, #tpu.memory_space<semaphore_mem>> -> memref<1x!tpu.dma_semaphore, #tpu.memory_space<semaphore_mem>>
    %24 = tpu.memref_squeeze %23 : memref<1x!tpu.dma_semaphore, #tpu.memory_space<semaphore_mem>> -> memref<!tpu.dma_semaphore, #tpu.memory_space<semaphore_mem>>
    tpu.wait_dma2 semaphore(%24 : memref<!tpu.dma_semaphore, #tpu.memory_space<semaphore_mem>>) src(%20 : memref<14x22x128xf32, #tpu.memory_space<any>>) dst(%22 : memref<14x22x128xf32, #tpu.memory_space<vmem>>)
    %c0_i32_13 = arith.constant 0 : i32
    %25 = arith.cmpi eq, %arg1, %c0_i32_13 : i32
    %26 = arith.extui %25 : i1 to i32
    %c0_i32_14 = arith.constant 0 : i32
    %27 = arith.cmpi ne, %26, %c0_i32_14 : i32
    scf.if %27 {
      %c2_i32_159 = arith.constant 2 : i32
      %107 = tpu.memref_slice %arg9[%c2_i32_159] : memref<3x!tpu.dma_semaphore, #tpu.memory_space<semaphore_mem>> -> memref<1x!tpu.dma_semaphore, #tpu.memory_space<semaphore_mem>>
      %108 = tpu.memref_squeeze %107 : memref<1x!tpu.dma_semaphore, #tpu.memory_space<semaphore_mem>> -> memref<!tpu.dma_semaphore, #tpu.memory_space<semaphore_mem>>
      tpu.wait_dma2 semaphore(%108 : memref<!tpu.dma_semaphore, #tpu.memory_space<semaphore_mem>>) src(%arg3 : memref<7x896x128xf32, #tpu.memory_space<any>>) dst(%arg7 : memref<7x896x128xf32, #tpu.memory_space<vmem>>)
    } else {
    }
    %c0_i32_15 = arith.constant 0 : i32
    %c0_i32_16 = arith.constant 0 : i32
    %c0_i32_17 = arith.constant 0 : i32
    %28 = tpu.memref_slice %arg5[%9, %c0_i32_15, %c0_i32_16, %c0_i32_17] : memref<2x14x22x128xf32, #tpu.memory_space<vmem>> -> memref<1x14x22x128xf32, #tpu.memory_space<vmem>>
    %29 = tpu.memref_squeeze %28 : memref<1x14x22x128xf32, #tpu.memory_space<vmem>> -> memref<14x22x128xf32, #tpu.memory_space<vmem>>
    %c0 = arith.constant 0 : index
    %c0_18 = arith.constant 0 : index
    %c0_19 = arith.constant 0 : index
    %30 = vector.load %29[%c0, %c0_18, %c0_19] : memref<14x22x128xf32, #tpu.memory_space<vmem>>, vector<14x16x128xf32>
    %c0_20 = arith.constant 0 : index
    %c0_21 = arith.constant 0 : index
    %c0_22 = arith.constant 0 : index
    %31 = vector.load %arg6[%c0_20, %c0_21, %c0_22] : memref<14x16x896xf32, #tpu.memory_space<vmem>>, vector<14x16x128xf32>
    tpu.vector_store %arg6[%c0_20, %c0_21, %c0_22], %30 {strides = array<i32>} : memref<14x16x896xf32, #tpu.memory_space<vmem>>, vector<14x16x128xf32>,
    %c0_i32_23 = arith.constant 0 : i32
    %c0_i32_24 = arith.constant 0 : i32
    %c0_i32_25 = arith.constant 0 : i32
    %32 = tpu.memref_slice %arg5[%9, %c0_i32_23, %c0_i32_24, %c0_i32_25] : memref<2x14x22x128xf32, #tpu.memory_space<vmem>> -> memref<1x14x22x128xf32, #tpu.memory_space<vmem>>
    %33 = tpu.memref_squeeze %32 : memref<1x14x22x128xf32, #tpu.memory_space<vmem>> -> memref<14x22x128xf32, #tpu.memory_space<vmem>>
    %c0_26 = arith.constant 0 : index
    %c1 = arith.constant 1 : index
    %c0_27 = arith.constant 0 : index
    %34 = vector.load %33[%c0_26, %c1, %c0_27] : memref<14x22x128xf32, #tpu.memory_space<vmem>>, vector<14x16x128xf32>
    %c0_28 = arith.constant 0 : index
    %c0_29 = arith.constant 0 : index
    %c128 = arith.constant 128 : index
    %35 = vector.load %arg6[%c0_28, %c0_29, %c128] : memref<14x16x896xf32, #tpu.memory_space<vmem>>, vector<14x16x128xf32>
    tpu.vector_store %arg6[%c0_28, %c0_29, %c128], %34 {strides = array<i32>} : memref<14x16x896xf32, #tpu.memory_space<vmem>>, vector<14x16x128xf32>,
    %c0_i32_30 = arith.constant 0 : i32
    %c0_i32_31 = arith.constant 0 : i32
    %c0_i32_32 = arith.constant 0 : i32
    %36 = tpu.memref_slice %arg5[%9, %c0_i32_30, %c0_i32_31, %c0_i32_32] : memref<2x14x22x128xf32, #tpu.memory_space<vmem>> -> memref<1x14x22x128xf32, #tpu.memory_space<vmem>>
    %37 = tpu.memref_squeeze %36 : memref<1x14x22x128xf32, #tpu.memory_space<vmem>> -> memref<14x22x128xf32, #tpu.memory_space<vmem>>
    %c0_33 = arith.constant 0 : index
    %c2 = arith.constant 2 : index
    %c0_34 = arith.constant 0 : index
    %38 = vector.load %37[%c0_33, %c2, %c0_34] : memref<14x22x128xf32, #tpu.memory_space<vmem>>, vector<14x16x128xf32>
    %c0_35 = arith.constant 0 : index
    %c0_36 = arith.constant 0 : index
    %c256 = arith.constant 256 : index
    %39 = vector.load %arg6[%c0_35, %c0_36, %c256] : memref<14x16x896xf32, #tpu.memory_space<vmem>>, vector<14x16x128xf32>
    tpu.vector_store %arg6[%c0_35, %c0_36, %c256], %38 {strides = array<i32>} : memref<14x16x896xf32, #tpu.memory_space<vmem>>, vector<14x16x128xf32>,
    %c0_i32_37 = arith.constant 0 : i32
    %c0_i32_38 = arith.constant 0 : i32
    %c0_i32_39 = arith.constant 0 : i32
    %40 = tpu.memref_slice %arg5[%9, %c0_i32_37, %c0_i32_38, %c0_i32_39] : memref<2x14x22x128xf32, #tpu.memory_space<vmem>> -> memref<1x14x22x128xf32, #tpu.memory_space<vmem>>
    %41 = tpu.memref_squeeze %40 : memref<1x14x22x128xf32, #tpu.memory_space<vmem>> -> memref<14x22x128xf32, #tpu.memory_space<vmem>>
    %c0_40 = arith.constant 0 : index
    %c3 = arith.constant 3 : index
    %c0_41 = arith.constant 0 : index
    %42 = vector.load %41[%c0_40, %c3, %c0_41] : memref<14x22x128xf32, #tpu.memory_space<vmem>>, vector<14x16x128xf32>
    %c0_42 = arith.constant 0 : index
    %c0_43 = arith.constant 0 : index
    %c384 = arith.constant 384 : index
    %43 = vector.load %arg6[%c0_42, %c0_43, %c384] : memref<14x16x896xf32, #tpu.memory_space<vmem>>, vector<14x16x128xf32>
    tpu.vector_store %arg6[%c0_42, %c0_43, %c384], %42 {strides = array<i32>} : memref<14x16x896xf32, #tpu.memory_space<vmem>>, vector<14x16x128xf32>,
    %c0_i32_44 = arith.constant 0 : i32
    %c0_i32_45 = arith.constant 0 : i32
    %c0_i32_46 = arith.constant 0 : i32
    %44 = tpu.memref_slice %arg5[%9, %c0_i32_44, %c0_i32_45, %c0_i32_46] : memref<2x14x22x128xf32, #tpu.memory_space<vmem>> -> memref<1x14x22x128xf32, #tpu.memory_space<vmem>>
    %45 = tpu.memref_squeeze %44 : memref<1x14x22x128xf32, #tpu.memory_space<vmem>> -> memref<14x22x128xf32, #tpu.memory_space<vmem>>
    %c0_47 = arith.constant 0 : index
    %c4 = arith.constant 4 : index
    %c0_48 = arith.constant 0 : index
    %46 = vector.load %45[%c0_47, %c4, %c0_48] : memref<14x22x128xf32, #tpu.memory_space<vmem>>, vector<14x16x128xf32>
    %c0_49 = arith.constant 0 : index
    %c0_50 = arith.constant 0 : index
    %c512 = arith.constant 512 : index
    %47 = vector.load %arg6[%c0_49, %c0_50, %c512] : memref<14x16x896xf32, #tpu.memory_space<vmem>>, vector<14x16x128xf32>
    tpu.vector_store %arg6[%c0_49, %c0_50, %c512], %46 {strides = array<i32>} : memref<14x16x896xf32, #tpu.memory_space<vmem>>, vector<14x16x128xf32>,
    %c0_i32_51 = arith.constant 0 : i32
    %c0_i32_52 = arith.constant 0 : i32
    %c0_i32_53 = arith.constant 0 : i32
    %48 = tpu.memref_slice %arg5[%9, %c0_i32_51, %c0_i32_52, %c0_i32_53] : memref<2x14x22x128xf32, #tpu.memory_space<vmem>> -> memref<1x14x22x128xf32, #tpu.memory_space<vmem>>
    %49 = tpu.memref_squeeze %48 : memref<1x14x22x128xf32, #tpu.memory_space<vmem>> -> memref<14x22x128xf32, #tpu.memory_space<vmem>>
    %c0_54 = arith.constant 0 : index
    %c5 = arith.constant 5 : index
    %c0_55 = arith.constant 0 : index
    %50 = vector.load %49[%c0_54, %c5, %c0_55] : memref<14x22x128xf32, #tpu.memory_space<vmem>>, vector<14x16x128xf32>
    %c0_56 = arith.constant 0 : index
    %c0_57 = arith.constant 0 : index
    %c640 = arith.constant 640 : index
    %51 = vector.load %arg6[%c0_56, %c0_57, %c640] : memref<14x16x896xf32, #tpu.memory_space<vmem>>, vector<14x16x128xf32>
    tpu.vector_store %arg6[%c0_56, %c0_57, %c640], %50 {strides = array<i32>} : memref<14x16x896xf32, #tpu.memory_space<vmem>>, vector<14x16x128xf32>,
    %c0_i32_58 = arith.constant 0 : i32
    %c0_i32_59 = arith.constant 0 : i32
    %c0_i32_60 = arith.constant 0 : i32
    %52 = tpu.memref_slice %arg5[%9, %c0_i32_58, %c0_i32_59, %c0_i32_60] : memref<2x14x22x128xf32, #tpu.memory_space<vmem>> -> memref<1x14x22x128xf32, #tpu.memory_space<vmem>>
    %53 = tpu.memref_squeeze %52 : memref<1x14x22x128xf32, #tpu.memory_space<vmem>> -> memref<14x22x128xf32, #tpu.memory_space<vmem>>
    %c0_61 = arith.constant 0 : index
    %c6 = arith.constant 6 : index
    %c0_62 = arith.constant 0 : index
    %54 = vector.load %53[%c0_61, %c6, %c0_62] : memref<14x22x128xf32, #tpu.memory_space<vmem>>, vector<14x16x128xf32>
    %c0_63 = arith.constant 0 : index
    %c0_64 = arith.constant 0 : index
    %c768 = arith.constant 768 : index
    %55 = vector.load %arg6[%c0_63, %c0_64, %c768] : memref<14x16x896xf32, #tpu.memory_space<vmem>>, vector<14x16x128xf32>
    tpu.vector_store %arg6[%c0_63, %c0_64, %c768], %54 {strides = array<i32>} : memref<14x16x896xf32, #tpu.memory_space<vmem>>, vector<14x16x128xf32>,
    %c0_65 = arith.constant 0 : index
    %c0_66 = arith.constant 0 : index
    %c0_67 = arith.constant 0 : index
    %56 = vector.load %arg6[%c0_65, %c0_66, %c0_67] : memref<14x16x896xf32, #tpu.memory_space<vmem>>, vector<8x16x896xf32>
    %c0_68 = arith.constant 0 : index
    %c0_69 = arith.constant 0 : index
    %c0_70 = arith.constant 0 : index
    %57 = vector.load %arg7[%c0_68, %c0_69, %c0_70] : memref<7x896x128xf32, #tpu.memory_space<vmem>>, vector<1x896x128xf32>
    %58 = vector.shape_cast %57 : vector<1x896x128xf32> to vector<896x128xf32>
    %cst = arith.constant dense<0.000000e+00> : vector<8x16x128xf32>
    %59 = tpu.matmul %56, %58, %cst {dimension_numbers = #tpu.dot_dimension_numbers<[2], [0], [0, 1], [1], [0, 0, 0, 1, 1, 1], [], []>} : vector<8x16x896xf32>, vector<896x128xf32>, vector<8x16x128xf32> -> vector<8x16x128xf32>
    %c0_71 = arith.constant 0 : index
    %c0_72 = arith.constant 0 : index
    %c0_73 = arith.constant 0 : index
    %60 = vector.load %arg8[%c0_71, %c0_72, %c0_73] : memref<8x16x128xf32, #tpu.memory_space<vmem>>, vector<8x16x128xf32>
    tpu.vector_store %arg8[%c0_71, %c0_72, %c0_73], %59 {strides = array<i32>} : memref<8x16x128xf32, #tpu.memory_space<vmem>>, vector<8x16x128xf32>,
    %c1_74 = arith.constant 1 : index
    %c0_75 = arith.constant 0 : index
    %c0_76 = arith.constant 0 : index
    %61 = vector.load %arg6[%c1_74, %c0_75, %c0_76] : memref<14x16x896xf32, #tpu.memory_space<vmem>>, vector<8x16x896xf32>
    %c1_77 = arith.constant 1 : index
    %c0_78 = arith.constant 0 : index
    %c0_79 = arith.constant 0 : index
    %62 = vector.load %arg7[%c1_77, %c0_78, %c0_79] : memref<7x896x128xf32, #tpu.memory_space<vmem>>, vector<1x896x128xf32>
    %63 = vector.shape_cast %62 : vector<1x896x128xf32> to vector<896x128xf32>
    %cst_80 = arith.constant dense<0.000000e+00> : vector<8x16x128xf32>
    %64 = tpu.matmul %61, %63, %cst_80 {dimension_numbers = #tpu.dot_dimension_numbers<[2], [0], [0, 1], [1], [0, 0, 0, 1, 1, 1], [], []>} : vector<8x16x896xf32>, vector<896x128xf32>, vector<8x16x128xf32> -> vector<8x16x128xf32>
    %c0_81 = arith.constant 0 : index
    %c0_82 = arith.constant 0 : index
    %c0_83 = arith.constant 0 : index
    %65 = vector.load %arg8[%c0_81, %c0_82, %c0_83] : memref<8x16x128xf32, #tpu.memory_space<vmem>>, vector<8x16x128xf32>
    %66 = arith.addf %65, %64 : vector<8x16x128xf32>
    %c0_84 = arith.constant 0 : index
    %c0_85 = arith.constant 0 : index
    %c0_86 = arith.constant 0 : index
    %67 = vector.load %arg8[%c0_84, %c0_85, %c0_86] : memref<8x16x128xf32, #tpu.memory_space<vmem>>, vector<8x16x128xf32>
    tpu.vector_store %arg8[%c0_84, %c0_85, %c0_86], %66 {strides = array<i32>} : memref<8x16x128xf32, #tpu.memory_space<vmem>>, vector<8x16x128xf32>,
    %c2_87 = arith.constant 2 : index
    %c0_88 = arith.constant 0 : index
    %c0_89 = arith.constant 0 : index
    %68 = vector.load %arg6[%c2_87, %c0_88, %c0_89] : memref<14x16x896xf32, #tpu.memory_space<vmem>>, vector<8x16x896xf32>
    %c2_90 = arith.constant 2 : index
    %c0_91 = arith.constant 0 : index
    %c0_92 = arith.constant 0 : index
    %69 = vector.load %arg7[%c2_90, %c0_91, %c0_92] : memref<7x896x128xf32, #tpu.memory_space<vmem>>, vector<1x896x128xf32>
    %70 = vector.shape_cast %69 : vector<1x896x128xf32> to vector<896x128xf32>
    %cst_93 = arith.constant dense<0.000000e+00> : vector<8x16x128xf32>
    %71 = tpu.matmul %68, %70, %cst_93 {dimension_numbers = #tpu.dot_dimension_numbers<[2], [0], [0, 1], [1], [0, 0, 0, 1, 1, 1], [], []>} : vector<8x16x896xf32>, vector<896x128xf32>, vector<8x16x128xf32> -> vector<8x16x128xf32>
    %c0_94 = arith.constant 0 : index
    %c0_95 = arith.constant 0 : index
    %c0_96 = arith.constant 0 : index
    %72 = vector.load %arg8[%c0_94, %c0_95, %c0_96] : memref<8x16x128xf32, #tpu.memory_space<vmem>>, vector<8x16x128xf32>
    %73 = arith.addf %72, %71 : vector<8x16x128xf32>
    %c0_97 = arith.constant 0 : index
    %c0_98 = arith.constant 0 : index
    %c0_99 = arith.constant 0 : index
    %74 = vector.load %arg8[%c0_97, %c0_98, %c0_99] : memref<8x16x128xf32, #tpu.memory_space<vmem>>, vector<8x16x128xf32>
    tpu.vector_store %arg8[%c0_97, %c0_98, %c0_99], %73 {strides = array<i32>} : memref<8x16x128xf32, #tpu.memory_space<vmem>>, vector<8x16x128xf32>,
    %c3_100 = arith.constant 3 : index
    %c0_101 = arith.constant 0 : index
    %c0_102 = arith.constant 0 : index
    %75 = vector.load %arg6[%c3_100, %c0_101, %c0_102] : memref<14x16x896xf32, #tpu.memory_space<vmem>>, vector<8x16x896xf32>
    %c3_103 = arith.constant 3 : index
    %c0_104 = arith.constant 0 : index
    %c0_105 = arith.constant 0 : index
    %76 = vector.load %arg7[%c3_103, %c0_104, %c0_105] : memref<7x896x128xf32, #tpu.memory_space<vmem>>, vector<1x896x128xf32>
    %77 = vector.shape_cast %76 : vector<1x896x128xf32> to vector<896x128xf32>
    %cst_106 = arith.constant dense<0.000000e+00> : vector<8x16x128xf32>
    %78 = tpu.matmul %75, %77, %cst_106 {dimension_numbers = #tpu.dot_dimension_numbers<[2], [0], [0, 1], [1], [0, 0, 0, 1, 1, 1], [], []>} : vector<8x16x896xf32>, vector<896x128xf32>, vector<8x16x128xf32> -> vector<8x16x128xf32>
    %c0_107 = arith.constant 0 : index
    %c0_108 = arith.constant 0 : index
    %c0_109 = arith.constant 0 : index
    %79 = vector.load %arg8[%c0_107, %c0_108, %c0_109] : memref<8x16x128xf32, #tpu.memory_space<vmem>>, vector<8x16x128xf32>
    %80 = arith.addf %79, %78 : vector<8x16x128xf32>
    %c0_110 = arith.constant 0 : index
    %c0_111 = arith.constant 0 : index
    %c0_112 = arith.constant 0 : index
    %81 = vector.load %arg8[%c0_110, %c0_111, %c0_112] : memref<8x16x128xf32, #tpu.memory_space<vmem>>, vector<8x16x128xf32>
    tpu.vector_store %arg8[%c0_110, %c0_111, %c0_112], %80 {strides = array<i32>} : memref<8x16x128xf32, #tpu.memory_space<vmem>>, vector<8x16x128xf32>,
    %c4_113 = arith.constant 4 : index
    %c0_114 = arith.constant 0 : index
    %c0_115 = arith.constant 0 : index
    %82 = vector.load %arg6[%c4_113, %c0_114, %c0_115] : memref<14x16x896xf32, #tpu.memory_space<vmem>>, vector<8x16x896xf32>
    %c4_116 = arith.constant 4 : index
    %c0_117 = arith.constant 0 : index
    %c0_118 = arith.constant 0 : index
    %83 = vector.load %arg7[%c4_116, %c0_117, %c0_118] : memref<7x896x128xf32, #tpu.memory_space<vmem>>, vector<1x896x128xf32>
    %84 = vector.shape_cast %83 : vector<1x896x128xf32> to vector<896x128xf32>
    %cst_119 = arith.constant dense<0.000000e+00> : vector<8x16x128xf32>
    %85 = tpu.matmul %82, %84, %cst_119 {dimension_numbers = #tpu.dot_dimension_numbers<[2], [0], [0, 1], [1], [0, 0, 0, 1, 1, 1], [], []>} : vector<8x16x896xf32>, vector<896x128xf32>, vector<8x16x128xf32> -> vector<8x16x128xf32>
    %c0_120 = arith.constant 0 : index
    %c0_121 = arith.constant 0 : index
    %c0_122 = arith.constant 0 : index
    %86 = vector.load %arg8[%c0_120, %c0_121, %c0_122] : memref<8x16x128xf32, #tpu.memory_space<vmem>>, vector<8x16x128xf32>
    %87 = arith.addf %86, %85 : vector<8x16x128xf32>
    %c0_123 = arith.constant 0 : index
    %c0_124 = arith.constant 0 : index
    %c0_125 = arith.constant 0 : index
    %88 = vector.load %arg8[%c0_123, %c0_124, %c0_125] : memref<8x16x128xf32, #tpu.memory_space<vmem>>, vector<8x16x128xf32>
    tpu.vector_store %arg8[%c0_123, %c0_124, %c0_125], %87 {strides = array<i32>} : memref<8x16x128xf32, #tpu.memory_space<vmem>>, vector<8x16x128xf32>,
    %c5_126 = arith.constant 5 : index
    %c0_127 = arith.constant 0 : index
    %c0_128 = arith.constant 0 : index
    %89 = vector.load %arg6[%c5_126, %c0_127, %c0_128] : memref<14x16x896xf32, #tpu.memory_space<vmem>>, vector<8x16x896xf32>
    %c5_129 = arith.constant 5 : index
    %c0_130 = arith.constant 0 : index
    %c0_131 = arith.constant 0 : index
    %90 = vector.load %arg7[%c5_129, %c0_130, %c0_131] : memref<7x896x128xf32, #tpu.memory_space<vmem>>, vector<1x896x128xf32>
    %91 = vector.shape_cast %90 : vector<1x896x128xf32> to vector<896x128xf32>
    %cst_132 = arith.constant dense<0.000000e+00> : vector<8x16x128xf32>
    %92 = tpu.matmul %89, %91, %cst_132 {dimension_numbers = #tpu.dot_dimension_numbers<[2], [0], [0, 1], [1], [0, 0, 0, 1, 1, 1], [], []>} : vector<8x16x896xf32>, vector<896x128xf32>, vector<8x16x128xf32> -> vector<8x16x128xf32>
    %c0_133 = arith.constant 0 : index
    %c0_134 = arith.constant 0 : index
    %c0_135 = arith.constant 0 : index
    %93 = vector.load %arg8[%c0_133, %c0_134, %c0_135] : memref<8x16x128xf32, #tpu.memory_space<vmem>>, vector<8x16x128xf32>
    %94 = arith.addf %93, %92 : vector<8x16x128xf32>
    %c0_136 = arith.constant 0 : index
    %c0_137 = arith.constant 0 : index
    %c0_138 = arith.constant 0 : index
    %95 = vector.load %arg8[%c0_136, %c0_137, %c0_138] : memref<8x16x128xf32, #tpu.memory_space<vmem>>, vector<8x16x128xf32>
    tpu.vector_store %arg8[%c0_136, %c0_137, %c0_138], %94 {strides = array<i32>} : memref<8x16x128xf32, #tpu.memory_space<vmem>>, vector<8x16x128xf32>,
    %c6_139 = arith.constant 6 : index
    %c0_140 = arith.constant 0 : index
    %c0_141 = arith.constant 0 : index
    %96 = vector.load %arg6[%c6_139, %c0_140, %c0_141] : memref<14x16x896xf32, #tpu.memory_space<vmem>>, vector<8x16x896xf32>
    %c6_142 = arith.constant 6 : index
    %c0_143 = arith.constant 0 : index
    %c0_144 = arith.constant 0 : index
    %97 = vector.load %arg7[%c6_142, %c0_143, %c0_144] : memref<7x896x128xf32, #tpu.memory_space<vmem>>, vector<1x896x128xf32>
    %98 = vector.shape_cast %97 : vector<1x896x128xf32> to vector<896x128xf32>
    %cst_145 = arith.constant dense<0.000000e+00> : vector<8x16x128xf32>
    %99 = tpu.matmul %96, %98, %cst_145 {dimension_numbers = #tpu.dot_dimension_numbers<[2], [0], [0, 1], [1], [0, 0, 0, 1, 1, 1], [], []>} : vector<8x16x896xf32>, vector<896x128xf32>, vector<8x16x128xf32> -> vector<8x16x128xf32>
    %c0_146 = arith.constant 0 : index
    %c0_147 = arith.constant 0 : index
    %c0_148 = arith.constant 0 : index
    %100 = vector.load %arg8[%c0_146, %c0_147, %c0_148] : memref<8x16x128xf32, #tpu.memory_space<vmem>>, vector<8x16x128xf32>
    %101 = arith.addf %100, %99 : vector<8x16x128xf32>
    %c0_149 = arith.constant 0 : index
    %c0_150 = arith.constant 0 : index
    %c0_151 = arith.constant 0 : index
    %102 = vector.load %arg8[%c0_149, %c0_150, %c0_151] : memref<8x16x128xf32, #tpu.memory_space<vmem>>, vector<8x16x128xf32>
    tpu.vector_store %arg8[%c0_149, %c0_150, %c0_151], %101 {strides = array<i32>} : memref<8x16x128xf32, #tpu.memory_space<vmem>>, vector<8x16x128xf32>,
    %c0_152 = arith.constant 0 : index
    %c0_153 = arith.constant 0 : index
    %c0_154 = arith.constant 0 : index
    %103 = vector.load %arg8[%c0_152, %c0_153, %c0_154] : memref<8x16x128xf32, #tpu.memory_space<vmem>>, vector<8x16x128xf32>
    %c0_155 = arith.constant 0 : index
    %c0_156 = arith.constant 0 : index
    %c0_157 = arith.constant 0 : index
    %c0_158 = arith.constant 0 : index
    %104 = vector.load %arg4[%c0_155, %c0_156, %c0_157, %c0_158] : memref<1x8x16x128xf32, #tpu.memory_space<vmem>>, vector<1x8x16x128xf32>
    %105 = vector.shape_cast %104 : vector<1x8x16x128xf32> to vector<8x16x128xf32>
    %106 = vector.shape_cast %103 : vector<8x16x128xf32> to vector<1x8x16x128xf32>
    tpu.vector_store %arg4[%c0_155, %c0_156, %c0_157, %c0_158], %106 {strides = array<i32>} : memref<1x8x16x128xf32, #tpu.memory_space<vmem>>, vector<1x8x16x128xf32>,
    return
  }
  func.func @transform_2(%arg0: i32, %arg1: i32) -> (i32, i32, i32, i32) {
    %c0_i32 = arith.constant 0 : i32
    %c0_i32_0 = arith.constant 0 : i32
    %c0_i32_1 = arith.constant 0 : i32
    return %arg0, %arg1, %c0_i32, %c0_i32_0 : i32, i32, i32, i32
  }
}

</mosaic_0001>

<llo_original>
// kernel: multiscale_conv.1
$region0: #{multiscale_conv.1}
  #allocation0 [shape = 'u32[]', space=smem, size = 0x4, offset = 0x4, fixed_abs, tag = 'smem constant byte address 0x4 - core index']
  #allocation1 [shape = 'u32[144,128]{1,0:T(1,128)}', space=vmem, size = 0x12000, scoped, tag = 'internal scratch']
  #allocation2 [shape = 'f32[2,14,22,128]{3,2,1,0:T(8,128)}', space=vmem, size = 0x54000, scoped, tag = 'scratch operand']
  #allocation3 [shape = 'f32[14,16,896]{2,1,0:T(8,128)}', space=vmem, size = 0xc4000, scoped, tag = 'scratch operand']
  #allocation4 [shape = 'f32[7,896,128]{2,1,0:T(8,128)}', space=vmem, size = 0x310000, scoped, tag = 'scratch operand']
  #allocation5 [shape = 'f32[8,16,128]{2,1,0:T(8,128)}', space=vmem, size = 0x10000, scoped, tag = 'scratch operand']
  #allocation6 [shape = 's32[3]{0}', space=sflag, size = 0xc, scoped, tag = 'scratch operand']
  #allocation7 [shape = 's32[]', space=sflag, size = 0x4, offset = 0, fixed_abs, tag = 'sflag constant byte address 0x0 - dummy sync flag']
  #allocation8 [shape = 's32[]', space=sflag, size = 0x4, offset = 0, fixed_abs, tag = 'sflag constant byte address 0x0 - dummy sync flag']
  #allocation9 [shape = 's32[]', space=sflag, size = 0x4, offset = 0, fixed_abs, tag = 'sflag constant byte address 0x0 - dummy sync flag']
  %s0 = inlined_call_operand.vmem [shape: f32[2,22,22,128], index: 0, kind: input, shape index: {}]
  %s1 = inlined_call_operand.vmem [shape: f32[7,896,128], index: 1, kind: input, shape index: {}]
  %s2 = inlined_call_operand.vmem [shape: f32[2,16,16,128], index: 2, kind: output, shape index: {}]
  %s3 = sld [smem:[#allocation0]]
  $region145: #{multiscale_conv.1} parent=0
    _
  %s5 = ssub.s32 1, %s3
  %s6 = scalar_select 0, %s5, %s3
  loop: start=0, step=1, limit=5
  $region2: #{multiscale_conv.1} parent=0 // loop_pre_header
    _
  $region3: #{multiscale_conv.1} parent=0 // loop_header
    %s8 = sphi 0, %s12
    %p9 = scmp.ge.s32.totalorder %s8, 5
    %s14 = sphi 0, %s24
    %s15 = sphi 0, %s20
    %s16 = sphi 0, %s14
    %s17 = sphi 0, %s15
    %s29 = sphi 0, %s31
    %s32 = sphi 0, %s29
    %s42 = sphi 0, %s32
  $region4: #{multiscale_conv.1} parent=0 // loop_header_branch
    %11 = sbr.rel (%p9) target = $region8
  $region5: #{multiscale_conv.1} parent=0 // loop_body
    %s13 = ssub.s32 %s8, 1
    %s18 = sadd.s32 1, %s15
    %p19 = scmp.ge.s32.totalorder %s18, 2
    %s20 = scalar_select %p19, 0, %s18
    %s21 = sadd.s32 1, %s14
    %s22 = scalar_select %p19, %s21, %s14
    %p23 = scmp.ge.s32.totalorder %s22, 2
    %s24 = scalar_select %p23, 0, %s22
    %s25 = ssub.s32 %s14, %s24
    %s26 = ssub.s32 %s15, %s20
    %s27 = sor.u32 %s25, %s26
    %p28 = scmp.eq.s32.totalorder %s27, 0
    %s30 = sadd.s32 %s29, 1
    %s31 = scalar_select %p28, %s29, %s30
    %p33 = pneg %p28
    %p34 = scmp.eq.s32.totalorder %s8, 3
    %p35 = por %p33, %p34
    %p36 = scmp.ne.s32.totalorder %s29, %s32
    %p37 = scmp.eq.s32.totalorder %s8, 0
    %p38 = por %p36, %p37
    %p39 = scmp.ne.s32.totalorder %s29, %s32
    %p40 = scmp.eq.s32.totalorder %s13, 3
    %p41 = por %p39, %p40
    %p43 = scmp.ne.s32.totalorder %s32, %s42
    %p44 = scmp.eq.s32.totalorder %s13, 0
    %p45 = por %p43, %p44
    %p46 = scmp.lt.s32.totalorder %s8, 4
    // Predicated region
    $region9: #{multiscale_conv.1} parent=5 // pred_check
      %p47 = pneg %p46
    $region10: #{multiscale_conv.1} parent=5 // pred_check_branch
      %49 = sbr.rel (%p47) target = $region12
    $region11: #{multiscale_conv.1} parent=5 // pred_region
      %p50 = pneg %p38
      %p51 = pneg %p35
      %s52 = smul.u32 8, %s15
      %p53 = scmp.lt.s32.totalorder %s14, 1
      %s54 = scalar_select %p53, %s14, 1
      %p55 = scmp.lt.s32.totalorder %s52, 15
      %s56 = scalar_select %p55, %s52, 15
      %s57 = smul.addr %s56, 2
      %s58 = smul.addr %s54, 32
      %s59 = sadd.s32 %s57, %s58
      %s60 = smul.addr %s59, 8
      %s61 = scalar_lea.vmem %s2, %s60
      %s62 = smul.u32 8, %s15
      %p63 = scmp.lt.s32.totalorder %s14, 1
      %s64 = scalar_select %p63, %s14, 1
      %p65 = scmp.lt.s32.totalorder %s62, 15
      %s66 = scalar_select %p65, %s62, 15
      %s67 = smul.addr %s66, 2
      %s68 = smul.addr %s64, 32
      %s69 = sadd.s32 %s67, %s68
      %s70 = smul.addr %s69, 8
      %s71 = scalar_lea.vmem %s2, %s70
      %s72 = smul.u32 8, %s15
      %p73 = scmp.lt.s32.totalorder %s15, 0
      %s74 = ssub.s32 0, %s15
      %s75 = scalar_select %p73, %s74, %s15
      %s76 = sand.u32 %s75, 1
      %s77 = ssub.s32 0, %s76
      %s78 = scalar_select %p73, %s77, %s76
      %p79 = scmp.ne.s32.totalorder %s78, 0
      %p80 = scmp.lt.s32.totalorder %s78, 0
      %p81 = pnand %p80, %p79
      %p82 = pneg %p81
      %s83 = sadd.s32 %s78, 2
      %s84 = scalar_select %p82, %s83, %s78
      %p85 = scmp.eq.s32.totalorder %s15, 0
      // Predicated region
      $region13: #{multiscale_conv.1} parent=11 // pred_check
        %p86 = pneg %p85
      $region14: #{multiscale_conv.1} parent=11 // pred_check_branch
        %88 = sbr.rel (%p86) target = $region16
      $region15: #{multiscale_conv.1} parent=11 // pred_region
        %s89 = smul.u32 %s15, 8
        %s90 = smul.u32 %s89, 24
        %s91 = smul.u32 %s14, 528
        %s92 = sadd.s32 %s90, %s91
        %s93 = scalar_lea.vmem %s0, %s92
        %s94 = smul.u32 %s84, 336
        %s95 = scalar_lea.vmem [#allocation2], %s94
        %s96 = scalar_lea.sflag [#allocation6], %s84
        %p98 = scmp.lt.u32.totalorder 22, 8
        %p99 = pneg %p98
        // Predicated region
        $region17: #{multiscale_conv.1} parent=15 // pred_check
          _
        $region18: #{multiscale_conv.1} parent=15 // pred_check_branch
          %101 = sbr.rel (%p98) target = $region20
        $region19: #{multiscale_conv.1} parent=15 // pred_region
          %s142 = sand.u32 22, 7
          %p143 = scmp.eq.s32.totalorder %s142, 0
          %p144 = pneg %p143
          // Predicated region
          $region32: #{multiscale_conv.1} parent=19 // pred_check
            _
          $region33: #{multiscale_conv.1} parent=19 // pred_check_branch
            %146 = sbr.rel (%p143) target = $region35
          $region34: #{multiscale_conv.1} parent=19 // pred_region
            %s147 = sand.u32 22, 7
            %s148 = ssub.s32 22, %s147
            %s149 = scalar_lea.vmem %s93, %s148
            %s150 = ssub.s32 22, %s147
            %s151 = scalar_lea.vmem %s95, %s150 [#allocation2]
            loop: start=0, step=1, limit=1
            $region36: #{multiscale_conv.1} parent=34 // loop_pre_header
              _
            $region37: #{multiscale_conv.1} parent=34 // loop_header
              %s153 = sphi 0, %s157
              %p154 = scmp.ge.s32.totalorder %s153, 1
              %s158 = sphi %s93, %s93
              %s159 = sphi %s95, %s95
            $region38: #{multiscale_conv.1} parent=34 // loop_header_branch
              %156 = sbr.rel (%p154) target = $region42
            $region39: #{multiscale_conv.1} parent=34 // loop_body
              %v160 = vld [vmem:[%s158] sm:$0xff]
              %161 = vst [vmem:[%s159] sm:$0xff] %v160
              %v162 = vld [vmem:[%s158 + $0x8] sm:$0xff]
              %163 = vst [vmem:[%s159 + $0x8] sm:$0xff] %v162
              %v164 = vld [vmem:[%s158 + $0x18] sm:$0xff]
              %165 = vst [vmem:[%s159 + $0x18] sm:$0xff] %v164
              %v166 = vld [vmem:[%s158 + $0x20] sm:$0xff]
              %167 = vst [vmem:[%s159 + $0x20] sm:$0xff] %v166
              %v168 = vld [vmem:[%s158 + $0x30] sm:$0xff]
              %169 = vst [vmem:[%s159 + $0x30] sm:$0xff] %v168
              %v170 = vld [vmem:[%s158 + $0x38] sm:$0xff]
              %171 = vst [vmem:[%s159 + $0x38] sm:$0xff] %v170
              %v172 = vld [vmem:[%s158 + $0x48] sm:$0xff]
              %173 = vst [vmem:[%s159 + $0x48] sm:$0xff] %v172
              %v174 = vld [vmem:[%s158 + $0x50] sm:$0xff]
              %175 = vst [vmem:[%s159 + $0x50] sm:$0xff] %v174
              %v176 = vld [vmem:[%s158 + $0x60] sm:$0xff]
              %177 = vst [vmem:[%s159 + $0x60] sm:$0xff] %v176
              %v178 = vld [vmem:[%s158 + $0x68] sm:$0xff]
              %179 = vst [vmem:[%s159 + $0x68] sm:$0xff] %v178
              %v180 = vld [vmem:[%s158 + $0x78] sm:$0xff]
              %181 = vst [vmem:[%s159 + $0x78] sm:$0xff] %v180
              %v182 = vld [vmem:[%s158 + $0x80] sm:$0xff]
              %183 = vst [vmem:[%s159 + $0x80] sm:$0xff] %v182
              %v184 = vld [vmem:[%s158 + $0x90] sm:$0xff]
              %185 = vst [vmem:[%s159 + $0x90] sm:$0xff] %v184
              %v186 = vld [vmem:[%s158 + $0x98] sm:$0xff]
              %187 = vst [vmem:[%s159 + $0x98] sm:$0xff] %v186
              %v188 = vld [vmem:[%s158 + $0xa8] sm:$0xff]
              %189 = vst [vmem:[%s159 + $0xa8] sm:$0xff] %v188
              %v190 = vld [vmem:[%s158 + $0xb0] sm:$0xff]
              %191 = vst [vmem:[%s159 + $0xb0] sm:$0xff] %v190
              %v192 = vld [vmem:[%s158 + $0xc0] sm:$0xff]
              %193 = vst [vmem:[%s159 + $0xc0] sm:$0xff] %v192
              %v194 = vld [vmem:[%s158 + $0xc8] sm:$0xff]
              %195 = vst [vmem:[%s159 + $0xc8] sm:$0xff] %v194
              %v196 = vld [vmem:[%s158 + $0xd8] sm:$0xff]
              %197 = vst [vmem:[%s159 + $0xd8] sm:$0xff] %v196
              %v198 = vld [vmem:[%s158 + $0xe0] sm:$0xff]
              %199 = vst [vmem:[%s159 + $0xe0] sm:$0xff] %v198
              %v200 = vld [vmem:[%s158 + $0xf0] sm:$0xff]
              %201 = vst [vmem:[%s159 + $0xf0] sm:$0xff] %v200
              %v202 = vld [vmem:[%s158 + $0xf8] sm:$0xff]
              %203 = vst [vmem:[%s159 + $0xf8] sm:$0xff] %v202
              %v204 = vld [vmem:[%s158 + $0x108] sm:$0xff]
              %205 = vst [vmem:[%s159 + $0x108] sm:$0xff] %v204
              %v206 = vld [vmem:[%s158 + $0x110] sm:$0xff]
              %207 = vst [vmem:[%s159 + $0x110] sm:$0xff] %v206
              %v208 = vld [vmem:[%s158 + $0x120] sm:$0xff]
              %209 = vst [vmem:[%s159 + $0x120] sm:$0xff] %v208
              %v210 = vld [vmem:[%s158 + $0x128] sm:$0xff]
              %211 = vst [vmem:[%s159 + $0x128] sm:$0xff] %v210
              %v212 = vld [vmem:[%s158 + $0x138] sm:$0xff]
              %213 = vst [vmem:[%s159 + $0x138] sm:$0xff] %v212
              %v214 = vld [vmem:[%s158 + $0x140] sm:$0xff]
              %215 = vst [vmem:[%s159 + $0x140] sm:$0xff] %v214
            $region40: #{multiscale_conv.1} parent=34 // loop_footer
              %s157 = sadd.s32 1, %s153
            $region41: #{multiscale_conv.1} parent=34 // loop_footer_branch
              %152 = sbr.rel target = $region37
            $region42: #{multiscale_conv.1} parent=34 // loop_exit
              _
            %s216 = sshllo.u32 0, %s147
            loop: start=0, step=1, limit=1
            $region43: #{multiscale_conv.1} parent=34 // loop_pre_header
              _
            $region44: #{multiscale_conv.1} parent=34 // loop_header
              %s218 = sphi 0, %s222
              %p219 = scmp.ge.s32.totalorder %s218, 1
              %s223 = sphi %s149, %s149
              %s224 = sphi %s151, %s151
            $region45: #{multiscale_conv.1} parent=34 // loop_header_branch
              %221 = sbr.rel (%p219) target = $region49
            $region46: #{multiscale_conv.1} parent=34 // loop_body
              %v225 = vld [vmem:[%s223] sm:%s216]
              %226 = vst [vmem:[%s224] sm:%s216] %v225
              %v227 = vld [vmem:[%s223 + $0x18] sm:%s216]
              %228 = vst [vmem:[%s224 + $0x18] sm:%s216] %v227
              %v229 = vld [vmem:[%s223 + $0x30] sm:%s216]
              %230 = vst [vmem:[%s224 + $0x30] sm:%s216] %v229
              %v231 = vld [vmem:[%s223 + $0x48] sm:%s216]
              %232 = vst [vmem:[%s224 + $0x48] sm:%s216] %v231
              %v233 = vld [vmem:[%s223 + $0x60] sm:%s216]
              %234 = vst [vmem:[%s224 + $0x60] sm:%s216] %v233
              %v235 = vld [vmem:[%s223 + $0x78] sm:%s216]
              %236 = vst [vmem:[%s224 + $0x78] sm:%s216] %v235
              %v237 = vld [vmem:[%s223 + $0x90] sm:%s216]
              %238 = vst [vmem:[%s224 + $0x90] sm:%s216] %v237
              %v239 = vld [vmem:[%s223 + $0xa8] sm:%s216]
              %240 = vst [vmem:[%s224 + $0xa8] sm:%s216] %v239
              %v241 = vld [vmem:[%s223 + $0xc0] sm:%s216]
              %242 = vst [vmem:[%s224 + $0xc0] sm:%s216] %v241
              %v243 = vld [vmem:[%s223 + $0xd8] sm:%s216]
              %244 = vst [vmem:[%s224 + $0xd8] sm:%s216] %v243
              %v245 = vld [vmem:[%s223 + $0xf0] sm:%s216]
              %246 = vst [vmem:[%s224 + $0xf0] sm:%s216] %v245
              %v247 = vld [vmem:[%s223 + $0x108] sm:%s216]
              %248 = vst [vmem:[%s224 + $0x108] sm:%s216] %v247
              %v249 = vld [vmem:[%s223 + $0x120] sm:%s216]
              %250 = vst [vmem:[%s224 + $0x120] sm:%s216] %v249
              %v251 = vld [vmem:[%s223 + $0x138] sm:%s216]
              %252 = vst [vmem:[%s224 + $0x138] sm:%s216] %v251
            $region47: #{multiscale_conv.1} parent=34 // loop_footer
              %s222 = sadd.s32 1, %s218
            $region48: #{multiscale_conv.1} parent=34 // loop_footer_branch
              %217 = sbr.rel target = $region44
            $region49: #{multiscale_conv.1} parent=34 // loop_exit
              _
          $region35: #{multiscale_conv.1} parent=19 // pred_fallthru
            _
        $region20: #{multiscale_conv.1} parent=15 // pred_fallthru
          _
        // Predicated region
        $region21: #{multiscale_conv.1} parent=15 // pred_check
          %p102 = pneg %p98
        $region22: #{multiscale_conv.1} parent=15 // pred_check_branch
          %104 = sbr.rel (%p102) target = $region24
        $region23: #{multiscale_conv.1} parent=15 // pred_region
          %s105 = sshllo.u32 0, 22
          loop: start=0, step=1, limit=1
          $region25: #{multiscale_conv.1} parent=23 // loop_pre_header
            _
          $region26: #{multiscale_conv.1} parent=23 // loop_header
            %s107 = sphi 0, %s111
            %p108 = scmp.ge.s32.totalorder %s107, 1
            %s112 = sphi %s93, %s93
            %s113 = sphi %s95, %s95
          $region27: #{multiscale_conv.1} parent=23 // loop_header_branch
            %110 = sbr.rel (%p108) target = $region31
          $region28: #{multiscale_conv.1} parent=23 // loop_body
            %v114 = vld [vmem:[%s112] sm:%s105]
            %115 = vst [vmem:[%s113] sm:%s105] %v114
            %v116 = vld [vmem:[%s112 + $0x18] sm:%s105]
            %117 = vst [vmem:[%s113 + $0x18] sm:%s105] %v116
            %v118 = vld [vmem:[%s112 + $0x30] sm:%s105]
            %119 = vst [vmem:[%s113 + $0x30] sm:%s105] %v118
            %v120 = vld [vmem:[%s112 + $0x48] sm:%s105]
            %121 = vst [vmem:[%s113 + $0x48] sm:%s105] %v120
            %v122 = vld [vmem:[%s112 + $0x60] sm:%s105]
            %123 = vst [vmem:[%s113 + $0x60] sm:%s105] %v122
            %v124 = vld [vmem:[%s112 + $0x78] sm:%s105]
            %125 = vst [vmem:[%s113 + $0x78] sm:%s105] %v124
            %v126 = vld [vmem:[%s112 + $0x90] sm:%s105]
            %127 = vst [vmem:[%s113 + $0x90] sm:%s105] %v126
            %v128 = vld [vmem:[%s112 + $0xa8] sm:%s105]
            %129 = vst [vmem:[%s113 + $0xa8] sm:%s105] %v128
            %v130 = vld [vmem:[%s112 + $0xc0] sm:%s105]
            %131 = vst [vmem:[%s113 + $0xc0] sm:%s105] %v130
            %v132 = vld [vmem:[%s112 + $0xd8] sm:%s105]
            %133 = vst [vmem:[%s113 + $0xd8] sm:%s105] %v132
            %v134 = vld [vmem:[%s112 + $0xf0] sm:%s105]
            %135 = vst [vmem:[%s113 + $0xf0] sm:%s105] %v134
            %v136 = vld [vmem:[%s112 + $0x108] sm:%s105]
            %137 = vst [vmem:[%s113 + $0x108] sm:%s105] %v136
            %v138 = vld [vmem:[%s112 + $0x120] sm:%s105]
            %139 = vst [vmem:[%s113 + $0x120] sm:%s105] %v138
            %v140 = vld [vmem:[%s112 + $0x138] sm:%s105]
            %141 = vst [vmem:[%s113 + $0x138] sm:%s105] %v140
          $region29: #{multiscale_conv.1} parent=23 // loop_footer
            %s111 = sadd.s32 1, %s107
          $region30: #{multiscale_conv.1} parent=23 // loop_footer_branch
            %106 = sbr.rel target = $region26
          $region31: #{multiscale_conv.1} parent=23 // loop_exit
            _
        $region24: #{multiscale_conv.1} parent=15 // pred_fallthru
          _
        // Predicated region
        $region50: #{multiscale_conv.1} parent=15 // pred_check
          _
        $region51: #{multiscale_conv.1} parent=15 // pred_check_branch
          %255 = sbr.rel (0) target = $region53
        $region52: #{multiscale_conv.1} parent=15 // pred_region
          %256 = vsyncadd %s96, 4928
        $region53: #{multiscale_conv.1} parent=15 // pred_fallthru
          _
        %s257 = scalar_lea.sflag [#allocation6], 2
        %p259 = scmp.lt.u32.totalorder 6272, 8
        %p260 = pneg %p259
        // Predicated region
        $region54: #{multiscale_conv.1} parent=15 // pred_check
          _
        $region55: #{multiscale_conv.1} parent=15 // pred_check_branch
          %262 = sbr.rel (%p259) target = $region57
        $region56: #{multiscale_conv.1} parent=15 // pred_region
          %s277 = sand.u32 6272, 7
          %p278 = scmp.eq.s32.totalorder %s277, 0
          // Predicated region
          $region69: #{multiscale_conv.1} parent=56 // pred_check
            %p279 = pneg %p278
          $region70: #{multiscale_conv.1} parent=56 // pred_check_branch
            %281 = sbr.rel (%p279) target = $region72
          $region71: #{multiscale_conv.1} parent=56 // pred_region
            loop: start=0, step=1, limit=1
            $region73: #{multiscale_conv.1} parent=71 // loop_pre_header
              _
            $region74: #{multiscale_conv.1} parent=71 // loop_header
              %s283 = sphi 0, %s287
              %p284 = scmp.ge.s32.totalorder %s283, 1
              %s288 = sphi %s1, %s1
              %s289 = sphi [#allocation4], [#allocation4]
            $region75: #{multiscale_conv.1} parent=71 // loop_header_branch
              %286 = sbr.rel (%p284) target = $region79
            $region76: #{multiscale_conv.1} parent=71 // loop_body
              %v290 = vld [vmem:[%s288] sm:$0xff]
              %291 = vst [vmem:[%s289] sm:$0xff] %v290
              %v292 = vld [vmem:[%s288 + $0x8] sm:$0xff]
              %293 = vst [vmem:[%s289 + $0x8] sm:$0xff] %v292
              %v294 = vld [vmem:[%s288 + $0x10] sm:$0xff]
              %295 = vst [vmem:[%s289 + $0x10] sm:$0xff] %v294
              %v296 = vld [vmem:[%s288 + $0x18] sm:$0xff]
              %297 = vst [vmem:[%s289 + $0x18] sm:$0xff] %v296
              %v298 = vld [vmem:[%s288 + $0x20] sm:$0xff]
              %299 = vst [vmem:[%s289 + $0x20] sm:$0xff] %v298
              %v300 = vld [vmem:[%s288 + $0x28] sm:$0xff]
              %301 = vst [vmem:[%s289 + $0x28] sm:$0xff] %v300
              %v302 = vld [vmem:[%s288 + $0x30] sm:$0xff]
              %303 = vst [vmem:[%s289 + $0x30] sm:$0xff] %v302
              %v304 = vld [vmem:[%s288 + $0x38] sm:$0xff]
              %305 = vst [vmem:[%s289 + $0x38] sm:$0xff] %v304
              %v306 = vld [vmem:[%s288 + $0x40] sm:$0xff]
              %307 = vst [vmem:[%s289 + $0x40] sm:$0xff] %v306
              %v308 = vld [vmem:[%s288 + $0x48] sm:$0xff]
              %309 = vst [vmem:[%s289 + $0x48] sm:$0xff] %v308
              %v310 = vld [vmem:[%s288 + $0x50] sm:$0xff]
              %311 = vst [vmem:[%s289 + $0x50] sm:$0xff] %v310
              %v312 = vld [vmem:[%s288 + $0x58] sm:$0xff]
              %313 = vst [vmem:[%s289 + $0x58] sm:$0xff] %v312
              %v314 = vld [vmem:[%s288 + $0x60] sm:$0xff]
              %315 = vst [vmem:[%s289 + $0x60] sm:$0xff] %v314
              %v316 = vld [vmem:[%s288 + $0x68] sm:$0xff]
              %317 = vst [vmem:[%s289 + $0x68] sm:$0xff] %v316
              %v318 = vld [vmem:[%s288 + $0x70] sm:$0xff]
              %319 = vst [vmem:[%s289 + $0x70] sm:$0xff] %v318
              %v320 = vld [vmem:[%s288 + $0x78] sm:$0xff]
              %321 = vst [vmem:[%s289 + $0x78] sm:$0xff] %v320
              %v322 = vld [vmem:[%s288 + $0x80] sm:$0xff]
              %323 = vst [vmem:[%s289 + $0x80] sm:$0xff] %v322
              %v324 = vld [vmem:[%s288 + $0x88] sm:$0xff]
              %325 = vst [vmem:[%s289 + $0x88] sm:$0xff] %v324
              %v326 = vld [vmem:[%s288 + $0x90] sm:$0xff]
              %327 = vst [vmem:[%s289 + $0x90] sm:$0xff] %v326
              %v328 = vld [vmem:[%s288 + $0x98] sm:$0xff]
              %329 = vst [vmem:[%s289 + $0x98] sm:$0xff] %v328
              %v330 = vld [vmem:[%s288 + $0xa0] sm:$0xff]
              %331 = vst [vmem:[%s289 + $0xa0] sm:$0xff] %v330
              %v332 = vld [vmem:[%s288 + $0xa8] sm:$0xff]
              %333 = vst [vmem:[%s289 + $0xa8] sm:$0xff] %v332
              %v334 = vld [vmem:[%s288 + $0xb0] sm:$0xff]
              %335 = vst [vmem:[%s289 + $0xb0] sm:$0xff] %v334
              %v336 = vld [vmem:[%s288 + $0xb8] sm:$0xff]
              %337 = vst [vmem:[%s289 + $0xb8] sm:$0xff] %v336
              %v338 = vld [vmem:[%s288 + $0xc0] sm:$0xff]
              %339 = vst [vmem:[%s289 + $0xc0] sm:$0xff] %v338
              %v340 = vld [vmem:[%s288 + $0xc8] sm:$0xff]
              %341 = vst [vmem:[%s289 + $0xc8] sm:$0xff] %v340
              %v342 = vld [vmem:[%s288 + $0xd0] sm:$0xff]
              %343 = vst [vmem:[%s289 + $0xd0] sm:$0xff] %v342
              %v344 = vld [vmem:[%s288 + $0xd8] sm:$0xff]
              %345 = vst [vmem:[%s289 + $0xd8] sm:$0xff] %v344
              %v346 = vld [vmem:[%s288 + $0xe0] sm:$0xff]
              %347 = vst [vmem:[%s289 + $0xe0] sm:$0xff] %v346
              %v348 = vld [vmem:[%s288 + $0xe8] sm:$0xff]
              %349 = vst [vmem:[%s289 + $0xe8] sm:$0xff] %v348
              %v350 = vld [vmem:[%s288 + $0xf0] sm:$0xff]
              %351 = vst [vmem:[%s289 + $0xf0] sm:$0xff] %v350
              %v352 = vld [vmem:[%s288 + $0xf8] sm:$0xff]
              %353 = vst [vmem:[%s289 + $0xf8] sm:$0xff] %v352
              %v354 = vld [vmem:[%s288 + $0x100] sm:$0xff]
              %355 = vst [vmem:[%s289 + $0x100] sm:$0xff] %v354
              %v356 = vld [vmem:[%s288 + $0x108] sm:$0xff]
              %357 = vst [vmem:[%s289 + $0x108] sm:$0xff] %v356
              %v358 = vld [vmem:[%s288 + $0x110] sm:$0xff]
              %359 = vst [vmem:[%s289 + $0x110] sm:$0xff] %v358
              %v360 = vld [vmem:[%s288 + $0x118] sm:$0xff]
              %361 = vst [vmem:[%s289 + $0x118] sm:$0xff] %v360
              %v362 = vld [vmem:[%s288 + $0x120] sm:$0xff]
              %363 = vst [vmem:[%s289 + $0x120] sm:$0xff] %v362
              %v364 = vld [vmem:[%s288 + $0x128] sm:$0xff]
              %365 = vst [vmem:[%s289 + $0x128] sm:$0xff] %v364
              %v366 = vld [vmem:[%s288 + $0x130] sm:$0xff]
              %367 = vst [vmem:[%s289 + $0x130] sm:$0xff] %v366
              %v368 = vld [vmem:[%s288 + $0x138] sm:$0xff]
              %369 = vst [vmem:[%s289 + $0x138] sm:$0xff] %v368
              %v370 = vld [vmem:[%s288 + $0x140] sm:$0xff]
              %371 = vst [vmem:[%s289 + $0x140] sm:$0xff] %v370
              %v372 = vld [vmem:[%s288 + $0x148] sm:$0xff]
              %373 = vst [vmem:[%s289 + $0x148] sm:$0xff] %v372
              %v374 = vld [vmem:[%s288 + $0x150] sm:$0xff]
              %375 = vst [vmem:[%s289 + $0x150] sm:$0xff] %v374
              %v376 = vld [vmem:[%s288 + $0x158] sm:$0xff]
              %377 = vst [vmem:[%s289 + $0x158] sm:$0xff] %v376
              %v378 = vld [vmem:[%s288 + $0x160] sm:$0xff]
              %379 = vst [vmem:[%s289 + $0x160] sm:$0xff] %v378
              %v380 = vld [vmem:[%s288 + $0x168] sm:$0xff]
              %381 = vst [vmem:[%s289 + $0x168] sm:$0xff] %v380
              %v382 = vld [vmem:[%s288 + $0x170] sm:$0xff]
              %383 = vst [vmem:[%s289 + $0x170] sm:$0xff] %v382
              %v384 = vld [vmem:[%s288 + $0x178] sm:$0xff]
              %385 = vst [vmem:[%s289 + $0x178] sm:$0xff] %v384
              %v386 = vld [vmem:[%s288 + $0x180] sm:$0xff]
              %387 = vst [vmem:[%s289 + $0x180] sm:$0xff] %v386
              %v388 = vld [vmem:[%s288 + $0x188] sm:$0xff]
              %389 = vst [vmem:[%s289 + $0x188] sm:$0xff] %v388
              %v390 = vld [vmem:[%s288 + $0x190] sm:$0xff]
              %391 = vst [vmem:[%s289 + $0x190] sm:$0xff] %v390
              %v392 = vld [vmem:[%s288 + $0x198] sm:$0xff]
              %393 = vst [vmem:[%s289 + $0x198] sm:$0xff] %v392
              %v394 = vld [vmem:[%s288 + $0x1a0] sm:$0xff]
              %395 = vst [vmem:[%s289 + $0x1a0] sm:$0xff] %v394
              %v396 = vld [vmem:[%s288 + $0x1a8] sm:$0xff]
              %397 = vst [vmem:[%s289 + $0x1a8] sm:$0xff] %v396
              %v398 = vld [vmem:[%s288 + $0x1b0] sm:$0xff]
              %399 = vst [vmem:[%s289 + $0x1b0] sm:$0xff] %v398
              %v400 = vld [vmem:[%s288 + $0x1b8] sm:$0xff]
              %401 = vst [vmem:[%s289 + $0x1b8] sm:$0xff] %v400
              %v402 = vld [vmem:[%s288 + $0x1c0] sm:$0xff]
              %403 = vst [vmem:[%s289 + $0x1c0] sm:$0xff] %v402
              %v404 = vld [vmem:[%s288 + $0x1c8] sm:$0xff]
              %405 = vst [vmem:[%s289 + $0x1c8] sm:$0xff] %v404
              %v406 = vld [vmem:[%s288 + $0x1d0] sm:$0xff]
              %407 = vst [vmem:[%s289 + $0x1d0] sm:$0xff] %v406
              %v408 = vld [vmem:[%s288 + $0x1d8] sm:$0xff]
              %409 = vst [vmem:[%s289 + $0x1d8] sm:$0xff] %v408
              %v410 = vld [vmem:[%s288 + $0x1e0] sm:$0xff]
              %411 = vst [vmem:[%s289 + $0x1e0] sm:$0xff] %v410
              %v412 = vld [vmem:[%s288 + $0x1e8] sm:$0xff]
              %413 = vst [vmem:[%s289 + $0x1e8] sm:$0xff] %v412
              %v414 = vld [vmem:[%s288 + $0x1f0] sm:$0xff]
              %415 = vst [vmem:[%s289 + $0x1f0] sm:$0xff] %v414
              %v416 = vld [vmem:[%s288 + $0x1f8] sm:$0xff]
              %417 = vst [vmem:[%s289 + $0x1f8] sm:$0xff] %v416
              %v418 = vld [vmem:[%s288 + $0x200] sm:$0xff]
              %419 = vst [vmem:[%s289 + $0x200] sm:$0xff] %v418
              %v420 = vld [vmem:[%s288 + $0x208] sm:$0xff]
              %421 = vst [vmem:[%s289 + $0x208] sm:$0xff] %v420
              %v422 = vld [vmem:[%s288 + $0x210] sm:$0xff]
              %423 = vst [vmem:[%s289 + $0x210] sm:$0xff] %v422
              %v424 = vld [vmem:[%s288 + $0x218] sm:$0xff]
              %425 = vst [vmem:[%s289 + $0x218] sm:$0xff] %v424
              %v426 = vld [vmem:[%s288 + $0x220] sm:$0xff]
              %427 = vst [vmem:[%s289 + $0x220] sm:$0xff] %v426
              %v428 = vld [vmem:[%s288 + $0x228] sm:$0xff]
              %429 = vst [vmem:[%s289 + $0x228] sm:$0xff] %v428
              %v430 = vld [vmem:[%s288 + $0x230] sm:$0xff]
              %431 = vst [vmem:[%s289 + $0x230] sm:$0xff] %v430
              %v432 = vld [vmem:[%s288 + $0x238] sm:$0xff]
              %433 = vst [vmem:[%s289 + $0x238] sm:$0xff] %v432
              %v434 = vld [vmem:[%s288 + $0x240] sm:$0xff]
              %435 = vst [vmem:[%s289 + $0x240] sm:$0xff] %v434
              %v436 = vld [vmem:[%s288 + $0x248] sm:$0xff]
              %437 = vst [vmem:[%s289 + $0x248] sm:$0xff] %v436
              %v438 = vld [vmem:[%s288 + $0x250] sm:$0xff]
              %439 = vst [vmem:[%s289 + $0x250] sm:$0xff] %v438
              %v440 = vld [vmem:[%s288 + $0x258] sm:$0xff]
              %441 = vst [vmem:[%s289 + $0x258] sm:$0xff] %v440
              %v442 = vld [vmem:[%s288 + $0x260] sm:$0xff]
              %443 = vst [vmem:[%s289 + $0x260] sm:$0xff] %v442
              %v444 = vld [vmem:[%s288 + $0x268] sm:$0xff]
              %445 = vst [vmem:[%s289 + $0x268] sm:$0xff] %v444
              %v446 = vld [vmem:[%s288 + $0x270] sm:$0xff]
              %447 = vst [vmem:[%s289 + $0x270] sm:$0xff] %v446
              %v448 = vld [vmem:[%s288 + $0x278] sm:$0xff]
              %449 = vst [vmem:[%s289 + $0x278] sm:$0xff] %v448
              %v450 = vld [vmem:[%s288 + $0x280] sm:$0xff]
              %451 = vst [vmem:[%s289 + $0x280] sm:$0xff] %v450
              %v452 = vld [vmem:[%s288 + $0x288] sm:$0xff]
              %453 = vst [vmem:[%s289 + $0x288] sm:$0xff] %v452
              %v454 = vld [vmem:[%s288 + $0x290] sm:$0xff]
              %455 = vst [vmem:[%s289 + $0x290] sm:$0xff] %v454
              %v456 = vld [vmem:[%s288 + $0x298] sm:$0xff]
              %457 = vst [vmem:[%s289 + $0x298] sm:$0xff] %v456
              %v458 = vld [vmem:[%s288 + $0x2a0] sm:$0xff]
              %459 = vst [vmem:[%s289 + $0x2a0] sm:$0xff] %v458
              %v460 = vld [vmem:[%s288 + $0x2a8] sm:$0xff]
              %461 = vst [vmem:[%s289 + $0x2a8] sm:$0xff] %v460
              %v462 = vld [vmem:[%s288 + $0x2b0] sm:$0xff]
              %463 = vst [vmem:[%s289 + $0x2b0] sm:$0xff] %v462
              %v464 = vld [vmem:[%s288 + $0x2b8] sm:$0xff]
              %465 = vst [vmem:[%s289 + $0x2b8] sm:$0xff] %v464
              %v466 = vld [vmem:[%s288 + $0x2c0] sm:$0xff]
              %467 = vst [vmem:[%s289 + $0x2c0] sm:$0xff] %v466
              %v468 = vld [vmem:[%s288 + $0x2c8] sm:$0xff]
              %469 = vst [vmem:[%s289 + $0x2c8] sm:$0xff] %v468
              %v470 = vld [vmem:[%s288 + $0x2d0] sm:$0xff]
              %471 = vst [vmem:[%s289 + $0x2d0] sm:$0xff] %v470
              %v472 = vld [vmem:[%s288 + $0x2d8] sm:$0xff]
              %473 = vst [vmem:[%s289 + $0x2d8] sm:$0xff] %v472
              %v474 = vld [vmem:[%s288 + $0x2e0] sm:$0xff]
              %475 = vst [vmem:[%s289 + $0x2e0] sm:$0xff] %v474
              %v476 = vld [vmem:[%s288 + $0x2e8] sm:$0xff]
              %477 = vst [vmem:[%s289 + $0x2e8] sm:$0xff] %v476
              %v478 = vld [vmem:[%s288 + $0x2f0] sm:$0xff]
              %479 = vst [vmem:[%s289 + $0x2f0] sm:$0xff] %v478
              %v480 = vld [vmem:[%s288 + $0x2f8] sm:$0xff]
              %481 = vst [vmem:[%s289 + $0x2f8] sm:$0xff] %v480
              %v482 = vld [vmem:[%s288 + $0x300] sm:$0xff]
              %483 = vst [vmem:[%s289 + $0x300] sm:$0xff] %v482
              %v484 = vld [vmem:[%s288 + $0x308] sm:$0xff]
              %485 = vst [vmem:[%s289 + $0x308] sm:$0xff] %v484
              %v486 = vld [vmem:[%s288 + $0x310] sm:$0xff]
              %487 = vst [vmem:[%s289 + $0x310] sm:$0xff] %v486
              %v488 = vld [vmem:[%s288 + $0x318] sm:$0xff]
              %489 = vst [vmem:[%s289 + $0x318] sm:$0xff] %v488
              %v490 = vld [vmem:[%s288 + $0x320] sm:$0xff]
              %491 = vst [vmem:[%s289 + $0x320] sm:$0xff] %v490
              %v492 = vld [vmem:[%s288 + $0x328] sm:$0xff]
              %493 = vst [vmem:[%s289 + $0x328] sm:$0xff] %v492
              %v494 = vld [vmem:[%s288 + $0x330] sm:$0xff]
              %495 = vst [vmem:[%s289 + $0x330] sm:$0xff] %v494
              %v496 = vld [vmem:[%s288 + $0x338] sm:$0xff]
              %497 = vst [vmem:[%s289 + $0x338] sm:$0xff] %v496
              %v498 = vld [vmem:[%s288 + $0x340] sm:$0xff]
              %499 = vst [vmem:[%s289 + $0x340] sm:$0xff] %v498
              %v500 = vld [vmem:[%s288 + $0x348] sm:$0xff]
              %501 = vst [vmem:[%s289 + $0x348] sm:$0xff] %v500
              %v502 = vld [vmem:[%s288 + $0x350] sm:$0xff]
              %503 = vst [vmem:[%s289 + $0x350] sm:$0xff] %v502
              %v504 = vld [vmem:[%s288 + $0x358] sm:$0xff]
              %505 = vst [vmem:[%s289 + $0x358] sm:$0xff] %v504
              %v506 = vld [vmem:[%s288 + $0x360] sm:$0xff]
              %507 = vst [vmem:[%s289 + $0x360] sm:$0xff] %v506
              %v508 = vld [vmem:[%s288 + $0x368] sm:$0xff]
              %509 = vst [vmem:[%s289 + $0x368] sm:$0xff] %v508
              %v510 = vld [vmem:[%s288 + $0x370] sm:$0xff]
              %511 = vst [vmem:[%s289 + $0x370] sm:$0xff] %v510
              %v512 = vld [vmem:[%s288 + $0x378] sm:$0xff]
              %513 = vst [vmem:[%s289 + $0x378] sm:$0xff] %v512
              %v514 = vld [vmem:[%s288 + $0x380] sm:$0xff]
              %515 = vst [vmem:[%s289 + $0x380] sm:$0xff] %v514
              %v516 = vld [vmem:[%s288 + $0x388] sm:$0xff]
              %517 = vst [vmem:[%s289 + $0x388] sm:$0xff] %v516
              %v518 = vld [vmem:[%s288 + $0x390] sm:$0xff]
              %519 = vst [vmem:[%s289 + $0x390] sm:$0xff] %v518
              %v520 = vld [vmem:[%s288 + $0x398] sm:$0xff]
              %521 = vst [vmem:[%s289 + $0x398] sm:$0xff] %v520
              %v522 = vld [vmem:[%s288 + $0x3a0] sm:$0xff]
              %523 = vst [vmem:[%s289 + $0x3a0] sm:$0xff] %v522
              %v524 = vld [vmem:[%s288 + $0x3a8] sm:$0xff]
              %525 = vst [vmem:[%s289 + $0x3a8] sm:$0xff] %v524
              %v526 = vld [vmem:[%s288 + $0x3b0] sm:$0xff]
              %527 = vst [vmem:[%s289 + $0x3b0] sm:$0xff] %v526
              %v528 = vld [vmem:[%s288 + $0x3b8] sm:$0xff]
              %529 = vst [vmem:[%s289 + $0x3b8] sm:$0xff] %v528
              %v530 = vld [vmem:[%s288 + $0x3c0] sm:$0xff]
              %531 = vst [vmem:[%s289 + $0x3c0] sm:$0xff] %v530
              %v532 = vld [vmem:[%s288 + $0x3c8] sm:$0xff]
              %533 = vst [vmem:[%s289 + $0x3c8] sm:$0xff] %v532
              %v534 = vld [vmem:[%s288 + $0x3d0] sm:$0xff]
              %535 = vst [vmem:[%s289 + $0x3d0] sm:$0xff] %v534
              %v536 = vld [vmem:[%s288 + $0x3d8] sm:$0xff]
              %537 = vst [vmem:[%s289 + $0x3d8] sm:$0xff] %v536
              %v538 = vld [vmem:[%s288 + $0x3e0] sm:$0xff]
              %539 = vst [vmem:[%s289 + $0x3e0] sm:$0xff] %v538
              %v540 = vld [vmem:[%s288 + $0x3e8] sm:$0xff]
              %541 = vst [vmem:[%s289 + $0x3e8] sm:$0xff] %v540
              %v542 = vld [vmem:[%s288 + $0x3f0] sm:$0xff]
              %543 = vst [vmem:[%s289 + $0x3f0] sm:$0xff] %v542
              %v544 = vld [vmem:[%s288 + $0x3f8] sm:$0xff]
              %545 = vst [vmem:[%s289 + $0x3f8] sm:$0xff] %v544
              %v546 = vld [vmem:[%s288 + $0x400] sm:$0xff]
              %547 = vst [vmem:[%s289 + $0x400] sm:$0xff] %v546
              %v548 = vld [vmem:[%s288 + $0x408] sm:$0xff]
              %549 = vst [vmem:[%s289 + $0x408] sm:$0xff] %v548
              %v550 = vld [vmem:[%s288 + $0x410] sm:$0xff]
              %551 = vst [vmem:[%s289 + $0x410] sm:$0xff] %v550
              %v552 = vld [vmem:[%s288 + $0x418] sm:$0xff]
              %553 = vst [vmem:[%s289 + $0x418] sm:$0xff] %v552
              %v554 = vld [vmem:[%s288 + $0x420] sm:$0xff]
              %555 = vst [vmem:[%s289 + $0x420] sm:$0xff] %v554
              %v556 = vld [vmem:[%s288 + $0x428] sm:$0xff]
              %557 = vst [vmem:[%s289 + $0x428] sm:$0xff] %v556
              %v558 = vld [vmem:[%s288 + $0x430] sm:$0xff]
              %559 = vst [vmem:[%s289 + $0x430] sm:$0xff] %v558
              %v560 = vld [vmem:[%s288 + $0x438] sm:$0xff]
              %561 = vst [vmem:[%s289 + $0x438] sm:$0xff] %v560
              %v562 = vld [vmem:[%s288 + $0x440] sm:$0xff]
              %563 = vst [vmem:[%s289 + $0x440] sm:$0xff] %v562
              %v564 = vld [vmem:[%s288 + $0x448] sm:$0xff]
              %565 = vst [vmem:[%s289 + $0x448] sm:$0xff] %v564
              %v566 = vld [vmem:[%s288 + $0x450] sm:$0xff]
              %567 = vst [vmem:[%s289 + $0x450] sm:$0xff] %v566
              %v568 = vld [vmem:[%s288 + $0x458] sm:$0xff]
              %569 = vst [vmem:[%s289 + $0x458] sm:$0xff] %v568
              %v570 = vld [vmem:[%s288 + $0x460] sm:$0xff]
              %571 = vst [vmem:[%s289 + $0x460] sm:$0xff] %v570
              %v572 = vld [vmem:[%s288 + $0x468] sm:$0xff]
              %573 = vst [vmem:[%s289 + $0x468] sm:$0xff] %v572
              %v574 = vld [vmem:[%s288 + $0x470] sm:$0xff]
              %575 = vst [vmem:[%s289 + $0x470] sm:$0xff] %v574
              %v576 = vld [vmem:[%s288 + $0x478] sm:$0xff]
              %577 = vst [vmem:[%s289 + $0x478] sm:$0xff] %v576
              %v578 = vld [vmem:[%s288 + $0x480] sm:$0xff]
              %579 = vst [vmem:[%s289 + $0x480] sm:$0xff] %v578
              %v580 = vld [vmem:[%s288 + $0x488] sm:$0xff]
              %581 = vst [vmem:[%s289 + $0x488] sm:$0xff] %v580
              %v582 = vld [vmem:[%s288 + $0x490] sm:$0xff]
              %583 = vst [vmem:[%s289 + $0x490] sm:$0xff] %v582
              %v584 = vld [vmem:[%s288 + $0x498] sm:$0xff]
              %585 = vst [vmem:[%s289 + $0x498] sm:$0xff] %v584
              %v586 = vld [vmem:[%s288 + $0x4a0] sm:$0xff]
              %587 = vst [vmem:[%s289 + $0x4a0] sm:$0xff] %v586
              %v588 = vld [vmem:[%s288 + $0x4a8] sm:$0xff]
              %589 = vst [vmem:[%s289 + $0x4a8] sm:$0xff] %v588
              %v590 = vld [vmem:[%s288 + $0x4b0] sm:$0xff]
              %591 = vst [vmem:[%s289 + $0x4b0] sm:$0xff] %v590
              %v592 = vld [vmem:[%s288 + $0x4b8] sm:$0xff]
              %593 = vst [vmem:[%s289 + $0x4b8] sm:$0xff] %v592
              %v594 = vld [vmem:[%s288 + $0x4c0] sm:$0xff]
              %595 = vst [vmem:[%s289 + $0x4c0] sm:$0xff] %v594
              %v596 = vld [vmem:[%s288 + $0x4c8] sm:$0xff]
              %597 = vst [vmem:[%s289 + $0x4c8] sm:$0xff] %v596
              %v598 = vld [vmem:[%s288 + $0x4d0] sm:$0xff]
              %599 = vst [vmem:[%s289 + $0x4d0] sm:$0xff] %v598
              %v600 = vld [vmem:[%s288 + $0x4d8] sm:$0xff]
              %601 = vst [vmem:[%s289 + $0x4d8] sm:$0xff] %v600
              %v602 = vld [vmem:[%s288 + $0x4e0] sm:$0xff]
              %603 = vst [vmem:[%s289 + $0x4e0] sm:$0xff] %v602
              %v604 = vld [vmem:[%s288 + $0x4e8] sm:$0xff]
              %605 = vst [vmem:[%s289 + $0x4e8] sm:$0xff] %v604
              %v606 = vld [vmem:[%s288 + $0x4f0] sm:$0xff]
              %607 = vst [vmem:[%s289 + $0x4f0] sm:$0xff] %v606
              %v608 = vld [vmem:[%s288 + $0x4f8] sm:$0xff]
              %609 = vst [vmem:[%s289 + $0x4f8] sm:$0xff] %v608
              %v610 = vld [vmem:[%s288 + $0x500] sm:$0xff]
              %611 = vst [vmem:[%s289 + $0x500] sm:$0xff] %v610
              %v612 = vld [vmem:[%s288 + $0x508] sm:$0xff]
              %613 = vst [vmem:[%s289 + $0x508] sm:$0xff] %v612
              %v614 = vld [vmem:[%s288 + $0x510] sm:$0xff]
              %615 = vst [vmem:[%s289 + $0x510] sm:$0xff] %v614
              %v616 = vld [vmem:[%s288 + $0x518] sm:$0xff]
              %617 = vst [vmem:[%s289 + $0x518] sm:$0xff] %v616
              %v618 = vld [vmem:[%s288 + $0x520] sm:$0xff]
              %619 = vst [vmem:[%s289 + $0x520] sm:$0xff] %v618
              %v620 = vld [vmem:[%s288 + $0x528] sm:$0xff]
              %621 = vst [vmem:[%s289 + $0x528] sm:$0xff] %v620
              %v622 = vld [vmem:[%s288 + $0x530] sm:$0xff]
              %623 = vst [vmem:[%s289 + $0x530] sm:$0xff] %v622
              %v624 = vld [vmem:[%s288 + $0x538] sm:$0xff]
              %625 = vst [vmem:[%s289 + $0x538] sm:$0xff] %v624
              %v626 = vld [vmem:[%s288 + $0x540] sm:$0xff]
              %627 = vst [vmem:[%s289 + $0x540] sm:$0xff] %v626
              %v628 = vld [vmem:[%s288 + $0x548] sm:$0xff]
              %629 = vst [vmem:[%s289 + $0x548] sm:$0xff] %v628
              %v630 = vld [vmem:[%s288 + $0x550] sm:$0xff]
              %631 = vst [vmem:[%s289 + $0x550] sm:$0xff] %v630
              %v632 = vld [vmem:[%s288 + $0x558] sm:$0xff]
              %633 = vst [vmem:[%s289 + $0x558] sm:$0xff] %v632
              %v634 = vld [vmem:[%s288 + $0x560] sm:$0xff]
              %635 = vst [vmem:[%s289 + $0x560] sm:$0xff] %v634
              %v636 = vld [vmem:[%s288 + $0x568] sm:$0xff]
              %637 = vst [vmem:[%s289 + $0x568] sm:$0xff] %v636
              %v638 = vld [vmem:[%s288 + $0x570] sm:$0xff]
              %639 = vst [vmem:[%s289 + $0x570] sm:$0xff] %v638
              %v640 = vld [vmem:[%s288 + $0x578] sm:$0xff]
              %641 = vst [vmem:[%s289 + $0x578] sm:$0xff] %v640
              %v642 = vld [vmem:[%s288 + $0x580] sm:$0xff]
              %643 = vst [vmem:[%s289 + $0x580] sm:$0xff] %v642
              %v644 = vld [vmem:[%s288 + $0x588] sm:$0xff]
              %645 = vst [vmem:[%s289 + $0x588] sm:$0xff] %v644
              %v646 = vld [vmem:[%s288 + $0x590] sm:$0xff]
              %647 = vst [vmem:[%s289 + $0x590] sm:$0xff] %v646
              %v648 = vld [vmem:[%s288 + $0x598] sm:$0xff]
              %649 = vst [vmem:[%s289 + $0x598] sm:$0xff] %v648
              %v650 = vld [vmem:[%s288 + $0x5a0] sm:$0xff]
              %651 = vst [vmem:[%s289 + $0x5a0] sm:$0xff] %v650
              %v652 = vld [vmem:[%s288 + $0x5a8] sm:$0xff]
              %653 = vst [vmem:[%s289 + $0x5a8] sm:$0xff] %v652
              %v654 = vld [vmem:[%s288 + $0x5b0] sm:$0xff]
              %655 = vst [vmem:[%s289 + $0x5b0] sm:$0xff] %v654
              %v656 = vld [vmem:[%s288 + $0x5b8] sm:$0xff]
              %657 = vst [vmem:[%s289 + $0x5b8] sm:$0xff] %v656
              %v658 = vld [vmem:[%s288 + $0x5c0] sm:$0xff]
              %659 = vst [vmem:[%s289 + $0x5c0] sm:$0xff] %v658
              %v660 = vld [vmem:[%s288 + $0x5c8] sm:$0xff]
              %661 = vst [vmem:[%s289 + $0x5c8] sm:$0xff] %v660
              %v662 = vld [vmem:[%s288 + $0x5d0] sm:$0xff]
              %663 = vst [vmem:[%s289 + $0x5d0] sm:$0xff] %v662
              %v664 = vld [vmem:[%s288 + $0x5d8] sm:$0xff]
              %665 = vst [vmem:[%s289 + $0x5d8] sm:$0xff] %v664
              %v666 = vld [vmem:[%s288 + $0x5e0] sm:$0xff]
              %667 = vst [vmem:[%s289 + $0x5e0] sm:$0xff] %v666
              %v668 = vld [vmem:[%s288 + $0x5e8] sm:$0xff]
              %669 = vst [vmem:[%s289 + $0x5e8] sm:$0xff] %v668
              %v670 = vld [vmem:[%s288 + $0x5f0] sm:$0xff]
              %671 = vst [vmem:[%s289 + $0x5f0] sm:$0xff] %v670
              %v672 = vld [vmem:[%s288 + $0x5f8] sm:$0xff]
              %673 = vst [vmem:[%s289 + $0x5f8] sm:$0xff] %v672
              %v674 = vld [vmem:[%s288 + $0x600] sm:$0xff]
              %675 = vst [vmem:[%s289 + $0x600] sm:$0xff] %v674
              %v676 = vld [vmem:[%s288 + $0x608] sm:$0xff]
              %677 = vst [vmem:[%s289 + $0x608] sm:$0xff] %v676
              %v678 = vld [vmem:[%s288 + $0x610] sm:$0xff]
              %679 = vst [vmem:[%s289 + $0x610] sm:$0xff] %v678
              %v680 = vld [vmem:[%s288 + $0x618] sm:$0xff]
              %681 = vst [vmem:[%s289 + $0x618] sm:$0xff] %v680
              %v682 = vld [vmem:[%s288 + $0x620] sm:$0xff]
              %683 = vst [vmem:[%s289 + $0x620] sm:$0xff] %v682
              %v684 = vld [vmem:[%s288 + $0x628] sm:$0xff]
              %685 = vst [vmem:[%s289 + $0x628] sm:$0xff] %v684
              %v686 = vld [vmem:[%s288 + $0x630] sm:$0xff]
              %687 = vst [vmem:[%s289 + $0x630] sm:$0xff] %v686
              %v688 = vld [vmem:[%s288 + $0x638] sm:$0xff]
              %689 = vst [vmem:[%s289 + $0x638] sm:$0xff] %v688
              %v690 = vld [vmem:[%s288 + $0x640] sm:$0xff]
              %691 = vst [vmem:[%s289 + $0x640] sm:$0xff] %v690
              %v692 = vld [vmem:[%s288 + $0x648] sm:$0xff]
              %693 = vst [vmem:[%s289 + $0x648] sm:$0xff] %v692
              %v694 = vld [vmem:[%s288 + $0x650] sm:$0xff]
              %695 = vst [vmem:[%s289 + $0x650] sm:$0xff] %v694
              %v696 = vld [vmem:[%s288 + $0x658] sm:$0xff]
              %697 = vst [vmem:[%s289 + $0x658] sm:$0xff] %v696
              %v698 = vld [vmem:[%s288 + $0x660] sm:$0xff]
              %699 = vst [vmem:[%s289 + $0x660] sm:$0xff] %v698
              %v700 = vld [vmem:[%s288 + $0x668] sm:$0xff]
              %701 = vst [vmem:[%s289 + $0x668] sm:$0xff] %v700
              %v702 = vld [vmem:[%s288 + $0x670] sm:$0xff]
              %703 = vst [vmem:[%s289 + $0x670] sm:$0xff] %v702
              %v704 = vld [vmem:[%s288 + $0x678] sm:$0xff]
              %705 = vst [vmem:[%s289 + $0x678] sm:$0xff] %v704
              %v706 = vld [vmem:[%s288 + $0x680] sm:$0xff]
              %707 = vst [vmem:[%s289 + $0x680] sm:$0xff] %v706
              %v708 = vld [vmem:[%s288 + $0x688] sm:$0xff]
              %709 = vst [vmem:[%s289 + $0x688] sm:$0xff] %v708
              %v710 = vld [vmem:[%s288 + $0x690] sm:$0xff]
              %711 = vst [vmem:[%s289 + $0x690] sm:$0xff] %v710
              %v712 = vld [vmem:[%s288 + $0x698] sm:$0xff]
              %713 = vst [vmem:[%s289 + $0x698] sm:$0xff] %v712
              %v714 = vld [vmem:[%s288 + $0x6a0] sm:$0xff]
              %715 = vst [vmem:[%s289 + $0x6a0] sm:$0xff] %v714
              %v716 = vld [vmem:[%s288 + $0x6a8] sm:$0xff]
              %717 = vst [vmem:[%s289 + $0x6a8] sm:$0xff] %v716
              %v718 = vld [vmem:[%s288 + $0x6b0] sm:$0xff]
              %719 = vst [vmem:[%s289 + $0x6b0] sm:$0xff] %v718
              %v720 = vld [vmem:[%s288 + $0x6b8] sm:$0xff]
              %721 = vst [vmem:[%s289 + $0x6b8] sm:$0xff] %v720
              %v722 = vld [vmem:[%s288 + $0x6c0] sm:$0xff]
              %723 = vst [vmem:[%s289 + $0x6c0] sm:$0xff] %v722
              %v724 = vld [vmem:[%s288 + $0x6c8] sm:$0xff]
              %725 = vst [vmem:[%s289 + $0x6c8] sm:$0xff] %v724
              %v726 = vld [vmem:[%s288 + $0x6d0] sm:$0xff]
              %727 = vst [vmem:[%s289 + $0x6d0] sm:$0xff] %v726
              %v728 = vld [vmem:[%s288 + $0x6d8] sm:$0xff]
              %729 = vst [vmem:[%s289 + $0x6d8] sm:$0xff] %v728
              %v730 = vld [vmem:[%s288 + $0x6e0] sm:$0xff]
              %731 = vst [vmem:[%s289 + $0x6e0] sm:$0xff] %v730
              %v732 = vld [vmem:[%s288 + $0x6e8] sm:$0xff]
              %733 = vst [vmem:[%s289 + $0x6e8] sm:$0xff] %v732
              %v734 = vld [vmem:[%s288 + $0x6f0] sm:$0xff]
              %735 = vst [vmem:[%s289 + $0x6f0] sm:$0xff] %v734
              %v736 = vld [vmem:[%s288 + $0x6f8] sm:$0xff]
              %737 = vst [vmem:[%s289 + $0x6f8] sm:$0xff] %v736
              %v738 = vld [vmem:[%s288 + $0x700] sm:$0xff]
              %739 = vst [vmem:[%s289 + $0x700] sm:$0xff] %v738
              %v740 = vld [vmem:[%s288 + $0x708] sm:$0xff]
              %741 = vst [vmem:[%s289 + $0x708] sm:$0xff] %v740
              %v742 = vld [vmem:[%s288 + $0x710] sm:$0xff]
              %743 = vst [vmem:[%s289 + $0x710] sm:$0xff] %v742
              %v744 = vld [vmem:[%s288 + $0x718] sm:$0xff]
              %745 = vst [vmem:[%s289 + $0x718] sm:$0xff] %v744
              %v746 = vld [vmem:[%s288 + $0x720] sm:$0xff]
              %747 = vst [vmem:[%s289 + $0x720] sm:$0xff] %v746
              %v748 = vld [vmem:[%s288 + $0x728] sm:$0xff]
              %749 = vst [vmem:[%s289 + $0x728] sm:$0xff] %v748
              %v750 = vld [vmem:[%s288 + $0x730] sm:$0xff]
              %751 = vst [vmem:[%s289 + $0x730] sm:$0xff] %v750
              %v752 = vld [vmem:[%s288 + $0x738] sm:$0xff]
              %753 = vst [vmem:[%s289 + $0x738] sm:$0xff] %v752
              %v754 = vld [vmem:[%s288 + $0x740] sm:$0xff]
              %755 = vst [vmem:[%s289 + $0x740] sm:$0xff] %v754
              %v756 = vld [vmem:[%s288 + $0x748] sm:$0xff]
              %757 = vst [vmem:[%s289 + $0x748] sm:$0xff] %v756
              %v758 = vld [vmem:[%s288 + $0x750] sm:$0xff]
              %759 = vst [vmem:[%s289 + $0x750] sm:$0xff] %v758
              %v760 = vld [vmem:[%s288 + $0x758] sm:$0xff]
              %761 = vst [vmem:[%s289 + $0x758] sm:$0xff] %v760
              %v762 = vld [vmem:[%s288 + $0x760] sm:$0xff]
              %763 = vst [vmem:[%s289 + $0x760] sm:$0xff] %v762
              %v764 = vld [vmem:[%s288 + $0x768] sm:$0xff]
              %765 = vst [vmem:[%s289 + $0x768] sm:$0xff] %v764
              %v766 = vld [vmem:[%s288 + $0x770] sm:$0xff]
              %767 = vst [vmem:[%s289 + $0x770] sm:$0xff] %v766
              %v768 = vld [vmem:[%s288 + $0x778] sm:$0xff]
              %769 = vst [vmem:[%s289 + $0x778] sm:$0xff] %v768
              %v770 = vld [vmem:[%s288 + $0x780] sm:$0xff]
              %771 = vst [vmem:[%s289 + $0x780] sm:$0xff] %v770
              %v772 = vld [vmem:[%s288 + $0x788] sm:$0xff]
              %773 = vst [vmem:[%s289 + $0x788] sm:$0xff] %v772
              %v774 = vld [vmem:[%s288 + $0x790] sm:$0xff]
              %775 = vst [vmem:[%s289 + $0x790] sm:$0xff] %v774
              %v776 = vld [vmem:[%s288 + $0x798] sm:$0xff]
              %777 = vst [vmem:[%s289 + $0x798] sm:$0xff] %v776
              %v778 = vld [vmem:[%s288 + $0x7a0] sm:$0xff]
              %779 = vst [vmem:[%s289 + $0x7a0] sm:$0xff] %v778
              %v780 = vld [vmem:[%s288 + $0x7a8] sm:$0xff]
              %781 = vst [vmem:[%s289 + $0x7a8] sm:$0xff] %v780
              %v782 = vld [vmem:[%s288 + $0x7b0] sm:$0xff]
              %783 = vst [vmem:[%s289 + $0x7b0] sm:$0xff] %v782
              %v784 = vld [vmem:[%s288 + $0x7b8] sm:$0xff]
              %785 = vst [vmem:[%s289 + $0x7b8] sm:$0xff] %v784
              %v786 = vld [vmem:[%s288 + $0x7c0] sm:$0xff]
              %787 = vst [vmem:[%s289 + $0x7c0] sm:$0xff] %v786
              %v788 = vld [vmem:[%s288 + $0x7c8] sm:$0xff]
              %789 = vst [vmem:[%s289 + $0x7c8] sm:$0xff] %v788
              %v790 = vld [vmem:[%s288 + $0x7d0] sm:$0xff]
              %791 = vst [vmem:[%s289 + $0x7d0] sm:$0xff] %v790
              %v792 = vld [vmem:[%s288 + $0x7d8] sm:$0xff]
              %793 = vst [vmem:[%s289 + $0x7d8] sm:$0xff] %v792
              %v794 = vld [vmem:[%s288 + $0x7e0] sm:$0xff]
              %795 = vst [vmem:[%s289 + $0x7e0] sm:$0xff] %v794
              %v796 = vld [vmem:[%s288 + $0x7e8] sm:$0xff]
              %797 = vst [vmem:[%s289 + $0x7e8] sm:$0xff] %v796
              %v798 = vld [vmem:[%s288 + $0x7f0] sm:$0xff]
              %799 = vst [vmem:[%s289 + $0x7f0] sm:$0xff] %v798
              %v800 = vld [vmem:[%s288 + $0x7f8] sm:$0xff]
              %801 = vst [vmem:[%s289 + $0x7f8] sm:$0xff] %v800
              %v802 = vld [vmem:[%s288 + $0x800] sm:$0xff]
              %803 = vst [vmem:[%s289 + $0x800] sm:$0xff] %v802
              %v804 = vld [vmem:[%s288 + $0x808] sm:$0xff]
              %805 = vst [vmem:[%s289 + $0x808] sm:$0xff] %v804
              %v806 = vld [vmem:[%s288 + $0x810] sm:$0xff]
              %807 = vst [vmem:[%s289 + $0x810] sm:$0xff] %v806
              %v808 = vld [vmem:[%s288 + $0x818] sm:$0xff]
              %809 = vst [vmem:[%s289 + $0x818] sm:$0xff] %v808
              %v810 = vld [vmem:[%s288 + $0x820] sm:$0xff]
              %811 = vst [vmem:[%s289 + $0x820] sm:$0xff] %v810
              %v812 = vld [vmem:[%s288 + $0x828] sm:$0xff]
              %813 = vst [vmem:[%s289 + $0x828] sm:$0xff] %v812
              %v814 = vld [vmem:[%s288 + $0x830] sm:$0xff]
              %815 = vst [vmem:[%s289 + $0x830] sm:$0xff] %v814
              %v816 = vld [vmem:[%s288 + $0x838] sm:$0xff]
              %817 = vst [vmem:[%s289 + $0x838] sm:$0xff] %v816
              %v818 = vld [vmem:[%s288 + $0x840] sm:$0xff]
              %819 = vst [vmem:[%s289 + $0x840] sm:$0xff] %v818
              %v820 = vld [vmem:[%s288 + $0x848] sm:$0xff]
              %821 = vst [vmem:[%s289 + $0x848] sm:$0xff] %v820
              %v822 = vld [vmem:[%s288 + $0x850] sm:$0xff]
              %823 = vst [vmem:[%s289 + $0x850] sm:$0xff] %v822
              %v824 = vld [vmem:[%s288 + $0x858] sm:$0xff]
              %825 = vst [vmem:[%s289 + $0x858] sm:$0xff] %v824
              %v826 = vld [vmem:[%s288 + $0x860] sm:$0xff]
              %827 = vst [vmem:[%s289 + $0x860] sm:$0xff] %v826
              %v828 = vld [vmem:[%s288 + $0x868] sm:$0xff]
              %829 = vst [vmem:[%s289 + $0x868] sm:$0xff] %v828
              %v830 = vld [vmem:[%s288 + $0x870] sm:$0xff]
              %831 = vst [vmem:[%s289 + $0x870] sm:$0xff] %v830
              %v832 = vld [vmem:[%s288 + $0x878] sm:$0xff]
              %833 = vst [vmem:[%s289 + $0x878] sm:$0xff] %v832
              %v834 = vld [vmem:[%s288 + $0x880] sm:$0xff]
              %835 = vst [vmem:[%s289 + $0x880] sm:$0xff] %v834
              %v836 = vld [vmem:[%s288 + $0x888] sm:$0xff]
              %837 = vst [vmem:[%s289 + $0x888] sm:$0xff] %v836
              %v838 = vld [vmem:[%s288 + $0x890] sm:$0xff]
              %839 = vst [vmem:[%s289 + $0x890] sm:$0xff] %v838
              %v840 = vld [vmem:[%s288 + $0x898] sm:$0xff]
              %841 = vst [vmem:[%s289 + $0x898] sm:$0xff] %v840
              %v842 = vld [vmem:[%s288 + $0x8a0] sm:$0xff]
              %843 = vst [vmem:[%s289 + $0x8a0] sm:$0xff] %v842
              %v844 = vld [vmem:[%s288 + $0x8a8] sm:$0xff]
              %845 = vst [vmem:[%s289 + $0x8a8] sm:$0xff] %v844
              %v846 = vld [vmem:[%s288 + $0x8b0] sm:$0xff]
              %847 = vst [vmem:[%s289 + $0x8b0] sm:$0xff] %v846
              %v848 = vld [vmem:[%s288 + $0x8b8] sm:$0xff]
              %849 = vst [vmem:[%s289 + $0x8b8] sm:$0xff] %v848
              %v850 = vld [vmem:[%s288 + $0x8c0] sm:$0xff]
              %851 = vst [vmem:[%s289 + $0x8c0] sm:$0xff] %v850
              %v852 = vld [vmem:[%s288 + $0x8c8] sm:$0xff]
              %853 = vst [vmem:[%s289 + $0x8c8] sm:$0xff] %v852
              %v854 = vld [vmem:[%s288 + $0x8d0] sm:$0xff]
              %855 = vst [vmem:[%s289 + $0x8d0] sm:$0xff] %v854
              %v856 = vld [vmem:[%s288 + $0x8d8] sm:$0xff]
              %857 = vst [vmem:[%s289 + $0x8d8] sm:$0xff] %v856
              %v858 = vld [vmem:[%s288 + $0x8e0] sm:$0xff]
              %859 = vst [vmem:[%s289 + $0x8e0] sm:$0xff] %v858
              %v860 = vld [vmem:[%s288 + $0x8e8] sm:$0xff]
              %861 = vst [vmem:[%s289 + $0x8e8] sm:$0xff] %v860
              %v862 = vld [vmem:[%s288 + $0x8f0] sm:$0xff]
              %863 = vst [vmem:[%s289 + $0x8f0] sm:$0xff] %v862
              %v864 = vld [vmem:[%s288 + $0x8f8] sm:$0xff]
              %865 = vst [vmem:[%s289 + $0x8f8] sm:$0xff] %v864
              %v866 = vld [vmem:[%s288 + $0x900] sm:$0xff]
              %867 = vst [vmem:[%s289 + $0x900] sm:$0xff] %v866
              %v868 = vld [vmem:[%s288 + $0x908] sm:$0xff]
              %869 = vst [vmem:[%s289 + $0x908] sm:$0xff] %v868
              %v870 = vld [vmem:[%s288 + $0x910] sm:$0xff]
              %871 = vst [vmem:[%s289 + $0x910] sm:$0xff] %v870
              %v872 = vld [vmem:[%s288 + $0x918] sm:$0xff]
              %873 = vst [vmem:[%s289 + $0x918] sm:$0xff] %v872
              %v874 = vld [vmem:[%s288 + $0x920] sm:$0xff]
              %875 = vst [vmem:[%s289 + $0x920] sm:$0xff] %v874
              %v876 = vld [vmem:[%s288 + $0x928] sm:$0xff]
              %877 = vst [vmem:[%s289 + $0x928] sm:$0xff] %v876
              %v878 = vld [vmem:[%s288 + $0x930] sm:$0xff]
              %879 = vst [vmem:[%s289 + $0x930] sm:$0xff] %v878
              %v880 = vld [vmem:[%s288 + $0x938] sm:$0xff]
              %881 = vst [vmem:[%s289 + $0x938] sm:$0xff] %v880
              %v882 = vld [vmem:[%s288 + $0x940] sm:$0xff]
              %883 = vst [vmem:[%s289 + $0x940] sm:$0xff] %v882
              %v884 = vld [vmem:[%s288 + $0x948] sm:$0xff]
              %885 = vst [vmem:[%s289 + $0x948] sm:$0xff] %v884
              %v886 = vld [vmem:[%s288 + $0x950] sm:$0xff]
              %887 = vst [vmem:[%s289 + $0x950] sm:$0xff] %v886
              %v888 = vld [vmem:[%s288 + $0x958] sm:$0xff]
              %889 = vst [vmem:[%s289 + $0x958] sm:$0xff] %v888
              %v890 = vld [vmem:[%s288 + $0x960] sm:$0xff]
              %891 = vst [vmem:[%s289 + $0x960] sm:$0xff] %v890
              %v892 = vld [vmem:[%s288 + $0x968] sm:$0xff]
              %893 = vst [vmem:[%s289 + $0x968] sm:$0xff] %v892
              %v894 = vld [vmem:[%s288 + $0x970] sm:$0xff]
              %895 = vst [vmem:[%s289 + $0x970] sm:$0xff] %v894
              %v896 = vld [vmem:[%s288 + $0x978] sm:$0xff]
              %897 = vst [vmem:[%s289 + $0x978] sm:$0xff] %v896
              %v898 = vld [vmem:[%s288 + $0x980] sm:$0xff]
              %899 = vst [vmem:[%s289 + $0x980] sm:$0xff] %v898
              %v900 = vld [vmem:[%s288 + $0x988] sm:$0xff]
              %901 = vst [vmem:[%s289 + $0x988] sm:$0xff] %v900
              %v902 = vld [vmem:[%s288 + $0x990] sm:$0xff]
              %903 = vst [vmem:[%s289 + $0x990] sm:$0xff] %v902
              %v904 = vld [vmem:[%s288 + $0x998] sm:$0xff]
              %905 = vst [vmem:[%s289 + $0x998] sm:$0xff] %v904
              %v906 = vld [vmem:[%s288 + $0x9a0] sm:$0xff]
              %907 = vst [vmem:[%s289 + $0x9a0] sm:$0xff] %v906
              %v908 = vld [vmem:[%s288 + $0x9a8] sm:$0xff]
              %909 = vst [vmem:[%s289 + $0x9a8] sm:$0xff] %v908
              %v910 = vld [vmem:[%s288 + $0x9b0] sm:$0xff]
              %911 = vst [vmem:[%s289 + $0x9b0] sm:$0xff] %v910
              %v912 = vld [vmem:[%s288 + $0x9b8] sm:$0xff]
              %913 = vst [vmem:[%s289 + $0x9b8] sm:$0xff] %v912
              %v914 = vld [vmem:[%s288 + $0x9c0] sm:$0xff]
              %915 = vst [vmem:[%s289 + $0x9c0] sm:$0xff] %v914
              %v916 = vld [vmem:[%s288 + $0x9c8] sm:$0xff]
              %917 = vst [vmem:[%s289 + $0x9c8] sm:$0xff] %v916
              %v918 = vld [vmem:[%s288 + $0x9d0] sm:$0xff]
              %919 = vst [vmem:[%s289 + $0x9d0] sm:$0xff] %v918
              %v920 = vld [vmem:[%s288 + $0x9d8] sm:$0xff]
              %921 = vst [vmem:[%s289 + $0x9d8] sm:$0xff] %v920
              %v922 = vld [vmem:[%s288 + $0x9e0] sm:$0xff]
              %923 = vst [vmem:[%s289 + $0x9e0] sm:$0xff] %v922
              %v924 = vld [vmem:[%s288 + $0x9e8] sm:$0xff]
              %925 = vst [vmem:[%s289 + $0x9e8] sm:$0xff] %v924
              %v926 = vld [vmem:[%s288 + $0x9f0] sm:$0xff]
              %927 = vst [vmem:[%s289 + $0x9f0] sm:$0xff] %v926
              %v928 = vld [vmem:[%s288 + $0x9f8] sm:$0xff]
              %929 = vst [vmem:[%s289 + $0x9f8] sm:$0xff] %v928
              %v930 = vld [vmem:[%s288 + $0xa00] sm:$0xff]
              %931 = vst [vmem:[%s289 + $0xa00] sm:$0xff] %v930
              %v932 = vld [vmem:[%s288 + $0xa08] sm:$0xff]
              %933 = vst [vmem:[%s289 + $0xa08] sm:$0xff] %v932
              %v934 = vld [vmem:[%s288 + $0xa10] sm:$0xff]
              %935 = vst [vmem:[%s289 + $0xa10] sm:$0xff] %v934
              %v936 = vld [vmem:[%s288 + $0xa18] sm:$0xff]
              %937 = vst [vmem:[%s289 + $0xa18] sm:$0xff] %v936
              %v938 = vld [vmem:[%s288 + $0xa20] sm:$0xff]
              %939 = vst [vmem:[%s289 + $0xa20] sm:$0xff] %v938
              %v940 = vld [vmem:[%s288 + $0xa28] sm:$0xff]
              %941 = vst [vmem:[%s289 + $0xa28] sm:$0xff] %v940
              %v942 = vld [vmem:[%s288 + $0xa30] sm:$0xff]
              %943 = vst [vmem:[%s289 + $0xa30] sm:$0xff] %v942
              %v944 = vld [vmem:[%s288 + $0xa38] sm:$0xff]
              %945 = vst [vmem:[%s289 + $0xa38] sm:$0xff] %v944
              %v946 = vld [vmem:[%s288 + $0xa40] sm:$0xff]
              %947 = vst [vmem:[%s289 + $0xa40] sm:$0xff] %v946
              %v948 = vld [vmem:[%s288 + $0xa48] sm:$0xff]
              %949 = vst [vmem:[%s289 + $0xa48] sm:$0xff] %v948
              %v950 = vld [vmem:[%s288 + $0xa50] sm:$0xff]
              %951 = vst [vmem:[%s289 + $0xa50] sm:$0xff] %v950
              %v952 = vld [vmem:[%s288 + $0xa58] sm:$0xff]
              %953 = vst [vmem:[%s289 + $0xa58] sm:$0xff] %v952
              %v954 = vld [vmem:[%s288 + $0xa60] sm:$0xff]
              %955 = vst [vmem:[%s289 + $0xa60] sm:$0xff] %v954
              %v956 = vld [vmem:[%s288 + $0xa68] sm:$0xff]
              %957 = vst [vmem:[%s289 + $0xa68] sm:$0xff] %v956
              %v958 = vld [vmem:[%s288 + $0xa70] sm:$0xff]
              %959 = vst [vmem:[%s289 + $0xa70] sm:$0xff] %v958
              %v960 = vld [vmem:[%s288 + $0xa78] sm:$0xff]
              %961 = vst [vmem:[%s289 + $0xa78] sm:$0xff] %v960
              %v962 = vld [vmem:[%s288 + $0xa80] sm:$0xff]
              %963 = vst [vmem:[%s289 + $0xa80] sm:$0xff] %v962
              %v964 = vld [vmem:[%s288 + $0xa88] sm:$0xff]
              %965 = vst [vmem:[%s289 + $0xa88] sm:$0xff] %v964
              %v966 = vld [vmem:[%s288 + $0xa90] sm:$0xff]
              %967 = vst [vmem:[%s289 + $0xa90] sm:$0xff] %v966
              %v968 = vld [vmem:[%s288 + $0xa98] sm:$0xff]
              %969 = vst [vmem:[%s289 + $0xa98] sm:$0xff] %v968
              %v970 = vld [vmem:[%s288 + $0xaa0] sm:$0xff]
              %971 = vst [vmem:[%s289 + $0xaa0] sm:$0xff] %v970
              %v972 = vld [vmem:[%s288 + $0xaa8] sm:$0xff]
              %973 = vst [vmem:[%s289 + $0xaa8] sm:$0xff] %v972
              %v974 = vld [vmem:[%s288 + $0xab0] sm:$0xff]
              %975 = vst [vmem:[%s289 + $0xab0] sm:$0xff] %v974
              %v976 = vld [vmem:[%s288 + $0xab8] sm:$0xff]
              %977 = vst [vmem:[%s289 + $0xab8] sm:$0xff] %v976
              %v978 = vld [vmem:[%s288 + $0xac0] sm:$0xff]
              %979 = vst [vmem:[%s289 + $0xac0] sm:$0xff] %v978
              %v980 = vld [vmem:[%s288 + $0xac8] sm:$0xff]
              %981 = vst [vmem:[%s289 + $0xac8] sm:$0xff] %v980
              %v982 = vld [vmem:[%s288 + $0xad0] sm:$0xff]
              %983 = vst [vmem:[%s289 + $0xad0] sm:$0xff] %v982
              %v984 = vld [vmem:[%s288 + $0xad8] sm:$0xff]
              %985 = vst [vmem:[%s289 + $0xad8] sm:$0xff] %v984
              %v986 = vld [vmem:[%s288 + $0xae0] sm:$0xff]
              %987 = vst [vmem:[%s289 + $0xae0] sm:$0xff] %v986
              %v988 = vld [vmem:[%s288 + $0xae8] sm:$0xff]
              %989 = vst [vmem:[%s289 + $0xae8] sm:$0xff] %v988
              %v990 = vld [vmem:[%s288 + $0xaf0] sm:$0xff]
              %991 = vst [vmem:[%s289 + $0xaf0] sm:$0xff] %v990
              %v992 = vld [vmem:[%s288 + $0xaf8] sm:$0xff]
              %993 = vst [vmem:[%s289 + $0xaf8] sm:$0xff] %v992
              %v994 = vld [vmem:[%s288 + $0xb00] sm:$0xff]
              %995 = vst [vmem:[%s289 + $0xb00] sm:$0xff] %v994
              %v996 = vld [vmem:[%s288 + $0xb08] sm:$0xff]
              %997 = vst [vmem:[%s289 + $0xb08] sm:$0xff] %v996
              %v998 = vld [vmem:[%s288 + $0xb10] sm:$0xff]
              %999 = vst [vmem:[%s289 + $0xb10] sm:$0xff] %v998
              %v1000 = vld [vmem:[%s288 + $0xb18] sm:$0xff]
              %1001 = vst [vmem:[%s289 + $0xb18] sm:$0xff] %v1000
              %v1002 = vld [vmem:[%s288 + $0xb20] sm:$0xff]
              %1003 = vst [vmem:[%s289 + $0xb20] sm:$0xff] %v1002
              %v1004 = vld [vmem:[%s288 + $0xb28] sm:$0xff]
              %1005 = vst [vmem:[%s289 + $0xb28] sm:$0xff] %v1004
              %v1006 = vld [vmem:[%s288 + $0xb30] sm:$0xff]
              %1007 = vst [vmem:[%s289 + $0xb30] sm:$0xff] %v1006
              %v1008 = vld [vmem:[%s288 + $0xb38] sm:$0xff]
              %1009 = vst [vmem:[%s289 + $0xb38] sm:$0xff] %v1008
              %v1010 = vld [vmem:[%s288 + $0xb40] sm:$0xff]
              %1011 = vst [vmem:[%s289 + $0xb40] sm:$0xff] %v1010
              %v1012 = vld [vmem:[%s288 + $0xb48] sm:$0xff]
              %1013 = vst [vmem:[%s289 + $0xb48] sm:$0xff] %v1012
              %v1014 = vld [vmem:[%s288 + $0xb50] sm:$0xff]
              %1015 = vst [vmem:[%s289 + $0xb50] sm:$0xff] %v1014
              %v1016 = vld [vmem:[%s288 + $0xb58] sm:$0xff]
              %1017 = vst [vmem:[%s289 + $0xb58] sm:$0xff] %v1016
              %v1018 = vld [vmem:[%s288 + $0xb60] sm:$0xff]
              %1019 = vst [vmem:[%s289 + $0xb60] sm:$0xff] %v1018
              %v1020 = vld [vmem:[%s288 + $0xb68] sm:$0xff]
              %1021 = vst [vmem:[%s289 + $0xb68] sm:$0xff] %v1020
              %v1022 = vld [vmem:[%s288 + $0xb70] sm:$0xff]
              %1023 = vst [vmem:[%s289 + $0xb70] sm:$0xff] %v1022
              %v1024 = vld [vmem:[%s288 + $0xb78] sm:$0xff]
              %1025 = vst [vmem:[%s289 + $0xb78] sm:$0xff] %v1024
              %v1026 = vld [vmem:[%s288 + $0xb80] sm:$0xff]
              %1027 = vst [vmem:[%s289 + $0xb80] sm:$0xff] %v1026
              %v1028 = vld [vmem:[%s288 + $0xb88] sm:$0xff]
              %1029 = vst [vmem:[%s289 + $0xb88] sm:$0xff] %v1028
              %v1030 = vld [vmem:[%s288 + $0xb90] sm:$0xff]
              %1031 = vst [vmem:[%s289 + $0xb90] sm:$0xff] %v1030
              %v1032 = vld [vmem:[%s288 + $0xb98] sm:$0xff]
              %1033 = vst [vmem:[%s289 + $0xb98] sm:$0xff] %v1032
              %v1034 = vld [vmem:[%s288 + $0xba0] sm:$0xff]
              %1035 = vst [vmem:[%s289 + $0xba0] sm:$0xff] %v1034
              %v1036 = vld [vmem:[%s288 + $0xba8] sm:$0xff]
              %1037 = vst [vmem:[%s289 + $0xba8] sm:$0xff] %v1036
              %v1038 = vld [vmem:[%s288 + $0xbb0] sm:$0xff]
              %1039 = vst [vmem:[%s289 + $0xbb0] sm:$0xff] %v1038
              %v1040 = vld [vmem:[%s288 + $0xbb8] sm:$0xff]
              %1041 = vst [vmem:[%s289 + $0xbb8] sm:$0xff] %v1040
              %v1042 = vld [vmem:[%s288 + $0xbc0] sm:$0xff]
              %1043 = vst [vmem:[%s289 + $0xbc0] sm:$0xff] %v1042
              %v1044 = vld [vmem:[%s288 + $0xbc8] sm:$0xff]
              %1045 = vst [vmem:[%s289 + $0xbc8] sm:$0xff] %v1044
              %v1046 = vld [vmem:[%s288 + $0xbd0] sm:$0xff]
              %1047 = vst [vmem:[%s289 + $0xbd0] sm:$0xff] %v1046
              %v1048 = vld [vmem:[%s288 + $0xbd8] sm:$0xff]
              %1049 = vst [vmem:[%s289 + $0xbd8] sm:$0xff] %v1048
              %v1050 = vld [vmem:[%s288 + $0xbe0] sm:$0xff]
              %1051 = vst [vmem:[%s289 + $0xbe0] sm:$0xff] %v1050
              %v1052 = vld [vmem:[%s288 + $0xbe8] sm:$0xff]
              %1053 = vst [vmem:[%s289 + $0xbe8] sm:$0xff] %v1052
              %v1054 = vld [vmem:[%s288 + $0xbf0] sm:$0xff]
              %1055 = vst [vmem:[%s289 + $0xbf0] sm:$0xff] %v1054
              %v1056 = vld [vmem:[%s288 + $0xbf8] sm:$0xff]
              %1057 = vst [vmem:[%s289 + $0xbf8] sm:$0xff] %v1056
              %v1058 = vld [vmem:[%s288 + $0xc00] sm:$0xff]
              %1059 = vst [vmem:[%s289 + $0xc00] sm:$0xff] %v1058
              %v1060 = vld [vmem:[%s288 + $0xc08] sm:$0xff]
              %1061 = vst [vmem:[%s289 + $0xc08] sm:$0xff] %v1060
              %v1062 = vld [vmem:[%s288 + $0xc10] sm:$0xff]
              %1063 = vst [vmem:[%s289 + $0xc10] sm:$0xff] %v1062
              %v1064 = vld [vmem:[%s288 + $0xc18] sm:$0xff]
              %1065 = vst [vmem:[%s289 + $0xc18] sm:$0xff] %v1064
              %v1066 = vld [vmem:[%s288 + $0xc20] sm:$0xff]
              %1067 = vst [vmem:[%s289 + $0xc20] sm:$0xff] %v1066
              %v1068 = vld [vmem:[%s288 + $0xc28] sm:$0xff]
              %1069 = vst [vmem:[%s289 + $0xc28] sm:$0xff] %v1068
              %v1070 = vld [vmem:[%s288 + $0xc30] sm:$0xff]
              %1071 = vst [vmem:[%s289 + $0xc30] sm:$0xff] %v1070
              %v1072 = vld [vmem:[%s288 + $0xc38] sm:$0xff]
              %1073 = vst [vmem:[%s289 + $0xc38] sm:$0xff] %v1072
              %v1074 = vld [vmem:[%s288 + $0xc40] sm:$0xff]
              %1075 = vst [vmem:[%s289 + $0xc40] sm:$0xff] %v1074
              %v1076 = vld [vmem:[%s288 + $0xc48] sm:$0xff]
              %1077 = vst [vmem:[%s289 + $0xc48] sm:$0xff] %v1076
              %v1078 = vld [vmem:[%s288 + $0xc50] sm:$0xff]
              %1079 = vst [vmem:[%s289 + $0xc50] sm:$0xff] %v1078
              %v1080 = vld [vmem:[%s288 + $0xc58] sm:$0xff]
              %1081 = vst [vmem:[%s289 + $0xc58] sm:$0xff] %v1080
              %v1082 = vld [vmem:[%s288 + $0xc60] sm:$0xff]
              %1083 = vst [vmem:[%s289 + $0xc60] sm:$0xff] %v1082
              %v1084 = vld [vmem:[%s288 + $0xc68] sm:$0xff]
              %1085 = vst [vmem:[%s289 + $0xc68] sm:$0xff] %v1084
              %v1086 = vld [vmem:[%s288 + $0xc70] sm:$0xff]
              %1087 = vst [vmem:[%s289 + $0xc70] sm:$0xff] %v1086
              %v1088 = vld [vmem:[%s288 + $0xc78] sm:$0xff]
              %1089 = vst [vmem:[%s289 + $0xc78] sm:$0xff] %v1088
              %v1090 = vld [vmem:[%s288 + $0xc80] sm:$0xff]
              %1091 = vst [vmem:[%s289 + $0xc80] sm:$0xff] %v1090
              %v1092 = vld [vmem:[%s288 + $0xc88] sm:$0xff]
              %1093 = vst [vmem:[%s289 + $0xc88] sm:$0xff] %v1092
              %v1094 = vld [vmem:[%s288 + $0xc90] sm:$0xff]
              %1095 = vst [vmem:[%s289 + $0xc90] sm:$0xff] %v1094
              %v1096 = vld [vmem:[%s288 + $0xc98] sm:$0xff]
              %1097 = vst [vmem:[%s289 + $0xc98] sm:$0xff] %v1096
              %v1098 = vld [vmem:[%s288 + $0xca0] sm:$0xff]
              %1099 = vst [vmem:[%s289 + $0xca0] sm:$0xff] %v1098
              %v1100 = vld [vmem:[%s288 + $0xca8] sm:$0xff]
              %1101 = vst [vmem:[%s289 + $0xca8] sm:$0xff] %v1100
              %v1102 = vld [vmem:[%s288 + $0xcb0] sm:$0xff]
              %1103 = vst [vmem:[%s289 + $0xcb0] sm:$0xff] %v1102
              %v1104 = vld [vmem:[%s288 + $0xcb8] sm:$0xff]
              %1105 = vst [vmem:[%s289 + $0xcb8] sm:$0xff] %v1104
              %v1106 = vld [vmem:[%s288 + $0xcc0] sm:$0xff]
              %1107 = vst [vmem:[%s289 + $0xcc0] sm:$0xff] %v1106
              %v1108 = vld [vmem:[%s288 + $0xcc8] sm:$0xff]
              %1109 = vst [vmem:[%s289 + $0xcc8] sm:$0xff] %v1108
              %v1110 = vld [vmem:[%s288 + $0xcd0] sm:$0xff]
              %1111 = vst [vmem:[%s289 + $0xcd0] sm:$0xff] %v1110
              %v1112 = vld [vmem:[%s288 + $0xcd8] sm:$0xff]
              %1113 = vst [vmem:[%s289 + $0xcd8] sm:$0xff] %v1112
              %v1114 = vld [vmem:[%s288 + $0xce0] sm:$0xff]
              %1115 = vst [vmem:[%s289 + $0xce0] sm:$0xff] %v1114
              %v1116 = vld [vmem:[%s288 + $0xce8] sm:$0xff]
              %1117 = vst [vmem:[%s289 + $0xce8] sm:$0xff] %v1116
              %v1118 = vld [vmem:[%s288 + $0xcf0] sm:$0xff]
              %1119 = vst [vmem:[%s289 + $0xcf0] sm:$0xff] %v1118
              %v1120 = vld [vmem:[%s288 + $0xcf8] sm:$0xff]
              %1121 = vst [vmem:[%s289 + $0xcf8] sm:$0xff] %v1120
              %v1122 = vld [vmem:[%s288 + $0xd00] sm:$0xff]
              %1123 = vst [vmem:[%s289 + $0xd00] sm:$0xff] %v1122
              %v1124 = vld [vmem:[%s288 + $0xd08] sm:$0xff]
              %1125 = vst [vmem:[%s289 + $0xd08] sm:$0xff] %v1124
              %v1126 = vld [vmem:[%s288 + $0xd10] sm:$0xff]
              %1127 = vst [vmem:[%s289 + $0xd10] sm:$0xff] %v1126
              %v1128 = vld [vmem:[%s288 + $0xd18] sm:$0xff]
              %1129 = vst [vmem:[%s289 + $0xd18] sm:$0xff] %v1128
              %v1130 = vld [vmem:[%s288 + $0xd20] sm:$0xff]
              %1131 = vst [vmem:[%s289 + $0xd20] sm:$0xff] %v1130
              %v1132 = vld [vmem:[%s288 + $0xd28] sm:$0xff]
              %1133 = vst [vmem:[%s289 + $0xd28] sm:$0xff] %v1132
              %v1134 = vld [vmem:[%s288 + $0xd30] sm:$0xff]
              %1135 = vst [vmem:[%s289 + $0xd30] sm:$0xff] %v1134
              %v1136 = vld [vmem:[%s288 + $0xd38] sm:$0xff]
              %1137 = vst [vmem:[%s289 + $0xd38] sm:$0xff] %v1136
              %v1138 = vld [vmem:[%s288 + $0xd40] sm:$0xff]
              %1139 = vst [vmem:[%s289 + $0xd40] sm:$0xff] %v1138
              %v1140 = vld [vmem:[%s288 + $0xd48] sm:$0xff]
              %1141 = vst [vmem:[%s289 + $0xd48] sm:$0xff] %v1140
              %v1142 = vld [vmem:[%s288 + $0xd50] sm:$0xff]
              %1143 = vst [vmem:[%s289 + $0xd50] sm:$0xff] %v1142
              %v1144 = vld [vmem:[%s288 + $0xd58] sm:$0xff]
              %1145 = vst [vmem:[%s289 + $0xd58] sm:$0xff] %v1144
              %v1146 = vld [vmem:[%s288 + $0xd60] sm:$0xff]
              %1147 = vst [vmem:[%s289 + $0xd60] sm:$0xff] %v1146
              %v1148 = vld [vmem:[%s288 + $0xd68] sm:$0xff]
              %1149 = vst [vmem:[%s289 + $0xd68] sm:$0xff] %v1148
              %v1150 = vld [vmem:[%s288 + $0xd70] sm:$0xff]
              %1151 = vst [vmem:[%s289 + $0xd70] sm:$0xff] %v1150
              %v1152 = vld [vmem:[%s288 + $0xd78] sm:$0xff]
              %1153 = vst [vmem:[%s289 + $0xd78] sm:$0xff] %v1152
              %v1154 = vld [vmem:[%s288 + $0xd80] sm:$0xff]
              %1155 = vst [vmem:[%s289 + $0xd80] sm:$0xff] %v1154
              %v1156 = vld [vmem:[%s288 + $0xd88] sm:$0xff]
              %1157 = vst [vmem:[%s289 + $0xd88] sm:$0xff] %v1156
              %v1158 = vld [vmem:[%s288 + $0xd90] sm:$0xff]
              %1159 = vst [vmem:[%s289 + $0xd90] sm:$0xff] %v1158
              %v1160 = vld [vmem:[%s288 + $0xd98] sm:$0xff]
              %1161 = vst [vmem:[%s289 + $0xd98] sm:$0xff] %v1160
              %v1162 = vld [vmem:[%s288 + $0xda0] sm:$0xff]
              %1163 = vst [vmem:[%s289 + $0xda0] sm:$0xff] %v1162
              %v1164 = vld [vmem:[%s288 + $0xda8] sm:$0xff]
              %1165 = vst [vmem:[%s289 + $0xda8] sm:$0xff] %v1164
              %v1166 = vld [vmem:[%s288 + $0xdb0] sm:$0xff]
              %1167 = vst [vmem:[%s289 + $0xdb0] sm:$0xff] %v1166
              %v1168 = vld [vmem:[%s288 + $0xdb8] sm:$0xff]
              %1169 = vst [vmem:[%s289 + $0xdb8] sm:$0xff] %v1168
              %v1170 = vld [vmem:[%s288 + $0xdc0] sm:$0xff]
              %1171 = vst [vmem:[%s289 + $0xdc0] sm:$0xff] %v1170
              %v1172 = vld [vmem:[%s288 + $0xdc8] sm:$0xff]
              %1173 = vst [vmem:[%s289 + $0xdc8] sm:$0xff] %v1172
              %v1174 = vld [vmem:[%s288 + $0xdd0] sm:$0xff]
              %1175 = vst [vmem:[%s289 + $0xdd0] sm:$0xff] %v1174
              %v1176 = vld [vmem:[%s288 + $0xdd8] sm:$0xff]
              %1177 = vst [vmem:[%s289 + $0xdd8] sm:$0xff] %v1176
              %v1178 = vld [vmem:[%s288 + $0xde0] sm:$0xff]
              %1179 = vst [vmem:[%s289 + $0xde0] sm:$0xff] %v1178
              %v1180 = vld [vmem:[%s288 + $0xde8] sm:$0xff]
              %1181 = vst [vmem:[%s289 + $0xde8] sm:$0xff] %v1180
              %v1182 = vld [vmem:[%s288 + $0xdf0] sm:$0xff]
              %1183 = vst [vmem:[%s289 + $0xdf0] sm:$0xff] %v1182
              %v1184 = vld [vmem:[%s288 + $0xdf8] sm:$0xff]
              %1185 = vst [vmem:[%s289 + $0xdf8] sm:$0xff] %v1184
              %v1186 = vld [vmem:[%s288 + $0xe00] sm:$0xff]
              %1187 = vst [vmem:[%s289 + $0xe00] sm:$0xff] %v1186
              %v1188 = vld [vmem:[%s288 + $0xe08] sm:$0xff]
              %1189 = vst [vmem:[%s289 + $0xe08] sm:$0xff] %v1188
              %v1190 = vld [vmem:[%s288 + $0xe10] sm:$0xff]
              %1191 = vst [vmem:[%s289 + $0xe10] sm:$0xff] %v1190
              %v1192 = vld [vmem:[%s288 + $0xe18] sm:$0xff]
              %1193 = vst [vmem:[%s289 + $0xe18] sm:$0xff] %v1192
              %v1194 = vld [vmem:[%s288 + $0xe20] sm:$0xff]
              %1195 = vst [vmem:[%s289 + $0xe20] sm:$0xff] %v1194
              %v1196 = vld [vmem:[%s288 + $0xe28] sm:$0xff]
              %1197 = vst [vmem:[%s289 + $0xe28] sm:$0xff] %v1196
              %v1198 = vld [vmem:[%s288 + $0xe30] sm:$0xff]
              %1199 = vst [vmem:[%s289 + $0xe30] sm:$0xff] %v1198
              %v1200 = vld [vmem:[%s288 + $0xe38] sm:$0xff]
              %1201 = vst [vmem:[%s289 + $0xe38] sm:$0xff] %v1200
              %v1202 = vld [vmem:[%s288 + $0xe40] sm:$0xff]
              %1203 = vst [vmem:[%s289 + $0xe40] sm:$0xff] %v1202
              %v1204 = vld [vmem:[%s288 + $0xe48] sm:$0xff]
              %1205 = vst [vmem:[%s289 + $0xe48] sm:$0xff] %v1204
              %v1206 = vld [vmem:[%s288 + $0xe50] sm:$0xff]
              %1207 = vst [vmem:[%s289 + $0xe50] sm:$0xff] %v1206
              %v1208 = vld [vmem:[%s288 + $0xe58] sm:$0xff]
              %1209 = vst [vmem:[%s289 + $0xe58] sm:$0xff] %v1208
              %v1210 = vld [vmem:[%s288 + $0xe60] sm:$0xff]
              %1211 = vst [vmem:[%s289 + $0xe60] sm:$0xff] %v1210
              %v1212 = vld [vmem:[%s288 + $0xe68] sm:$0xff]
              %1213 = vst [vmem:[%s289 + $0xe68] sm:$0xff] %v1212
              %v1214 = vld [vmem:[%s288 + $0xe70] sm:$0xff]
              %1215 = vst [vmem:[%s289 + $0xe70] sm:$0xff] %v1214
              %v1216 = vld [vmem:[%s288 + $0xe78] sm:$0xff]
              %1217 = vst [vmem:[%s289 + $0xe78] sm:$0xff] %v1216
              %v1218 = vld [vmem:[%s288 + $0xe80] sm:$0xff]
              %1219 = vst [vmem:[%s289 + $0xe80] sm:$0xff] %v1218
              %v1220 = vld [vmem:[%s288 + $0xe88] sm:$0xff]
              %1221 = vst [vmem:[%s289 + $0xe88] sm:$0xff] %v1220
              %v1222 = vld [vmem:[%s288 + $0xe90] sm:$0xff]
              %1223 = vst [vmem:[%s289 + $0xe90] sm:$0xff] %v1222
              %v1224 = vld [vmem:[%s288 + $0xe98] sm:$0xff]
              %1225 = vst [vmem:[%s289 + $0xe98] sm:$0xff] %v1224
              %v1226 = vld [vmem:[%s288 + $0xea0] sm:$0xff]
              %1227 = vst [vmem:[%s289 + $0xea0] sm:$0xff] %v1226
              %v1228 = vld [vmem:[%s288 + $0xea8] sm:$0xff]
              %1229 = vst [vmem:[%s289 + $0xea8] sm:$0xff] %v1228
              %v1230 = vld [vmem:[%s288 + $0xeb0] sm:$0xff]
              %1231 = vst [vmem:[%s289 + $0xeb0] sm:$0xff] %v1230
              %v1232 = vld [vmem:[%s288 + $0xeb8] sm:$0xff]
              %1233 = vst [vmem:[%s289 + $0xeb8] sm:$0xff] %v1232
              %v1234 = vld [vmem:[%s288 + $0xec0] sm:$0xff]
              %1235 = vst [vmem:[%s289 + $0xec0] sm:$0xff] %v1234
              %v1236 = vld [vmem:[%s288 + $0xec8] sm:$0xff]
              %1237 = vst [vmem:[%s289 + $0xec8] sm:$0xff] %v1236
              %v1238 = vld [vmem:[%s288 + $0xed0] sm:$0xff]
              %1239 = vst [vmem:[%s289 + $0xed0] sm:$0xff] %v1238
              %v1240 = vld [vmem:[%s288 + $0xed8] sm:$0xff]
              %1241 = vst [vmem:[%s289 + $0xed8] sm:$0xff] %v1240
              %v1242 = vld [vmem:[%s288 + $0xee0] sm:$0xff]
              %1243 = vst [vmem:[%s289 + $0xee0] sm:$0xff] %v1242
              %v1244 = vld [vmem:[%s288 + $0xee8] sm:$0xff]
              %1245 = vst [vmem:[%s289 + $0xee8] sm:$0xff] %v1244
              %v1246 = vld [vmem:[%s288 + $0xef0] sm:$0xff]
              %1247 = vst [vmem:[%s289 + $0xef0] sm:$0xff] %v1246
              %v1248 = vld [vmem:[%s288 + $0xef8] sm:$0xff]
              %1249 = vst [vmem:[%s289 + $0xef8] sm:$0xff] %v1248
              %v1250 = vld [vmem:[%s288 + $0xf00] sm:$0xff]
              %1251 = vst [vmem:[%s289 + $0xf00] sm:$0xff] %v1250
              %v1252 = vld [vmem:[%s288 + $0xf08] sm:$0xff]
              %1253 = vst [vmem:[%s289 + $0xf08] sm:$0xff] %v1252
              %v1254 = vld [vmem:[%s288 + $0xf10] sm:$0xff]
              %1255 = vst [vmem:[%s289 + $0xf10] sm:$0xff] %v1254
              %v1256 = vld [vmem:[%s288 + $0xf18] sm:$0xff]
              %1257 = vst [vmem:[%s289 + $0xf18] sm:$0xff] %v1256
              %v1258 = vld [vmem:[%s288 + $0xf20] sm:$0xff]
              %1259 = vst [vmem:[%s289 + $0xf20] sm:$0xff] %v1258
              %v1260 = vld [vmem:[%s288 + $0xf28] sm:$0xff]
              %1261 = vst [vmem:[%s289 + $0xf28] sm:$0xff] %v1260
              %v1262 = vld [vmem:[%s288 + $0xf30] sm:$0xff]
              %1263 = vst [vmem:[%s289 + $0xf30] sm:$0xff] %v1262
              %v1264 = vld [vmem:[%s288 + $0xf38] sm:$0xff]
              %1265 = vst [vmem:[%s289 + $0xf38] sm:$0xff] %v1264
              %v1266 = vld [vmem:[%s288 + $0xf40] sm:$0xff]
              %1267 = vst [vmem:[%s289 + $0xf40] sm:$0xff] %v1266
              %v1268 = vld [vmem:[%s288 + $0xf48] sm:$0xff]
              %1269 = vst [vmem:[%s289 + $0xf48] sm:$0xff] %v1268
              %v1270 = vld [vmem:[%s288 + $0xf50] sm:$0xff]
              %1271 = vst [vmem:[%s289 + $0xf50] sm:$0xff] %v1270
              %v1272 = vld [vmem:[%s288 + $0xf58] sm:$0xff]
              %1273 = vst [vmem:[%s289 + $0xf58] sm:$0xff] %v1272
              %v1274 = vld [vmem:[%s288 + $0xf60] sm:$0xff]
              %1275 = vst [vmem:[%s289 + $0xf60] sm:$0xff] %v1274
              %v1276 = vld [vmem:[%s288 + $0xf68] sm:$0xff]
              %1277 = vst [vmem:[%s289 + $0xf68] sm:$0xff] %v1276
              %v1278 = vld [vmem:[%s288 + $0xf70] sm:$0xff]
              %1279 = vst [vmem:[%s289 + $0xf70] sm:$0xff] %v1278
              %v1280 = vld [vmem:[%s288 + $0xf78] sm:$0xff]
              %1281 = vst [vmem:[%s289 + $0xf78] sm:$0xff] %v1280
              %v1282 = vld [vmem:[%s288 + $0xf80] sm:$0xff]
              %1283 = vst [vmem:[%s289 + $0xf80] sm:$0xff] %v1282
              %v1284 = vld [vmem:[%s288 + $0xf88] sm:$0xff]
              %1285 = vst [vmem:[%s289 + $0xf88] sm:$0xff] %v1284
              %v1286 = vld [vmem:[%s288 + $0xf90] sm:$0xff]
              %1287 = vst [vmem:[%s289 + $0xf90] sm:$0xff] %v1286
              %v1288 = vld [vmem:[%s288 + $0xf98] sm:$0xff]
              %1289 = vst [vmem:[%s289 + $0xf98] sm:$0xff] %v1288
              %v1290 = vld [vmem:[%s288 + $0xfa0] sm:$0xff]
              %1291 = vst [vmem:[%s289 + $0xfa0] sm:$0xff] %v1290
              %v1292 = vld [vmem:[%s288 + $0xfa8] sm:$0xff]
              %1293 = vst [vmem:[%s289 + $0xfa8] sm:$0xff] %v1292
              %v1294 = vld [vmem:[%s288 + $0xfb0] sm:$0xff]
              %1295 = vst [vmem:[%s289 + $0xfb0] sm:$0xff] %v1294
              %v1296 = vld [vmem:[%s288 + $0xfb8] sm:$0xff]
              %1297 = vst [vmem:[%s289 + $0xfb8] sm:$0xff] %v1296
              %v1298 = vld [vmem:[%s288 + $0xfc0] sm:$0xff]
              %1299 = vst [vmem:[%s289 + $0xfc0] sm:$0xff] %v1298
              %v1300 = vld [vmem:[%s288 + $0xfc8] sm:$0xff]
              %1301 = vst [vmem:[%s289 + $0xfc8] sm:$0xff] %v1300
              %v1302 = vld [vmem:[%s288 + $0xfd0] sm:$0xff]
              %1303 = vst [vmem:[%s289 + $0xfd0] sm:$0xff] %v1302
              %v1304 = vld [vmem:[%s288 + $0xfd8] sm:$0xff]
              %1305 = vst [vmem:[%s289 + $0xfd8] sm:$0xff] %v1304
              %v1306 = vld [vmem:[%s288 + $0xfe0] sm:$0xff]
              %1307 = vst [vmem:[%s289 + $0xfe0] sm:$0xff] %v1306
              %v1308 = vld [vmem:[%s288 + $0xfe8] sm:$0xff]
              %1309 = vst [vmem:[%s289 + $0xfe8] sm:$0xff] %v1308
              %v1310 = vld [vmem:[%s288 + $0xff0] sm:$0xff]
              %1311 = vst [vmem:[%s289 + $0xff0] sm:$0xff] %v1310
              %v1312 = vld [vmem:[%s288 + $0xff8] sm:$0xff]
              %1313 = vst [vmem:[%s289 + $0xff8] sm:$0xff] %v1312
              %v1314 = vld [vmem:[%s288 + $0x1000] sm:$0xff]
              %1315 = vst [vmem:[%s289 + $0x1000] sm:$0xff] %v1314
              %v1316 = vld [vmem:[%s288 + $0x1008] sm:$0xff]
              %1317 = vst [vmem:[%s289 + $0x1008] sm:$0xff] %v1316
              %v1318 = vld [vmem:[%s288 + $0x1010] sm:$0xff]
              %1319 = vst [vmem:[%s289 + $0x1010] sm:$0xff] %v1318
              %v1320 = vld [vmem:[%s288 + $0x1018] sm:$0xff]
              %1321 = vst [vmem:[%s289 + $0x1018] sm:$0xff] %v1320
              %v1322 = vld [vmem:[%s288 + $0x1020] sm:$0xff]
              %1323 = vst [vmem:[%s289 + $0x1020] sm:$0xff] %v1322
              %v1324 = vld [vmem:[%s288 + $0x1028] sm:$0xff]
              %1325 = vst [vmem:[%s289 + $0x1028] sm:$0xff] %v1324
              %v1326 = vld [vmem:[%s288 + $0x1030] sm:$0xff]
              %1327 = vst [vmem:[%s289 + $0x1030] sm:$0xff] %v1326
              %v1328 = vld [vmem:[%s288 + $0x1038] sm:$0xff]
              %1329 = vst [vmem:[%s289 + $0x1038] sm:$0xff] %v1328
              %v1330 = vld [vmem:[%s288 + $0x1040] sm:$0xff]
              %1331 = vst [vmem:[%s289 + $0x1040] sm:$0xff] %v1330
              %v1332 = vld [vmem:[%s288 + $0x1048] sm:$0xff]
              %1333 = vst [vmem:[%s289 + $0x1048] sm:$0xff] %v1332
              %v1334 = vld [vmem:[%s288 + $0x1050] sm:$0xff]
              %1335 = vst [vmem:[%s289 + $0x1050] sm:$0xff] %v1334
              %v1336 = vld [vmem:[%s288 + $0x1058] sm:$0xff]
              %1337 = vst [vmem:[%s289 + $0x1058] sm:$0xff] %v1336
              %v1338 = vld [vmem:[%s288 + $0x1060] sm:$0xff]
              %1339 = vst [vmem:[%s289 + $0x1060] sm:$0xff] %v1338
              %v1340 = vld [vmem:[%s288 + $0x1068] sm:$0xff]
              %1341 = vst [vmem:[%s289 + $0x1068] sm:$0xff] %v1340
              %v1342 = vld [vmem:[%s288 + $0x1070] sm:$0xff]
              %1343 = vst [vmem:[%s289 + $0x1070] sm:$0xff] %v1342
              %v1344 = vld [vmem:[%s288 + $0x1078] sm:$0xff]
              %1345 = vst [vmem:[%s289 + $0x1078] sm:$0xff] %v1344
              %v1346 = vld [vmem:[%s288 + $0x1080] sm:$0xff]
              %1347 = vst [vmem:[%s289 + $0x1080] sm:$0xff] %v1346
              %v1348 = vld [vmem:[%s288 + $0x1088] sm:$0xff]
              %1349 = vst [vmem:[%s289 + $0x1088] sm:$0xff] %v1348
              %v1350 = vld [vmem:[%s288 + $0x1090] sm:$0xff]
              %1351 = vst [vmem:[%s289 + $0x1090] sm:$0xff] %v1350
              %v1352 = vld [vmem:[%s288 + $0x1098] sm:$0xff]
              %1353 = vst [vmem:[%s289 + $0x1098] sm:$0xff] %v1352
              %v1354 = vld [vmem:[%s288 + $0x10a0] sm:$0xff]
              %1355 = vst [vmem:[%s289 + $0x10a0] sm:$0xff] %v1354
              %v1356 = vld [vmem:[%s288 + $0x10a8] sm:$0xff]
              %1357 = vst [vmem:[%s289 + $0x10a8] sm:$0xff] %v1356
              %v1358 = vld [vmem:[%s288 + $0x10b0] sm:$0xff]
              %1359 = vst [vmem:[%s289 + $0x10b0] sm:$0xff] %v1358
              %v1360 = vld [vmem:[%s288 + $0x10b8] sm:$0xff]
              %1361 = vst [vmem:[%s289 + $0x10b8] sm:$0xff] %v1360
              %v1362 = vld [vmem:[%s288 + $0x10c0] sm:$0xff]
              %1363 = vst [vmem:[%s289 + $0x10c0] sm:$0xff] %v1362
              %v1364 = vld [vmem:[%s288 + $0x10c8] sm:$0xff]
              %1365 = vst [vmem:[%s289 + $0x10c8] sm:$0xff] %v1364
              %v1366 = vld [vmem:[%s288 + $0x10d0] sm:$0xff]
              %1367 = vst [vmem:[%s289 + $0x10d0] sm:$0xff] %v1366
              %v1368 = vld [vmem:[%s288 + $0x10d8] sm:$0xff]
              %1369 = vst [vmem:[%s289 + $0x10d8] sm:$0xff] %v1368
              %v1370 = vld [vmem:[%s288 + $0x10e0] sm:$0xff]
              %1371 = vst [vmem:[%s289 + $0x10e0] sm:$0xff] %v1370
              %v1372 = vld [vmem:[%s288 + $0x10e8] sm:$0xff]
              %1373 = vst [vmem:[%s289 + $0x10e8] sm:$0xff] %v1372
              %v1374 = vld [vmem:[%s288 + $0x10f0] sm:$0xff]
              %1375 = vst [vmem:[%s289 + $0x10f0] sm:$0xff] %v1374
              %v1376 = vld [vmem:[%s288 + $0x10f8] sm:$0xff]
              %1377 = vst [vmem:[%s289 + $0x10f8] sm:$0xff] %v1376
              %v1378 = vld [vmem:[%s288 + $0x1100] sm:$0xff]
              %1379 = vst [vmem:[%s289 + $0x1100] sm:$0xff] %v1378
              %v1380 = vld [vmem:[%s288 + $0x1108] sm:$0xff]
              %1381 = vst [vmem:[%s289 + $0x1108] sm:$0xff] %v1380
              %v1382 = vld [vmem:[%s288 + $0x1110] sm:$0xff]
              %1383 = vst [vmem:[%s289 + $0x1110] sm:$0xff] %v1382
              %v1384 = vld [vmem:[%s288 + $0x1118] sm:$0xff]
              %1385 = vst [vmem:[%s289 + $0x1118] sm:$0xff] %v1384
              %v1386 = vld [vmem:[%s288 + $0x1120] sm:$0xff]
              %1387 = vst [vmem:[%s289 + $0x1120] sm:$0xff] %v1386
              %v1388 = vld [vmem:[%s288 + $0x1128] sm:$0xff]
              %1389 = vst [vmem:[%s289 + $0x1128] sm:$0xff] %v1388
              %v1390 = vld [vmem:[%s288 + $0x1130] sm:$0xff]
              %1391 = vst [vmem:[%s289 + $0x1130] sm:$0xff] %v1390
              %v1392 = vld [vmem:[%s288 + $0x1138] sm:$0xff]
              %1393 = vst [vmem:[%s289 + $0x1138] sm:$0xff] %v1392
              %v1394 = vld [vmem:[%s288 + $0x1140] sm:$0xff]
              %1395 = vst [vmem:[%s289 + $0x1140] sm:$0xff] %v1394
              %v1396 = vld [vmem:[%s288 + $0x1148] sm:$0xff]
              %1397 = vst [vmem:[%s289 + $0x1148] sm:$0xff] %v1396
              %v1398 = vld [vmem:[%s288 + $0x1150] sm:$0xff]
              %1399 = vst [vmem:[%s289 + $0x1150] sm:$0xff] %v1398
              %v1400 = vld [vmem:[%s288 + $0x1158] sm:$0xff]
              %1401 = vst [vmem:[%s289 + $0x1158] sm:$0xff] %v1400
              %v1402 = vld [vmem:[%s288 + $0x1160] sm:$0xff]
              %1403 = vst [vmem:[%s289 + $0x1160] sm:$0xff] %v1402
              %v1404 = vld [vmem:[%s288 + $0x1168] sm:$0xff]
              %1405 = vst [vmem:[%s289 + $0x1168] sm:$0xff] %v1404
              %v1406 = vld [vmem:[%s288 + $0x1170] sm:$0xff]
              %1407 = vst [vmem:[%s289 + $0x1170] sm:$0xff] %v1406
              %v1408 = vld [vmem:[%s288 + $0x1178] sm:$0xff]
              %1409 = vst [vmem:[%s289 + $0x1178] sm:$0xff] %v1408
              %v1410 = vld [vmem:[%s288 + $0x1180] sm:$0xff]
              %1411 = vst [vmem:[%s289 + $0x1180] sm:$0xff] %v1410
              %v1412 = vld [vmem:[%s288 + $0x1188] sm:$0xff]
              %1413 = vst [vmem:[%s289 + $0x1188] sm:$0xff] %v1412
              %v1414 = vld [vmem:[%s288 + $0x1190] sm:$0xff]
              %1415 = vst [vmem:[%s289 + $0x1190] sm:$0xff] %v1414
              %v1416 = vld [vmem:[%s288 + $0x1198] sm:$0xff]
              %1417 = vst [vmem:[%s289 + $0x1198] sm:$0xff] %v1416
              %v1418 = vld [vmem:[%s288 + $0x11a0] sm:$0xff]
              %1419 = vst [vmem:[%s289 + $0x11a0] sm:$0xff] %v1418
              %v1420 = vld [vmem:[%s288 + $0x11a8] sm:$0xff]
              %1421 = vst [vmem:[%s289 + $0x11a8] sm:$0xff] %v1420
              %v1422 = vld [vmem:[%s288 + $0x11b0] sm:$0xff]
              %1423 = vst [vmem:[%s289 + $0x11b0] sm:$0xff] %v1422
              %v1424 = vld [vmem:[%s288 + $0x11b8] sm:$0xff]
              %1425 = vst [vmem:[%s289 + $0x11b8] sm:$0xff] %v1424
              %v1426 = vld [vmem:[%s288 + $0x11c0] sm:$0xff]
              %1427 = vst [vmem:[%s289 + $0x11c0] sm:$0xff] %v1426
              %v1428 = vld [vmem:[%s288 + $0x11c8] sm:$0xff]
              %1429 = vst [vmem:[%s289 + $0x11c8] sm:$0xff] %v1428
              %v1430 = vld [vmem:[%s288 + $0x11d0] sm:$0xff]
              %1431 = vst [vmem:[%s289 + $0x11d0] sm:$0xff] %v1430
              %v1432 = vld [vmem:[%s288 + $0x11d8] sm:$0xff]
              %1433 = vst [vmem:[%s289 + $0x11d8] sm:$0xff] %v1432
              %v1434 = vld [vmem:[%s288 + $0x11e0] sm:$0xff]
              %1435 = vst [vmem:[%s289 + $0x11e0] sm:$0xff] %v1434
              %v1436 = vld [vmem:[%s288 + $0x11e8] sm:$0xff]
              %1437 = vst [vmem:[%s289 + $0x11e8] sm:$0xff] %v1436
              %v1438 = vld [vmem:[%s288 + $0x11f0] sm:$0xff]
              %1439 = vst [vmem:[%s289 + $0x11f0] sm:$0xff] %v1438
              %v1440 = vld [vmem:[%s288 + $0x11f8] sm:$0xff]
              %1441 = vst [vmem:[%s289 + $0x11f8] sm:$0xff] %v1440
              %v1442 = vld [vmem:[%s288 + $0x1200] sm:$0xff]
              %1443 = vst [vmem:[%s289 + $0x1200] sm:$0xff] %v1442
              %v1444 = vld [vmem:[%s288 + $0x1208] sm:$0xff]
              %1445 = vst [vmem:[%s289 + $0x1208] sm:$0xff] %v1444
              %v1446 = vld [vmem:[%s288 + $0x1210] sm:$0xff]
              %1447 = vst [vmem:[%s289 + $0x1210] sm:$0xff] %v1446
              %v1448 = vld [vmem:[%s288 + $0x1218] sm:$0xff]
              %1449 = vst [vmem:[%s289 + $0x1218] sm:$0xff] %v1448
              %v1450 = vld [vmem:[%s288 + $0x1220] sm:$0xff]
              %1451 = vst [vmem:[%s289 + $0x1220] sm:$0xff] %v1450
              %v1452 = vld [vmem:[%s288 + $0x1228] sm:$0xff]
              %1453 = vst [vmem:[%s289 + $0x1228] sm:$0xff] %v1452
              %v1454 = vld [vmem:[%s288 + $0x1230] sm:$0xff]
              %1455 = vst [vmem:[%s289 + $0x1230] sm:$0xff] %v1454
              %v1456 = vld [vmem:[%s288 + $0x1238] sm:$0xff]
              %1457 = vst [vmem:[%s289 + $0x1238] sm:$0xff] %v1456
              %v1458 = vld [vmem:[%s288 + $0x1240] sm:$0xff]
              %1459 = vst [vmem:[%s289 + $0x1240] sm:$0xff] %v1458
              %v1460 = vld [vmem:[%s288 + $0x1248] sm:$0xff]
              %1461 = vst [vmem:[%s289 + $0x1248] sm:$0xff] %v1460
              %v1462 = vld [vmem:[%s288 + $0x1250] sm:$0xff]
              %1463 = vst [vmem:[%s289 + $0x1250] sm:$0xff] %v1462
              %v1464 = vld [vmem:[%s288 + $0x1258] sm:$0xff]
              %1465 = vst [vmem:[%s289 + $0x1258] sm:$0xff] %v1464
              %v1466 = vld [vmem:[%s288 + $0x1260] sm:$0xff]
              %1467 = vst [vmem:[%s289 + $0x1260] sm:$0xff] %v1466
              %v1468 = vld [vmem:[%s288 + $0x1268] sm:$0xff]
              %1469 = vst [vmem:[%s289 + $0x1268] sm:$0xff] %v1468
              %v1470 = vld [vmem:[%s288 + $0x1270] sm:$0xff]
              %1471 = vst [vmem:[%s289 + $0x1270] sm:$0xff] %v1470
              %v1472 = vld [vmem:[%s288 + $0x1278] sm:$0xff]
              %1473 = vst [vmem:[%s289 + $0x1278] sm:$0xff] %v1472
              %v1474 = vld [vmem:[%s288 + $0x1280] sm:$0xff]
              %1475 = vst [vmem:[%s289 + $0x1280] sm:$0xff] %v1474
              %v1476 = vld [vmem:[%s288 + $0x1288] sm:$0xff]
              %1477 = vst [vmem:[%s289 + $0x1288] sm:$0xff] %v1476
              %v1478 = vld [vmem:[%s288 + $0x1290] sm:$0xff]
              %1479 = vst [vmem:[%s289 + $0x1290] sm:$0xff] %v1478
              %v1480 = vld [vmem:[%s288 + $0x1298] sm:$0xff]
              %1481 = vst [vmem:[%s289 + $0x1298] sm:$0xff] %v1480
              %v1482 = vld [vmem:[%s288 + $0x12a0] sm:$0xff]
              %1483 = vst [vmem:[%s289 + $0x12a0] sm:$0xff] %v1482
              %v1484 = vld [vmem:[%s288 + $0x12a8] sm:$0xff]
              %1485 = vst [vmem:[%s289 + $0x12a8] sm:$0xff] %v1484
              %v1486 = vld [vmem:[%s288 + $0x12b0] sm:$0xff]
              %1487 = vst [vmem:[%s289 + $0x12b0] sm:$0xff] %v1486
              %v1488 = vld [vmem:[%s288 + $0x12b8] sm:$0xff]
              %1489 = vst [vmem:[%s289 + $0x12b8] sm:$0xff] %v1488
              %v1490 = vld [vmem:[%s288 + $0x12c0] sm:$0xff]
              %1491 = vst [vmem:[%s289 + $0x12c0] sm:$0xff] %v1490
              %v1492 = vld [vmem:[%s288 + $0x12c8] sm:$0xff]
              %1493 = vst [vmem:[%s289 + $0x12c8] sm:$0xff] %v1492
              %v1494 = vld [vmem:[%s288 + $0x12d0] sm:$0xff]
              %1495 = vst [vmem:[%s289 + $0x12d0] sm:$0xff] %v1494
              %v1496 = vld [vmem:[%s288 + $0x12d8] sm:$0xff]
              %1497 = vst [vmem:[%s289 + $0x12d8] sm:$0xff] %v1496
              %v1498 = vld [vmem:[%s288 + $0x12e0] sm:$0xff]
              %1499 = vst [vmem:[%s289 + $0x12e0] sm:$0xff] %v1498
              %v1500 = vld [vmem:[%s288 + $0x12e8] sm:$0xff]
              %1501 = vst [vmem:[%s289 + $0x12e8] sm:$0xff] %v1500
              %v1502 = vld [vmem:[%s288 + $0x12f0] sm:$0xff]
              %1503 = vst [vmem:[%s289 + $0x12f0] sm:$0xff] %v1502
              %v1504 = vld [vmem:[%s288 + $0x12f8] sm:$0xff]
              %1505 = vst [vmem:[%s289 + $0x12f8] sm:$0xff] %v1504
              %v1506 = vld [vmem:[%s288 + $0x1300] sm:$0xff]
              %1507 = vst [vmem:[%s289 + $0x1300] sm:$0xff] %v1506
              %v1508 = vld [vmem:[%s288 + $0x1308] sm:$0xff]
              %1509 = vst [vmem:[%s289 + $0x1308] sm:$0xff] %v1508
              %v1510 = vld [vmem:[%s288 + $0x1310] sm:$0xff]
              %1511 = vst [vmem:[%s289 + $0x1310] sm:$0xff] %v1510
              %v1512 = vld [vmem:[%s288 + $0x1318] sm:$0xff]
              %1513 = vst [vmem:[%s289 + $0x1318] sm:$0xff] %v1512
              %v1514 = vld [vmem:[%s288 + $0x1320] sm:$0xff]
              %1515 = vst [vmem:[%s289 + $0x1320] sm:$0xff] %v1514
              %v1516 = vld [vmem:[%s288 + $0x1328] sm:$0xff]
              %1517 = vst [vmem:[%s289 + $0x1328] sm:$0xff] %v1516
              %v1518 = vld [vmem:[%s288 + $0x1330] sm:$0xff]
              %1519 = vst [vmem:[%s289 + $0x1330] sm:$0xff] %v1518
              %v1520 = vld [vmem:[%s288 + $0x1338] sm:$0xff]
              %1521 = vst [vmem:[%s289 + $0x1338] sm:$0xff] %v1520
              %v1522 = vld [vmem:[%s288 + $0x1340] sm:$0xff]
              %1523 = vst [vmem:[%s289 + $0x1340] sm:$0xff] %v1522
              %v1524 = vld [vmem:[%s288 + $0x1348] sm:$0xff]
              %1525 = vst [vmem:[%s289 + $0x1348] sm:$0xff] %v1524
              %v1526 = vld [vmem:[%s288 + $0x1350] sm:$0xff]
              %1527 = vst [vmem:[%s289 + $0x1350] sm:$0xff] %v1526
              %v1528 = vld [vmem:[%s288 + $0x1358] sm:$0xff]
              %1529 = vst [vmem:[%s289 + $0x1358] sm:$0xff] %v1528
              %v1530 = vld [vmem:[%s288 + $0x1360] sm:$0xff]
              %1531 = vst [vmem:[%s289 + $0x1360] sm:$0xff] %v1530
              %v1532 = vld [vmem:[%s288 + $0x1368] sm:$0xff]
              %1533 = vst [vmem:[%s289 + $0x1368] sm:$0xff] %v1532
              %v1534 = vld [vmem:[%s288 + $0x1370] sm:$0xff]
              %1535 = vst [vmem:[%s289 + $0x1370] sm:$0xff] %v1534
              %v1536 = vld [vmem:[%s288 + $0x1378] sm:$0xff]
              %1537 = vst [vmem:[%s289 + $0x1378] sm:$0xff] %v1536
              %v1538 = vld [vmem:[%s288 + $0x1380] sm:$0xff]
              %1539 = vst [vmem:[%s289 + $0x1380] sm:$0xff] %v1538
              %v1540 = vld [vmem:[%s288 + $0x1388] sm:$0xff]
              %1541 = vst [vmem:[%s289 + $0x1388] sm:$0xff] %v1540
              %v1542 = vld [vmem:[%s288 + $0x1390] sm:$0xff]
              %1543 = vst [vmem:[%s289 + $0x1390] sm:$0xff] %v1542
              %v1544 = vld [vmem:[%s288 + $0x1398] sm:$0xff]
              %1545 = vst [vmem:[%s289 + $0x1398] sm:$0xff] %v1544
              %v1546 = vld [vmem:[%s288 + $0x13a0] sm:$0xff]
              %1547 = vst [vmem:[%s289 + $0x13a0] sm:$0xff] %v1546
              %v1548 = vld [vmem:[%s288 + $0x13a8] sm:$0xff]
              %1549 = vst [vmem:[%s289 + $0x13a8] sm:$0xff] %v1548
              %v1550 = vld [vmem:[%s288 + $0x13b0] sm:$0xff]
              %1551 = vst [vmem:[%s289 + $0x13b0] sm:$0xff] %v1550
              %v1552 = vld [vmem:[%s288 + $0x13b8] sm:$0xff]
              %1553 = vst [vmem:[%s289 + $0x13b8] sm:$0xff] %v1552
              %v1554 = vld [vmem:[%s288 + $0x13c0] sm:$0xff]
              %1555 = vst [vmem:[%s289 + $0x13c0] sm:$0xff] %v1554
              %v1556 = vld [vmem:[%s288 + $0x13c8] sm:$0xff]
              %1557 = vst [vmem:[%s289 + $0x13c8] sm:$0xff] %v1556
              %v1558 = vld [vmem:[%s288 + $0x13d0] sm:$0xff]
              %1559 = vst [vmem:[%s289 + $0x13d0] sm:$0xff] %v1558
              %v1560 = vld [vmem:[%s288 + $0x13d8] sm:$0xff]
              %1561 = vst [vmem:[%s289 + $0x13d8] sm:$0xff] %v1560
              %v1562 = vld [vmem:[%s288 + $0x13e0] sm:$0xff]
              %1563 = vst [vmem:[%s289 + $0x13e0] sm:$0xff] %v1562
              %v1564 = vld [vmem:[%s288 + $0x13e8] sm:$0xff]
              %1565 = vst [vmem:[%s289 + $0x13e8] sm:$0xff] %v1564
              %v1566 = vld [vmem:[%s288 + $0x13f0] sm:$0xff]
              %1567 = vst [vmem:[%s289 + $0x13f0] sm:$0xff] %v1566
              %v1568 = vld [vmem:[%s288 + $0x13f8] sm:$0xff]
              %1569 = vst [vmem:[%s289 + $0x13f8] sm:$0xff] %v1568
              %v1570 = vld [vmem:[%s288 + $0x1400] sm:$0xff]
              %1571 = vst [vmem:[%s289 + $0x1400] sm:$0xff] %v1570
              %v1572 = vld [vmem:[%s288 + $0x1408] sm:$0xff]
              %1573 = vst [vmem:[%s289 + $0x1408] sm:$0xff] %v1572
              %v1574 = vld [vmem:[%s288 + $0x1410] sm:$0xff]
              %1575 = vst [vmem:[%s289 + $0x1410] sm:$0xff] %v1574
              %v1576 = vld [vmem:[%s288 + $0x1418] sm:$0xff]
              %1577 = vst [vmem:[%s289 + $0x1418] sm:$0xff] %v1576
              %v1578 = vld [vmem:[%s288 + $0x1420] sm:$0xff]
              %1579 = vst [vmem:[%s289 + $0x1420] sm:$0xff] %v1578
              %v1580 = vld [vmem:[%s288 + $0x1428] sm:$0xff]
              %1581 = vst [vmem:[%s289 + $0x1428] sm:$0xff] %v1580
              %v1582 = vld [vmem:[%s288 + $0x1430] sm:$0xff]
              %1583 = vst [vmem:[%s289 + $0x1430] sm:$0xff] %v1582
              %v1584 = vld [vmem:[%s288 + $0x1438] sm:$0xff]
              %1585 = vst [vmem:[%s289 + $0x1438] sm:$0xff] %v1584
              %v1586 = vld [vmem:[%s288 + $0x1440] sm:$0xff]
              %1587 = vst [vmem:[%s289 + $0x1440] sm:$0xff] %v1586
              %v1588 = vld [vmem:[%s288 + $0x1448] sm:$0xff]
              %1589 = vst [vmem:[%s289 + $0x1448] sm:$0xff] %v1588
              %v1590 = vld [vmem:[%s288 + $0x1450] sm:$0xff]
              %1591 = vst [vmem:[%s289 + $0x1450] sm:$0xff] %v1590
              %v1592 = vld [vmem:[%s288 + $0x1458] sm:$0xff]
              %1593 = vst [vmem:[%s289 + $0x1458] sm:$0xff] %v1592
              %v1594 = vld [vmem:[%s288 + $0x1460] sm:$0xff]
              %1595 = vst [vmem:[%s289 + $0x1460] sm:$0xff] %v1594
              %v1596 = vld [vmem:[%s288 + $0x1468] sm:$0xff]
              %1597 = vst [vmem:[%s289 + $0x1468] sm:$0xff] %v1596
              %v1598 = vld [vmem:[%s288 + $0x1470] sm:$0xff]
              %1599 = vst [vmem:[%s289 + $0x1470] sm:$0xff] %v1598
              %v1600 = vld [vmem:[%s288 + $0x1478] sm:$0xff]
              %1601 = vst [vmem:[%s289 + $0x1478] sm:$0xff] %v1600
              %v1602 = vld [vmem:[%s288 + $0x1480] sm:$0xff]
              %1603 = vst [vmem:[%s289 + $0x1480] sm:$0xff] %v1602
              %v1604 = vld [vmem:[%s288 + $0x1488] sm:$0xff]
              %1605 = vst [vmem:[%s289 + $0x1488] sm:$0xff] %v1604
              %v1606 = vld [vmem:[%s288 + $0x1490] sm:$0xff]
              %1607 = vst [vmem:[%s289 + $0x1490] sm:$0xff] %v1606
              %v1608 = vld [vmem:[%s288 + $0x1498] sm:$0xff]
              %1609 = vst [vmem:[%s289 + $0x1498] sm:$0xff] %v1608
              %v1610 = vld [vmem:[%s288 + $0x14a0] sm:$0xff]
              %1611 = vst [vmem:[%s289 + $0x14a0] sm:$0xff] %v1610
              %v1612 = vld [vmem:[%s288 + $0x14a8] sm:$0xff]
              %1613 = vst [vmem:[%s289 + $0x14a8] sm:$0xff] %v1612
              %v1614 = vld [vmem:[%s288 + $0x14b0] sm:$0xff]
              %1615 = vst [vmem:[%s289 + $0x14b0] sm:$0xff] %v1614
              %v1616 = vld [vmem:[%s288 + $0x14b8] sm:$0xff]
              %1617 = vst [vmem:[%s289 + $0x14b8] sm:$0xff] %v1616
              %v1618 = vld [vmem:[%s288 + $0x14c0] sm:$0xff]
              %1619 = vst [vmem:[%s289 + $0x14c0] sm:$0xff] %v1618
              %v1620 = vld [vmem:[%s288 + $0x14c8] sm:$0xff]
              %1621 = vst [vmem:[%s289 + $0x14c8] sm:$0xff] %v1620
              %v1622 = vld [vmem:[%s288 + $0x14d0] sm:$0xff]
              %1623 = vst [vmem:[%s289 + $0x14d0] sm:$0xff] %v1622
              %v1624 = vld [vmem:[%s288 + $0x14d8] sm:$0xff]
              %1625 = vst [vmem:[%s289 + $0x14d8] sm:$0xff] %v1624
              %v1626 = vld [vmem:[%s288 + $0x14e0] sm:$0xff]
              %1627 = vst [vmem:[%s289 + $0x14e0] sm:$0xff] %v1626
              %v1628 = vld [vmem:[%s288 + $0x14e8] sm:$0xff]
              %1629 = vst [vmem:[%s289 + $0x14e8] sm:$0xff] %v1628
              %v1630 = vld [vmem:[%s288 + $0x14f0] sm:$0xff]
              %1631 = vst [vmem:[%s289 + $0x14f0] sm:$0xff] %v1630
              %v1632 = vld [vmem:[%s288 + $0x14f8] sm:$0xff]
              %1633 = vst [vmem:[%s289 + $0x14f8] sm:$0xff] %v1632
              %v1634 = vld [vmem:[%s288 + $0x1500] sm:$0xff]
              %1635 = vst [vmem:[%s289 + $0x1500] sm:$0xff] %v1634
              %v1636 = vld [vmem:[%s288 + $0x1508] sm:$0xff]
              %1637 = vst [vmem:[%s289 + $0x1508] sm:$0xff] %v1636
              %v1638 = vld [vmem:[%s288 + $0x1510] sm:$0xff]
              %1639 = vst [vmem:[%s289 + $0x1510] sm:$0xff] %v1638
              %v1640 = vld [vmem:[%s288 + $0x1518] sm:$0xff]
              %1641 = vst [vmem:[%s289 + $0x1518] sm:$0xff] %v1640
              %v1642 = vld [vmem:[%s288 + $0x1520] sm:$0xff]
              %1643 = vst [vmem:[%s289 + $0x1520] sm:$0xff] %v1642
              %v1644 = vld [vmem:[%s288 + $0x1528] sm:$0xff]
              %1645 = vst [vmem:[%s289 + $0x1528] sm:$0xff] %v1644
              %v1646 = vld [vmem:[%s288 + $0x1530] sm:$0xff]
              %1647 = vst [vmem:[%s289 + $0x1530] sm:$0xff] %v1646
              %v1648 = vld [vmem:[%s288 + $0x1538] sm:$0xff]
              %1649 = vst [vmem:[%s289 + $0x1538] sm:$0xff] %v1648
              %v1650 = vld [vmem:[%s288 + $0x1540] sm:$0xff]
              %1651 = vst [vmem:[%s289 + $0x1540] sm:$0xff] %v1650
              %v1652 = vld [vmem:[%s288 + $0x1548] sm:$0xff]
              %1653 = vst [vmem:[%s289 + $0x1548] sm:$0xff] %v1652
              %v1654 = vld [vmem:[%s288 + $0x1550] sm:$0xff]
              %1655 = vst [vmem:[%s289 + $0x1550] sm:$0xff] %v1654
              %v1656 = vld [vmem:[%s288 + $0x1558] sm:$0xff]
              %1657 = vst [vmem:[%s289 + $0x1558] sm:$0xff] %v1656
              %v1658 = vld [vmem:[%s288 + $0x1560] sm:$0xff]
              %1659 = vst [vmem:[%s289 + $0x1560] sm:$0xff] %v1658
              %v1660 = vld [vmem:[%s288 + $0x1568] sm:$0xff]
              %1661 = vst [vmem:[%s289 + $0x1568] sm:$0xff] %v1660
              %v1662 = vld [vmem:[%s288 + $0x1570] sm:$0xff]
              %1663 = vst [vmem:[%s289 + $0x1570] sm:$0xff] %v1662
              %v1664 = vld [vmem:[%s288 + $0x1578] sm:$0xff]
              %1665 = vst [vmem:[%s289 + $0x1578] sm:$0xff] %v1664
              %v1666 = vld [vmem:[%s288 + $0x1580] sm:$0xff]
              %1667 = vst [vmem:[%s289 + $0x1580] sm:$0xff] %v1666
              %v1668 = vld [vmem:[%s288 + $0x1588] sm:$0xff]
              %1669 = vst [vmem:[%s289 + $0x1588] sm:$0xff] %v1668
              %v1670 = vld [vmem:[%s288 + $0x1590] sm:$0xff]
              %1671 = vst [vmem:[%s289 + $0x1590] sm:$0xff] %v1670
              %v1672 = vld [vmem:[%s288 + $0x1598] sm:$0xff]
              %1673 = vst [vmem:[%s289 + $0x1598] sm:$0xff] %v1672
              %v1674 = vld [vmem:[%s288 + $0x15a0] sm:$0xff]
              %1675 = vst [vmem:[%s289 + $0x15a0] sm:$0xff] %v1674
              %v1676 = vld [vmem:[%s288 + $0x15a8] sm:$0xff]
              %1677 = vst [vmem:[%s289 + $0x15a8] sm:$0xff] %v1676
              %v1678 = vld [vmem:[%s288 + $0x15b0] sm:$0xff]
              %1679 = vst [vmem:[%s289 + $0x15b0] sm:$0xff] %v1678
              %v1680 = vld [vmem:[%s288 + $0x15b8] sm:$0xff]
              %1681 = vst [vmem:[%s289 + $0x15b8] sm:$0xff] %v1680
              %v1682 = vld [vmem:[%s288 + $0x15c0] sm:$0xff]
              %1683 = vst [vmem:[%s289 + $0x15c0] sm:$0xff] %v1682
              %v1684 = vld [vmem:[%s288 + $0x15c8] sm:$0xff]
              %1685 = vst [vmem:[%s289 + $0x15c8] sm:$0xff] %v1684
              %v1686 = vld [vmem:[%s288 + $0x15d0] sm:$0xff]
              %1687 = vst [vmem:[%s289 + $0x15d0] sm:$0xff] %v1686
              %v1688 = vld [vmem:[%s288 + $0x15d8] sm:$0xff]
              %1689 = vst [vmem:[%s289 + $0x15d8] sm:$0xff] %v1688
              %v1690 = vld [vmem:[%s288 + $0x15e0] sm:$0xff]
              %1691 = vst [vmem:[%s289 + $0x15e0] sm:$0xff] %v1690
              %v1692 = vld [vmem:[%s288 + $0x15e8] sm:$0xff]
              %1693 = vst [vmem:[%s289 + $0x15e8] sm:$0xff] %v1692
              %v1694 = vld [vmem:[%s288 + $0x15f0] sm:$0xff]
              %1695 = vst [vmem:[%s289 + $0x15f0] sm:$0xff] %v1694
              %v1696 = vld [vmem:[%s288 + $0x15f8] sm:$0xff]
              %1697 = vst [vmem:[%s289 + $0x15f8] sm:$0xff] %v1696
              %v1698 = vld [vmem:[%s288 + $0x1600] sm:$0xff]
              %1699 = vst [vmem:[%s289 + $0x1600] sm:$0xff] %v1698
              %v1700 = vld [vmem:[%s288 + $0x1608] sm:$0xff]
              %1701 = vst [vmem:[%s289 + $0x1608] sm:$0xff] %v1700
              %v1702 = vld [vmem:[%s288 + $0x1610] sm:$0xff]
              %1703 = vst [vmem:[%s289 + $0x1610] sm:$0xff] %v1702
              %v1704 = vld [vmem:[%s288 + $0x1618] sm:$0xff]
              %1705 = vst [vmem:[%s289 + $0x1618] sm:$0xff] %v1704
              %v1706 = vld [vmem:[%s288 + $0x1620] sm:$0xff]
              %1707 = vst [vmem:[%s289 + $0x1620] sm:$0xff] %v1706
              %v1708 = vld [vmem:[%s288 + $0x1628] sm:$0xff]
              %1709 = vst [vmem:[%s289 + $0x1628] sm:$0xff] %v1708
              %v1710 = vld [vmem:[%s288 + $0x1630] sm:$0xff]
              %1711 = vst [vmem:[%s289 + $0x1630] sm:$0xff] %v1710
              %v1712 = vld [vmem:[%s288 + $0x1638] sm:$0xff]
              %1713 = vst [vmem:[%s289 + $0x1638] sm:$0xff] %v1712
              %v1714 = vld [vmem:[%s288 + $0x1640] sm:$0xff]
              %1715 = vst [vmem:[%s289 + $0x1640] sm:$0xff] %v1714
              %v1716 = vld [vmem:[%s288 + $0x1648] sm:$0xff]
              %1717 = vst [vmem:[%s289 + $0x1648] sm:$0xff] %v1716
              %v1718 = vld [vmem:[%s288 + $0x1650] sm:$0xff]
              %1719 = vst [vmem:[%s289 + $0x1650] sm:$0xff] %v1718
              %v1720 = vld [vmem:[%s288 + $0x1658] sm:$0xff]
              %1721 = vst [vmem:[%s289 + $0x1658] sm:$0xff] %v1720
              %v1722 = vld [vmem:[%s288 + $0x1660] sm:$0xff]
              %1723 = vst [vmem:[%s289 + $0x1660] sm:$0xff] %v1722
              %v1724 = vld [vmem:[%s288 + $0x1668] sm:$0xff]
              %1725 = vst [vmem:[%s289 + $0x1668] sm:$0xff] %v1724
              %v1726 = vld [vmem:[%s288 + $0x1670] sm:$0xff]
              %1727 = vst [vmem:[%s289 + $0x1670] sm:$0xff] %v1726
              %v1728 = vld [vmem:[%s288 + $0x1678] sm:$0xff]
              %1729 = vst [vmem:[%s289 + $0x1678] sm:$0xff] %v1728
              %v1730 = vld [vmem:[%s288 + $0x1680] sm:$0xff]
              %1731 = vst [vmem:[%s289 + $0x1680] sm:$0xff] %v1730
              %v1732 = vld [vmem:[%s288 + $0x1688] sm:$0xff]
              %1733 = vst [vmem:[%s289 + $0x1688] sm:$0xff] %v1732
              %v1734 = vld [vmem:[%s288 + $0x1690] sm:$0xff]
              %1735 = vst [vmem:[%s289 + $0x1690] sm:$0xff] %v1734
              %v1736 = vld [vmem:[%s288 + $0x1698] sm:$0xff]
              %1737 = vst [vmem:[%s289 + $0x1698] sm:$0xff] %v1736
              %v1738 = vld [vmem:[%s288 + $0x16a0] sm:$0xff]
              %1739 = vst [vmem:[%s289 + $0x16a0] sm:$0xff] %v1738
              %v1740 = vld [vmem:[%s288 + $0x16a8] sm:$0xff]
              %1741 = vst [vmem:[%s289 + $0x16a8] sm:$0xff] %v1740
              %v1742 = vld [vmem:[%s288 + $0x16b0] sm:$0xff]
              %1743 = vst [vmem:[%s289 + $0x16b0] sm:$0xff] %v1742
              %v1744 = vld [vmem:[%s288 + $0x16b8] sm:$0xff]
              %1745 = vst [vmem:[%s289 + $0x16b8] sm:$0xff] %v1744
              %v1746 = vld [vmem:[%s288 + $0x16c0] sm:$0xff]
              %1747 = vst [vmem:[%s289 + $0x16c0] sm:$0xff] %v1746
              %v1748 = vld [vmem:[%s288 + $0x16c8] sm:$0xff]
              %1749 = vst [vmem:[%s289 + $0x16c8] sm:$0xff] %v1748
              %v1750 = vld [vmem:[%s288 + $0x16d0] sm:$0xff]
              %1751 = vst [vmem:[%s289 + $0x16d0] sm:$0xff] %v1750
              %v1752 = vld [vmem:[%s288 + $0x16d8] sm:$0xff]
              %1753 = vst [vmem:[%s289 + $0x16d8] sm:$0xff] %v1752
              %v1754 = vld [vmem:[%s288 + $0x16e0] sm:$0xff]
              %1755 = vst [vmem:[%s289 + $0x16e0] sm:$0xff] %v1754
              %v1756 = vld [vmem:[%s288 + $0x16e8] sm:$0xff]
              %1757 = vst [vmem:[%s289 + $0x16e8] sm:$0xff] %v1756
              %v1758 = vld [vmem:[%s288 + $0x16f0] sm:$0xff]
              %1759 = vst [vmem:[%s289 + $0x16f0] sm:$0xff] %v1758
              %v1760 = vld [vmem:[%s288 + $0x16f8] sm:$0xff]
              %1761 = vst [vmem:[%s289 + $0x16f8] sm:$0xff] %v1760
              %v1762 = vld [vmem:[%s288 + $0x1700] sm:$0xff]
              %1763 = vst [vmem:[%s289 + $0x1700] sm:$0xff] %v1762
              %v1764 = vld [vmem:[%s288 + $0x1708] sm:$0xff]
              %1765 = vst [vmem:[%s289 + $0x1708] sm:$0xff] %v1764
              %v1766 = vld [vmem:[%s288 + $0x1710] sm:$0xff]
              %1767 = vst [vmem:[%s289 + $0x1710] sm:$0xff] %v1766
              %v1768 = vld [vmem:[%s288 + $0x1718] sm:$0xff]
              %1769 = vst [vmem:[%s289 + $0x1718] sm:$0xff] %v1768
              %v1770 = vld [vmem:[%s288 + $0x1720] sm:$0xff]
              %1771 = vst [vmem:[%s289 + $0x1720] sm:$0xff] %v1770
              %v1772 = vld [vmem:[%s288 + $0x1728] sm:$0xff]
              %1773 = vst [vmem:[%s289 + $0x1728] sm:$0xff] %v1772
              %v1774 = vld [vmem:[%s288 + $0x1730] sm:$0xff]
              %1775 = vst [vmem:[%s289 + $0x1730] sm:$0xff] %v1774
              %v1776 = vld [vmem:[%s288 + $0x1738] sm:$0xff]
              %1777 = vst [vmem:[%s289 + $0x1738] sm:$0xff] %v1776
              %v1778 = vld [vmem:[%s288 + $0x1740] sm:$0xff]
              %1779 = vst [vmem:[%s289 + $0x1740] sm:$0xff] %v1778
              %v1780 = vld [vmem:[%s288 + $0x1748] sm:$0xff]
              %1781 = vst [vmem:[%s289 + $0x1748] sm:$0xff] %v1780
              %v1782 = vld [vmem:[%s288 + $0x1750] sm:$0xff]
              %1783 = vst [vmem:[%s289 + $0x1750] sm:$0xff] %v1782
              %v1784 = vld [vmem:[%s288 + $0x1758] sm:$0xff]
              %1785 = vst [vmem:[%s289 + $0x1758] sm:$0xff] %v1784
              %v1786 = vld [vmem:[%s288 + $0x1760] sm:$0xff]
              %1787 = vst [vmem:[%s289 + $0x1760] sm:$0xff] %v1786
              %v1788 = vld [vmem:[%s288 + $0x1768] sm:$0xff]
              %1789 = vst [vmem:[%s289 + $0x1768] sm:$0xff] %v1788
              %v1790 = vld [vmem:[%s288 + $0x1770] sm:$0xff]
              %1791 = vst [vmem:[%s289 + $0x1770] sm:$0xff] %v1790
              %v1792 = vld [vmem:[%s288 + $0x1778] sm:$0xff]
              %1793 = vst [vmem:[%s289 + $0x1778] sm:$0xff] %v1792
              %v1794 = vld [vmem:[%s288 + $0x1780] sm:$0xff]
              %1795 = vst [vmem:[%s289 + $0x1780] sm:$0xff] %v1794
              %v1796 = vld [vmem:[%s288 + $0x1788] sm:$0xff]
              %1797 = vst [vmem:[%s289 + $0x1788] sm:$0xff] %v1796
              %v1798 = vld [vmem:[%s288 + $0x1790] sm:$0xff]
              %1799 = vst [vmem:[%s289 + $0x1790] sm:$0xff] %v1798
              %v1800 = vld [vmem:[%s288 + $0x1798] sm:$0xff]
              %1801 = vst [vmem:[%s289 + $0x1798] sm:$0xff] %v1800
              %v1802 = vld [vmem:[%s288 + $0x17a0] sm:$0xff]
              %1803 = vst [vmem:[%s289 + $0x17a0] sm:$0xff] %v1802
              %v1804 = vld [vmem:[%s288 + $0x17a8] sm:$0xff]
              %1805 = vst [vmem:[%s289 + $0x17a8] sm:$0xff] %v1804
              %v1806 = vld [vmem:[%s288 + $0x17b0] sm:$0xff]
              %1807 = vst [vmem:[%s289 + $0x17b0] sm:$0xff] %v1806
              %v1808 = vld [vmem:[%s288 + $0x17b8] sm:$0xff]
              %1809 = vst [vmem:[%s289 + $0x17b8] sm:$0xff] %v1808
              %v1810 = vld [vmem:[%s288 + $0x17c0] sm:$0xff]
              %1811 = vst [vmem:[%s289 + $0x17c0] sm:$0xff] %v1810
              %v1812 = vld [vmem:[%s288 + $0x17c8] sm:$0xff]
              %1813 = vst [vmem:[%s289 + $0x17c8] sm:$0xff] %v1812
              %v1814 = vld [vmem:[%s288 + $0x17d0] sm:$0xff]
              %1815 = vst [vmem:[%s289 + $0x17d0] sm:$0xff] %v1814
              %v1816 = vld [vmem:[%s288 + $0x17d8] sm:$0xff]
              %1817 = vst [vmem:[%s289 + $0x17d8] sm:$0xff] %v1816
              %v1818 = vld [vmem:[%s288 + $0x17e0] sm:$0xff]
              %1819 = vst [vmem:[%s289 + $0x17e0] sm:$0xff] %v1818
              %v1820 = vld [vmem:[%s288 + $0x17e8] sm:$0xff]
              %1821 = vst [vmem:[%s289 + $0x17e8] sm:$0xff] %v1820
              %v1822 = vld [vmem:[%s288 + $0x17f0] sm:$0xff]
              %1823 = vst [vmem:[%s289 + $0x17f0] sm:$0xff] %v1822
              %v1824 = vld [vmem:[%s288 + $0x17f8] sm:$0xff]
              %1825 = vst [vmem:[%s289 + $0x17f8] sm:$0xff] %v1824
              %v1826 = vld [vmem:[%s288 + $0x1800] sm:$0xff]
              %1827 = vst [vmem:[%s289 + $0x1800] sm:$0xff] %v1826
              %v1828 = vld [vmem:[%s288 + $0x1808] sm:$0xff]
              %1829 = vst [vmem:[%s289 + $0x1808] sm:$0xff] %v1828
              %v1830 = vld [vmem:[%s288 + $0x1810] sm:$0xff]
              %1831 = vst [vmem:[%s289 + $0x1810] sm:$0xff] %v1830
              %v1832 = vld [vmem:[%s288 + $0x1818] sm:$0xff]
              %1833 = vst [vmem:[%s289 + $0x1818] sm:$0xff] %v1832
              %v1834 = vld [vmem:[%s288 + $0x1820] sm:$0xff]
              %1835 = vst [vmem:[%s289 + $0x1820] sm:$0xff] %v1834
              %v1836 = vld [vmem:[%s288 + $0x1828] sm:$0xff]
              %1837 = vst [vmem:[%s289 + $0x1828] sm:$0xff] %v1836
              %v1838 = vld [vmem:[%s288 + $0x1830] sm:$0xff]
              %1839 = vst [vmem:[%s289 + $0x1830] sm:$0xff] %v1838
              %v1840 = vld [vmem:[%s288 + $0x1838] sm:$0xff]
              %1841 = vst [vmem:[%s289 + $0x1838] sm:$0xff] %v1840
              %v1842 = vld [vmem:[%s288 + $0x1840] sm:$0xff]
              %1843 = vst [vmem:[%s289 + $0x1840] sm:$0xff] %v1842
              %v1844 = vld [vmem:[%s288 + $0x1848] sm:$0xff]
              %1845 = vst [vmem:[%s289 + $0x1848] sm:$0xff] %v1844
              %v1846 = vld [vmem:[%s288 + $0x1850] sm:$0xff]
              %1847 = vst [vmem:[%s289 + $0x1850] sm:$0xff] %v1846
              %v1848 = vld [vmem:[%s288 + $0x1858] sm:$0xff]
              %1849 = vst [vmem:[%s289 + $0x1858] sm:$0xff] %v1848
              %v1850 = vld [vmem:[%s288 + $0x1860] sm:$0xff]
              %1851 = vst [vmem:[%s289 + $0x1860] sm:$0xff] %v1850
              %v1852 = vld [vmem:[%s288 + $0x1868] sm:$0xff]
              %1853 = vst [vmem:[%s289 + $0x1868] sm:$0xff] %v1852
              %v1854 = vld [vmem:[%s288 + $0x1870] sm:$0xff]
              %1855 = vst [vmem:[%s289 + $0x1870] sm:$0xff] %v1854
              %v1856 = vld [vmem:[%s288 + $0x1878] sm:$0xff]
              %1857 = vst [vmem:[%s289 + $0x1878] sm:$0xff] %v1856
            $region77: #{multiscale_conv.1} parent=71 // loop_footer
              %s287 = sadd.s32 1, %s283
            $region78: #{multiscale_conv.1} parent=71 // loop_footer_branch
              %282 = sbr.rel target = $region74
            $region79: #{multiscale_conv.1} parent=71 // loop_exit
              _
          $region72: #{multiscale_conv.1} parent=56 // pred_fallthru
            _
          %p1858 = pneg %p278
          // Predicated region
          $region80: #{multiscale_conv.1} parent=56 // pred_check
            _
          $region81: #{multiscale_conv.1} parent=56 // pred_check_branch
            %1860 = sbr.rel (%p278) target = $region83
          $region82: #{multiscale_conv.1} parent=56 // pred_region
            %s1861 = sand.u32 6272, 7
          $region83: #{multiscale_conv.1} parent=56 // pred_fallthru
            _
        $region57: #{multiscale_conv.1} parent=15 // pred_fallthru
          _
        // Predicated region
        $region58: #{multiscale_conv.1} parent=15 // pred_check
          %p263 = pneg %p259
        $region59: #{multiscale_conv.1} parent=15 // pred_check_branch
          %265 = sbr.rel (%p263) target = $region61
        $region60: #{multiscale_conv.1} parent=15 // pred_region
          %s266 = sshllo.u32 0, 6272
          loop: start=0, step=1, limit=1
          $region62: #{multiscale_conv.1} parent=60 // loop_pre_header
            _
          $region63: #{multiscale_conv.1} parent=60 // loop_header
            %s268 = sphi 0, %s272
            %p269 = scmp.ge.s32.totalorder %s268, 1
            %s273 = sphi %s1, %s1
            %s274 = sphi [#allocation4], [#allocation4]
          $region64: #{multiscale_conv.1} parent=60 // loop_header_branch
            %271 = sbr.rel (%p269) target = $region68
          $region65: #{multiscale_conv.1} parent=60 // loop_body
            %v275 = vld [vmem:[%s273] sm:%s266]
            %276 = vst [vmem:[%s274] sm:%s266] %v275
          $region66: #{multiscale_conv.1} parent=60 // loop_footer
            %s272 = sadd.s32 1, %s268
          $region67: #{multiscale_conv.1} parent=60 // loop_footer_branch
            %267 = sbr.rel target = $region63
          $region68: #{multiscale_conv.1} parent=60 // loop_exit
            _
        $region61: #{multiscale_conv.1} parent=15 // pred_fallthru
          _
        // Predicated region
        $region84: #{multiscale_conv.1} parent=15 // pred_check
          _
        $region85: #{multiscale_conv.1} parent=15 // pred_check_branch
          %1864 = sbr.rel (0) target = $region87
        $region86: #{multiscale_conv.1} parent=15 // pred_region
          %1865 = vsyncadd %s257, 100352
        $region87: #{multiscale_conv.1} parent=15 // pred_fallthru
          _
      $region16: #{multiscale_conv.1} parent=11 // pred_fallthru
        _
      %s1866 = sadd.s32 %s15, 1
      %p1867 = scmp.lt.s32.totalorder %s1866, 2
      // Predicated region
      $region88: #{multiscale_conv.1} parent=11 // pred_check
        %p1868 = pneg %p1867
      $region89: #{multiscale_conv.1} parent=11 // pred_check_branch
        %1870 = sbr.rel (%p1868) target = $region91
      $region90: #{multiscale_conv.1} parent=11 // pred_region
        %s1871 = ssub.s32 1, %s84
        %s1872 = smul.u32 %s1866, 8
        %s1873 = smul.u32 %s1872, 24
        %s1874 = smul.u32 %s14, 528
        %s1875 = sadd.s32 %s1873, %s1874
        %s1876 = scalar_lea.vmem %s0, %s1875
        %s1877 = smul.u32 %s1871, 336
        %s1878 = scalar_lea.vmem [#allocation2], %s1877
        %s1879 = scalar_lea.sflag [#allocation6], %s1871
        %p1881 = scmp.lt.u32.totalorder 22, 8
        %p1882 = pneg %p1881
        // Predicated region
        $region92: #{multiscale_conv.1} parent=90 // pred_check
          _
        $region93: #{multiscale_conv.1} parent=90 // pred_check_branch
          %1884 = sbr.rel (%p1881) target = $region95
        $region94: #{multiscale_conv.1} parent=90 // pred_region
          %s1925 = sand.u32 22, 7
          %p1926 = scmp.eq.s32.totalorder %s1925, 0
          %p1927 = pneg %p1926
          // Predicated region
          $region107: #{multiscale_conv.1} parent=94 // pred_check
            _
          $region108: #{multiscale_conv.1} parent=94 // pred_check_branch
            %1929 = sbr.rel (%p1926) target = $region110
          $region109: #{multiscale_conv.1} parent=94 // pred_region
            %s1930 = sand.u32 22, 7
            %s1931 = ssub.s32 22, %s1930
            %s1932 = scalar_lea.vmem %s1876, %s1931
            %s1933 = ssub.s32 22, %s1930
            %s1934 = scalar_lea.vmem %s1878, %s1933 [#allocation2]
            loop: start=0, step=1, limit=1
            $region111: #{multiscale_conv.1} parent=109 // loop_pre_header
              _
            $region112: #{multiscale_conv.1} parent=109 // loop_header
              %s1936 = sphi 0, %s1940
              %p1937 = scmp.ge.s32.totalorder %s1936, 1
              %s1941 = sphi %s1876, %s1876
              %s1942 = sphi %s1878, %s1878
            $region113: #{multiscale_conv.1} parent=109 // loop_header_branch
              %1939 = sbr.rel (%p1937) target = $region117
            $region114: #{multiscale_conv.1} parent=109 // loop_body
              %v1943 = vld [vmem:[%s1941] sm:$0xff]
              %1944 = vst [vmem:[%s1942] sm:$0xff] %v1943
              %v1945 = vld [vmem:[%s1941 + $0x8] sm:$0xff]
              %1946 = vst [vmem:[%s1942 + $0x8] sm:$0xff] %v1945
              %v1947 = vld [vmem:[%s1941 + $0x18] sm:$0xff]
              %1948 = vst [vmem:[%s1942 + $0x18] sm:$0xff] %v1947
              %v1949 = vld [vmem:[%s1941 + $0x20] sm:$0xff]
              %1950 = vst [vmem:[%s1942 + $0x20] sm:$0xff] %v1949
              %v1951 = vld [vmem:[%s1941 + $0x30] sm:$0xff]
              %1952 = vst [vmem:[%s1942 + $0x30] sm:$0xff] %v1951
              %v1953 = vld [vmem:[%s1941 + $0x38] sm:$0xff]
              %1954 = vst [vmem:[%s1942 + $0x38] sm:$0xff] %v1953
              %v1955 = vld [vmem:[%s1941 + $0x48] sm:$0xff]
              %1956 = vst [vmem:[%s1942 + $0x48] sm:$0xff] %v1955
              %v1957 = vld [vmem:[%s1941 + $0x50] sm:$0xff]
              %1958 = vst [vmem:[%s1942 + $0x50] sm:$0xff] %v1957
              %v1959 = vld [vmem:[%s1941 + $0x60] sm:$0xff]
              %1960 = vst [vmem:[%s1942 + $0x60] sm:$0xff] %v1959
              %v1961 = vld [vmem:[%s1941 + $0x68] sm:$0xff]
              %1962 = vst [vmem:[%s1942 + $0x68] sm:$0xff] %v1961
              %v1963 = vld [vmem:[%s1941 + $0x78] sm:$0xff]
              %1964 = vst [vmem:[%s1942 + $0x78] sm:$0xff] %v1963
              %v1965 = vld [vmem:[%s1941 + $0x80] sm:$0xff]
              %1966 = vst [vmem:[%s1942 + $0x80] sm:$0xff] %v1965
              %v1967 = vld [vmem:[%s1941 + $0x90] sm:$0xff]
              %1968 = vst [vmem:[%s1942 + $0x90] sm:$0xff] %v1967
              %v1969 = vld [vmem:[%s1941 + $0x98] sm:$0xff]
              %1970 = vst [vmem:[%s1942 + $0x98] sm:$0xff] %v1969
              %v1971 = vld [vmem:[%s1941 + $0xa8] sm:$0xff]
              %1972 = vst [vmem:[%s1942 + $0xa8] sm:$0xff] %v1971
              %v1973 = vld [vmem:[%s1941 + $0xb0] sm:$0xff]
              %1974 = vst [vmem:[%s1942 + $0xb0] sm:$0xff] %v1973
              %v1975 = vld [vmem:[%s1941 + $0xc0] sm:$0xff]
              %1976 = vst [vmem:[%s1942 + $0xc0] sm:$0xff] %v1975
              %v1977 = vld [vmem:[%s1941 + $0xc8] sm:$0xff]
              %1978 = vst [vmem:[%s1942 + $0xc8] sm:$0xff] %v1977
              %v1979 = vld [vmem:[%s1941 + $0xd8] sm:$0xff]
              %1980 = vst [vmem:[%s1942 + $0xd8] sm:$0xff] %v1979
              %v1981 = vld [vmem:[%s1941 + $0xe0] sm:$0xff]
              %1982 = vst [vmem:[%s1942 + $0xe0] sm:$0xff] %v1981
              %v1983 = vld [vmem:[%s1941 + $0xf0] sm:$0xff]
              %1984 = vst [vmem:[%s1942 + $0xf0] sm:$0xff] %v1983
              %v1985 = vld [vmem:[%s1941 + $0xf8] sm:$0xff]
              %1986 = vst [vmem:[%s1942 + $0xf8] sm:$0xff] %v1985
              %v1987 = vld [vmem:[%s1941 + $0x108] sm:$0xff]
              %1988 = vst [vmem:[%s1942 + $0x108] sm:$0xff] %v1987
              %v1989 = vld [vmem:[%s1941 + $0x110] sm:$0xff]
              %1990 = vst [vmem:[%s1942 + $0x110] sm:$0xff] %v1989
              %v1991 = vld [vmem:[%s1941 + $0x120] sm:$0xff]
              %1992 = vst [vmem:[%s1942 + $0x120] sm:$0xff] %v1991
              %v1993 = vld [vmem:[%s1941 + $0x128] sm:$0xff]
              %1994 = vst [vmem:[%s1942 + $0x128] sm:$0xff] %v1993
              %v1995 = vld [vmem:[%s1941 + $0x138] sm:$0xff]
              %1996 = vst [vmem:[%s1942 + $0x138] sm:$0xff] %v1995
              %v1997 = vld [vmem:[%s1941 + $0x140] sm:$0xff]
              %1998 = vst [vmem:[%s1942 + $0x140] sm:$0xff] %v1997
            $region115: #{multiscale_conv.1} parent=109 // loop_footer
              %s1940 = sadd.s32 1, %s1936
            $region116: #{multiscale_conv.1} parent=109 // loop_footer_branch
              %1935 = sbr.rel target = $region112
            $region117: #{multiscale_conv.1} parent=109 // loop_exit
              _
            %s1999 = sshllo.u32 0, %s1930
            loop: start=0, step=1, limit=1
            $region118: #{multiscale_conv.1} parent=109 // loop_pre_header
              _
            $region119: #{multiscale_conv.1} parent=109 // loop_header
              %s2001 = sphi 0, %s2005
              %p2002 = scmp.ge.s32.totalorder %s2001, 1
              %s2006 = sphi %s1932, %s1932
              %s2007 = sphi %s1934, %s1934
            $region120: #{multiscale_conv.1} parent=109 // loop_header_branch
              %2004 = sbr.rel (%p2002) target = $region124
            $region121: #{multiscale_conv.1} parent=109 // loop_body
              %v2008 = vld [vmem:[%s2006] sm:%s1999]
              %2009 = vst [vmem:[%s2007] sm:%s1999] %v2008
              %v2010 = vld [vmem:[%s2006 + $0x18] sm:%s1999]
              %2011 = vst [vmem:[%s2007 + $0x18] sm:%s1999] %v2010
              %v2012 = vld [vmem:[%s2006 + $0x30] sm:%s1999]
              %2013 = vst [vmem:[%s2007 + $0x30] sm:%s1999] %v2012
              %v2014 = vld [vmem:[%s2006 + $0x48] sm:%s1999]
              %2015 = vst [vmem:[%s2007 + $0x48] sm:%s1999] %v2014
              %v2016 = vld [vmem:[%s2006 + $0x60] sm:%s1999]
              %2017 = vst [vmem:[%s2007 + $0x60] sm:%s1999] %v2016
              %v2018 = vld [vmem:[%s2006 + $0x78] sm:%s1999]
              %2019 = vst [vmem:[%s2007 + $0x78] sm:%s1999] %v2018
              %v2020 = vld [vmem:[%s2006 + $0x90] sm:%s1999]
              %2021 = vst [vmem:[%s2007 + $0x90] sm:%s1999] %v2020
              %v2022 = vld [vmem:[%s2006 + $0xa8] sm:%s1999]
              %2023 = vst [vmem:[%s2007 + $0xa8] sm:%s1999] %v2022
              %v2024 = vld [vmem:[%s2006 + $0xc0] sm:%s1999]
              %2025 = vst [vmem:[%s2007 + $0xc0] sm:%s1999] %v2024
              %v2026 = vld [vmem:[%s2006 + $0xd8] sm:%s1999]
              %2027 = vst [vmem:[%s2007 + $0xd8] sm:%s1999] %v2026
              %v2028 = vld [vmem:[%s2006 + $0xf0] sm:%s1999]
              %2029 = vst [vmem:[%s2007 + $0xf0] sm:%s1999] %v2028
              %v2030 = vld [vmem:[%s2006 + $0x108] sm:%s1999]
              %2031 = vst [vmem:[%s2007 + $0x108] sm:%s1999] %v2030
              %v2032 = vld [vmem:[%s2006 + $0x120] sm:%s1999]
              %2033 = vst [vmem:[%s2007 + $0x120] sm:%s1999] %v2032
              %v2034 = vld [vmem:[%s2006 + $0x138] sm:%s1999]
              %2035 = vst [vmem:[%s2007 + $0x138] sm:%s1999] %v2034
            $region122: #{multiscale_conv.1} parent=109 // loop_footer
              %s2005 = sadd.s32 1, %s2001
            $region123: #{multiscale_conv.1} parent=109 // loop_footer_branch
              %2000 = sbr.rel target = $region119
            $region124: #{multiscale_conv.1} parent=109 // loop_exit
              _
          $region110: #{multiscale_conv.1} parent=94 // pred_fallthru
            _
        $region95: #{multiscale_conv.1} parent=90 // pred_fallthru
          _
        // Predicated region
        $region96: #{multiscale_conv.1} parent=90 // pred_check
          %p1885 = pneg %p1881
        $region97: #{multiscale_conv.1} parent=90 // pred_check_branch
          %1887 = sbr.rel (%p1885) target = $region99
        $region98: #{multiscale_conv.1} parent=90 // pred_region
          %s1888 = sshllo.u32 0, 22
          loop: start=0, step=1, limit=1
          $region100: #{multiscale_conv.1} parent=98 // loop_pre_header
            _
          $region101: #{multiscale_conv.1} parent=98 // loop_header
            %s1890 = sphi 0, %s1894
            %p1891 = scmp.ge.s32.totalorder %s1890, 1
            %s1895 = sphi %s1876, %s1876
            %s1896 = sphi %s1878, %s1878
          $region102: #{multiscale_conv.1} parent=98 // loop_header_branch
            %1893 = sbr.rel (%p1891) target = $region106
          $region103: #{multiscale_conv.1} parent=98 // loop_body
            %v1897 = vld [vmem:[%s1895] sm:%s1888]
            %1898 = vst [vmem:[%s1896] sm:%s1888] %v1897
            %v1899 = vld [vmem:[%s1895 + $0x18] sm:%s1888]
            %1900 = vst [vmem:[%s1896 + $0x18] sm:%s1888] %v1899
            %v1901 = vld [vmem:[%s1895 + $0x30] sm:%s1888]
            %1902 = vst [vmem:[%s1896 + $0x30] sm:%s1888] %v1901
            %v1903 = vld [vmem:[%s1895 + $0x48] sm:%s1888]
            %1904 = vst [vmem:[%s1896 + $0x48] sm:%s1888] %v1903
            %v1905 = vld [vmem:[%s1895 + $0x60] sm:%s1888]
            %1906 = vst [vmem:[%s1896 + $0x60] sm:%s1888] %v1905
            %v1907 = vld [vmem:[%s1895 + $0x78] sm:%s1888]
            %1908 = vst [vmem:[%s1896 + $0x78] sm:%s1888] %v1907
            %v1909 = vld [vmem:[%s1895 + $0x90] sm:%s1888]
            %1910 = vst [vmem:[%s1896 + $0x90] sm:%s1888] %v1909
            %v1911 = vld [vmem:[%s1895 + $0xa8] sm:%s1888]
            %1912 = vst [vmem:[%s1896 + $0xa8] sm:%s1888] %v1911
            %v1913 = vld [vmem:[%s1895 + $0xc0] sm:%s1888]
            %1914 = vst [vmem:[%s1896 + $0xc0] sm:%s1888] %v1913
            %v1915 = vld [vmem:[%s1895 + $0xd8] sm:%s1888]
            %1916 = vst [vmem:[%s1896 + $0xd8] sm:%s1888] %v1915
            %v1917 = vld [vmem:[%s1895 + $0xf0] sm:%s1888]
            %1918 = vst [vmem:[%s1896 + $0xf0] sm:%s1888] %v1917
            %v1919 = vld [vmem:[%s1895 + $0x108] sm:%s1888]
            %1920 = vst [vmem:[%s1896 + $0x108] sm:%s1888] %v1919
            %v1921 = vld [vmem:[%s1895 + $0x120] sm:%s1888]
            %1922 = vst [vmem:[%s1896 + $0x120] sm:%s1888] %v1921
            %v1923 = vld [vmem:[%s1895 + $0x138] sm:%s1888]
            %1924 = vst [vmem:[%s1896 + $0x138] sm:%s1888] %v1923
          $region104: #{multiscale_conv.1} parent=98 // loop_footer
            %s1894 = sadd.s32 1, %s1890
          $region105: #{multiscale_conv.1} parent=98 // loop_footer_branch
            %1889 = sbr.rel target = $region101
          $region106: #{multiscale_conv.1} parent=98 // loop_exit
            _
        $region99: #{multiscale_conv.1} parent=90 // pred_fallthru
          _
        // Predicated region
        $region125: #{multiscale_conv.1} parent=90 // pred_check
          _
        $region126: #{multiscale_conv.1} parent=90 // pred_check_branch
          %2038 = sbr.rel (0) target = $region128
        $region127: #{multiscale_conv.1} parent=90 // pred_region
          %2039 = vsyncadd %s1879, 4928
        $region128: #{multiscale_conv.1} parent=90 // pred_fallthru
          _
      $region91: #{multiscale_conv.1} parent=11 // pred_fallthru
        _
      %s2040 = smul.u32 %s15, 8
      %s2041 = smul.u32 %s84, 336
      %s2042 = scalar_lea.vmem [#allocation2], %s2041
      %s2043 = scalar_lea.sflag [#allocation6], %s84
      %s2044 = smul.u32 14, 22
      %s2045 = smul.u32 %s2044, 1
      %s2046 = sshll.u32 %s2045, 4
      %2047 = dma.done %s2043, %s2046
      // Predicated region
      $region129: #{multiscale_conv.1} parent=11 // pred_check
        %p2048 = pneg %p85
      $region130: #{multiscale_conv.1} parent=11 // pred_check_branch
        %2050 = sbr.rel (%p2048) target = $region132
      $region131: #{multiscale_conv.1} parent=11 // pred_region
        %s2051 = scalar_lea.sflag [#allocation6], 2
        %s2052 = smul.u32 7, 896
        %s2053 = smul.u32 %s2052, 1
        %s2054 = sshll.u32 %s2053, 4
        %2055 = dma.done %s2051, %s2054
      $region132: #{multiscale_conv.1} parent=11 // pred_fallthru
        _
      %v2056 = vld [vmem:[%s2042] sm:$0xff]
      %v2057 = vld [vmem:[%s2042 + $0x8] sm:$0xff]
      %v2058 = vld [vmem:[%s2042 + $0x18] sm:$0xff]
      %v2059 = vld [vmem:[%s2042 + $0x20] sm:$0xff]
      %v2060 = vld [vmem:[%s2042 + $0x30] sm:$0xff]
      %v2061 = vld [vmem:[%s2042 + $0x38] sm:$0xff]
      %v2062 = vld [vmem:[%s2042 + $0x48] sm:$0xff]
      %v2063 = vld [vmem:[%s2042 + $0x50] sm:$0xff]
      %v2064 = vld [vmem:[%s2042 + $0x60] sm:$0xff]
      %v2065 = vld [vmem:[%s2042 + $0x68] sm:$0xff]
      %v2066 = vld [vmem:[%s2042 + $0x78] sm:$0xff]
      %v2067 = vld [vmem:[%s2042 + $0x80] sm:$0xff]
      %v2068 = vld [vmem:[%s2042 + $0x90] sm:$0xff]
      %v2069 = vld [vmem:[%s2042 + $0x98] sm:$0xff]
      %v2070 = vld [vmem:[%s2042 + $0xa8] sm:$0xff]
      %v2071 = vld [vmem:[%s2042 + $0xb0] sm:$0xff]
      %v2072 = vld [vmem:[%s2042 + $0xc0] sm:$0xff]
      %v2073 = vld [vmem:[%s2042 + $0xc8] sm:$0xff]
      %v2074 = vld [vmem:[%s2042 + $0xd8] sm:$0xff]
      %v2075 = vld [vmem:[%s2042 + $0xe0] sm:$0xff]
      %v2076 = vld [vmem:[%s2042 + $0xf0] sm:$0xff]
      %v2077 = vld [vmem:[%s2042 + $0xf8] sm:$0xff]
      %v2078 = vld [vmem:[%s2042 + $0x108] sm:$0xff]
      %v2079 = vld [vmem:[%s2042 + $0x110] sm:$0xff]
      %v2080 = vld [vmem:[%s2042 + $0x120] sm:$0xff]
      %v2081 = vld [vmem:[%s2042 + $0x128] sm:$0xff]
      %v2082 = vld [vmem:[%s2042 + $0x138] sm:$0xff]
      %v2083 = vld [vmem:[%s2042 + $0x140] sm:$0xff]
      %2084 = vst [vmem:[#allocation3] sm:$0xff] %v2056
      %2085 = vst [vmem:[#allocation3 + $0x38] sm:$0xff] %v2057
      %2086 = vst [vmem:[#allocation3 + $0x70] sm:$0xff] %v2058
      %2087 = vst [vmem:[#allocation3 + $0xa8] sm:$0xff] %v2059
      %2088 = vst [vmem:[#allocation3 + $0xe0] sm:$0xff] %v2060
      %2089 = vst [vmem:[#allocation3 + $0x118] sm:$0xff] %v2061
      %2090 = vst [vmem:[#allocation3 + $0x150] sm:$0xff] %v2062
      %2091 = vst [vmem:[#allocation3 + $0x188] sm:$0xff] %v2063
      %2092 = vst [vmem:[#allocation3 + $0x1c0] sm:$0xff] %v2064
      %2093 = vst [vmem:[#allocation3 + $0x1f8] sm:$0xff] %v2065
      %2094 = vst [vmem:[#allocation3 + $0x230] sm:$0xff] %v2066
      %2095 = vst [vmem:[#allocation3 + $0x268] sm:$0xff] %v2067
      %2096 = vst [vmem:[#allocation3 + $0x2a0] sm:$0xff] %v2068
      %2097 = vst [vmem:[#allocation3 + $0x2d8] sm:$0xff] %v2069
      %2098 = vst [vmem:[#allocation3 + $0x310] sm:$0xff] %v2070
      %2099 = vst [vmem:[#allocation3 + $0x348] sm:$0xff] %v2071
      %2100 = vst [vmem:[#allocation3 + $0x380] sm:$0xff] %v2072
      %2101 = vst [vmem:[#allocation3 + $0x3b8] sm:$0xff] %v2073
      %2102 = vst [vmem:[#allocation3 + $0x3f0] sm:$0xff] %v2074
      %2103 = vst [vmem:[#allocation3 + $0x428] sm:$0xff] %v2075
      %2104 = vst [vmem:[#allocation3 + $0x460] sm:$0xff] %v2076
      %2105 = vst [vmem:[#allocation3 + $0x498] sm:$0xff] %v2077
      %2106 = vst [vmem:[#allocation3 + $0x4d0] sm:$0xff] %v2078
      %2107 = vst [vmem:[#allocation3 + $0x508] sm:$0xff] %v2079
      %2108 = vst [vmem:[#allocation3 + $0x540] sm:$0xff] %v2080
      %2109 = vst [vmem:[#allocation3 + $0x578] sm:$0xff] %v2081
      %2110 = vst [vmem:[#allocation3 + $0x5b0] sm:$0xff] %v2082
      %2111 = vst [vmem:[#allocation3 + $0x5e8] sm:$0xff] %v2083
      %v2112 = vld [vmem:[%s2042 + $0x1] sm:$0xff]
      %v2113 = vld [vmem:[%s2042 + $0x9] sm:$0xff]
      %v2114 = vld [vmem:[%s2042 + $0x19] sm:$0xff]
      %v2115 = vld [vmem:[%s2042 + $0x21] sm:$0xff]
      %v2116 = vld [vmem:[%s2042 + $0x31] sm:$0xff]
      %v2117 = vld [vmem:[%s2042 + $0x39] sm:$0xff]
      %v2118 = vld [vmem:[%s2042 + $0x49] sm:$0xff]
      %v2119 = vld [vmem:[%s2042 + $0x51] sm:$0xff]
      %v2120 = vld [vmem:[%s2042 + $0x61] sm:$0xff]
      %v2121 = vld [vmem:[%s2042 + $0x69] sm:$0xff]
      %v2122 = vld [vmem:[%s2042 + $0x79] sm:$0xff]
      %v2123 = vld [vmem:[%s2042 + $0x81] sm:$0xff]
      %v2124 = vld [vmem:[%s2042 + $0x91] sm:$0xff]
      %v2125 = vld [vmem:[%s2042 + $0x99] sm:$0xff]
      %v2126 = vld [vmem:[%s2042 + $0xa9] sm:$0xff]
      %v2127 = vld [vmem:[%s2042 + $0xb1] sm:$0xff]
      %v2128 = vld [vmem:[%s2042 + $0xc1] sm:$0xff]
      %v2129 = vld [vmem:[%s2042 + $0xc9] sm:$0xff]
      %v2130 = vld [vmem:[%s2042 + $0xd9] sm:$0xff]
      %v2131 = vld [vmem:[%s2042 + $0xe1] sm:$0xff]
      %v2132 = vld [vmem:[%s2042 + $0xf1] sm:$0xff]
      %v2133 = vld [vmem:[%s2042 + $0xf9] sm:$0xff]
      %v2134 = vld [vmem:[%s2042 + $0x109] sm:$0xff]
      %v2135 = vld [vmem:[%s2042 + $0x111] sm:$0xff]
      %v2136 = vld [vmem:[%s2042 + $0x121] sm:$0xff]
      %v2137 = vld [vmem:[%s2042 + $0x129] sm:$0xff]
      %v2138 = vld [vmem:[%s2042 + $0x139] sm:$0xff]
      %v2139 = vld [vmem:[%s2042 + $0x141] sm:$0xff]
      %2140 = vst [vmem:[#allocation3 + $0x8] sm:$0xff] %v2112
      %2141 = vst [vmem:[#allocation3 + $0x40] sm:$0xff] %v2113
      %2142 = vst [vmem:[#allocation3 + $0x78] sm:$0xff] %v2114
      %2143 = vst [vmem:[#allocation3 + $0xb0] sm:$0xff] %v2115
      %2144 = vst [vmem:[#allocation3 + $0xe8] sm:$0xff] %v2116
      %2145 = vst [vmem:[#allocation3 + $0x120] sm:$0xff] %v2117
      %2146 = vst [vmem:[#allocation3 + $0x158] sm:$0xff] %v2118
      %2147 = vst [vmem:[#allocation3 + $0x190] sm:$0xff] %v2119
      %2148 = vst [vmem:[#allocation3 + $0x1c8] sm:$0xff] %v2120
      %2149 = vst [vmem:[#allocation3 + $0x200] sm:$0xff] %v2121
      %2150 = vst [vmem:[#allocation3 + $0x238] sm:$0xff] %v2122
      %2151 = vst [vmem:[#allocation3 + $0x270] sm:$0xff] %v2123
      %2152 = vst [vmem:[#allocation3 + $0x2a8] sm:$0xff] %v2124
      %2153 = vst [vmem:[#allocation3 + $0x2e0] sm:$0xff] %v2125
      %2154 = vst [vmem:[#allocation3 + $0x318] sm:$0xff] %v2126
      %2155 = vst [vmem:[#allocation3 + $0x350] sm:$0xff] %v2127
      %2156 = vst [vmem:[#allocation3 + $0x388] sm:$0xff] %v2128
      %2157 = vst [vmem:[#allocation3 + $0x3c0] sm:$0xff] %v2129
      %2158 = vst [vmem:[#allocation3 + $0x3f8] sm:$0xff] %v2130
      %2159 = vst [vmem:[#allocation3 + $0x430] sm:$0xff] %v2131
      %2160 = vst [vmem:[#allocation3 + $0x468] sm:$0xff] %v2132
      %2161 = vst [vmem:[#allocation3 + $0x4a0] sm:$0xff] %v2133
      %2162 = vst [vmem:[#allocation3 + $0x4d8] sm:$0xff] %v2134
      %2163 = vst [vmem:[#allocation3 + $0x510] sm:$0xff] %v2135
      %2164 = vst [vmem:[#allocation3 + $0x548] sm:$0xff] %v2136
      %2165 = vst [vmem:[#allocation3 + $0x580] sm:$0xff] %v2137
      %2166 = vst [vmem:[#allocation3 + $0x5b8] sm:$0xff] %v2138
      %2167 = vst [vmem:[#allocation3 + $0x5f0] sm:$0xff] %v2139
      %v2168 = vld [vmem:[%s2042 + $0x2] sm:$0xff]
      %v2169 = vld [vmem:[%s2042 + $0xa] sm:$0xff]
      %v2170 = vld [vmem:[%s2042 + $0x1a] sm:$0xff]
      %v2171 = vld [vmem:[%s2042 + $0x22] sm:$0xff]
      %v2172 = vld [vmem:[%s2042 + $0x32] sm:$0xff]
      %v2173 = vld [vmem:[%s2042 + $0x3a] sm:$0xff]
      %v2174 = vld [vmem:[%s2042 + $0x4a] sm:$0xff]
      %v2175 = vld [vmem:[%s2042 + $0x52] sm:$0xff]
      %v2176 = vld [vmem:[%s2042 + $0x62] sm:$0xff]
      %v2177 = vld [vmem:[%s2042 + $0x6a] sm:$0xff]
      %v2178 = vld [vmem:[%s2042 + $0x7a] sm:$0xff]
      %v2179 = vld [vmem:[%s2042 + $0x82] sm:$0xff]
      %v2180 = vld [vmem:[%s2042 + $0x92] sm:$0xff]
      %v2181 = vld [vmem:[%s2042 + $0x9a] sm:$0xff]
      %v2182 = vld [vmem:[%s2042 + $0xaa] sm:$0xff]
      %v2183 = vld [vmem:[%s2042 + $0xb2] sm:$0xff]
      %v2184 = vld [vmem:[%s2042 + $0xc2] sm:$0xff]
      %v2185 = vld [vmem:[%s2042 + $0xca] sm:$0xff]
      %v2186 = vld [vmem:[%s2042 + $0xda] sm:$0xff]
      %v2187 = vld [vmem:[%s2042 + $0xe2] sm:$0xff]
      %v2188 = vld [vmem:[%s2042 + $0xf2] sm:$0xff]
      %v2189 = vld [vmem:[%s2042 + $0xfa] sm:$0xff]
      %v2190 = vld [vmem:[%s2042 + $0x10a] sm:$0xff]
      %v2191 = vld [vmem:[%s2042 + $0x112] sm:$0xff]
      %v2192 = vld [vmem:[%s2042 + $0x122] sm:$0xff]
      %v2193 = vld [vmem:[%s2042 + $0x12a] sm:$0xff]
      %v2194 = vld [vmem:[%s2042 + $0x13a] sm:$0xff]
      %v2195 = vld [vmem:[%s2042 + $0x142] sm:$0xff]
      %2196 = vst [vmem:[#allocation3 + $0x10] sm:$0xff] %v2168
      %2197 = vst [vmem:[#allocation3 + $0x48] sm:$0xff] %v2169
      %2198 = vst [vmem:[#allocation3 + $0x80] sm:$0xff] %v2170
      %2199 = vst [vmem:[#allocation3 + $0xb8] sm:$0xff] %v2171
      %2200 = vst [vmem:[#allocation3 + $0xf0] sm:$0xff] %v2172
      %2201 = vst [vmem:[#allocation3 + $0x128] sm:$0xff] %v2173
      %2202 = vst [vmem:[#allocation3 + $0x160] sm:$0xff] %v2174
      %2203 = vst [vmem:[#allocation3 + $0x198] sm:$0xff] %v2175
      %2204 = vst [vmem:[#allocation3 + $0x1d0] sm:$0xff] %v2176
      %2205 = vst [vmem:[#allocation3 + $0x208] sm:$0xff] %v2177
      %2206 = vst [vmem:[#allocation3 + $0x240] sm:$0xff] %v2178
      %2207 = vst [vmem:[#allocation3 + $0x278] sm:$0xff] %v2179
      %2208 = vst [vmem:[#allocation3 + $0x2b0] sm:$0xff] %v2180
      %2209 = vst [vmem:[#allocation3 + $0x2e8] sm:$0xff] %v2181
      %2210 = vst [vmem:[#allocation3 + $0x320] sm:$0xff] %v2182
      %2211 = vst [vmem:[#allocation3 + $0x358] sm:$0xff] %v2183
      %2212 = vst [vmem:[#allocation3 + $0x390] sm:$0xff] %v2184
      %2213 = vst [vmem:[#allocation3 + $0x3c8] sm:$0xff] %v2185
      %2214 = vst [vmem:[#allocation3 + $0x400] sm:$0xff] %v2186
      %2215 = vst [vmem:[#allocation3 + $0x438] sm:$0xff] %v2187
      %2216 = vst [vmem:[#allocation3 + $0x470] sm:$0xff] %v2188
      %2217 = vst [vmem:[#allocation3 + $0x4a8] sm:$0xff] %v2189
      %2218 = vst [vmem:[#allocation3 + $0x4e0] sm:$0xff] %v2190
      %2219 = vst [vmem:[#allocation3 + $0x518] sm:$0xff] %v2191
      %2220 = vst [vmem:[#allocation3 + $0x550] sm:$0xff] %v2192
      %2221 = vst [vmem:[#allocation3 + $0x588] sm:$0xff] %v2193
      %2222 = vst [vmem:[#allocation3 + $0x5c0] sm:$0xff] %v2194
      %2223 = vst [vmem:[#allocation3 + $0x5f8] sm:$0xff] %v2195
      %v2224 = vld [vmem:[%s2042 + $0x3] sm:$0xff]
      %v2225 = vld [vmem:[%s2042 + $0xb] sm:$0xff]
      %v2226 = vld [vmem:[%s2042 + $0x1b] sm:$0xff]
      %v2227 = vld [vmem:[%s2042 + $0x23] sm:$0xff]
      %v2228 = vld [vmem:[%s2042 + $0x33] sm:$0xff]
      %v2229 = vld [vmem:[%s2042 + $0x3b] sm:$0xff]
      %v2230 = vld [vmem:[%s2042 + $0x4b] sm:$0xff]
      %v2231 = vld [vmem:[%s2042 + $0x53] sm:$0xff]
      %v2232 = vld [vmem:[%s2042 + $0x63] sm:$0xff]
      %v2233 = vld [vmem:[%s2042 + $0x6b] sm:$0xff]
      %v2234 = vld [vmem:[%s2042 + $0x7b] sm:$0xff]
      %v2235 = vld [vmem:[%s2042 + $0x83] sm:$0xff]
      %v2236 = vld [vmem:[%s2042 + $0x93] sm:$0xff]
      %v2237 = vld [vmem:[%s2042 + $0x9b] sm:$0xff]
      %v2238 = vld [vmem:[%s2042 + $0xab] sm:$0xff]
      %v2239 = vld [vmem:[%s2042 + $0xb3] sm:$0xff]
      %v2240 = vld [vmem:[%s2042 + $0xc3] sm:$0xff]
      %v2241 = vld [vmem:[%s2042 + $0xcb] sm:$0xff]
      %v2242 = vld [vmem:[%s2042 + $0xdb] sm:$0xff]
      %v2243 = vld [vmem:[%s2042 + $0xe3] sm:$0xff]
      %v2244 = vld [vmem:[%s2042 + $0xf3] sm:$0xff]
      %v2245 = vld [vmem:[%s2042 + $0xfb] sm:$0xff]
      %v2246 = vld [vmem:[%s2042 + $0x10b] sm:$0xff]
      %v2247 = vld [vmem:[%s2042 + $0x113] sm:$0xff]
      %v2248 = vld [vmem:[%s2042 + $0x123] sm:$0xff]
      %v2249 = vld [vmem:[%s2042 + $0x12b] sm:$0xff]
      %v2250 = vld [vmem:[%s2042 + $0x13b] sm:$0xff]
      %v2251 = vld [vmem:[%s2042 + $0x143] sm:$0xff]
      %2252 = vst [vmem:[#allocation3 + $0x18] sm:$0xff] %v2224
      %2253 = vst [vmem:[#allocation3 + $0x50] sm:$0xff] %v2225
      %2254 = vst [vmem:[#allocation3 + $0x88] sm:$0xff] %v2226
      %2255 = vst [vmem:[#allocation3 + $0xc0] sm:$0xff] %v2227
      %2256 = vst [vmem:[#allocation3 + $0xf8] sm:$0xff] %v2228
      %2257 = vst [vmem:[#allocation3 + $0x130] sm:$0xff] %v2229
      %2258 = vst [vmem:[#allocation3 + $0x168] sm:$0xff] %v2230
      %2259 = vst [vmem:[#allocation3 + $0x1a0] sm:$0xff] %v2231
      %2260 = vst [vmem:[#allocation3 + $0x1d8] sm:$0xff] %v2232
      %2261 = vst [vmem:[#allocation3 + $0x210] sm:$0xff] %v2233
      %2262 = vst [vmem:[#allocation3 + $0x248] sm:$0xff] %v2234
      %2263 = vst [vmem:[#allocation3 + $0x280] sm:$0xff] %v2235
      %2264 = vst [vmem:[#allocation3 + $0x2b8] sm:$0xff] %v2236
      %2265 = vst [vmem:[#allocation3 + $0x2f0] sm:$0xff] %v2237
      %2266 = vst [vmem:[#allocation3 + $0x328] sm:$0xff] %v2238
      %2267 = vst [vmem:[#allocation3 + $0x360] sm:$0xff] %v2239
      %2268 = vst [vmem:[#allocation3 + $0x398] sm:$0xff] %v2240
      %2269 = vst [vmem:[#allocation3 + $0x3d0] sm:$0xff] %v2241
      %2270 = vst [vmem:[#allocation3 + $0x408] sm:$0xff] %v2242
      %2271 = vst [vmem:[#allocation3 + $0x440] sm:$0xff] %v2243
      %2272 = vst [vmem:[#allocation3 + $0x478] sm:$0xff] %v2244
      %2273 = vst [vmem:[#allocation3 + $0x4b0] sm:$0xff] %v2245
      %2274 = vst [vmem:[#allocation3 + $0x4e8] sm:$0xff] %v2246
      %2275 = vst [vmem:[#allocation3 + $0x520] sm:$0xff] %v2247
      %2276 = vst [vmem:[#allocation3 + $0x558] sm:$0xff] %v2248
      %2277 = vst [vmem:[#allocation3 + $0x590] sm:$0xff] %v2249
      %2278 = vst [vmem:[#allocation3 + $0x5c8] sm:$0xff] %v2250
      %2279 = vst [vmem:[#allocation3 + $0x600] sm:$0xff] %v2251
      %v2280 = vld [vmem:[%s2042 + $0x4] sm:$0xff]
      %v2281 = vld [vmem:[%s2042 + $0xc] sm:$0xff]
      %v2282 = vld [vmem:[%s2042 + $0x1c] sm:$0xff]
      %v2283 = vld [vmem:[%s2042 + $0x24] sm:$0xff]
      %v2284 = vld [vmem:[%s2042 + $0x34] sm:$0xff]
      %v2285 = vld [vmem:[%s2042 + $0x3c] sm:$0xff]
      %v2286 = vld [vmem:[%s2042 + $0x4c] sm:$0xff]
      %v2287 = vld [vmem:[%s2042 + $0x54] sm:$0xff]
      %v2288 = vld [vmem:[%s2042 + $0x64] sm:$0xff]
      %v2289 = vld [vmem:[%s2042 + $0x6c] sm:$0xff]
      %v2290 = vld [vmem:[%s2042 + $0x7c] sm:$0xff]
      %v2291 = vld [vmem:[%s2042 + $0x84] sm:$0xff]
      %v2292 = vld [vmem:[%s2042 + $0x94] sm:$0xff]
      %v2293 = vld [vmem:[%s2042 + $0x9c] sm:$0xff]
      %v2294 = vld [vmem:[%s2042 + $0xac] sm:$0xff]
      %v2295 = vld [vmem:[%s2042 + $0xb4] sm:$0xff]
      %v2296 = vld [vmem:[%s2042 + $0xc4] sm:$0xff]
      %v2297 = vld [vmem:[%s2042 + $0xcc] sm:$0xff]
      %v2298 = vld [vmem:[%s2042 + $0xdc] sm:$0xff]
      %v2299 = vld [vmem:[%s2042 + $0xe4] sm:$0xff]
      %v2300 = vld [vmem:[%s2042 + $0xf4] sm:$0xff]
      %v2301 = vld [vmem:[%s2042 + $0xfc] sm:$0xff]
      %v2302 = vld [vmem:[%s2042 + $0x10c] sm:$0xff]
      %v2303 = vld [vmem:[%s2042 + $0x114] sm:$0xff]
      %v2304 = vld [vmem:[%s2042 + $0x124] sm:$0xff]
      %v2305 = vld [vmem:[%s2042 + $0x12c] sm:$0xff]
      %v2306 = vld [vmem:[%s2042 + $0x13c] sm:$0xff]
      %v2307 = vld [vmem:[%s2042 + $0x144] sm:$0xff]
      %2308 = vst [vmem:[#allocation3 + $0x20] sm:$0xff] %v2280
      %2309 = vst [vmem:[#allocation3 + $0x58] sm:$0xff] %v2281
      %2310 = vst [vmem:[#allocation3 + $0x90] sm:$0xff] %v2282
      %2311 = vst [vmem:[#allocation3 + $0xc8] sm:$0xff] %v2283
      %2312 = vst [vmem:[#allocation3 + $0x100] sm:$0xff] %v2284
      %2313 = vst [vmem:[#allocation3 + $0x138] sm:$0xff] %v2285
      %2314 = vst [vmem:[#allocation3 + $0x170] sm:$0xff] %v2286
      %2315 = vst [vmem:[#allocation3 + $0x1a8] sm:$0xff] %v2287
      %2316 = vst [vmem:[#allocation3 + $0x1e0] sm:$0xff] %v2288
      %2317 = vst [vmem:[#allocation3 + $0x218] sm:$0xff] %v2289
      %2318 = vst [vmem:[#allocation3 + $0x250] sm:$0xff] %v2290
      %2319 = vst [vmem:[#allocation3 + $0x288] sm:$0xff] %v2291
      %2320 = vst [vmem:[#allocation3 + $0x2c0] sm:$0xff] %v2292
      %2321 = vst [vmem:[#allocation3 + $0x2f8] sm:$0xff] %v2293
      %2322 = vst [vmem:[#allocation3 + $0x330] sm:$0xff] %v2294
      %2323 = vst [vmem:[#allocation3 + $0x368] sm:$0xff] %v2295
      %2324 = vst [vmem:[#allocation3 + $0x3a0] sm:$0xff] %v2296
      %2325 = vst [vmem:[#allocation3 + $0x3d8] sm:$0xff] %v2297
      %2326 = vst [vmem:[#allocation3 + $0x410] sm:$0xff] %v2298
      %2327 = vst [vmem:[#allocation3 + $0x448] sm:$0xff] %v2299
      %2328 = vst [vmem:[#allocation3 + $0x480] sm:$0xff] %v2300
      %2329 = vst [vmem:[#allocation3 + $0x4b8] sm:$0xff] %v2301
      %2330 = vst [vmem:[#allocation3 + $0x4f0] sm:$0xff] %v2302
      %2331 = vst [vmem:[#allocation3 + $0x528] sm:$0xff] %v2303
      %2332 = vst [vmem:[#allocation3 + $0x560] sm:$0xff] %v2304
      %2333 = vst [vmem:[#allocation3 + $0x598] sm:$0xff] %v2305
      %2334 = vst [vmem:[#allocation3 + $0x5d0] sm:$0xff] %v2306
      %2335 = vst [vmem:[#allocation3 + $0x608] sm:$0xff] %v2307
      %v2336 = vld [vmem:[%s2042 + $0x5] sm:$0xff]
      %v2337 = vld [vmem:[%s2042 + $0xd] sm:$0xff]
      %v2338 = vld [vmem:[%s2042 + $0x1d] sm:$0xff]
      %v2339 = vld [vmem:[%s2042 + $0x25] sm:$0xff]
      %v2340 = vld [vmem:[%s2042 + $0x35] sm:$0xff]
      %v2341 = vld [vmem:[%s2042 + $0x3d] sm:$0xff]
      %v2342 = vld [vmem:[%s2042 + $0x4d] sm:$0xff]
      %v2343 = vld [vmem:[%s2042 + $0x55] sm:$0xff]
      %v2344 = vld [vmem:[%s2042 + $0x65] sm:$0xff]
      %v2345 = vld [vmem:[%s2042 + $0x6d] sm:$0xff]
      %v2346 = vld [vmem:[%s2042 + $0x7d] sm:$0xff]
      %v2347 = vld [vmem:[%s2042 + $0x85] sm:$0xff]
      %v2348 = vld [vmem:[%s2042 + $0x95] sm:$0xff]
      %v2349 = vld [vmem:[%s2042 + $0x9d] sm:$0xff]
      %v2350 = vld [vmem:[%s2042 + $0xad] sm:$0xff]
      %v2351 = vld [vmem:[%s2042 + $0xb5] sm:$0xff]
      %v2352 = vld [vmem:[%s2042 + $0xc5] sm:$0xff]
      %v2353 = vld [vmem:[%s2042 + $0xcd] sm:$0xff]
      %v2354 = vld [vmem:[%s2042 + $0xdd] sm:$0xff]
      %v2355 = vld [vmem:[%s2042 + $0xe5] sm:$0xff]
      %v2356 = vld [vmem:[%s2042 + $0xf5] sm:$0xff]
      %v2357 = vld [vmem:[%s2042 + $0xfd] sm:$0xff]
      %v2358 = vld [vmem:[%s2042 + $0x10d] sm:$0xff]
      %v2359 = vld [vmem:[%s2042 + $0x115] sm:$0xff]
      %v2360 = vld [vmem:[%s2042 + $0x125] sm:$0xff]
      %v2361 = vld [vmem:[%s2042 + $0x12d] sm:$0xff]
      %v2362 = vld [vmem:[%s2042 + $0x13d] sm:$0xff]
      %v2363 = vld [vmem:[%s2042 + $0x145] sm:$0xff]
      %2364 = vst [vmem:[#allocation3 + $0x28] sm:$0xff] %v2336
      %2365 = vst [vmem:[#allocation3 + $0x60] sm:$0xff] %v2337
      %2366 = vst [vmem:[#allocation3 + $0x98] sm:$0xff] %v2338
      %2367 = vst [vmem:[#allocation3 + $0xd0] sm:$0xff] %v2339
      %2368 = vst [vmem:[#allocation3 + $0x108] sm:$0xff] %v2340
      %2369 = vst [vmem:[#allocation3 + $0x140] sm:$0xff] %v2341
      %2370 = vst [vmem:[#allocation3 + $0x178] sm:$0xff] %v2342
      %2371 = vst [vmem:[#allocation3 + $0x1b0] sm:$0xff] %v2343
      %2372 = vst [vmem:[#allocation3 + $0x1e8] sm:$0xff] %v2344
      %2373 = vst [vmem:[#allocation3 + $0x220] sm:$0xff] %v2345
      %2374 = vst [vmem:[#allocation3 + $0x258] sm:$0xff] %v2346
      %2375 = vst [vmem:[#allocation3 + $0x290] sm:$0xff] %v2347
      %2376 = vst [vmem:[#allocation3 + $0x2c8] sm:$0xff] %v2348
      %2377 = vst [vmem:[#allocation3 + $0x300] sm:$0xff] %v2349
      %2378 = vst [vmem:[#allocation3 + $0x338] sm:$0xff] %v2350
      %2379 = vst [vmem:[#allocation3 + $0x370] sm:$0xff] %v2351
      %2380 = vst [vmem:[#allocation3 + $0x3a8] sm:$0xff] %v2352
      %2381 = vst [vmem:[#allocation3 + $0x3e0] sm:$0xff] %v2353
      %2382 = vst [vmem:[#allocation3 + $0x418] sm:$0xff] %v2354
      %2383 = vst [vmem:[#allocation3 + $0x450] sm:$0xff] %v2355
      %2384 = vst [vmem:[#allocation3 + $0x488] sm:$0xff] %v2356
      %2385 = vst [vmem:[#allocation3 + $0x4c0] sm:$0xff] %v2357
      %2386 = vst [vmem:[#allocation3 + $0x4f8] sm:$0xff] %v2358
      %2387 = vst [vmem:[#allocation3 + $0x530] sm:$0xff] %v2359
      %2388 = vst [vmem:[#allocation3 + $0x568] sm:$0xff] %v2360
      %2389 = vst [vmem:[#allocation3 + $0x5a0] sm:$0xff] %v2361
      %2390 = vst [vmem:[#allocation3 + $0x5d8] sm:$0xff] %v2362
      %2391 = vst [vmem:[#allocation3 + $0x610] sm:$0xff] %v2363
      %v2392 = vld [vmem:[%s2042 + $0x6] sm:$0xff]
      %v2393 = vld [vmem:[%s2042 + $0xe] sm:$0xff]
      %v2394 = vld [vmem:[%s2042 + $0x1e] sm:$0xff]
      %v2395 = vld [vmem:[%s2042 + $0x26] sm:$0xff]
      %v2396 = vld [vmem:[%s2042 + $0x36] sm:$0xff]
      %v2397 = vld [vmem:[%s2042 + $0x3e] sm:$0xff]
      %v2398 = vld [vmem:[%s2042 + $0x4e] sm:$0xff]
      %v2399 = vld [vmem:[%s2042 + $0x56] sm:$0xff]
      %v2400 = vld [vmem:[%s2042 + $0x66] sm:$0xff]
      %v2401 = vld [vmem:[%s2042 + $0x6e] sm:$0xff]
      %v2402 = vld [vmem:[%s2042 + $0x7e] sm:$0xff]
      %v2403 = vld [vmem:[%s2042 + $0x86] sm:$0xff]
      %v2404 = vld [vmem:[%s2042 + $0x96] sm:$0xff]
      %v2405 = vld [vmem:[%s2042 + $0x9e] sm:$0xff]
      %v2406 = vld [vmem:[%s2042 + $0xae] sm:$0xff]
      %v2407 = vld [vmem:[%s2042 + $0xb6] sm:$0xff]
      %v2408 = vld [vmem:[%s2042 + $0xc6] sm:$0xff]
      %v2409 = vld [vmem:[%s2042 + $0xce] sm:$0xff]
      %v2410 = vld [vmem:[%s2042 + $0xde] sm:$0xff]
      %v2411 = vld [vmem:[%s2042 + $0xe6] sm:$0xff]
      %v2412 = vld [vmem:[%s2042 + $0xf6] sm:$0xff]
      %v2413 = vld [vmem:[%s2042 + $0xfe] sm:$0xff]
      %v2414 = vld [vmem:[%s2042 + $0x10e] sm:$0xff]
      %v2415 = vld [vmem:[%s2042 + $0x116] sm:$0xff]
      %v2416 = vld [vmem:[%s2042 + $0x126] sm:$0xff]
      %v2417 = vld [vmem:[%s2042 + $0x12e] sm:$0xff]
      %v2418 = vld [vmem:[%s2042 + $0x13e] sm:$0xff]
      %v2419 = vld [vmem:[%s2042 + $0x146] sm:$0xff]
      %2420 = vst [vmem:[#allocation3 + $0x30] sm:$0xff] %v2392
      %2421 = vst [vmem:[#allocation3 + $0x68] sm:$0xff] %v2393
      %2422 = vst [vmem:[#allocation3 + $0xa0] sm:$0xff] %v2394
      %2423 = vst [vmem:[#allocation3 + $0xd8] sm:$0xff] %v2395
      %2424 = vst [vmem:[#allocation3 + $0x110] sm:$0xff] %v2396
      %2425 = vst [vmem:[#allocation3 + $0x148] sm:$0xff] %v2397
      %2426 = vst [vmem:[#allocation3 + $0x180] sm:$0xff] %v2398
      %2427 = vst [vmem:[#allocation3 + $0x1b8] sm:$0xff] %v2399
      %2428 = vst [vmem:[#allocation3 + $0x1f0] sm:$0xff] %v2400
      %2429 = vst [vmem:[#allocation3 + $0x228] sm:$0xff] %v2401
      %2430 = vst [vmem:[#allocation3 + $0x260] sm:$0xff] %v2402
      %2431 = vst [vmem:[#allocation3 + $0x298] sm:$0xff] %v2403
      %2432 = vst [vmem:[#allocation3 + $0x2d0] sm:$0xff] %v2404
      %2433 = vst [vmem:[#allocation3 + $0x308] sm:$0xff] %v2405
      %2434 = vst [vmem:[#allocation3 + $0x340] sm:$0xff] %v2406
      %2435 = vst [vmem:[#allocation3 + $0x378] sm:$0xff] %v2407
      %2436 = vst [vmem:[#allocation3 + $0x3b0] sm:$0xff] %v2408
      %2437 = vst [vmem:[#allocation3 + $0x3e8] sm:$0xff] %v2409
      %2438 = vst [vmem:[#allocation3 + $0x420] sm:$0xff] %v2410
      %2439 = vst [vmem:[#allocation3 + $0x458] sm:$0xff] %v2411
      %2440 = vst [vmem:[#allocation3 + $0x490] sm:$0xff] %v2412
      %2441 = vst [vmem:[#allocation3 + $0x4c8] sm:$0xff] %v2413
      %2442 = vst [vmem:[#allocation3 + $0x500] sm:$0xff] %v2414
      %2443 = vst [vmem:[#allocation3 + $0x538] sm:$0xff] %v2415
      %2444 = vst [vmem:[#allocation3 + $0x570] sm:$0xff] %v2416
      %2445 = vst [vmem:[#allocation3 + $0x5a8] sm:$0xff] %v2417
      %2446 = vst [vmem:[#allocation3 + $0x5e0] sm:$0xff] %v2418
      %2447 = vst [vmem:[#allocation3 + $0x618] sm:$0xff] %v2419
      %v2448 = vld [vmem:[#allocation3] sm:$0xff]
      %v2449 = vld [vmem:[#allocation3 + $0x8] sm:$0xff]
      %v2450 = vld [vmem:[#allocation3 + $0x10] sm:$0xff]
      %v2451 = vld [vmem:[#allocation3 + $0x18] sm:$0xff]
      %v2452 = vld [vmem:[#allocation3 + $0x20] sm:$0xff]
      %v2453 = vld [vmem:[#allocation3 + $0x28] sm:$0xff]
      %v2454 = vld [vmem:[#allocation3 + $0x30] sm:$0xff]
      %v2455 = vld [vmem:[#allocation3 + $0x38] sm:$0xff]
      %v2456 = vld [vmem:[#allocation3 + $0x40] sm:$0xff]
      %v2457 = vld [vmem:[#allocation3 + $0x48] sm:$0xff]
      %v2458 = vld [vmem:[#allocation3 + $0x50] sm:$0xff]
      %v2459 = vld [vmem:[#allocation3 + $0x58] sm:$0xff]
      %v2460 = vld [vmem:[#allocation3 + $0x60] sm:$0xff]
      %v2461 = vld [vmem:[#allocation3 + $0x68] sm:$0xff]
      %v2462 = vld [vmem:[#allocation3 + $0x70] sm:$0xff]
      %v2463 = vld [vmem:[#allocation3 + $0x78] sm:$0xff]
      %v2464 = vld [vmem:[#allocation3 + $0x80] sm:$0xff]
      %v2465 = vld [vmem:[#allocation3 + $0x88] sm:$0xff]
      %v2466 = vld [vmem:[#allocation3 + $0x90] sm:$0xff]
      %v2467 = vld [vmem:[#allocation3 + $0x98] sm:$0xff]
      %v2468 = vld [vmem:[#allocation3 + $0xa0] sm:$0xff]
      %v2469 = vld [vmem:[#allocation3 + $0xa8] sm:$0xff]
      %v2470 = vld [vmem:[#allocation3 + $0xb0] sm:$0xff]
      %v2471 = vld [vmem:[#allocation3 + $0xb8] sm:$0xff]
      %v2472 = vld [vmem:[#allocation3 + $0xc0] sm:$0xff]
      %v2473 = vld [vmem:[#allocation3 + $0xc8] sm:$0xff]
      %v2474 = vld [vmem:[#allocation3 + $0xd0] sm:$0xff]
      %v2475 = vld [vmem:[#allocation3 + $0xd8] sm:$0xff]
      %v2476 = vld [vmem:[#allocation3 + $0xe0] sm:$0xff]
      %v2477 = vld [vmem:[#allocation3 + $0xe8] sm:$0xff]
      %v2478 = vld [vmem:[#allocation3 + $0xf0] sm:$0xff]
      %v2479 = vld [vmem:[#allocation3 + $0xf8] sm:$0xff]
      %v2480 = vld [vmem:[#allocation3 + $0x100] sm:$0xff]
      %v2481 = vld [vmem:[#allocation3 + $0x108] sm:$0xff]
      %v2482 = vld [vmem:[#allocation3 + $0x110] sm:$0xff]
      %v2483 = vld [vmem:[#allocation3 + $0x118] sm:$0xff]
      %v2484 = vld [vmem:[#allocation3 + $0x120] sm:$0xff]
      %v2485 = vld [vmem:[#allocation3 + $0x128] sm:$0xff]
      %v2486 = vld [vmem:[#allocation3 + $0x130] sm:$0xff]
      %v2487 = vld [vmem:[#allocation3 + $0x138] sm:$0xff]
      %v2488 = vld [vmem:[#allocation3 + $0x140] sm:$0xff]
      %v2489 = vld [vmem:[#allocation3 + $0x148] sm:$0xff]
      %v2490 = vld [vmem:[#allocation3 + $0x150] sm:$0xff]
      %v2491 = vld [vmem:[#allocation3 + $0x158] sm:$0xff]
      %v2492 = vld [vmem:[#allocation3 + $0x160] sm:$0xff]
      %v2493 = vld [vmem:[#allocation3 + $0x168] sm:$0xff]
      %v2494 = vld [vmem:[#allocation3 + $0x170] sm:$0xff]
      %v2495 = vld [vmem:[#allocation3 + $0x178] sm:$0xff]
      %v2496 = vld [vmem:[#allocation3 + $0x180] sm:$0xff]
      %v2497 = vld [vmem:[#allocation3 + $0x188] sm:$0xff]
      %v2498 = vld [vmem:[#allocation3 + $0x190] sm:$0xff]
      %v2499 = vld [vmem:[#allocation3 + $0x198] sm:$0xff]
      %v2500 = vld [vmem:[#allocation3 + $0x1a0] sm:$0xff]
      %v2501 = vld [vmem:[#allocation3 + $0x1a8] sm:$0xff]
      %v2502 = vld [vmem:[#allocation3 + $0x1b0] sm:$0xff]
      %v2503 = vld [vmem:[#allocation3 + $0x1b8] sm:$0xff]
      %v2504 = vld [vmem:[#allocation3 + $0x1c0] sm:$0xff]
      %v2505 = vld [vmem:[#allocation3 + $0x1c8] sm:$0xff]
      %v2506 = vld [vmem:[#allocation3 + $0x1d0] sm:$0xff]
      %v2507 = vld [vmem:[#allocation3 + $0x1d8] sm:$0xff]
      %v2508 = vld [vmem:[#allocation3 + $0x1e0] sm:$0xff]
      %v2509 = vld [vmem:[#allocation3 + $0x1e8] sm:$0xff]
      %v2510 = vld [vmem:[#allocation3 + $0x1f0] sm:$0xff]
      %v2511 = vld [vmem:[#allocation3 + $0x1f8] sm:$0xff]
      %v2512 = vld [vmem:[#allocation3 + $0x200] sm:$0xff]
      %v2513 = vld [vmem:[#allocation3 + $0x208] sm:$0xff]
      %v2514 = vld [vmem:[#allocation3 + $0x210] sm:$0xff]
      %v2515 = vld [vmem:[#allocation3 + $0x218] sm:$0xff]
      %v2516 = vld [vmem:[#allocation3 + $0x220] sm:$0xff]
      %v2517 = vld [vmem:[#allocation3 + $0x228] sm:$0xff]
      %v2518 = vld [vmem:[#allocation3 + $0x230] sm:$0xff]
      %v2519 = vld [vmem:[#allocation3 + $0x238] sm:$0xff]
      %v2520 = vld [vmem:[#allocation3 + $0x240] sm:$0xff]
      %v2521 = vld [vmem:[#allocation3 + $0x248] sm:$0xff]
      %v2522 = vld [vmem:[#allocation3 + $0x250] sm:$0xff]
      %v2523 = vld [vmem:[#allocation3 + $0x258] sm:$0xff]
      %v2524 = vld [vmem:[#allocation3 + $0x260] sm:$0xff]
      %v2525 = vld [vmem:[#allocation3 + $0x268] sm:$0xff]
      %v2526 = vld [vmem:[#allocation3 + $0x270] sm:$0xff]
      %v2527 = vld [vmem:[#allocation3 + $0x278] sm:$0xff]
      %v2528 = vld [vmem:[#allocation3 + $0x280] sm:$0xff]
      %v2529 = vld [vmem:[#allocation3 + $0x288] sm:$0xff]
      %v2530 = vld [vmem:[#allocation3 + $0x290] sm:$0xff]
      %v2531 = vld [vmem:[#allocation3 + $0x298] sm:$0xff]
      %v2532 = vld [vmem:[#allocation3 + $0x2a0] sm:$0xff]
      %v2533 = vld [vmem:[#allocation3 + $0x2a8] sm:$0xff]
      %v2534 = vld [vmem:[#allocation3 + $0x2b0] sm:$0xff]
      %v2535 = vld [vmem:[#allocation3 + $0x2b8] sm:$0xff]
      %v2536 = vld [vmem:[#allocation3 + $0x2c0] sm:$0xff]
      %v2537 = vld [vmem:[#allocation3 + $0x2c8] sm:$0xff]
      %v2538 = vld [vmem:[#allocation3 + $0x2d0] sm:$0xff]
      %v2539 = vld [vmem:[#allocation3 + $0x2d8] sm:$0xff]
      %v2540 = vld [vmem:[#allocation3 + $0x2e0] sm:$0xff]
      %v2541 = vld [vmem:[#allocation3 + $0x2e8] sm:$0xff]
      %v2542 = vld [vmem:[#allocation3 + $0x2f0] sm:$0xff]
      %v2543 = vld [vmem:[#allocation3 + $0x2f8] sm:$0xff]
      %v2544 = vld [vmem:[#allocation3 + $0x300] sm:$0xff]
      %v2545 = vld [vmem:[#allocation3 + $0x308] sm:$0xff]
      %v2546 = vld [vmem:[#allocation3 + $0x310] sm:$0xff]
      %v2547 = vld [vmem:[#allocation3 + $0x318] sm:$0xff]
      %v2548 = vld [vmem:[#allocation3 + $0x320] sm:$0xff]
      %v2549 = vld [vmem:[#allocation3 + $0x328] sm:$0xff]
      %v2550 = vld [vmem:[#allocation3 + $0x330] sm:$0xff]
      %v2551 = vld [vmem:[#allocation3 + $0x338] sm:$0xff]
      %v2552 = vld [vmem:[#allocation3 + $0x340] sm:$0xff]
      %v2553 = vld [vmem:[#allocation3 + $0x348] sm:$0xff]
      %v2554 = vld [vmem:[#allocation3 + $0x350] sm:$0xff]
      %v2555 = vld [vmem:[#allocation3 + $0x358] sm:$0xff]
      %v2556 = vld [vmem:[#allocation3 + $0x360] sm:$0xff]
      %v2557 = vld [vmem:[#allocation3 + $0x368] sm:$0xff]
      %v2558 = vld [vmem:[#allocation3 + $0x370] sm:$0xff]
      %v2559 = vld [vmem:[#allocation3 + $0x378] sm:$0xff]
      %v2560 = vld [vmem:[#allocation4] sm:$0xff]
      %v2561 = vld [vmem:[#allocation4 + $0x8] sm:$0xff]
      %v2562 = vld [vmem:[#allocation4 + $0x10] sm:$0xff]
      %v2563 = vld [vmem:[#allocation4 + $0x18] sm:$0xff]
      %v2564 = vld [vmem:[#allocation4 + $0x20] sm:$0xff]
      %v2565 = vld [vmem:[#allocation4 + $0x28] sm:$0xff]
      %v2566 = vld [vmem:[#allocation4 + $0x30] sm:$0xff]
      %v2567 = vld [vmem:[#allocation4 + $0x38] sm:$0xff]
      %v2568 = vld [vmem:[#allocation4 + $0x40] sm:$0xff]
      %v2569 = vld [vmem:[#allocation4 + $0x48] sm:$0xff]
      %v2570 = vld [vmem:[#allocation4 + $0x50] sm:$0xff]
      %v2571 = vld [vmem:[#allocation4 + $0x58] sm:$0xff]
      %v2572 = vld [vmem:[#allocation4 + $0x60] sm:$0xff]
      %v2573 = vld [vmem:[#allocation4 + $0x68] sm:$0xff]
      %v2574 = vld [vmem:[#allocation4 + $0x70] sm:$0xff]
      %v2575 = vld [vmem:[#allocation4 + $0x78] sm:$0xff]
      %v2576 = vld [vmem:[#allocation4 + $0x80] sm:$0xff]
      %v2577 = vld [vmem:[#allocation4 + $0x88] sm:$0xff]
      %v2578 = vld [vmem:[#allocation4 + $0x90] sm:$0xff]
      %v2579 = vld [vmem:[#allocation4 + $0x98] sm:$0xff]
      %v2580 = vld [vmem:[#allocation4 + $0xa0] sm:$0xff]
      %v2581 = vld [vmem:[#allocation4 + $0xa8] sm:$0xff]
      %v2582 = vld [vmem:[#allocation4 + $0xb0] sm:$0xff]
      %v2583 = vld [vmem:[#allocation4 + $0xb8] sm:$0xff]
      %v2584 = vld [vmem:[#allocation4 + $0xc0] sm:$0xff]
      %v2585 = vld [vmem:[#allocation4 + $0xc8] sm:$0xff]
      %v2586 = vld [vmem:[#allocation4 + $0xd0] sm:$0xff]
      %v2587 = vld [vmem:[#allocation4 + $0xd8] sm:$0xff]
      %v2588 = vld [vmem:[#allocation4 + $0xe0] sm:$0xff]
      %v2589 = vld [vmem:[#allocation4 + $0xe8] sm:$0xff]
      %v2590 = vld [vmem:[#allocation4 + $0xf0] sm:$0xff]
      %v2591 = vld [vmem:[#allocation4 + $0xf8] sm:$0xff]
      %v2592 = vld [vmem:[#allocation4 + $0x100] sm:$0xff]
      %v2593 = vld [vmem:[#allocation4 + $0x108] sm:$0xff]
      %v2594 = vld [vmem:[#allocation4 + $0x110] sm:$0xff]
      %v2595 = vld [vmem:[#allocation4 + $0x118] sm:$0xff]
      %v2596 = vld [vmem:[#allocation4 + $0x120] sm:$0xff]
      %v2597 = vld [vmem:[#allocation4 + $0x128] sm:$0xff]
      %v2598 = vld [vmem:[#allocation4 + $0x130] sm:$0xff]
      %v2599 = vld [vmem:[#allocation4 + $0x138] sm:$0xff]
      %v2600 = vld [vmem:[#allocation4 + $0x140] sm:$0xff]
      %v2601 = vld [vmem:[#allocation4 + $0x148] sm:$0xff]
      %v2602 = vld [vmem:[#allocation4 + $0x150] sm:$0xff]
      %v2603 = vld [vmem:[#allocation4 + $0x158] sm:$0xff]
      %v2604 = vld [vmem:[#allocation4 + $0x160] sm:$0xff]
      %v2605 = vld [vmem:[#allocation4 + $0x168] sm:$0xff]
      %v2606 = vld [vmem:[#allocation4 + $0x170] sm:$0xff]
      %v2607 = vld [vmem:[#allocation4 + $0x178] sm:$0xff]
      %v2608 = vld [vmem:[#allocation4 + $0x180] sm:$0xff]
      %v2609 = vld [vmem:[#allocation4 + $0x188] sm:$0xff]
      %v2610 = vld [vmem:[#allocation4 + $0x190] sm:$0xff]
      %v2611 = vld [vmem:[#allocation4 + $0x198] sm:$0xff]
      %v2612 = vld [vmem:[#allocation4 + $0x1a0] sm:$0xff]
      %v2613 = vld [vmem:[#allocation4 + $0x1a8] sm:$0xff]
      %v2614 = vld [vmem:[#allocation4 + $0x1b0] sm:$0xff]
      %v2615 = vld [vmem:[#allocation4 + $0x1b8] sm:$0xff]
      %v2616 = vld [vmem:[#allocation4 + $0x1c0] sm:$0xff]
      %v2617 = vld [vmem:[#allocation4 + $0x1c8] sm:$0xff]
      %v2618 = vld [vmem:[#allocation4 + $0x1d0] sm:$0xff]
      %v2619 = vld [vmem:[#allocation4 + $0x1d8] sm:$0xff]
      %v2620 = vld [vmem:[#allocation4 + $0x1e0] sm:$0xff]
      %v2621 = vld [vmem:[#allocation4 + $0x1e8] sm:$0xff]
      %v2622 = vld [vmem:[#allocation4 + $0x1f0] sm:$0xff]
      %v2623 = vld [vmem:[#allocation4 + $0x1f8] sm:$0xff]
      %v2624 = vld [vmem:[#allocation4 + $0x200] sm:$0xff]
      %v2625 = vld [vmem:[#allocation4 + $0x208] sm:$0xff]
      %v2626 = vld [vmem:[#allocation4 + $0x210] sm:$0xff]
      %v2627 = vld [vmem:[#allocation4 + $0x218] sm:$0xff]
      %v2628 = vld [vmem:[#allocation4 + $0x220] sm:$0xff]
      %v2629 = vld [vmem:[#allocation4 + $0x228] sm:$0xff]
      %v2630 = vld [vmem:[#allocation4 + $0x230] sm:$0xff]
      %v2631 = vld [vmem:[#allocation4 + $0x238] sm:$0xff]
      %v2632 = vld [vmem:[#allocation4 + $0x240] sm:$0xff]
      %v2633 = vld [vmem:[#allocation4 + $0x248] sm:$0xff]
      %v2634 = vld [vmem:[#allocation4 + $0x250] sm:$0xff]
      %v2635 = vld [vmem:[#allocation4 + $0x258] sm:$0xff]
      %v2636 = vld [vmem:[#allocation4 + $0x260] sm:$0xff]
      %v2637 = vld [vmem:[#allocation4 + $0x268] sm:$0xff]
      %v2638 = vld [vmem:[#allocation4 + $0x270] sm:$0xff]
      %v2639 = vld [vmem:[#allocation4 + $0x278] sm:$0xff]
      %v2640 = vld [vmem:[#allocation4 + $0x280] sm:$0xff]
      %v2641 = vld [vmem:[#allocation4 + $0x288] sm:$0xff]
      %v2642 = vld [vmem:[#allocation4 + $0x290] sm:$0xff]
      %v2643 = vld [vmem:[#allocation4 + $0x298] sm:$0xff]
      %v2644 = vld [vmem:[#allocation4 + $0x2a0] sm:$0xff]
      %v2645 = vld [vmem:[#allocation4 + $0x2a8] sm:$0xff]
      %v2646 = vld [vmem:[#allocation4 + $0x2b0] sm:$0xff]
      %v2647 = vld [vmem:[#allocation4 + $0x2b8] sm:$0xff]
      %v2648 = vld [vmem:[#allocation4 + $0x2c0] sm:$0xff]
      %v2649 = vld [vmem:[#allocation4 + $0x2c8] sm:$0xff]
      %v2650 = vld [vmem:[#allocation4 + $0x2d0] sm:$0xff]
      %v2651 = vld [vmem:[#allocation4 + $0x2d8] sm:$0xff]
      %v2652 = vld [vmem:[#allocation4 + $0x2e0] sm:$0xff]
      %v2653 = vld [vmem:[#allocation4 + $0x2e8] sm:$0xff]
      %v2654 = vld [vmem:[#allocation4 + $0x2f0] sm:$0xff]
      %v2655 = vld [vmem:[#allocation4 + $0x2f8] sm:$0xff]
      %v2656 = vld [vmem:[#allocation4 + $0x300] sm:$0xff]
      %v2657 = vld [vmem:[#allocation4 + $0x308] sm:$0xff]
      %v2658 = vld [vmem:[#allocation4 + $0x310] sm:$0xff]
      %v2659 = vld [vmem:[#allocation4 + $0x318] sm:$0xff]
      %v2660 = vld [vmem:[#allocation4 + $0x320] sm:$0xff]
      %v2661 = vld [vmem:[#allocation4 + $0x328] sm:$0xff]
      %v2662 = vld [vmem:[#allocation4 + $0x330] sm:$0xff]
      %v2663 = vld [vmem:[#allocation4 + $0x338] sm:$0xff]
      %v2664 = vld [vmem:[#allocation4 + $0x340] sm:$0xff]
      %v2665 = vld [vmem:[#allocation4 + $0x348] sm:$0xff]
      %v2666 = vld [vmem:[#allocation4 + $0x350] sm:$0xff]
      %v2667 = vld [vmem:[#allocation4 + $0x358] sm:$0xff]
      %v2668 = vld [vmem:[#allocation4 + $0x360] sm:$0xff]
      %v2669 = vld [vmem:[#allocation4 + $0x368] sm:$0xff]
      %v2670 = vld [vmem:[#allocation4 + $0x370] sm:$0xff]
      %v2671 = vld [vmem:[#allocation4 + $0x378] sm:$0xff]
      %2672 = vmatprep.subr.mxu0 0.0
      %2673 = vmatpush1.msra.mxu0 %v2560
      %2674 = vmatprep.subr.mxu0 0.0
      %2675 = vmatpush1.msra.mxu0 %v2561
      %2676 = vmatprep.subr.mxu0 0.0
      %2677 = vmatpush1.msra.mxu0 %v2562
      %2678 = vmatprep.subr.mxu0 0.0
      %2679 = vmatpush1.msra.mxu0 %v2563
      %2680 = vmatprep.subr.mxu0 0.0
      %2681 = vmatpush1.msra.mxu0 %v2564
      %2682 = vmatprep.subr.mxu0 0.0
      %2683 = vmatpush1.msra.mxu0 %v2565
      %2684 = vmatprep.subr.mxu0 0.0
      %2685 = vmatpush1.msra.mxu0 %v2566
      %2686 = vmatprep.subr.mxu0 0.0
      %2687 = vmatpush1.msra.mxu0 %v2567
      %2688 = vmatprep.subr.mxu0 0.0
      %2689 = vmatpush1.msra.mxu0 %v2568
      %2690 = vmatprep.subr.mxu0 0.0
      %2691 = vmatpush1.msra.mxu0 %v2569
      %2692 = vmatprep.subr.mxu0 0.0
      %2693 = vmatpush1.msra.mxu0 %v2570
      %2694 = vmatprep.subr.mxu0 0.0
      %2695 = vmatpush1.msra.mxu0 %v2571
      %2696 = vmatprep.subr.mxu0 0.0
      %2697 = vmatpush1.msra.mxu0 %v2572
      %2698 = vmatprep.subr.mxu0 0.0
      %2699 = vmatpush1.msra.mxu0 %v2573
      %2700 = vmatprep.subr.mxu0 0.0
      %2701 = vmatpush1.msra.mxu0 %v2574
      %2702 = vmatprep.subr.mxu0 0.0
      %2703 = vmatpush1.msra.mxu0 %v2575
      %2704 = vmatprep.subr.mxu0 0.0
      %2705 = vmatpush1.msra.mxu0 %v2576
      %2706 = vmatprep.subr.mxu0 0.0
      %2707 = vmatpush1.msra.mxu0 %v2577
      %2708 = vmatprep.subr.mxu0 0.0
      %2709 = vmatpush1.msra.mxu0 %v2578
      %2710 = vmatprep.subr.mxu0 0.0
      %2711 = vmatpush1.msra.mxu0 %v2579
      %2712 = vmatprep.subr.mxu0 0.0
      %2713 = vmatpush1.msra.mxu0 %v2580
      %2714 = vmatprep.subr.mxu0 0.0
      %2715 = vmatpush1.msra.mxu0 %v2581
      %2716 = vmatprep.subr.mxu0 0.0
      %2717 = vmatpush1.msra.mxu0 %v2582
      %2718 = vmatprep.subr.mxu0 0.0
      %2719 = vmatpush1.msra.mxu0 %v2583
      %2720 = vmatprep.subr.mxu0 0.0
      %2721 = vmatpush1.msra.mxu0 %v2584
      %2722 = vmatprep.subr.mxu0 0.0
      %2723 = vmatpush1.msra.mxu0 %v2585
      %2724 = vmatprep.subr.mxu0 0.0
      %2725 = vmatpush1.msra.mxu0 %v2586
      %2726 = vmatprep.subr.mxu0 0.0
      %2727 = vmatpush1.msra.mxu0 %v2587
      %2728 = vmatprep.subr.mxu0 0.0
      %2729 = vmatpush1.msra.mxu0 %v2588
      %2730 = vmatprep.subr.mxu0 0.0
      %2731 = vmatpush1.msra.mxu0 %v2589
      %2732 = vmatprep.subr.mxu0 0.0
      %2733 = vmatpush1.msra.mxu0 %v2590
      %2734 = vmatprep.subr.mxu0 0.0
      %2735 = vmatpush1.msra.mxu0 %v2591
      %2736 = vmatprep.mubr.f32.mxu0 %v2449
      %2737 = vmatmul.mubr.f32.gmra.mrb[0].mxu0 %v2448
      %v2738 = vpop.f32.mrb[0].mxu0
      %v2739 = vadd.f32 0.0, %v2738
      %v2740 = vpop.f32.mrb[0].mxu0
      %2741 = vmatprep.mubr.f32.mxu0 %v2456
      %2742 = vmatmul.mubr.f32.gmra.mrb[0].mxu0 %v2455
      %v2743 = vpop.f32.mrb[0].mxu0
      %v2744 = vadd.f32 0.0, %v2743
      %v2745 = vpop.f32.mrb[0].mxu0
      %2746 = vmatprep.mubr.f32.mxu0 %v2463
      %2747 = vmatmul.mubr.f32.gmra.mrb[0].mxu0 %v2462
      %v2748 = vpop.f32.mrb[0].mxu0
      %v2749 = vadd.f32 0.0, %v2748
      %v2750 = vpop.f32.mrb[0].mxu0
      %2751 = vmatprep.mubr.f32.mxu0 %v2470
      %2752 = vmatmul.mubr.f32.gmra.mrb[0].mxu0 %v2469
      %v2753 = vpop.f32.mrb[0].mxu0
      %v2754 = vadd.f32 0.0, %v2753
      %v2755 = vpop.f32.mrb[0].mxu0
      %2756 = vmatprep.mubr.f32.mxu0 %v2477
      %2757 = vmatmul.mubr.f32.gmra.mrb[0].mxu0 %v2476
      %v2758 = vpop.f32.mrb[0].mxu0
      %v2759 = vadd.f32 0.0, %v2758
      %v2760 = vpop.f32.mrb[0].mxu0
      %2761 = vmatprep.mubr.f32.mxu0 %v2484
      %2762 = vmatmul.mubr.f32.gmra.mrb[0].mxu0 %v2483
      %v2763 = vpop.f32.mrb[0].mxu0
      %v2764 = vadd.f32 0.0, %v2763
      %v2765 = vpop.f32.mrb[0].mxu0
      %2766 = vmatprep.mubr.f32.mxu0 %v2491
      %2767 = vmatmul.mubr.f32.gmra.mrb[0].mxu0 %v2490
      %v2768 = vpop.f32.mrb[0].mxu0
      %v2769 = vadd.f32 0.0, %v2768
      %v2770 = vpop.f32.mrb[0].mxu0
      %2771 = vmatprep.mubr.f32.mxu0 %v2498
      %2772 = vmatmul.mubr.f32.gmra.mrb[0].mxu0 %v2497
      %v2773 = vpop.f32.mrb[0].mxu0
      %v2774 = vadd.f32 0.0, %v2773
      %v2775 = vpop.f32.mrb[0].mxu0
      %2776 = vmatprep.mubr.f32.mxu0 %v2505
      %2777 = vmatmul.mubr.f32.gmra.mrb[0].mxu0 %v2504
      %v2778 = vpop.f32.mrb[0].mxu0
      %v2779 = vadd.f32 0.0, %v2778
      %v2780 = vpop.f32.mrb[0].mxu0
      %2781 = vmatprep.mubr.f32.mxu0 %v2512
      %2782 = vmatmul.mubr.f32.gmra.mrb[0].mxu0 %v2511
      %v2783 = vpop.f32.mrb[0].mxu0
      %v2784 = vadd.f32 0.0, %v2783
      %v2785 = vpop.f32.mrb[0].mxu0
      %2786 = vmatprep.mubr.f32.mxu0 %v2519
      %2787 = vmatmul.mubr.f32.gmra.mrb[0].mxu0 %v2518
      %v2788 = vpop.f32.mrb[0].mxu0
      %v2789 = vadd.f32 0.0, %v2788
      %v2790 = vpop.f32.mrb[0].mxu0
      %2791 = vmatprep.mubr.f32.mxu0 %v2526
      %2792 = vmatmul.mubr.f32.gmra.mrb[0].mxu0 %v2525
      %v2793 = vpop.f32.mrb[0].mxu0
      %v2794 = vadd.f32 0.0, %v2793
      %v2795 = vpop.f32.mrb[0].mxu0
      %2796 = vmatprep.mubr.f32.mxu0 %v2533
      %2797 = vmatmul.mubr.f32.gmra.mrb[0].mxu0 %v2532
      %v2798 = vpop.f32.mrb[0].mxu0
      %v2799 = vadd.f32 0.0, %v2798
      %v2800 = vpop.f32.mrb[0].mxu0
      %2801 = vmatprep.mubr.f32.mxu0 %v2540
      %2802 = vmatmul.mubr.f32.gmra.mrb[0].mxu0 %v2539
      %v2803 = vpop.f32.mrb[0].mxu0
      %v2804 = vadd.f32 0.0, %v2803
      %v2805 = vpop.f32.mrb[0].mxu0
      %2806 = vmatprep.mubr.f32.mxu0 %v2547
      %2807 = vmatmul.mubr.f32.gmra.mrb[0].mxu0 %v2546
      %v2808 = vpop.f32.mrb[0].mxu0
      %v2809 = vadd.f32 0.0, %v2808
      %v2810 = vpop.f32.mrb[0].mxu0
      %2811 = vmatprep.mubr.f32.mxu0 %v2554
      %2812 = vmatmul.mubr.f32.gmra.mrb[0].mxu0 %v2553
      %v2813 = vpop.f32.mrb[0].mxu0
      %v2814 = vadd.f32 0.0, %v2813
      %v2815 = vpop.f32.mrb[0].mxu0
      %2816 = vdwg.mxu0
      %2817 = vmatprep.subr.mxu0 0.0
      %2818 = vmatpush1.msra.mxu0 %v2592
      %2819 = vmatprep.subr.mxu0 0.0
      %2820 = vmatpush1.msra.mxu0 %v2593
      %2821 = vmatprep.subr.mxu0 0.0
      %2822 = vmatpush1.msra.mxu0 %v2594
      %2823 = vmatprep.subr.mxu0 0.0
      %2824 = vmatpush1.msra.mxu0 %v2595
      %2825 = vmatprep.subr.mxu0 0.0
      %2826 = vmatpush1.msra.mxu0 %v2596
      %2827 = vmatprep.subr.mxu0 0.0
      %2828 = vmatpush1.msra.mxu0 %v2597
      %2829 = vmatprep.subr.mxu0 0.0
      %2830 = vmatpush1.msra.mxu0 %v2598
      %2831 = vmatprep.subr.mxu0 0.0
      %2832 = vmatpush1.msra.mxu0 %v2599
      %2833 = vmatprep.subr.mxu0 0.0
      %2834 = vmatpush1.msra.mxu0 %v2600
      %2835 = vmatprep.subr.mxu0 0.0
      %2836 = vmatpush1.msra.mxu0 %v2601
      %2837 = vmatprep.subr.mxu0 0.0
      %2838 = vmatpush1.msra.mxu0 %v2602
      %2839 = vmatprep.subr.mxu0 0.0
      %2840 = vmatpush1.msra.mxu0 %v2603
      %2841 = vmatprep.subr.mxu0 0.0
      %2842 = vmatpush1.msra.mxu0 %v2604
      %2843 = vmatprep.subr.mxu0 0.0
      %2844 = vmatpush1.msra.mxu0 %v2605
      %2845 = vmatprep.subr.mxu0 0.0
      %2846 = vmatpush1.msra.mxu0 %v2606
      %2847 = vmatprep.subr.mxu0 0.0
      %2848 = vmatpush1.msra.mxu0 %v2607
      %2849 = vmatprep.subr.mxu0 0.0
      %2850 = vmatpush1.msra.mxu0 %v2608
      %2851 = vmatprep.subr.mxu0 0.0
      %2852 = vmatpush1.msra.mxu0 %v2609
      %2853 = vmatprep.subr.mxu0 0.0
      %2854 = vmatpush1.msra.mxu0 %v2610
      %2855 = vmatprep.subr.mxu0 0.0
      %2856 = vmatpush1.msra.mxu0 %v2611
      %2857 = vmatprep.subr.mxu0 0.0
      %2858 = vmatpush1.msra.mxu0 %v2612
      %2859 = vmatprep.subr.mxu0 0.0
      %2860 = vmatpush1.msra.mxu0 %v2613
      %2861 = vmatprep.subr.mxu0 0.0
      %2862 = vmatpush1.msra.mxu0 %v2614
      %2863 = vmatprep.subr.mxu0 0.0
      %2864 = vmatpush1.msra.mxu0 %v2615
      %2865 = vmatprep.subr.mxu0 0.0
      %2866 = vmatpush1.msra.mxu0 %v2616
      %2867 = vmatprep.subr.mxu0 0.0
      %2868 = vmatpush1.msra.mxu0 %v2617
      %2869 = vmatprep.subr.mxu0 0.0
      %2870 = vmatpush1.msra.mxu0 %v2618
      %2871 = vmatprep.subr.mxu0 0.0
      %2872 = vmatpush1.msra.mxu0 %v2619
      %2873 = vmatprep.subr.mxu0 0.0
      %2874 = vmatpush1.msra.mxu0 %v2620
      %2875 = vmatprep.subr.mxu0 0.0
      %2876 = vmatpush1.msra.mxu0 %v2621
      %2877 = vmatprep.subr.mxu0 0.0
      %2878 = vmatpush1.msra.mxu0 %v2622
      %2879 = vmatprep.subr.mxu0 0.0
      %2880 = vmatpush1.msra.mxu0 %v2623
      %2881 = vmatprep.mubr.f32.mxu0 %v2451
      %2882 = vmatmul.mubr.f32.gmra.mrb[0].mxu0 %v2450
      %v2883 = vpop.f32.mrb[0].mxu0
      %v2884 = vadd.f32 %v2739, %v2883
      %v2885 = vpop.f32.mrb[0].mxu0
      %2886 = vmatprep.mubr.f32.mxu0 %v2458
      %2887 = vmatmul.mubr.f32.gmra.mrb[0].mxu0 %v2457
      %v2888 = vpop.f32.mrb[0].mxu0
      %v2889 = vadd.f32 %v2744, %v2888
      %v2890 = vpop.f32.mrb[0].mxu0
      %2891 = vmatprep.mubr.f32.mxu0 %v2465
      %2892 = vmatmul.mubr.f32.gmra.mrb[0].mxu0 %v2464
      %v2893 = vpop.f32.mrb[0].mxu0
      %v2894 = vadd.f32 %v2749, %v2893
      %v2895 = vpop.f32.mrb[0].mxu0
      %2896 = vmatprep.mubr.f32.mxu0 %v2472
      %2897 = vmatmul.mubr.f32.gmra.mrb[0].mxu0 %v2471
      %v2898 = vpop.f32.mrb[0].mxu0
      %v2899 = vadd.f32 %v2754, %v2898
      %v2900 = vpop.f32.mrb[0].mxu0
      %2901 = vmatprep.mubr.f32.mxu0 %v2479
      %2902 = vmatmul.mubr.f32.gmra.mrb[0].mxu0 %v2478
      %v2903 = vpop.f32.mrb[0].mxu0
      %v2904 = vadd.f32 %v2759, %v2903
      %v2905 = vpop.f32.mrb[0].mxu0
      %2906 = vmatprep.mubr.f32.mxu0 %v2486
      %2907 = vmatmul.mubr.f32.gmra.mrb[0].mxu0 %v2485
      %v2908 = vpop.f32.mrb[0].mxu0
      %v2909 = vadd.f32 %v2764, %v2908
      %v2910 = vpop.f32.mrb[0].mxu0
      %2911 = vmatprep.mubr.f32.mxu0 %v2493
      %2912 = vmatmul.mubr.f32.gmra.mrb[0].mxu0 %v2492
      %v2913 = vpop.f32.mrb[0].mxu0
      %v2914 = vadd.f32 %v2769, %v2913
      %v2915 = vpop.f32.mrb[0].mxu0
      %2916 = vmatprep.mubr.f32.mxu0 %v2500
      %2917 = vmatmul.mubr.f32.gmra.mrb[0].mxu0 %v2499
      %v2918 = vpop.f32.mrb[0].mxu0
      %v2919 = vadd.f32 %v2774, %v2918
      %v2920 = vpop.f32.mrb[0].mxu0
      %2921 = vmatprep.mubr.f32.mxu0 %v2507
      %2922 = vmatmul.mubr.f32.gmra.mrb[0].mxu0 %v2506
      %v2923 = vpop.f32.mrb[0].mxu0
      %v2924 = vadd.f32 %v2779, %v2923
      %v2925 = vpop.f32.mrb[0].mxu0
      %2926 = vmatprep.mubr.f32.mxu0 %v2514
      %2927 = vmatmul.mubr.f32.gmra.mrb[0].mxu0 %v2513
      %v2928 = vpop.f32.mrb[0].mxu0
      %v2929 = vadd.f32 %v2784, %v2928
      %v2930 = vpop.f32.mrb[0].mxu0
      %2931 = vmatprep.mubr.f32.mxu0 %v2521
      %2932 = vmatmul.mubr.f32.gmra.mrb[0].mxu0 %v2520
      %v2933 = vpop.f32.mrb[0].mxu0
      %v2934 = vadd.f32 %v2789, %v2933
      %v2935 = vpop.f32.mrb[0].mxu0
      %2936 = vmatprep.mubr.f32.mxu0 %v2528
      %2937 = vmatmul.mubr.f32.gmra.mrb[0].mxu0 %v2527
      %v2938 = vpop.f32.mrb[0].mxu0
      %v2939 = vadd.f32 %v2794, %v2938
      %v2940 = vpop.f32.mrb[0].mxu0
      %2941 = vmatprep.mubr.f32.mxu0 %v2535
      %2942 = vmatmul.mubr.f32.gmra.mrb[0].mxu0 %v2534
      %v2943 = vpop.f32.mrb[0].mxu0
      %v2944 = vadd.f32 %v2799, %v2943
      %v2945 = vpop.f32.mrb[0].mxu0
      %2946 = vmatprep.mubr.f32.mxu0 %v2542
      %2947 = vmatmul.mubr.f32.gmra.mrb[0].mxu0 %v2541
      %v2948 = vpop.f32.mrb[0].mxu0
      %v2949 = vadd.f32 %v2804, %v2948
      %v2950 = vpop.f32.mrb[0].mxu0
      %2951 = vmatprep.mubr.f32.mxu0 %v2549
      %2952 = vmatmul.mubr.f32.gmra.mrb[0].mxu0 %v2548
      %v2953 = vpop.f32.mrb[0].mxu0
      %v2954 = vadd.f32 %v2809, %v2953
      %v2955 = vpop.f32.mrb[0].mxu0
      %2956 = vmatprep.mubr.f32.mxu0 %v2556
      %2957 = vmatmul.mubr.f32.gmra.mrb[0].mxu0 %v2555
      %v2958 = vpop.f32.mrb[0].mxu0
      %v2959 = vadd.f32 %v2814, %v2958
      %v2960 = vpop.f32.mrb[0].mxu0
      %2961 = vdwg.mxu0
      %2962 = vmatprep.subr.mxu0 0.0
      %2963 = vmatpush1.msra.mxu0 %v2624
      %2964 = vmatprep.subr.mxu0 0.0
      %2965 = vmatpush1.msra.mxu0 %v2625
      %2966 = vmatprep.subr.mxu0 0.0
      %2967 = vmatpush1.msra.mxu0 %v2626
      %2968 = vmatprep.subr.mxu0 0.0
      %2969 = vmatpush1.msra.mxu0 %v2627
      %2970 = vmatprep.subr.mxu0 0.0
      %2971 = vmatpush1.msra.mxu0 %v2628
      %2972 = vmatprep.subr.mxu0 0.0
      %2973 = vmatpush1.msra.mxu0 %v2629
      %2974 = vmatprep.subr.mxu0 0.0
      %2975 = vmatpush1.msra.mxu0 %v2630
      %2976 = vmatprep.subr.mxu0 0.0
      %2977 = vmatpush1.msra.mxu0 %v2631
      %2978 = vmatprep.subr.mxu0 0.0
      %2979 = vmatpush1.msra.mxu0 %v2632
      %2980 = vmatprep.subr.mxu0 0.0
      %2981 = vmatpush1.msra.mxu0 %v2633
      %2982 = vmatprep.subr.mxu0 0.0
      %2983 = vmatpush1.msra.mxu0 %v2634
      %2984 = vmatprep.subr.mxu0 0.0
      %2985 = vmatpush1.msra.mxu0 %v2635
      %2986 = vmatprep.subr.mxu0 0.0
      %2987 = vmatpush1.msra.mxu0 %v2636
      %2988 = vmatprep.subr.mxu0 0.0
      %2989 = vmatpush1.msra.mxu0 %v2637
      %2990 = vmatprep.subr.mxu0 0.0
      %2991 = vmatpush1.msra.mxu0 %v2638
      %2992 = vmatprep.subr.mxu0 0.0
      %2993 = vmatpush1.msra.mxu0 %v2639
      %2994 = vmatprep.subr.mxu0 0.0
      %2995 = vmatpush1.msra.mxu0 %v2640
      %2996 = vmatprep.subr.mxu0 0.0
      %2997 = vmatpush1.msra.mxu0 %v2641
      %2998 = vmatprep.subr.mxu0 0.0
      %2999 = vmatpush1.msra.mxu0 %v2642
      %3000 = vmatprep.subr.mxu0 0.0
      %3001 = vmatpush1.msra.mxu0 %v2643
      %3002 = vmatprep.subr.mxu0 0.0
      %3003 = vmatpush1.msra.mxu0 %v2644
      %3004 = vmatprep.subr.mxu0 0.0
      %3005 = vmatpush1.msra.mxu0 %v2645
      %3006 = vmatprep.subr.mxu0 0.0
      %3007 = vmatpush1.msra.mxu0 %v2646
      %3008 = vmatprep.subr.mxu0 0.0
      %3009 = vmatpush1.msra.mxu0 %v2647
      %3010 = vmatprep.subr.mxu0 0.0
      %3011 = vmatpush1.msra.mxu0 %v2648
      %3012 = vmatprep.subr.mxu0 0.0
      %3013 = vmatpush1.msra.mxu0 %v2649
      %3014 = vmatprep.subr.mxu0 0.0
      %3015 = vmatpush1.msra.mxu0 %v2650
      %3016 = vmatprep.subr.mxu0 0.0
      %3017 = vmatpush1.msra.mxu0 %v2651
      %3018 = vmatprep.subr.mxu0 0.0
      %3019 = vmatpush1.msra.mxu0 %v2652
      %3020 = vmatprep.subr.mxu0 0.0
      %3021 = vmatpush1.msra.mxu0 %v2653
      %3022 = vmatprep.subr.mxu0 0.0
      %3023 = vmatpush1.msra.mxu0 %v2654
      %3024 = vmatprep.subr.mxu0 0.0
      %3025 = vmatpush1.msra.mxu0 %v2655
      %3026 = vmatprep.mubr.f32.mxu0 %v2453
      %3027 = vmatmul.mubr.f32.gmra.mrb[0].mxu0 %v2452
      %v3028 = vpop.f32.mrb[0].mxu0
      %v3029 = vadd.f32 %v2884, %v3028
      %v3030 = vpop.f32.mrb[0].mxu0
      %3031 = vmatprep.mubr.f32.mxu0 %v2460
      %3032 = vmatmul.mubr.f32.gmra.mrb[0].mxu0 %v2459
      %v3033 = vpop.f32.mrb[0].mxu0
      %v3034 = vadd.f32 %v2889, %v3033
      %v3035 = vpop.f32.mrb[0].mxu0
      %3036 = vmatprep.mubr.f32.mxu0 %v2467
      %3037 = vmatmul.mubr.f32.gmra.mrb[0].mxu0 %v2466
      %v3038 = vpop.f32.mrb[0].mxu0
      %v3039 = vadd.f32 %v2894, %v3038
      %v3040 = vpop.f32.mrb[0].mxu0
      %3041 = vmatprep.mubr.f32.mxu0 %v2474
      %3042 = vmatmul.mubr.f32.gmra.mrb[0].mxu0 %v2473
      %v3043 = vpop.f32.mrb[0].mxu0
      %v3044 = vadd.f32 %v2899, %v3043
      %v3045 = vpop.f32.mrb[0].mxu0
      %3046 = vmatprep.mubr.f32.mxu0 %v2481
      %3047 = vmatmul.mubr.f32.gmra.mrb[0].mxu0 %v2480
      %v3048 = vpop.f32.mrb[0].mxu0
      %v3049 = vadd.f32 %v2904, %v3048
      %v3050 = vpop.f32.mrb[0].mxu0
      %3051 = vmatprep.mubr.f32.mxu0 %v2488
      %3052 = vmatmul.mubr.f32.gmra.mrb[0].mxu0 %v2487
      %v3053 = vpop.f32.mrb[0].mxu0
      %v3054 = vadd.f32 %v2909, %v3053
      %v3055 = vpop.f32.mrb[0].mxu0
      %3056 = vmatprep.mubr.f32.mxu0 %v2495
      %3057 = vmatmul.mubr.f32.gmra.mrb[0].mxu0 %v2494
      %v3058 = vpop.f32.mrb[0].mxu0
      %v3059 = vadd.f32 %v2914, %v3058
      %v3060 = vpop.f32.mrb[0].mxu0
      %3061 = vmatprep.mubr.f32.mxu0 %v2502
      %3062 = vmatmul.mubr.f32.gmra.mrb[0].mxu0 %v2501
      %v3063 = vpop.f32.mrb[0].mxu0
      %v3064 = vadd.f32 %v2919, %v3063
      %v3065 = vpop.f32.mrb[0].mxu0
      %3066 = vmatprep.mubr.f32.mxu0 %v2509
      %3067 = vmatmul.mubr.f32.gmra.mrb[0].mxu0 %v2508
      %v3068 = vpop.f32.mrb[0].mxu0
      %v3069 = vadd.f32 %v2924, %v3068
      %v3070 = vpop.f32.mrb[0].mxu0
      %3071 = vmatprep.mubr.f32.mxu0 %v2516
      %3072 = vmatmul.mubr.f32.gmra.mrb[0].mxu0 %v2515
      %v3073 = vpop.f32.mrb[0].mxu0
      %v3074 = vadd.f32 %v2929, %v3073
      %v3075 = vpop.f32.mrb[0].mxu0
      %3076 = vmatprep.mubr.f32.mxu0 %v2523
      %3077 = vmatmul.mubr.f32.gmra.mrb[0].mxu0 %v2522
      %v3078 = vpop.f32.mrb[0].mxu0
      %v3079 = vadd.f32 %v2934, %v3078
      %v3080 = vpop.f32.mrb[0].mxu0
      %3081 = vmatprep.mubr.f32.mxu0 %v2530
      %3082 = vmatmul.mubr.f32.gmra.mrb[0].mxu0 %v2529
      %v3083 = vpop.f32.mrb[0].mxu0
      %v3084 = vadd.f32 %v2939, %v3083
      %v3085 = vpop.f32.mrb[0].mxu0
      %3086 = vmatprep.mubr.f32.mxu0 %v2537
      %3087 = vmatmul.mubr.f32.gmra.mrb[0].mxu0 %v2536
      %v3088 = vpop.f32.mrb[0].mxu0
      %v3089 = vadd.f32 %v2944, %v3088
      %v3090 = vpop.f32.mrb[0].mxu0
      %3091 = vmatprep.mubr.f32.mxu0 %v2544
      %3092 = vmatmul.mubr.f32.gmra.mrb[0].mxu0 %v2543
      %v3093 = vpop.f32.mrb[0].mxu0
      %v3094 = vadd.f32 %v2949, %v3093
      %v3095 = vpop.f32.mrb[0].mxu0
      %3096 = vmatprep.mubr.f32.mxu0 %v2551
      %3097 = vmatmul.mubr.f32.gmra.mrb[0].mxu0 %v2550
      %v3098 = vpop.f32.mrb[0].mxu0
      %v3099 = vadd.f32 %v2954, %v3098
      %v3100 = vpop.f32.mrb[0].mxu0
      %3101 = vmatprep.mubr.f32.mxu0 %v2558
      %3102 = vmatmul.mubr.f32.gmra.mrb[0].mxu0 %v2557
      %v3103 = vpop.f32.mrb[0].mxu0
      %v3104 = vadd.f32 %v2959, %v3103
      %v3105 = vpop.f32.mrb[0].mxu0
      %3106 = vdwg.mxu0
      %3107 = vmatprep.subr.mxu0 0.0
      %3108 = vmatpush1.msra.mxu0 %v2656
      %3109 = vmatprep.subr.mxu0 0.0
      %3110 = vmatpush1.msra.mxu0 %v2657
      %3111 = vmatprep.subr.mxu0 0.0
      %3112 = vmatpush1.msra.mxu0 %v2658
      %3113 = vmatprep.subr.mxu0 0.0
      %3114 = vmatpush1.msra.mxu0 %v2659
      %3115 = vmatprep.subr.mxu0 0.0
      %3116 = vmatpush1.msra.mxu0 %v2660
      %3117 = vmatprep.subr.mxu0 0.0
      %3118 = vmatpush1.msra.mxu0 %v2661
      %3119 = vmatprep.subr.mxu0 0.0
      %3120 = vmatpush1.msra.mxu0 %v2662
      %3121 = vmatprep.subr.mxu0 0.0
      %3122 = vmatpush1.msra.mxu0 %v2663
      %3123 = vmatprep.subr.mxu0 0.0
      %3124 = vmatpush1.msra.mxu0 %v2664
      %3125 = vmatprep.subr.mxu0 0.0
      %3126 = vmatpush1.msra.mxu0 %v2665
      %3127 = vmatprep.subr.mxu0 0.0
      %3128 = vmatpush1.msra.mxu0 %v2666
      %3129 = vmatprep.subr.mxu0 0.0
      %3130 = vmatpush1.msra.mxu0 %v2667
      %3131 = vmatprep.subr.mxu0 0.0
      %3132 = vmatpush1.msra.mxu0 %v2668
      %3133 = vmatprep.subr.mxu0 0.0
      %3134 = vmatpush1.msra.mxu0 %v2669
      %3135 = vmatprep.subr.mxu0 0.0
      %3136 = vmatpush1.msra.mxu0 %v2670
      %3137 = vmatprep.subr.mxu0 0.0
      %3138 = vmatpush1.msra.mxu0 %v2671
      %3139 = vmatprep.subr.mxu0 0.0
      %3140 = vmatpush1.msra.mxu0 0.0
      %3141 = vmatprep.subr.mxu0 0.0
      %3142 = vmatpush1.msra.mxu0 0.0
      %3143 = vmatprep.subr.mxu0 0.0
      %3144 = vmatpush1.msra.mxu0 0.0
      %3145 = vmatprep.subr.mxu0 0.0
      %3146 = vmatpush1.msra.mxu0 0.0
      %3147 = vmatprep.subr.mxu0 0.0
      %3148 = vmatpush1.msra.mxu0 0.0
      %3149 = vmatprep.subr.mxu0 0.0
      %3150 = vmatpush1.msra.mxu0 0.0
      %3151 = vmatprep.subr.mxu0 0.0
      %3152 = vmatpush1.msra.mxu0 0.0
      %3153 = vmatprep.subr.mxu0 0.0
      %3154 = vmatpush1.msra.mxu0 0.0
      %3155 = vmatprep.subr.mxu0 0.0
      %3156 = vmatpush1.msra.mxu0 0.0
      %3157 = vmatprep.subr.mxu0 0.0
      %3158 = vmatpush1.msra.mxu0 0.0
      %3159 = vmatprep.subr.mxu0 0.0
      %3160 = vmatpush1.msra.mxu0 0.0
      %3161 = vmatprep.subr.mxu0 0.0
      %3162 = vmatpush1.msra.mxu0 0.0
      %3163 = vmatprep.subr.mxu0 0.0
      %3164 = vmatpush1.msra.mxu0 0.0
      %3165 = vmatprep.subr.mxu0 0.0
      %3166 = vmatpush1.msra.mxu0 0.0
      %3167 = vmatprep.subr.mxu0 0.0
      %3168 = vmatpush1.msra.mxu0 0.0
      %3169 = vmatprep.subr.mxu0 0.0
      %3170 = vmatpush1.msra.mxu0 0.0
      %3171 = vmatprep.mubr.f32.mxu0 0.0
      %3172 = vmatmul.mubr.f32.gmra.mrb[0].mxu0 %v2454
      %v3173 = vpop.f32.mrb[0].mxu0
      %v3174 = vadd.f32 %v3029, %v3173
      %v3175 = vpop.f32.mrb[0].mxu0
      %3176 = vmatprep.mubr.f32.mxu0 0.0
      %3177 = vmatmul.mubr.f32.gmra.mrb[0].mxu0 %v2461
      %v3178 = vpop.f32.mrb[0].mxu0
      %v3179 = vadd.f32 %v3034, %v3178
      %v3180 = vpop.f32.mrb[0].mxu0
      %3181 = vmatprep.mubr.f32.mxu0 0.0
      %3182 = vmatmul.mubr.f32.gmra.mrb[0].mxu0 %v2468
      %v3183 = vpop.f32.mrb[0].mxu0
      %v3184 = vadd.f32 %v3039, %v3183
      %v3185 = vpop.f32.mrb[0].mxu0
      %3186 = vmatprep.mubr.f32.mxu0 0.0
      %3187 = vmatmul.mubr.f32.gmra.mrb[0].mxu0 %v2475
      %v3188 = vpop.f32.mrb[0].mxu0
      %v3189 = vadd.f32 %v3044, %v3188
      %v3190 = vpop.f32.mrb[0].mxu0
      %3191 = vmatprep.mubr.f32.mxu0 0.0
      %3192 = vmatmul.mubr.f32.gmra.mrb[0].mxu0 %v2482
      %v3193 = vpop.f32.mrb[0].mxu0
      %v3194 = vadd.f32 %v3049, %v3193
      %v3195 = vpop.f32.mrb[0].mxu0
      %3196 = vmatprep.mubr.f32.mxu0 0.0
      %3197 = vmatmul.mubr.f32.gmra.mrb[0].mxu0 %v2489
      %v3198 = vpop.f32.mrb[0].mxu0
      %v3199 = vadd.f32 %v3054, %v3198
      %v3200 = vpop.f32.mrb[0].mxu0
      %3201 = vmatprep.mubr.f32.mxu0 0.0
      %3202 = vmatmul.mubr.f32.gmra.mrb[0].mxu0 %v2496
      %v3203 = vpop.f32.mrb[0].mxu0
      %v3204 = vadd.f32 %v3059, %v3203
      %v3205 = vpop.f32.mrb[0].mxu0
      %3206 = vmatprep.mubr.f32.mxu0 0.0
      %3207 = vmatmul.mubr.f32.gmra.mrb[0].mxu0 %v2503
      %v3208 = vpop.f32.mrb[0].mxu0
      %v3209 = vadd.f32 %v3064, %v3208
      %v3210 = vpop.f32.mrb[0].mxu0
      %3211 = vmatprep.mubr.f32.mxu0 0.0
      %3212 = vmatmul.mubr.f32.gmra.mrb[0].mxu0 %v2510
      %v3213 = vpop.f32.mrb[0].mxu0
      %v3214 = vadd.f32 %v3069, %v3213
      %v3215 = vpop.f32.mrb[0].mxu0
      %3216 = vmatprep.mubr.f32.mxu0 0.0
      %3217 = vmatmul.mubr.f32.gmra.mrb[0].mxu0 %v2517
      %v3218 = vpop.f32.mrb[0].mxu0
      %v3219 = vadd.f32 %v3074, %v3218
      %v3220 = vpop.f32.mrb[0].mxu0
      %3221 = vmatprep.mubr.f32.mxu0 0.0
      %3222 = vmatmul.mubr.f32.gmra.mrb[0].mxu0 %v2524
      %v3223 = vpop.f32.mrb[0].mxu0
      %v3224 = vadd.f32 %v3079, %v3223
      %v3225 = vpop.f32.mrb[0].mxu0
      %3226 = vmatprep.mubr.f32.mxu0 0.0
      %3227 = vmatmul.mubr.f32.gmra.mrb[0].mxu0 %v2531
      %v3228 = vpop.f32.mrb[0].mxu0
      %v3229 = vadd.f32 %v3084, %v3228
      %v3230 = vpop.f32.mrb[0].mxu0
      %3231 = vmatprep.mubr.f32.mxu0 0.0
      %3232 = vmatmul.mubr.f32.gmra.mrb[0].mxu0 %v2538
      %v3233 = vpop.f32.mrb[0].mxu0
      %v3234 = vadd.f32 %v3089, %v3233
      %v3235 = vpop.f32.mrb[0].mxu0
      %3236 = vmatprep.mubr.f32.mxu0 0.0
      %3237 = vmatmul.mubr.f32.gmra.mrb[0].mxu0 %v2545
      %v3238 = vpop.f32.mrb[0].mxu0
      %v3239 = vadd.f32 %v3094, %v3238
      %v3240 = vpop.f32.mrb[0].mxu0
      %3241 = vmatprep.mubr.f32.mxu0 0.0
      %3242 = vmatmul.mubr.f32.gmra.mrb[0].mxu0 %v2552
      %v3243 = vpop.f32.mrb[0].mxu0
      %v3244 = vadd.f32 %v3099, %v3243
      %v3245 = vpop.f32.mrb[0].mxu0
      %3246 = vmatprep.mubr.f32.mxu0 0.0
      %3247 = vmatmul.mubr.f32.gmra.mrb[0].mxu0 %v2559
      %v3248 = vpop.f32.mrb[0].mxu0
      %v3249 = vadd.f32 %v3104, %v3248
      %v3250 = vpop.f32.mrb[0].mxu0
      %3251 = vdwg.mxu0
      %3252 = vst [vmem:[#allocation5] sm:$0xff] %v3174
      %3253 = vst [vmem:[#allocation5 + $0x8] sm:$0xff] %v3179
      %3254 = vst [vmem:[#allocation5 + $0x10] sm:$0xff] %v3184
      %3255 = vst [vmem:[#allocation5 + $0x18] sm:$0xff] %v3189
      %3256 = vst [vmem:[#allocation5 + $0x20] sm:$0xff] %v3194
      %3257 = vst [vmem:[#allocation5 + $0x28] sm:$0xff] %v3199
      %3258 = vst [vmem:[#allocation5 + $0x30] sm:$0xff] %v3204
      %3259 = vst [vmem:[#allocation5 + $0x38] sm:$0xff] %v3209
      %3260 = vst [vmem:[#allocation5 + $0x40] sm:$0xff] %v3214
      %3261 = vst [vmem:[#allocation5 + $0x48] sm:$0xff] %v3219
      %3262 = vst [vmem:[#allocation5 + $0x50] sm:$0xff] %v3224
      %3263 = vst [vmem:[#allocation5 + $0x58] sm:$0xff] %v3229
      %3264 = vst [vmem:[#allocation5 + $0x60] sm:$0xff] %v3234
      %3265 = vst [vmem:[#allocation5 + $0x68] sm:$0xff] %v3239
      %3266 = vst [vmem:[#allocation5 + $0x70] sm:$0xff] %v3244
      %3267 = vst [vmem:[#allocation5 + $0x78] sm:$0xff] %v3249
      %s3268 = scalar_lea.vmem [#allocation3], 112
      %v3269 = vld [vmem:[%s3268] sm:$0xff]
      %v3270 = vld [vmem:[%s3268 + $0x8] sm:$0xff]
      %v3271 = vld [vmem:[%s3268 + $0x10] sm:$0xff]
      %v3272 = vld [vmem:[%s3268 + $0x18] sm:$0xff]
      %v3273 = vld [vmem:[%s3268 + $0x20] sm:$0xff]
      %v3274 = vld [vmem:[%s3268 + $0x28] sm:$0xff]
      %v3275 = vld [vmem:[%s3268 + $0x30] sm:$0xff]
      %v3276 = vld [vmem:[%s3268 + $0x38] sm:$0xff]
      %v3277 = vld [vmem:[%s3268 + $0x40] sm:$0xff]
      %v3278 = vld [vmem:[%s3268 + $0x48] sm:$0xff]
      %v3279 = vld [vmem:[%s3268 + $0x50] sm:$0xff]
      %v3280 = vld [vmem:[%s3268 + $0x58] sm:$0xff]
      %v3281 = vld [vmem:[%s3268 + $0x60] sm:$0xff]
      %v3282 = vld [vmem:[%s3268 + $0x68] sm:$0xff]
      %v3283 = vld [vmem:[%s3268 + $0x70] sm:$0xff]
      %v3284 = vld [vmem:[%s3268 + $0x78] sm:$0xff]
      %v3285 = vld [vmem:[%s3268 + $0x80] sm:$0xff]
      %v3286 = vld [vmem:[%s3268 + $0x88] sm:$0xff]
      %v3287 = vld [vmem:[%s3268 + $0x90] sm:$0xff]
      %v3288 = vld [vmem:[%s3268 + $0x98] sm:$0xff]
      %v3289 = vld [vmem:[%s3268 + $0xa0] sm:$0xff]
      %v3290 = vld [vmem:[%s3268 + $0xa8] sm:$0xff]
      %v3291 = vld [vmem:[%s3268 + $0xb0] sm:$0xff]
      %v3292 = vld [vmem:[%s3268 + $0xb8] sm:$0xff]
      %v3293 = vld [vmem:[%s3268 + $0xc0] sm:$0xff]
      %v3294 = vld [vmem:[%s3268 + $0xc8] sm:$0xff]
      %v3295 = vld [vmem:[%s3268 + $0xd0] sm:$0xff]
      %v3296 = vld [vmem:[%s3268 + $0xd8] sm:$0xff]
      %v3297 = vld [vmem:[%s3268 + $0xe0] sm:$0xff]
      %v3298 = vld [vmem:[%s3268 + $0xe8] sm:$0xff]
      %v3299 = vld [vmem:[%s3268 + $0xf0] sm:$0xff]
      %v3300 = vld [vmem:[%s3268 + $0xf8] sm:$0xff]
      %v3301 = vld [vmem:[%s3268 + $0x100] sm:$0xff]
      %v3302 = vld [vmem:[%s3268 + $0x108] sm:$0xff]
      %v3303 = vld [vmem:[%s3268 + $0x110] sm:$0xff]
      %v3304 = vld [vmem:[%s3268 + $0x118] sm:$0xff]
      %v3305 = vld [vmem:[%s3268 + $0x120] sm:$0xff]
      %v3306 = vld [vmem:[%s3268 + $0x128] sm:$0xff]
      %v3307 = vld [vmem:[%s3268 + $0x130] sm:$0xff]
      %v3308 = vld [vmem:[%s3268 + $0x138] sm:$0xff]
      %v3309 = vld [vmem:[%s3268 + $0x140] sm:$0xff]
      %v3310 = vld [vmem:[%s3268 + $0x148] sm:$0xff]
      %v3311 = vld [vmem:[%s3268 + $0x150] sm:$0xff]
      %v3312 = vld [vmem:[%s3268 + $0x158] sm:$0xff]
      %v3313 = vld [vmem:[%s3268 + $0x160] sm:$0xff]
      %v3314 = vld [vmem:[%s3268 + $0x168] sm:$0xff]
      %v3315 = vld [vmem:[%s3268 + $0x170] sm:$0xff]
      %v3316 = vld [vmem:[%s3268 + $0x178] sm:$0xff]
      %v3317 = vld [vmem:[%s3268 + $0x180] sm:$0xff]
      %v3318 = vld [vmem:[%s3268 + $0x188] sm:$0xff]
      %v3319 = vld [vmem:[%s3268 + $0x190] sm:$0xff]
      %v3320 = vld [vmem:[%s3268 + $0x198] sm:$0xff]
      %v3321 = vld [vmem:[%s3268 + $0x1a0] sm:$0xff]
      %v3322 = vld [vmem:[%s3268 + $0x1a8] sm:$0xff]
      %v3323 = vld [vmem:[%s3268 + $0x1b0] sm:$0xff]
      %v3324 = vld [vmem:[%s3268 + $0x1b8] sm:$0xff]
      %v3325 = vld [vmem:[%s3268 + $0x1c0] sm:$0xff]
      %v3326 = vld [vmem:[%s3268 + $0x1c8] sm:$0xff]
      %v3327 = vld [vmem:[%s3268 + $0x1d0] sm:$0xff]
      %v3328 = vld [vmem:[%s3268 + $0x1d8] sm:$0xff]
      %v3329 = vld [vmem:[%s3268 + $0x1e0] sm:$0xff]
      %v3330 = vld [vmem:[%s3268 + $0x1e8] sm:$0xff]
      %v3331 = vld [vmem:[%s3268 + $0x1f0] sm:$0xff]
      %v3332 = vld [vmem:[%s3268 + $0x1f8] sm:$0xff]
      %v3333 = vld [vmem:[%s3268 + $0x200] sm:$0xff]
      %v3334 = vld [vmem:[%s3268 + $0x208] sm:$0xff]
      %v3335 = vld [vmem:[%s3268 + $0x210] sm:$0xff]
      %v3336 = vld [vmem:[%s3268 + $0x218] sm:$0xff]
      %v3337 = vld [vmem:[%s3268 + $0x220] sm:$0xff]
      %v3338 = vld [vmem:[%s3268 + $0x228] sm:$0xff]
      %v3339 = vld [vmem:[%s3268 + $0x230] sm:$0xff]
      %v3340 = vld [vmem:[%s3268 + $0x238] sm:$0xff]
      %v3341 = vld [vmem:[%s3268 + $0x240] sm:$0xff]
      %v3342 = vld [vmem:[%s3268 + $0x248] sm:$0xff]
      %v3343 = vld [vmem:[%s3268 + $0x250] sm:$0xff]
      %v3344 = vld [vmem:[%s3268 + $0x258] sm:$0xff]
      %v3345 = vld [vmem:[%s3268 + $0x260] sm:$0xff]
      %v3346 = vld [vmem:[%s3268 + $0x268] sm:$0xff]
      %v3347 = vld [vmem:[%s3268 + $0x270] sm:$0xff]
      %v3348 = vld [vmem:[%s3268 + $0x278] sm:$0xff]
      %v3349 = vld [vmem:[%s3268 + $0x280] sm:$0xff]
      %v3350 = vld [vmem:[%s3268 + $0x288] sm:$0xff]
      %v3351 = vld [vmem:[%s3268 + $0x290] sm:$0xff]
      %v3352 = vld [vmem:[%s3268 + $0x298] sm:$0xff]
      %v3353 = vld [vmem:[%s3268 + $0x2a0] sm:$0xff]
      %v3354 = vld [vmem:[%s3268 + $0x2a8] sm:$0xff]
      %v3355 = vld [vmem:[%s3268 + $0x2b0] sm:$0xff]
      %v3356 = vld [vmem:[%s3268 + $0x2b8] sm:$0xff]
      %v3357 = vld [vmem:[%s3268 + $0x2c0] sm:$0xff]
      %v3358 = vld [vmem:[%s3268 + $0x2c8] sm:$0xff]
      %v3359 = vld [vmem:[%s3268 + $0x2d0] sm:$0xff]
      %v3360 = vld [vmem:[%s3268 + $0x2d8] sm:$0xff]
      %v3361 = vld [vmem:[%s3268 + $0x2e0] sm:$0xff]
      %v3362 = vld [vmem:[%s3268 + $0x2e8] sm:$0xff]
      %v3363 = vld [vmem:[%s3268 + $0x2f0] sm:$0xff]
      %v3364 = vld [vmem:[%s3268 + $0x2f8] sm:$0xff]
      %v3365 = vld [vmem:[%s3268 + $0x300] sm:$0xff]
      %v3366 = vld [vmem:[%s3268 + $0x308] sm:$0xff]
      %v3367 = vld [vmem:[%s3268 + $0x310] sm:$0xff]
      %v3368 = vld [vmem:[%s3268 + $0x318] sm:$0xff]
      %v3369 = vld [vmem:[%s3268 + $0x320] sm:$0xff]
      %v3370 = vld [vmem:[%s3268 + $0x328] sm:$0xff]
      %v3371 = vld [vmem:[%s3268 + $0x330] sm:$0xff]
      %v3372 = vld [vmem:[%s3268 + $0x338] sm:$0xff]
      %v3373 = vld [vmem:[%s3268 + $0x340] sm:$0xff]
      %v3374 = vld [vmem:[%s3268 + $0x348] sm:$0xff]
      %v3375 = vld [vmem:[%s3268 + $0x350] sm:$0xff]
      %v3376 = vld [vmem:[%s3268 + $0x358] sm:$0xff]
      %v3377 = vld [vmem:[%s3268 + $0x360] sm:$0xff]
      %v3378 = vld [vmem:[%s3268 + $0x368] sm:$0xff]
      %v3379 = vld [vmem:[%s3268 + $0x370] sm:$0xff]
      %v3380 = vld [vmem:[%s3268 + $0x378] sm:$0xff]
      %s3381 = scalar_lea.vmem [#allocation4], 896
      %v3382 = vld [vmem:[%s3381] sm:$0xff]
      %v3383 = vld [vmem:[%s3381 + $0x8] sm:$0xff]
      %v3384 = vld [vmem:[%s3381 + $0x10] sm:$0xff]
      %v3385 = vld [vmem:[%s3381 + $0x18] sm:$0xff]
      %v3386 = vld [vmem:[%s3381 + $0x20] sm:$0xff]
      %v3387 = vld [vmem:[%s3381 + $0x28] sm:$0xff]
      %v3388 = vld [vmem:[%s3381 + $0x30] sm:$0xff]
      %v3389 = vld [vmem:[%s3381 + $0x38] sm:$0xff]
      %v3390 = vld [vmem:[%s3381 + $0x40] sm:$0xff]
      %v3391 = vld [vmem:[%s3381 + $0x48] sm:$0xff]
      %v3392 = vld [vmem:[%s3381 + $0x50] sm:$0xff]
      %v3393 = vld [vmem:[%s3381 + $0x58] sm:$0xff]
      %v3394 = vld [vmem:[%s3381 + $0x60] sm:$0xff]
      %v3395 = vld [vmem:[%s3381 + $0x68] sm:$0xff]
      %v3396 = vld [vmem:[%s3381 + $0x70] sm:$0xff]
      %v3397 = vld [vmem:[%s3381 + $0x78] sm:$0xff]
      %v3398 = vld [vmem:[%s3381 + $0x80] sm:$0xff]
      %v3399 = vld [vmem:[%s3381 + $0x88] sm:$0xff]
      %v3400 = vld [vmem:[%s3381 + $0x90] sm:$0xff]
      %v3401 = vld [vmem:[%s3381 + $0x98] sm:$0xff]
      %v3402 = vld [vmem:[%s3381 + $0xa0] sm:$0xff]
      %v3403 = vld [vmem:[%s3381 + $0xa8] sm:$0xff]
      %v3404 = vld [vmem:[%s3381 + $0xb0] sm:$0xff]
      %v3405 = vld [vmem:[%s3381 + $0xb8] sm:$0xff]
      %v3406 = vld [vmem:[%s3381 + $0xc0] sm:$0xff]
      %v3407 = vld [vmem:[%s3381 + $0xc8] sm:$0xff]
      %v3408 = vld [vmem:[%s3381 + $0xd0] sm:$0xff]
      %v3409 = vld [vmem:[%s3381 + $0xd8] sm:$0xff]
      %v3410 = vld [vmem:[%s3381 + $0xe0] sm:$0xff]
      %v3411 = vld [vmem:[%s3381 + $0xe8] sm:$0xff]
      %v3412 = vld [vmem:[%s3381 + $0xf0] sm:$0xff]
      %v3413 = vld [vmem:[%s3381 + $0xf8] sm:$0xff]
      %v3414 = vld [vmem:[%s3381 + $0x100] sm:$0xff]
      %v3415 = vld [vmem:[%s3381 + $0x108] sm:$0xff]
      %v3416 = vld [vmem:[%s3381 + $0x110] sm:$0xff]
      %v3417 = vld [vmem:[%s3381 + $0x118] sm:$0xff]
      %v3418 = vld [vmem:[%s3381 + $0x120] sm:$0xff]
      %v3419 = vld [vmem:[%s3381 + $0x128] sm:$0xff]
      %v3420 = vld [vmem:[%s3381 + $0x130] sm:$0xff]
      %v3421 = vld [vmem:[%s3381 + $0x138] sm:$0xff]
      %v3422 = vld [vmem:[%s3381 + $0x140] sm:$0xff]
      %v3423 = vld [vmem:[%s3381 + $0x148] sm:$0xff]
      %v3424 = vld [vmem:[%s3381 + $0x150] sm:$0xff]
      %v3425 = vld [vmem:[%s3381 + $0x158] sm:$0xff]
      %v3426 = vld [vmem:[%s3381 + $0x160] sm:$0xff]
      %v3427 = vld [vmem:[%s3381 + $0x168] sm:$0xff]
      %v3428 = vld [vmem:[%s3381 + $0x170] sm:$0xff]
      %v3429 = vld [vmem:[%s3381 + $0x178] sm:$0xff]
      %v3430 = vld [vmem:[%s3381 + $0x180] sm:$0xff]
      %v3431 = vld [vmem:[%s3381 + $0x188] sm:$0xff]
      %v3432 = vld [vmem:[%s3381 + $0x190] sm:$0xff]
      %v3433 = vld [vmem:[%s3381 + $0x198] sm:$0xff]
      %v3434 = vld [vmem:[%s3381 + $0x1a0] sm:$0xff]
      %v3435 = vld [vmem:[%s3381 + $0x1a8] sm:$0xff]
      %v3436 = vld [vmem:[%s3381 + $0x1b0] sm:$0xff]
      %v3437 = vld [vmem:[%s3381 + $0x1b8] sm:$0xff]
      %v3438 = vld [vmem:[%s3381 + $0x1c0] sm:$0xff]
      %v3439 = vld [vmem:[%s3381 + $0x1c8] sm:$0xff]
      %v3440 = vld [vmem:[%s3381 + $0x1d0] sm:$0xff]
      %v3441 = vld [vmem:[%s3381 + $0x1d8] sm:$0xff]
      %v3442 = vld [vmem:[%s3381 + $0x1e0] sm:$0xff]
      %v3443 = vld [vmem:[%s3381 + $0x1e8] sm:$0xff]
      %v3444 = vld [vmem:[%s3381 + $0x1f0] sm:$0xff]
      %v3445 = vld [vmem:[%s3381 + $0x1f8] sm:$0xff]
      %v3446 = vld [vmem:[%s3381 + $0x200] sm:$0xff]
      %v3447 = vld [vmem:[%s3381 + $0x208] sm:$0xff]
      %v3448 = vld [vmem:[%s3381 + $0x210] sm:$0xff]
      %v3449 = vld [vmem:[%s3381 + $0x218] sm:$0xff]
      %v3450 = vld [vmem:[%s3381 + $0x220] sm:$0xff]
      %v3451 = vld [vmem:[%s3381 + $0x228] sm:$0xff]
      %v3452 = vld [vmem:[%s3381 + $0x230] sm:$0xff]
      %v3453 = vld [vmem:[%s3381 + $0x238] sm:$0xff]
      %v3454 = vld [vmem:[%s3381 + $0x240] sm:$0xff]
      %v3455 = vld [vmem:[%s3381 + $0x248] sm:$0xff]
      %v3456 = vld [vmem:[%s3381 + $0x250] sm:$0xff]
      %v3457 = vld [vmem:[%s3381 + $0x258] sm:$0xff]
      %v3458 = vld [vmem:[%s3381 + $0x260] sm:$0xff]
      %v3459 = vld [vmem:[%s3381 + $0x268] sm:$0xff]
      %v3460 = vld [vmem:[%s3381 + $0x270] sm:$0xff]
      %v3461 = vld [vmem:[%s3381 + $0x278] sm:$0xff]
      %v3462 = vld [vmem:[%s3381 + $0x280] sm:$0xff]
      %v3463 = vld [vmem:[%s3381 + $0x288] sm:$0xff]
      %v3464 = vld [vmem:[%s3381 + $0x290] sm:$0xff]
      %v3465 = vld [vmem:[%s3381 + $0x298] sm:$0xff]
      %v3466 = vld [vmem:[%s3381 + $0x2a0] sm:$0xff]
      %v3467 = vld [vmem:[%s3381 + $0x2a8] sm:$0xff]
      %v3468 = vld [vmem:[%s3381 + $0x2b0] sm:$0xff]
      %v3469 = vld [vmem:[%s3381 + $0x2b8] sm:$0xff]
      %v3470 = vld [vmem:[%s3381 + $0x2c0] sm:$0xff]
      %v3471 = vld [vmem:[%s3381 + $0x2c8] sm:$0xff]
      %v3472 = vld [vmem:[%s3381 + $0x2d0] sm:$0xff]
      %v3473 = vld [vmem:[%s3381 + $0x2d8] sm:$0xff]
      %v3474 = vld [vmem:[%s3381 + $0x2e0] sm:$0xff]
      %v3475 = vld [vmem:[%s3381 + $0x2e8] sm:$0xff]
      %v3476 = vld [vmem:[%s3381 + $0x2f0] sm:$0xff]
      %v3477 = vld [vmem:[%s3381 + $0x2f8] sm:$0xff]
      %v3478 = vld [vmem:[%s3381 + $0x300] sm:$0xff]
      %v3479 = vld [vmem:[%s3381 + $0x308] sm:$0xff]
      %v3480 = vld [vmem:[%s3381 + $0x310] sm:$0xff]
      %v3481 = vld [vmem:[%s3381 + $0x318] sm:$0xff]
      %v3482 = vld [vmem:[%s3381 + $0x320] sm:$0xff]
      %v3483 = vld [vmem:[%s3381 + $0x328] sm:$0xff]
      %v3484 = vld [vmem:[%s3381 + $0x330] sm:$0xff]
      %v3485 = vld [vmem:[%s3381 + $0x338] sm:$0xff]
      %v3486 = vld [vmem:[%s3381 + $0x340] sm:$0xff]
      %v3487 = vld [vmem:[%s3381 + $0x348] sm:$0xff]
      %v3488 = vld [vmem:[%s3381 + $0x350] sm:$0xff]
      %v3489 = vld [vmem:[%s3381 + $0x358] sm:$0xff]
      %v3490 = vld [vmem:[%s3381 + $0x360] sm:$0xff]
      %v3491 = vld [vmem:[%s3381 + $0x368] sm:$0xff]
      %v3492 = vld [vmem:[%s3381 + $0x370] sm:$0xff]
      %v3493 = vld [vmem:[%s3381 + $0x378] sm:$0xff]
      %3494 = vmatprep.subr.mxu0 0.0
      %3495 = vmatpush1.msra.mxu0 %v3382
      %3496 = vmatprep.subr.mxu0 0.0
      %3497 = vmatpush1.msra.mxu0 %v3383
      %3498 = vmatprep.subr.mxu0 0.0
      %3499 = vmatpush1.msra.mxu0 %v3384
      %3500 = vmatprep.subr.mxu0 0.0
      %3501 = vmatpush1.msra.mxu0 %v3385
      %3502 = vmatprep.subr.mxu0 0.0
      %3503 = vmatpush1.msra.mxu0 %v3386
      %3504 = vmatprep.subr.mxu0 0.0
      %3505 = vmatpush1.msra.mxu0 %v3387
      %3506 = vmatprep.subr.mxu0 0.0
      %3507 = vmatpush1.msra.mxu0 %v3388
      %3508 = vmatprep.subr.mxu0 0.0
      %3509 = vmatpush1.msra.mxu0 %v3389
      %3510 = vmatprep.subr.mxu0 0.0
      %3511 = vmatpush1.msra.mxu0 %v3390
      %3512 = vmatprep.subr.mxu0 0.0
      %3513 = vmatpush1.msra.mxu0 %v3391
      %3514 = vmatprep.subr.mxu0 0.0
      %3515 = vmatpush1.msra.mxu0 %v3392
      %3516 = vmatprep.subr.mxu0 0.0
      %3517 = vmatpush1.msra.mxu0 %v3393
      %3518 = vmatprep.subr.mxu0 0.0
      %3519 = vmatpush1.msra.mxu0 %v3394
      %3520 = vmatprep.subr.mxu0 0.0
      %3521 = vmatpush1.msra.mxu0 %v3395
      %3522 = vmatprep.subr.mxu0 0.0
      %3523 = vmatpush1.msra.mxu0 %v3396
      %3524 = vmatprep.subr.mxu0 0.0
      %3525 = vmatpush1.msra.mxu0 %v3397
      %3526 = vmatprep.subr.mxu0 0.0
      %3527 = vmatpush1.msra.mxu0 %v3398
      %3528 = vmatprep.subr.mxu0 0.0
      %3529 = vmatpush1.msra.mxu0 %v3399
      %3530 = vmatprep.subr.mxu0 0.0
      %3531 = vmatpush1.msra.mxu0 %v3400
      %3532 = vmatprep.subr.mxu0 0.0
      %3533 = vmatpush1.msra.mxu0 %v3401
      %3534 = vmatprep.subr.mxu0 0.0
      %3535 = vmatpush1.msra.mxu0 %v3402
      %3536 = vmatprep.subr.mxu0 0.0
      %3537 = vmatpush1.msra.mxu0 %v3403
      %3538 = vmatprep.subr.mxu0 0.0
      %3539 = vmatpush1.msra.mxu0 %v3404
      %3540 = vmatprep.subr.mxu0 0.0
      %3541 = vmatpush1.msra.mxu0 %v3405
      %3542 = vmatprep.subr.mxu0 0.0
      %3543 = vmatpush1.msra.mxu0 %v3406
      %3544 = vmatprep.subr.mxu0 0.0
      %3545 = vmatpush1.msra.mxu0 %v3407
      %3546 = vmatprep.subr.mxu0 0.0
      %3547 = vmatpush1.msra.mxu0 %v3408
      %3548 = vmatprep.subr.mxu0 0.0
      %3549 = vmatpush1.msra.mxu0 %v3409
      %3550 = vmatprep.subr.mxu0 0.0
      %3551 = vmatpush1.msra.mxu0 %v3410
      %3552 = vmatprep.subr.mxu0 0.0
      %3553 = vmatpush1.msra.mxu0 %v3411
      %3554 = vmatprep.subr.mxu0 0.0
      %3555 = vmatpush1.msra.mxu0 %v3412
      %3556 = vmatprep.subr.mxu0 0.0
      %3557 = vmatpush1.msra.mxu0 %v3413
      %3558 = vmatprep.mubr.f32.mxu0 %v3270
      %3559 = vmatmul.mubr.f32.gmra.mrb[0].mxu0 %v3269
      %v3560 = vpop.f32.mrb[0].mxu0
      %v3561 = vadd.f32 0.0, %v3560
      %v3562 = vpop.f32.mrb[0].mxu0
      %3563 = vmatprep.mubr.f32.mxu0 %v3277
      %3564 = vmatmul.mubr.f32.gmra.mrb[0].mxu0 %v3276
      %v3565 = vpop.f32.mrb[0].mxu0
      %v3566 = vadd.f32 0.0, %v3565
      %v3567 = vpop.f32.mrb[0].mxu0
      %3568 = vmatprep.mubr.f32.mxu0 %v3284
      %3569 = vmatmul.mubr.f32.gmra.mrb[0].mxu0 %v3283
      %v3570 = vpop.f32.mrb[0].mxu0
      %v3571 = vadd.f32 0.0, %v3570
      %v3572 = vpop.f32.mrb[0].mxu0
      %3573 = vmatprep.mubr.f32.mxu0 %v3291
      %3574 = vmatmul.mubr.f32.gmra.mrb[0].mxu0 %v3290
      %v3575 = vpop.f32.mrb[0].mxu0
      %v3576 = vadd.f32 0.0, %v3575
      %v3577 = vpop.f32.mrb[0].mxu0
      %3578 = vmatprep.mubr.f32.mxu0 %v3298
      %3579 = vmatmul.mubr.f32.gmra.mrb[0].mxu0 %v3297
      %v3580 = vpop.f32.mrb[0].mxu0
      %v3581 = vadd.f32 0.0, %v3580
      %v3582 = vpop.f32.mrb[0].mxu0
      %3583 = vmatprep.mubr.f32.mxu0 %v3305
      %3584 = vmatmul.mubr.f32.gmra.mrb[0].mxu0 %v3304
      %v3585 = vpop.f32.mrb[0].mxu0
      %v3586 = vadd.f32 0.0, %v3585
      %v3587 = vpop.f32.mrb[0].mxu0
      %3588 = vmatprep.mubr.f32.mxu0 %v3312
      %3589 = vmatmul.mubr.f32.gmra.mrb[0].mxu0 %v3311
      %v3590 = vpop.f32.mrb[0].mxu0
      %v3591 = vadd.f32 0.0, %v3590
      %v3592 = vpop.f32.mrb[0].mxu0
      %3593 = vmatprep.mubr.f32.mxu0 %v3319
      %3594 = vmatmul.mubr.f32.gmra.mrb[0].mxu0 %v3318
      %v3595 = vpop.f32.mrb[0].mxu0
      %v3596 = vadd.f32 0.0, %v3595
      %v3597 = vpop.f32.mrb[0].mxu0
      %3598 = vmatprep.mubr.f32.mxu0 %v3326
      %3599 = vmatmul.mubr.f32.gmra.mrb[0].mxu0 %v3325
      %v3600 = vpop.f32.mrb[0].mxu0
      %v3601 = vadd.f32 0.0, %v3600
      %v3602 = vpop.f32.mrb[0].mxu0
      %3603 = vmatprep.mubr.f32.mxu0 %v3333
      %3604 = vmatmul.mubr.f32.gmra.mrb[0].mxu0 %v3332
      %v3605 = vpop.f32.mrb[0].mxu0
      %v3606 = vadd.f32 0.0, %v3605
      %v3607 = vpop.f32.mrb[0].mxu0
      %3608 = vmatprep.mubr.f32.mxu0 %v3340
      %3609 = vmatmul.mubr.f32.gmra.mrb[0].mxu0 %v3339
      %v3610 = vpop.f32.mrb[0].mxu0
      %v3611 = vadd.f32 0.0, %v3610
      %v3612 = vpop.f32.mrb[0].mxu0
      %3613 = vmatprep.mubr.f32.mxu0 %v3347
      %3614 = vmatmul.mubr.f32.gmra.mrb[0].mxu0 %v3346
      %v3615 = vpop.f32.mrb[0].mxu0
      %v3616 = vadd.f32 0.0, %v3615
      %v3617 = vpop.f32.mrb[0].mxu0
      %3618 = vmatprep.mubr.f32.mxu0 %v3354
      %3619 = vmatmul.mubr.f32.gmra.mrb[0].mxu0 %v3353
      %v3620 = vpop.f32.mrb[0].mxu0
      %v3621 = vadd.f32 0.0, %v3620
      %v3622 = vpop.f32.mrb[0].mxu0
      %3623 = vmatprep.mubr.f32.mxu0 %v3361
      %3624 = vmatmul.mubr.f32.gmra.mrb[0].mxu0 %v3360
      %v3625 = vpop.f32.mrb[0].mxu0
      %v3626 = vadd.f32 0.0, %v3625
      %v3627 = vpop.f32.mrb[0].mxu0
      %3628 = vmatprep.mubr.f32.mxu0 %v3368
      %3629 = vmatmul.mubr.f32.gmra.mrb[0].mxu0 %v3367
      %v3630 = vpop.f32.mrb[0].mxu0
      %v3631 = vadd.f32 0.0, %v3630
      %v3632 = vpop.f32.mrb[0].mxu0
      %3633 = vmatprep.mubr.f32.mxu0 %v3375
      %3634 = vmatmul.mubr.f32.gmra.mrb[0].mxu0 %v3374
      %v3635 = vpop.f32.mrb[0].mxu0
      %v3636 = vadd.f32 0.0, %v3635
      %v3637 = vpop.f32.mrb[0].mxu0
      %3638 = vdwg.mxu0
      %3639 = vmatprep.subr.mxu0 0.0
      %3640 = vmatpush1.msra.mxu0 %v3414
      %3641 = vmatprep.subr.mxu0 0.0
      %3642 = vmatpush1.msra.mxu0 %v3415
      %3643 = vmatprep.subr.mxu0 0.0
      %3644 = vmatpush1.msra.mxu0 %v3416
      %3645 = vmatprep.subr.mxu0 0.0
      %3646 = vmatpush1.msra.mxu0 %v3417
      %3647 = vmatprep.subr.mxu0 0.0
      %3648 = vmatpush1.msra.mxu0 %v3418
      %3649 = vmatprep.subr.mxu0 0.0
      %3650 = vmatpush1.msra.mxu0 %v3419
      %3651 = vmatprep.subr.mxu0 0.0
      %3652 = vmatpush1.msra.mxu0 %v3420
      %3653 = vmatprep.subr.mxu0 0.0
      %3654 = vmatpush1.msra.mxu0 %v3421
      %3655 = vmatprep.subr.mxu0 0.0
      %3656 = vmatpush1.msra.mxu0 %v3422
      %3657 = vmatprep.subr.mxu0 0.0
      %3658 = vmatpush1.msra.mxu0 %v3423
      %3659 = vmatprep.subr.mxu0 0.0
      %3660 = vmatpush1.msra.mxu0 %v3424
      %3661 = vmatprep.subr.mxu0 0.0
      %3662 = vmatpush1.msra.mxu0 %v3425
      %3663 = vmatprep.subr.mxu0 0.0
      %3664 = vmatpush1.msra.mxu0 %v3426
      %3665 = vmatprep.subr.mxu0 0.0
      %3666 = vmatpush1.msra.mxu0 %v3427
      %3667 = vmatprep.subr.mxu0 0.0
      %3668 = vmatpush1.msra.mxu0 %v3428
      %3669 = vmatprep.subr.mxu0 0.0
      %3670 = vmatpush1.msra.mxu0 %v3429
      %3671 = vmatprep.subr.mxu0 0.0
      %3672 = vmatpush1.msra.mxu0 %v3430
      %3673 = vmatprep.subr.mxu0 0.0
      %3674 = vmatpush1.msra.mxu0 %v3431
      %3675 = vmatprep.subr.mxu0 0.0
      %3676 = vmatpush1.msra.mxu0 %v3432
      %3677 = vmatprep.subr.mxu0 0.0
      %3678 = vmatpush1.msra.mxu0 %v3433
      %3679 = vmatprep.subr.mxu0 0.0
      %3680 = vmatpush1.msra.mxu0 %v3434
      %3681 = vmatprep.subr.mxu0 0.0
      %3682 = vmatpush1.msra.mxu0 %v3435
      %3683 = vmatprep.subr.mxu0 0.0
      %3684 = vmatpush1.msra.mxu0 %v3436
      %3685 = vmatprep.subr.mxu0 0.0
      %3686 = vmatpush1.msra.mxu0 %v3437
      %3687 = vmatprep.subr.mxu0 0.0
      %3688 = vmatpush1.msra.mxu0 %v3438
      %3689 = vmatprep.subr.mxu0 0.0
      %3690 = vmatpush1.msra.mxu0 %v3439
      %3691 = vmatprep.subr.mxu0 0.0
      %3692 = vmatpush1.msra.mxu0 %v3440
      %3693 = vmatprep.subr.mxu0 0.0
      %3694 = vmatpush1.msra.mxu0 %v3441
      %3695 = vmatprep.subr.mxu0 0.0
      %3696 = vmatpush1.msra.mxu0 %v3442
      %3697 = vmatprep.subr.mxu0 0.0
      %3698 = vmatpush1.msra.mxu0 %v3443
      %3699 = vmatprep.subr.mxu0 0.0
      %3700 = vmatpush1.msra.mxu0 %v3444
      %3701 = vmatprep.subr.mxu0 0.0
      %3702 = vmatpush1.msra.mxu0 %v3445
      %3703 = vmatprep.mubr.f32.mxu0 %v3272
      %3704 = vmatmul.mubr.f32.gmra.mrb[0].mxu0 %v3271
      %v3705 = vpop.f32.mrb[0].mxu0
      %v3706 = vadd.f32 %v3561, %v3705
      %v3707 = vpop.f32.mrb[0].mxu0
      %3708 = vmatprep.mubr.f32.mxu0 %v3279
      %3709 = vmatmul.mubr.f32.gmra.mrb[0].mxu0 %v3278
      %v3710 = vpop.f32.mrb[0].mxu0
      %v3711 = vadd.f32 %v3566, %v3710
      %v3712 = vpop.f32.mrb[0].mxu0
      %3713 = vmatprep.mubr.f32.mxu0 %v3286
      %3714 = vmatmul.mubr.f32.gmra.mrb[0].mxu0 %v3285
      %v3715 = vpop.f32.mrb[0].mxu0
      %v3716 = vadd.f32 %v3571, %v3715
      %v3717 = vpop.f32.mrb[0].mxu0
      %3718 = vmatprep.mubr.f32.mxu0 %v3293
      %3719 = vmatmul.mubr.f32.gmra.mrb[0].mxu0 %v3292
      %v3720 = vpop.f32.mrb[0].mxu0
      %v3721 = vadd.f32 %v3576, %v3720
      %v3722 = vpop.f32.mrb[0].mxu0
      %3723 = vmatprep.mubr.f32.mxu0 %v3300
      %3724 = vmatmul.mubr.f32.gmra.mrb[0].mxu0 %v3299
      %v3725 = vpop.f32.mrb[0].mxu0
      %v3726 = vadd.f32 %v3581, %v3725
      %v3727 = vpop.f32.mrb[0].mxu0
      %3728 = vmatprep.mubr.f32.mxu0 %v3307
      %3729 = vmatmul.mubr.f32.gmra.mrb[0].mxu0 %v3306
      %v3730 = vpop.f32.mrb[0].mxu0
      %v3731 = vadd.f32 %v3586, %v3730
      %v3732 = vpop.f32.mrb[0].mxu0
      %3733 = vmatprep.mubr.f32.mxu0 %v3314
      %3734 = vmatmul.mubr.f32.gmra.mrb[0].mxu0 %v3313
      %v3735 = vpop.f32.mrb[0].mxu0
      %v3736 = vadd.f32 %v3591, %v3735
      %v3737 = vpop.f32.mrb[0].mxu0
      %3738 = vmatprep.mubr.f32.mxu0 %v3321
      %3739 = vmatmul.mubr.f32.gmra.mrb[0].mxu0 %v3320
      %v3740 = vpop.f32.mrb[0].mxu0
      %v3741 = vadd.f32 %v3596, %v3740
      %v3742 = vpop.f32.mrb[0].mxu0
      %3743 = vmatprep.mubr.f32.mxu0 %v3328
      %3744 = vmatmul.mubr.f32.gmra.mrb[0].mxu0 %v3327
      %v3745 = vpop.f32.mrb[0].mxu0
      %v3746 = vadd.f32 %v3601, %v3745
      %v3747 = vpop.f32.mrb[0].mxu0
      %3748 = vmatprep.mubr.f32.mxu0 %v3335
      %3749 = vmatmul.mubr.f32.gmra.mrb[0].mxu0 %v3334
      %v3750 = vpop.f32.mrb[0].mxu0
      %v3751 = vadd.f32 %v3606, %v3750
      %v3752 = vpop.f32.mrb[0].mxu0
      %3753 = vmatprep.mubr.f32.mxu0 %v3342
      %3754 = vmatmul.mubr.f32.gmra.mrb[0].mxu0 %v3341
      %v3755 = vpop.f32.mrb[0].mxu0
      %v3756 = vadd.f32 %v3611, %v3755
      %v3757 = vpop.f32.mrb[0].mxu0
      %3758 = vmatprep.mubr.f32.mxu0 %v3349
      %3759 = vmatmul.mubr.f32.gmra.mrb[0].mxu0 %v3348
      %v3760 = vpop.f32.mrb[0].mxu0
      %v3761 = vadd.f32 %v3616, %v3760
      %v3762 = vpop.f32.mrb[0].mxu0
      %3763 = vmatprep.mubr.f32.mxu0 %v3356
      %3764 = vmatmul.mubr.f32.gmra.mrb[0].mxu0 %v3355
      %v3765 = vpop.f32.mrb[0].mxu0
      %v3766 = vadd.f32 %v3621, %v3765
      %v3767 = vpop.f32.mrb[0].mxu0
      %3768 = vmatprep.mubr.f32.mxu0 %v3363
      %3769 = vmatmul.mubr.f32.gmra.mrb[0].mxu0 %v3362
      %v3770 = vpop.f32.mrb[0].mxu0
      %v3771 = vadd.f32 %v3626, %v3770
      %v3772 = vpop.f32.mrb[0].mxu0
      %3773 = vmatprep.mubr.f32.mxu0 %v3370
      %3774 = vmatmul.mubr.f32.gmra.mrb[0].mxu0 %v3369
      %v3775 = vpop.f32.mrb[0].mxu0
      %v3776 = vadd.f32 %v3631, %v3775
      %v3777 = vpop.f32.mrb[0].mxu0
      %3778 = vmatprep.mubr.f32.mxu0 %v3377
      %3779 = vmatmul.mubr.f32.gmra.mrb[0].mxu0 %v3376
      %v3780 = vpop.f32.mrb[0].mxu0
      %v3781 = vadd.f32 %v3636, %v3780
      %v3782 = vpop.f32.mrb[0].mxu0
      %3783 = vdwg.mxu0
      %3784 = vmatprep.subr.mxu0 0.0
      %3785 = vmatpush1.msra.mxu0 %v3446
      %3786 = vmatprep.subr.mxu0 0.0
      %3787 = vmatpush1.msra.mxu0 %v3447
      %3788 = vmatprep.subr.mxu0 0.0
      %3789 = vmatpush1.msra.mxu0 %v3448
      %3790 = vmatprep.subr.mxu0 0.0
      %3791 = vmatpush1.msra.mxu0 %v3449
      %3792 = vmatprep.subr.mxu0 0.0
      %3793 = vmatpush1.msra.mxu0 %v3450
      %3794 = vmatprep.subr.mxu0 0.0
      %3795 = vmatpush1.msra.mxu0 %v3451
      %3796 = vmatprep.subr.mxu0 0.0
      %3797 = vmatpush1.msra.mxu0 %v3452
      %3798 = vmatprep.subr.mxu0 0.0
      %3799 = vmatpush1.msra.mxu0 %v3453
      %3800 = vmatprep.subr.mxu0 0.0
      %3801 = vmatpush1.msra.mxu0 %v3454
      %3802 = vmatprep.subr.mxu0 0.0
      %3803 = vmatpush1.msra.mxu0 %v3455
      %3804 = vmatprep.subr.mxu0 0.0
      %3805 = vmatpush1.msra.mxu0 %v3456
      %3806 = vmatprep.subr.mxu0 0.0
      %3807 = vmatpush1.msra.mxu0 %v3457
      %3808 = vmatprep.subr.mxu0 0.0
      %3809 = vmatpush1.msra.mxu0 %v3458
      %3810 = vmatprep.subr.mxu0 0.0
      %3811 = vmatpush1.msra.mxu0 %v3459
      %3812 = vmatprep.subr.mxu0 0.0
      %3813 = vmatpush1.msra.mxu0 %v3460
      %3814 = vmatprep.subr.mxu0 0.0
      %3815 = vmatpush1.msra.mxu0 %v3461
      %3816 = vmatprep.subr.mxu0 0.0
      %3817 = vmatpush1.msra.mxu0 %v3462
      %3818 = vmatprep.subr.mxu0 0.0
      %3819 = vmatpush1.msra.mxu0 %v3463
      %3820 = vmatprep.subr.mxu0 0.0
      %3821 = vmatpush1.msra.mxu0 %v3464
      %3822 = vmatprep.subr.mxu0 0.0
      %3823 = vmatpush1.msra.mxu0 %v3465
      %3824 = vmatprep.subr.mxu0 0.0
      %3825 = vmatpush1.msra.mxu0 %v3466
      %3826 = vmatprep.subr.mxu0 0.0
      %3827 = vmatpush1.msra.mxu0 %v3467
      %3828 = vmatprep.subr.mxu0 0.0
      %3829 = vmatpush1.msra.mxu0 %v3468
      %3830 = vmatprep.subr.mxu0 0.0
      %3831 = vmatpush1.msra.mxu0 %v3469
      %3832 = vmatprep.subr.mxu0 0.0
      %3833 = vmatpush1.msra.mxu0 %v3470
      %3834 = vmatprep.subr.mxu0 0.0
      %3835 = vmatpush1.msra.mxu0 %v3471
      %3836 = vmatprep.subr.mxu0 0.0
      %3837 = vmatpush1.msra.mxu0 %v3472
      %3838 = vmatprep.subr.mxu0 0.0
      %3839 = vmatpush1.msra.mxu0 %v3473
      %3840 = vmatprep.subr.mxu0 0.0
      %3841 = vmatpush1.msra.mxu0 %v3474
      %3842 = vmatprep.subr.mxu0 0.0
      %3843 = vmatpush1.msra.mxu0 %v3475
      %3844 = vmatprep.subr.mxu0 0.0
      %3845 = vmatpush1.msra.mxu0 %v3476
      %3846 = vmatprep.subr.mxu0 0.0
      %3847 = vmatpush1.msra.mxu0 %v3477
      %3848 = vmatprep.mubr.f32.mxu0 %v3274
      %3849 = vmatmul.mubr.f32.gmra.mrb[0].mxu0 %v3273
      %v3850 = vpop.f32.mrb[0].mxu0
      %v3851 = vadd.f32 %v3706, %v3850
      %v3852 = vpop.f32.mrb[0].mxu0
      %3853 = vmatprep.mubr.f32.mxu0 %v3281
      %3854 = vmatmul.mubr.f32.gmra.mrb[0].mxu0 %v3280
      %v3855 = vpop.f32.mrb[0].mxu0
      %v3856 = vadd.f32 %v3711, %v3855
      %v3857 = vpop.f32.mrb[0].mxu0
      %3858 = vmatprep.mubr.f32.mxu0 %v3288
      %3859 = vmatmul.mubr.f32.gmra.mrb[0].mxu0 %v3287
      %v3860 = vpop.f32.mrb[0].mxu0
      %v3861 = vadd.f32 %v3716, %v3860
      %v3862 = vpop.f32.mrb[0].mxu0
      %3863 = vmatprep.mubr.f32.mxu0 %v3295
      %3864 = vmatmul.mubr.f32.gmra.mrb[0].mxu0 %v3294
      %v3865 = vpop.f32.mrb[0].mxu0
      %v3866 = vadd.f32 %v3721, %v3865
      %v3867 = vpop.f32.mrb[0].mxu0
      %3868 = vmatprep.mubr.f32.mxu0 %v3302
      %3869 = vmatmul.mubr.f32.gmra.mrb[0].mxu0 %v3301
      %v3870 = vpop.f32.mrb[0].mxu0
      %v3871 = vadd.f32 %v3726, %v3870
      %v3872 = vpop.f32.mrb[0].mxu0
      %3873 = vmatprep.mubr.f32.mxu0 %v3309
      %3874 = vmatmul.mubr.f32.gmra.mrb[0].mxu0 %v3308
      %v3875 = vpop.f32.mrb[0].mxu0
      %v3876 = vadd.f32 %v3731, %v3875
      %v3877 = vpop.f32.mrb[0].mxu0
      %3878 = vmatprep.mubr.f32.mxu0 %v3316
      %3879 = vmatmul.mubr.f32.gmra.mrb[0].mxu0 %v3315
      %v3880 = vpop.f32.mrb[0].mxu0
      %v3881 = vadd.f32 %v3736, %v3880
      %v3882 = vpop.f32.mrb[0].mxu0
      %3883 = vmatprep.mubr.f32.mxu0 %v3323
      %3884 = vmatmul.mubr.f32.gmra.mrb[0].mxu0 %v3322
      %v3885 = vpop.f32.mrb[0].mxu0
      %v3886 = vadd.f32 %v3741, %v3885
      %v3887 = vpop.f32.mrb[0].mxu0
      %3888 = vmatprep.mubr.f32.mxu0 %v3330
      %3889 = vmatmul.mubr.f32.gmra.mrb[0].mxu0 %v3329
      %v3890 = vpop.f32.mrb[0].mxu0
      %v3891 = vadd.f32 %v3746, %v3890
      %v3892 = vpop.f32.mrb[0].mxu0
      %3893 = vmatprep.mubr.f32.mxu0 %v3337
      %3894 = vmatmul.mubr.f32.gmra.mrb[0].mxu0 %v3336
      %v3895 = vpop.f32.mrb[0].mxu0
      %v3896 = vadd.f32 %v3751, %v3895
      %v3897 = vpop.f32.mrb[0].mxu0
      %3898 = vmatprep.mubr.f32.mxu0 %v3344
      %3899 = vmatmul.mubr.f32.gmra.mrb[0].mxu0 %v3343
      %v3900 = vpop.f32.mrb[0].mxu0
      %v3901 = vadd.f32 %v3756, %v3900
      %v3902 = vpop.f32.mrb[0].mxu0
      %3903 = vmatprep.mubr.f32.mxu0 %v3351
      %3904 = vmatmul.mubr.f32.gmra.mrb[0].mxu0 %v3350
      %v3905 = vpop.f32.mrb[0].mxu0
      %v3906 = vadd.f32 %v3761, %v3905
      %v3907 = vpop.f32.mrb[0].mxu0
      %3908 = vmatprep.mubr.f32.mxu0 %v3358
      %3909 = vmatmul.mubr.f32.gmra.mrb[0].mxu0 %v3357
      %v3910 = vpop.f32.mrb[0].mxu0
      %v3911 = vadd.f32 %v3766, %v3910
      %v3912 = vpop.f32.mrb[0].mxu0
      %3913 = vmatprep.mubr.f32.mxu0 %v3365
      %3914 = vmatmul.mubr.f32.gmra.mrb[0].mxu0 %v3364
      %v3915 = vpop.f32.mrb[0].mxu0
      %v3916 = vadd.f32 %v3771, %v3915
      %v3917 = vpop.f32.mrb[0].mxu0
      %3918 = vmatprep.mubr.f32.mxu0 %v3372
      %3919 = vmatmul.mubr.f32.gmra.mrb[0].mxu0 %v3371
      %v3920 = vpop.f32.mrb[0].mxu0
      %v3921 = vadd.f32 %v3776, %v3920
      %v3922 = vpop.f32.mrb[0].mxu0
      %3923 = vmatprep.mubr.f32.mxu0 %v3379
      %3924 = vmatmul.mubr.f32.gmra.mrb[0].mxu0 %v3378
      %v3925 = vpop.f32.mrb[0].mxu0
      %v3926 = vadd.f32 %v3781, %v3925
      %v3927 = vpop.f32.mrb[0].mxu0
      %3928 = vdwg.mxu0
      %3929 = vmatprep.subr.mxu0 0.0
      %3930 = vmatpush1.msra.mxu0 %v3478
      %3931 = vmatprep.subr.mxu0 0.0
      %3932 = vmatpush1.msra.mxu0 %v3479
      %3933 = vmatprep.subr.mxu0 0.0
      %3934 = vmatpush1.msra.mxu0 %v3480
      %3935 = vmatprep.subr.mxu0 0.0
      %3936 = vmatpush1.msra.mxu0 %v3481
      %3937 = vmatprep.subr.mxu0 0.0
      %3938 = vmatpush1.msra.mxu0 %v3482
      %3939 = vmatprep.subr.mxu0 0.0
      %3940 = vmatpush1.msra.mxu0 %v3483
      %3941 = vmatprep.subr.mxu0 0.0
      %3942 = vmatpush1.msra.mxu0 %v3484
      %3943 = vmatprep.subr.mxu0 0.0
      %3944 = vmatpush1.msra.mxu0 %v3485
      %3945 = vmatprep.subr.mxu0 0.0
      %3946 = vmatpush1.msra.mxu0 %v3486
      %3947 = vmatprep.subr.mxu0 0.0
      %3948 = vmatpush1.msra.mxu0 %v3487
      %3949 = vmatprep.subr.mxu0 0.0
      %3950 = vmatpush1.msra.mxu0 %v3488
      %3951 = vmatprep.subr.mxu0 0.0
      %3952 = vmatpush1.msra.mxu0 %v3489
      %3953 = vmatprep.subr.mxu0 0.0
      %3954 = vmatpush1.msra.mxu0 %v3490
      %3955 = vmatprep.subr.mxu0 0.0
      %3956 = vmatpush1.msra.mxu0 %v3491
      %3957 = vmatprep.subr.mxu0 0.0
      %3958 = vmatpush1.msra.mxu0 %v3492
      %3959 = vmatprep.subr.mxu0 0.0
      %3960 = vmatpush1.msra.mxu0 %v3493
      %3961 = vmatprep.subr.mxu0 0.0
      %3962 = vmatpush1.msra.mxu0 0.0
      %3963 = vmatprep.subr.mxu0 0.0
      %3964 = vmatpush1.msra.mxu0 0.0
      %3965 = vmatprep.subr.mxu0 0.0
      %3966 = vmatpush1.msra.mxu0 0.0
      %3967 = vmatprep.subr.mxu0 0.0
      %3968 = vmatpush1.msra.mxu0 0.0
      %3969 = vmatprep.subr.mxu0 0.0
      %3970 = vmatpush1.msra.mxu0 0.0
      %3971 = vmatprep.subr.mxu0 0.0
      %3972 = vmatpush1.msra.mxu0 0.0
      %3973 = vmatprep.subr.mxu0 0.0
      %3974 = vmatpush1.msra.mxu0 0.0
      %3975 = vmatprep.subr.mxu0 0.0
      %3976 = vmatpush1.msra.mxu0 0.0
      %3977 = vmatprep.subr.mxu0 0.0
      %3978 = vmatpush1.msra.mxu0 0.0
      %3979 = vmatprep.subr.mxu0 0.0
      %3980 = vmatpush1.msra.mxu0 0.0
      %3981 = vmatprep.subr.mxu0 0.0
      %3982 = vmatpush1.msra.mxu0 0.0
      %3983 = vmatprep.subr.mxu0 0.0
      %3984 = vmatpush1.msra.mxu0 0.0
      %3985 = vmatprep.subr.mxu0 0.0
      %3986 = vmatpush1.msra.mxu0 0.0
      %3987 = vmatprep.subr.mxu0 0.0
      %3988 = vmatpush1.msra.mxu0 0.0
      %3989 = vmatprep.subr.mxu0 0.0
      %3990 = vmatpush1.msra.mxu0 0.0
      %3991 = vmatprep.subr.mxu0 0.0
      %3992 = vmatpush1.msra.mxu0 0.0
      %3993 = vmatprep.mubr.f32.mxu0 0.0
      %3994 = vmatmul.mubr.f32.gmra.mrb[0].mxu0 %v3275
      %v3995 = vpop.f32.mrb[0].mxu0
      %v3996 = vadd.f32 %v3851, %v3995
      %v3997 = vpop.f32.mrb[0].mxu0
      %3998 = vmatprep.mubr.f32.mxu0 0.0
      %3999 = vmatmul.mubr.f32.gmra.mrb[0].mxu0 %v3282
      %v4000 = vpop.f32.mrb[0].mxu0
      %v4001 = vadd.f32 %v3856, %v4000
      %v4002 = vpop.f32.mrb[0].mxu0
      %4003 = vmatprep.mubr.f32.mxu0 0.0
      %4004 = vmatmul.mubr.f32.gmra.mrb[0].mxu0 %v3289
      %v4005 = vpop.f32.mrb[0].mxu0
      %v4006 = vadd.f32 %v3861, %v4005
      %v4007 = vpop.f32.mrb[0].mxu0
      %4008 = vmatprep.mubr.f32.mxu0 0.0
      %4009 = vmatmul.mubr.f32.gmra.mrb[0].mxu0 %v3296
      %v4010 = vpop.f32.mrb[0].mxu0
      %v4011 = vadd.f32 %v3866, %v4010
      %v4012 = vpop.f32.mrb[0].mxu0
      %4013 = vmatprep.mubr.f32.mxu0 0.0
      %4014 = vmatmul.mubr.f32.gmra.mrb[0].mxu0 %v3303
      %v4015 = vpop.f32.mrb[0].mxu0
      %v4016 = vadd.f32 %v3871, %v4015
      %v4017 = vpop.f32.mrb[0].mxu0
      %4018 = vmatprep.mubr.f32.mxu0 0.0
      %4019 = vmatmul.mubr.f32.gmra.mrb[0].mxu0 %v3310
      %v4020 = vpop.f32.mrb[0].mxu0
      %v4021 = vadd.f32 %v3876, %v4020
      %v4022 = vpop.f32.mrb[0].mxu0
      %4023 = vmatprep.mubr.f32.mxu0 0.0
      %4024 = vmatmul.mubr.f32.gmra.mrb[0].mxu0 %v3317
      %v4025 = vpop.f32.mrb[0].mxu0
      %v4026 = vadd.f32 %v3881, %v4025
      %v4027 = vpop.f32.mrb[0].mxu0
      %4028 = vmatprep.mubr.f32.mxu0 0.0
      %4029 = vmatmul.mubr.f32.gmra.mrb[0].mxu0 %v3324
      %v4030 = vpop.f32.mrb[0].mxu0
      %v4031 = vadd.f32 %v3886, %v4030
      %v4032 = vpop.f32.mrb[0].mxu0
      %4033 = vmatprep.mubr.f32.mxu0 0.0
      %4034 = vmatmul.mubr.f32.gmra.mrb[0].mxu0 %v3331
      %v4035 = vpop.f32.mrb[0].mxu0
      %v4036 = vadd.f32 %v3891, %v4035
      %v4037 = vpop.f32.mrb[0].mxu0
      %4038 = vmatprep.mubr.f32.mxu0 0.0
      %4039 = vmatmul.mubr.f32.gmra.mrb[0].mxu0 %v3338
      %v4040 = vpop.f32.mrb[0].mxu0
      %v4041 = vadd.f32 %v3896, %v4040
      %v4042 = vpop.f32.mrb[0].mxu0
      %4043 = vmatprep.mubr.f32.mxu0 0.0
      %4044 = vmatmul.mubr.f32.gmra.mrb[0].mxu0 %v3345
      %v4045 = vpop.f32.mrb[0].mxu0
      %v4046 = vadd.f32 %v3901, %v4045
      %v4047 = vpop.f32.mrb[0].mxu0
      %4048 = vmatprep.mubr.f32.mxu0 0.0
      %4049 = vmatmul.mubr.f32.gmra.mrb[0].mxu0 %v3352
      %v4050 = vpop.f32.mrb[0].mxu0
      %v4051 = vadd.f32 %v3906, %v4050
      %v4052 = vpop.f32.mrb[0].mxu0
      %4053 = vmatprep.mubr.f32.mxu0 0.0
      %4054 = vmatmul.mubr.f32.gmra.mrb[0].mxu0 %v3359
      %v4055 = vpop.f32.mrb[0].mxu0
      %v4056 = vadd.f32 %v3911, %v4055
      %v4057 = vpop.f32.mrb[0].mxu0
      %4058 = vmatprep.mubr.f32.mxu0 0.0
      %4059 = vmatmul.mubr.f32.gmra.mrb[0].mxu0 %v3366
      %v4060 = vpop.f32.mrb[0].mxu0
      %v4061 = vadd.f32 %v3916, %v4060
      %v4062 = vpop.f32.mrb[0].mxu0
      %4063 = vmatprep.mubr.f32.mxu0 0.0
      %4064 = vmatmul.mubr.f32.gmra.mrb[0].mxu0 %v3373
      %v4065 = vpop.f32.mrb[0].mxu0
      %v4066 = vadd.f32 %v3921, %v4065
      %v4067 = vpop.f32.mrb[0].mxu0
      %4068 = vmatprep.mubr.f32.mxu0 0.0
      %4069 = vmatmul.mubr.f32.gmra.mrb[0].mxu0 %v3380
      %v4070 = vpop.f32.mrb[0].mxu0
      %v4071 = vadd.f32 %v3926, %v4070
      %v4072 = vpop.f32.mrb[0].mxu0
      %4073 = vdwg.mxu0
      %v4074 = vld [vmem:[#allocation5] sm:$0xff]
      %v4075 = vld [vmem:[#allocation5 + $0x8] sm:$0xff]
      %v4076 = vld [vmem:[#allocation5 + $0x10] sm:$0xff]
      %v4077 = vld [vmem:[#allocation5 + $0x18] sm:$0xff]
      %v4078 = vld [vmem:[#allocation5 + $0x20] sm:$0xff]
      %v4079 = vld [vmem:[#allocation5 + $0x28] sm:$0xff]
      %v4080 = vld [vmem:[#allocation5 + $0x30] sm:$0xff]
      %v4081 = vld [vmem:[#allocation5 + $0x38] sm:$0xff]
      %v4082 = vld [vmem:[#allocation5 + $0x40] sm:$0xff]
      %v4083 = vld [vmem:[#allocation5 + $0x48] sm:$0xff]
      %v4084 = vld [vmem:[#allocation5 + $0x50] sm:$0xff]
      %v4085 = vld [vmem:[#allocation5 + $0x58] sm:$0xff]
      %v4086 = vld [vmem:[#allocation5 + $0x60] sm:$0xff]
      %v4087 = vld [vmem:[#allocation5 + $0x68] sm:$0xff]
      %v4088 = vld [vmem:[#allocation5 + $0x70] sm:$0xff]
      %v4089 = vld [vmem:[#allocation5 + $0x78] sm:$0xff]
      %v4090 = vadd.f32 %v4074, %v3996
      %v4091 = vadd.f32 %v4075, %v4001
      %v4092 = vadd.f32 %v4076, %v4006
      %v4093 = vadd.f32 %v4077, %v4011
      %v4094 = vadd.f32 %v4078, %v4016
      %v4095 = vadd.f32 %v4079, %v4021
      %v4096 = vadd.f32 %v4080, %v4026
      %v4097 = vadd.f32 %v4081, %v4031
      %v4098 = vadd.f32 %v4082, %v4036
      %v4099 = vadd.f32 %v4083, %v4041
      %v4100 = vadd.f32 %v4084, %v4046
      %v4101 = vadd.f32 %v4085, %v4051
      %v4102 = vadd.f32 %v4086, %v4056
      %v4103 = vadd.f32 %v4087, %v4061
      %v4104 = vadd.f32 %v4088, %v4066
      %v4105 = vadd.f32 %v4089, %v4071
      %4106 = vst [vmem:[#allocation5] sm:$0xff] %v4090
      %4107 = vst [vmem:[#allocation5 + $0x8] sm:$0xff] %v4091
      %4108 = vst [vmem:[#allocation5 + $0x10] sm:$0xff] %v4092
      %4109 = vst [vmem:[#allocation5 + $0x18] sm:$0xff] %v4093
      %4110 = vst [vmem:[#allocation5 + $0x20] sm:$0xff] %v4094
      %4111 = vst [vmem:[#allocation5 + $0x28] sm:$0xff] %v4095
      %4112 = vst [vmem:[#allocation5 + $0x30] sm:$0xff] %v4096
      %4113 = vst [vmem:[#allocation5 + $0x38] sm:$0xff] %v4097
      %4114 = vst [vmem:[#allocation5 + $0x40] sm:$0xff] %v4098
      %4115 = vst [vmem:[#allocation5 + $0x48] sm:$0xff] %v4099
      %4116 = vst [vmem:[#allocation5 + $0x50] sm:$0xff] %v4100
      %4117 = vst [vmem:[#allocation5 + $0x58] sm:$0xff] %v4101
      %4118 = vst [vmem:[#allocation5 + $0x60] sm:$0xff] %v4102
      %4119 = vst [vmem:[#allocation5 + $0x68] sm:$0xff] %v4103
      %4120 = vst [vmem:[#allocation5 + $0x70] sm:$0xff] %v4104
      %4121 = vst [vmem:[#allocation5 + $0x78] sm:$0xff] %v4105
      %s4122 = scalar_lea.vmem [#allocation3], 224
      %v4123 = vld [vmem:[%s4122] sm:$0xff]
      %v4124 = vld [vmem:[%s4122 + $0x8] sm:$0xff]
      %v4125 = vld [vmem:[%s4122 + $0x10] sm:$0xff]
      %v4126 = vld [vmem:[%s4122 + $0x18] sm:$0xff]
      %v4127 = vld [vmem:[%s4122 + $0x20] sm:$0xff]
      %v4128 = vld [vmem:[%s4122 + $0x28] sm:$0xff]
      %v4129 = vld [vmem:[%s4122 + $0x30] sm:$0xff]
      %v4130 = vld [vmem:[%s4122 + $0x38] sm:$0xff]
      %v4131 = vld [vmem:[%s4122 + $0x40] sm:$0xff]
      %v4132 = vld [vmem:[%s4122 + $0x48] sm:$0xff]
      %v4133 = vld [vmem:[%s4122 + $0x50] sm:$0xff]
      %v4134 = vld [vmem:[%s4122 + $0x58] sm:$0xff]
      %v4135 = vld [vmem:[%s4122 + $0x60] sm:$0xff]
      %v4136 = vld [vmem:[%s4122 + $0x68] sm:$0xff]
      %v4137 = vld [vmem:[%s4122 + $0x70] sm:$0xff]
      %v4138 = vld [vmem:[%s4122 + $0x78] sm:$0xff]
      %v4139 = vld [vmem:[%s4122 + $0x80] sm:$0xff]
      %v4140 = vld [vmem:[%s4122 + $0x88] sm:$0xff]
      %v4141 = vld [vmem:[%s4122 + $0x90] sm:$0xff]
      %v4142 = vld [vmem:[%s4122 + $0x98] sm:$0xff]
      %v4143 = vld [vmem:[%s4122 + $0xa0] sm:$0xff]
      %v4144 = vld [vmem:[%s4122 + $0xa8] sm:$0xff]
      %v4145 = vld [vmem:[%s4122 + $0xb0] sm:$0xff]
      %v4146 = vld [vmem:[%s4122 + $0xb8] sm:$0xff]
      %v4147 = vld [vmem:[%s4122 + $0xc0] sm:$0xff]
      %v4148 = vld [vmem:[%s4122 + $0xc8] sm:$0xff]
      %v4149 = vld [vmem:[%s4122 + $0xd0] sm:$0xff]
      %v4150 = vld [vmem:[%s4122 + $0xd8] sm:$0xff]
      %v4151 = vld [vmem:[%s4122 + $0xe0] sm:$0xff]
      %v4152 = vld [vmem:[%s4122 + $0xe8] sm:$0xff]
      %v4153 = vld [vmem:[%s4122 + $0xf0] sm:$0xff]
      %v4154 = vld [vmem:[%s4122 + $0xf8] sm:$0xff]
      %v4155 = vld [vmem:[%s4122 + $0x100] sm:$0xff]
      %v4156 = vld [vmem:[%s4122 + $0x108] sm:$0xff]
      %v4157 = vld [vmem:[%s4122 + $0x110] sm:$0xff]
      %v4158 = vld [vmem:[%s4122 + $0x118] sm:$0xff]
      %v4159 = vld [vmem:[%s4122 + $0x120] sm:$0xff]
      %v4160 = vld [vmem:[%s4122 + $0x128] sm:$0xff]
      %v4161 = vld [vmem:[%s4122 + $0x130] sm:$0xff]
      %v4162 = vld [vmem:[%s4122 + $0x138] sm:$0xff]
      %v4163 = vld [vmem:[%s4122 + $0x140] sm:$0xff]
      %v4164 = vld [vmem:[%s4122 + $0x148] sm:$0xff]
      %v4165 = vld [vmem:[%s4122 + $0x150] sm:$0xff]
      %v4166 = vld [vmem:[%s4122 + $0x158] sm:$0xff]
      %v4167 = vld [vmem:[%s4122 + $0x160] sm:$0xff]
      %v4168 = vld [vmem:[%s4122 + $0x168] sm:$0xff]
      %v4169 = vld [vmem:[%s4122 + $0x170] sm:$0xff]
      %v4170 = vld [vmem:[%s4122 + $0x178] sm:$0xff]
      %v4171 = vld [vmem:[%s4122 + $0x180] sm:$0xff]
      %v4172 = vld [vmem:[%s4122 + $0x188] sm:$0xff]
      %v4173 = vld [vmem:[%s4122 + $0x190] sm:$0xff]
      %v4174 = vld [vmem:[%s4122 + $0x198] sm:$0xff]
      %v4175 = vld [vmem:[%s4122 + $0x1a0] sm:$0xff]
      %v4176 = vld [vmem:[%s4122 + $0x1a8] sm:$0xff]
      %v4177 = vld [vmem:[%s4122 + $0x1b0] sm:$0xff]
      %v4178 = vld [vmem:[%s4122 + $0x1b8] sm:$0xff]
      %v4179 = vld [vmem:[%s4122 + $0x1c0] sm:$0xff]
      %v4180 = vld [vmem:[%s4122 + $0x1c8] sm:$0xff]
      %v4181 = vld [vmem:[%s4122 + $0x1d0] sm:$0xff]
      %v4182 = vld [vmem:[%s4122 + $0x1d8] sm:$0xff]
      %v4183 = vld [vmem:[%s4122 + $0x1e0] sm:$0xff]
      %v4184 = vld [vmem:[%s4122 + $0x1e8] sm:$0xff]
      %v4185 = vld [vmem:[%s4122 + $0x1f0] sm:$0xff]
      %v4186 = vld [vmem:[%s4122 + $0x1f8] sm:$0xff]
      %v4187 = vld [vmem:[%s4122 + $0x200] sm:$0xff]
      %v4188 = vld [vmem:[%s4122 + $0x208] sm:$0xff]
      %v4189 = vld [vmem:[%s4122 + $0x210] sm:$0xff]
      %v4190 = vld [vmem:[%s4122 + $0x218] sm:$0xff]
      %v4191 = vld [vmem:[%s4122 + $0x220] sm:$0xff]
      %v4192 = vld [vmem:[%s4122 + $0x228] sm:$0xff]
      %v4193 = vld [vmem:[%s4122 + $0x230] sm:$0xff]
      %v4194 = vld [vmem:[%s4122 + $0x238] sm:$0xff]
      %v4195 = vld [vmem:[%s4122 + $0x240] sm:$0xff]
      %v4196 = vld [vmem:[%s4122 + $0x248] sm:$0xff]
      %v4197 = vld [vmem:[%s4122 + $0x250] sm:$0xff]
      %v4198 = vld [vmem:[%s4122 + $0x258] sm:$0xff]
      %v4199 = vld [vmem:[%s4122 + $0x260] sm:$0xff]
      %v4200 = vld [vmem:[%s4122 + $0x268] sm:$0xff]
      %v4201 = vld [vmem:[%s4122 + $0x270] sm:$0xff]
      %v4202 = vld [vmem:[%s4122 + $0x278] sm:$0xff]
      %v4203 = vld [vmem:[%s4122 + $0x280] sm:$0xff]
      %v4204 = vld [vmem:[%s4122 + $0x288] sm:$0xff]
      %v4205 = vld [vmem:[%s4122 + $0x290] sm:$0xff]
      %v4206 = vld [vmem:[%s4122 + $0x298] sm:$0xff]
      %v4207 = vld [vmem:[%s4122 + $0x2a0] sm:$0xff]
      %v4208 = vld [vmem:[%s4122 + $0x2a8] sm:$0xff]
      %v4209 = vld [vmem:[%s4122 + $0x2b0] sm:$0xff]
      %v4210 = vld [vmem:[%s4122 + $0x2b8] sm:$0xff]
      %v4211 = vld [vmem:[%s4122 + $0x2c0] sm:$0xff]
      %v4212 = vld [vmem:[%s4122 + $0x2c8] sm:$0xff]
      %v4213 = vld [vmem:[%s4122 + $0x2d0] sm:$0xff]
      %v4214 = vld [vmem:[%s4122 + $0x2d8] sm:$0xff]
      %v4215 = vld [vmem:[%s4122 + $0x2e0] sm:$0xff]
      %v4216 = vld [vmem:[%s4122 + $0x2e8] sm:$0xff]
      %v4217 = vld [vmem:[%s4122 + $0x2f0] sm:$0xff]
      %v4218 = vld [vmem:[%s4122 + $0x2f8] sm:$0xff]
      %v4219 = vld [vmem:[%s4122 + $0x300] sm:$0xff]
      %v4220 = vld [vmem:[%s4122 + $0x308] sm:$0xff]
      %v4221 = vld [vmem:[%s4122 + $0x310] sm:$0xff]
      %v4222 = vld [vmem:[%s4122 + $0x318] sm:$0xff]
      %v4223 = vld [vmem:[%s4122 + $0x320] sm:$0xff]
      %v4224 = vld [vmem:[%s4122 + $0x328] sm:$0xff]
      %v4225 = vld [vmem:[%s4122 + $0x330] sm:$0xff]
      %v4226 = vld [vmem:[%s4122 + $0x338] sm:$0xff]
      %v4227 = vld [vmem:[%s4122 + $0x340] sm:$0xff]
      %v4228 = vld [vmem:[%s4122 + $0x348] sm:$0xff]
      %v4229 = vld [vmem:[%s4122 + $0x350] sm:$0xff]
      %v4230 = vld [vmem:[%s4122 + $0x358] sm:$0xff]
      %v4231 = vld [vmem:[%s4122 + $0x360] sm:$0xff]
      %v4232 = vld [vmem:[%s4122 + $0x368] sm:$0xff]
      %v4233 = vld [vmem:[%s4122 + $0x370] sm:$0xff]
      %v4234 = vld [vmem:[%s4122 + $0x378] sm:$0xff]
      %s4235 = scalar_lea.vmem [#allocation4], 1792
      %v4236 = vld [vmem:[%s4235] sm:$0xff]
      %v4237 = vld [vmem:[%s4235 + $0x8] sm:$0xff]
      %v4238 = vld [vmem:[%s4235 + $0x10] sm:$0xff]
      %v4239 = vld [vmem:[%s4235 + $0x18] sm:$0xff]
      %v4240 = vld [vmem:[%s4235 + $0x20] sm:$0xff]
      %v4241 = vld [vmem:[%s4235 + $0x28] sm:$0xff]
      %v4242 = vld [vmem:[%s4235 + $0x30] sm:$0xff]
      %v4243 = vld [vmem:[%s4235 + $0x38] sm:$0xff]
      %v4244 = vld [vmem:[%s4235 + $0x40] sm:$0xff]
      %v4245 = vld [vmem:[%s4235 + $0x48] sm:$0xff]
      %v4246 = vld [vmem:[%s4235 + $0x50] sm:$0xff]
      %v4247 = vld [vmem:[%s4235 + $0x58] sm:$0xff]
      %v4248 = vld [vmem:[%s4235 + $0x60] sm:$0xff]
      %v4249 = vld [vmem:[%s4235 + $0x68] sm:$0xff]
      %v4250 = vld [vmem:[%s4235 + $0x70] sm:$0xff]
      %v4251 = vld [vmem:[%s4235 + $0x78] sm:$0xff]
      %v4252 = vld [vmem:[%s4235 + $0x80] sm:$0xff]
      %v4253 = vld [vmem:[%s4235 + $0x88] sm:$0xff]
      %v4254 = vld [vmem:[%s4235 + $0x90] sm:$0xff]
      %v4255 = vld [vmem:[%s4235 + $0x98] sm:$0xff]
      %v4256 = vld [vmem:[%s4235 + $0xa0] sm:$0xff]
      %v4257 = vld [vmem:[%s4235 + $0xa8] sm:$0xff]
      %v4258 = vld [vmem:[%s4235 + $0xb0] sm:$0xff]
      %v4259 = vld [vmem:[%s4235 + $0xb8] sm:$0xff]
      %v4260 = vld [vmem:[%s4235 + $0xc0] sm:$0xff]
      %v4261 = vld [vmem:[%s4235 + $0xc8] sm:$0xff]
      %v4262 = vld [vmem:[%s4235 + $0xd0] sm:$0xff]
      %v4263 = vld [vmem:[%s4235 + $0xd8] sm:$0xff]
      %v4264 = vld [vmem:[%s4235 + $0xe0] sm:$0xff]
      %v4265 = vld [vmem:[%s4235 + $0xe8] sm:$0xff]
      %v4266 = vld [vmem:[%s4235 + $0xf0] sm:$0xff]
      %v4267 = vld [vmem:[%s4235 + $0xf8] sm:$0xff]
      %v4268 = vld [vmem:[%s4235 + $0x100] sm:$0xff]
      %v4269 = vld [vmem:[%s4235 + $0x108] sm:$0xff]
      %v4270 = vld [vmem:[%s4235 + $0x110] sm:$0xff]
      %v4271 = vld [vmem:[%s4235 + $0x118] sm:$0xff]
      %v4272 = vld [vmem:[%s4235 + $0x120] sm:$0xff]
      %v4273 = vld [vmem:[%s4235 + $0x128] sm:$0xff]
      %v4274 = vld [vmem:[%s4235 + $0x130] sm:$0xff]
      %v4275 = vld [vmem:[%s4235 + $0x138] sm:$0xff]
      %v4276 = vld [vmem:[%s4235 + $0x140] sm:$0xff]
      %v4277 = vld [vmem:[%s4235 + $0x148] sm:$0xff]
      %v4278 = vld [vmem:[%s4235 + $0x150] sm:$0xff]
      %v4279 = vld [vmem:[%s4235 + $0x158] sm:$0xff]
      %v4280 = vld [vmem:[%s4235 + $0x160] sm:$0xff]
      %v4281 = vld [vmem:[%s4235 + $0x168] sm:$0xff]
      %v4282 = vld [vmem:[%s4235 + $0x170] sm:$0xff]
      %v4283 = vld [vmem:[%s4235 + $0x178] sm:$0xff]
      %v4284 = vld [vmem:[%s4235 + $0x180] sm:$0xff]
      %v4285 = vld [vmem:[%s4235 + $0x188] sm:$0xff]
      %v4286 = vld [vmem:[%s4235 + $0x190] sm:$0xff]
      %v4287 = vld [vmem:[%s4235 + $0x198] sm:$0xff]
      %v4288 = vld [vmem:[%s4235 + $0x1a0] sm:$0xff]
      %v4289 = vld [vmem:[%s4235 + $0x1a8] sm:$0xff]
      %v4290 = vld [vmem:[%s4235 + $0x1b0] sm:$0xff]
      %v4291 = vld [vmem:[%s4235 + $0x1b8] sm:$0xff]
      %v4292 = vld [vmem:[%s4235 + $0x1c0] sm:$0xff]
      %v4293 = vld [vmem:[%s4235 + $0x1c8] sm:$0xff]
      %v4294 = vld [vmem:[%s4235 + $0x1d0] sm:$0xff]
      %v4295 = vld [vmem:[%s4235 + $0x1d8] sm:$0xff]
      %v4296 = vld [vmem:[%s4235 + $0x1e0] sm:$0xff]
      %v4297 = vld [vmem:[%s4235 + $0x1e8] sm:$0xff]
      %v4298 = vld [vmem:[%s4235 + $0x1f0] sm:$0xff]
      %v4299 = vld [vmem:[%s4235 + $0x1f8] sm:$0xff]
      %v4300 = vld [vmem:[%s4235 + $0x200] sm:$0xff]
      %v4301 = vld [vmem:[%s4235 + $0x208] sm:$0xff]
      %v4302 = vld [vmem:[%s4235 + $0x210] sm:$0xff]
      %v4303 = vld [vmem:[%s4235 + $0x218] sm:$0xff]
      %v4304 = vld [vmem:[%s4235 + $0x220] sm:$0xff]
      %v4305 = vld [vmem:[%s4235 + $0x228] sm:$0xff]
      %v4306 = vld [vmem:[%s4235 + $0x230] sm:$0xff]
      %v4307 = vld [vmem:[%s4235 + $0x238] sm:$0xff]
      %v4308 = vld [vmem:[%s4235 + $0x240] sm:$0xff]
      %v4309 = vld [vmem:[%s4235 + $0x248] sm:$0xff]
      %v4310 = vld [vmem:[%s4235 + $0x250] sm:$0xff]
      %v4311 = vld [vmem:[%s4235 + $0x258] sm:$0xff]
      %v4312 = vld [vmem:[%s4235 + $0x260] sm:$0xff]
      %v4313 = vld [vmem:[%s4235 + $0x268] sm:$0xff]
      %v4314 = vld [vmem:[%s4235 + $0x270] sm:$0xff]
      %v4315 = vld [vmem:[%s4235 + $0x278] sm:$0xff]
      %v4316 = vld [vmem:[%s4235 + $0x280] sm:$0xff]
      %v4317 = vld [vmem:[%s4235 + $0x288] sm:$0xff]
      %v4318 = vld [vmem:[%s4235 + $0x290] sm:$0xff]
      %v4319 = vld [vmem:[%s4235 + $0x298] sm:$0xff]
      %v4320 = vld [vmem:[%s4235 + $0x2a0] sm:$0xff]
      %v4321 = vld [vmem:[%s4235 + $0x2a8] sm:$0xff]
      %v4322 = vld [vmem:[%s4235 + $0x2b0] sm:$0xff]
      %v4323 = vld [vmem:[%s4235 + $0x2b8] sm:$0xff]
      %v4324 = vld [vmem:[%s4235 + $0x2c0] sm:$0xff]
      %v4325 = vld [vmem:[%s4235 + $0x2c8] sm:$0xff]
      %v4326 = vld [vmem:[%s4235 + $0x2d0] sm:$0xff]
      %v4327 = vld [vmem:[%s4235 + $0x2d8] sm:$0xff]
      %v4328 = vld [vmem:[%s4235 + $0x2e0] sm:$0xff]
      %v4329 = vld [vmem:[%s4235 + $0x2e8] sm:$0xff]
      %v4330 = vld [vmem:[%s4235 + $0x2f0] sm:$0xff]
      %v4331 = vld [vmem:[%s4235 + $0x2f8] sm:$0xff]
      %v4332 = vld [vmem:[%s4235 + $0x300] sm:$0xff]
      %v4333 = vld [vmem:[%s4235 + $0x308] sm:$0xff]
      %v4334 = vld [vmem:[%s4235 + $0x310] sm:$0xff]
      %v4335 = vld [vmem:[%s4235 + $0x318] sm:$0xff]
      %v4336 = vld [vmem:[%s4235 + $0x320] sm:$0xff]
      %v4337 = vld [vmem:[%s4235 + $0x328] sm:$0xff]
      %v4338 = vld [vmem:[%s4235 + $0x330] sm:$0xff]
      %v4339 = vld [vmem:[%s4235 + $0x338] sm:$0xff]
      %v4340 = vld [vmem:[%s4235 + $0x340] sm:$0xff]
      %v4341 = vld [vmem:[%s4235 + $0x348] sm:$0xff]
      %v4342 = vld [vmem:[%s4235 + $0x350] sm:$0xff]
      %v4343 = vld [vmem:[%s4235 + $0x358] sm:$0xff]
      %v4344 = vld [vmem:[%s4235 + $0x360] sm:$0xff]
      %v4345 = vld [vmem:[%s4235 + $0x368] sm:$0xff]
      %v4346 = vld [vmem:[%s4235 + $0x370] sm:$0xff]
      %v4347 = vld [vmem:[%s4235 + $0x378] sm:$0xff]
      %4348 = vmatprep.subr.mxu0 0.0
      %4349 = vmatpush1.msra.mxu0 %v4236
      %4350 = vmatprep.subr.mxu0 0.0
      %4351 = vmatpush1.msra.mxu0 %v4237
      %4352 = vmatprep.subr.mxu0 0.0
      %4353 = vmatpush1.msra.mxu0 %v4238
      %4354 = vmatprep.subr.mxu0 0.0
      %4355 = vmatpush1.msra.mxu0 %v4239
      %4356 = vmatprep.subr.mxu0 0.0
      %4357 = vmatpush1.msra.mxu0 %v4240
      %4358 = vmatprep.subr.mxu0 0.0
      %4359 = vmatpush1.msra.mxu0 %v4241
      %4360 = vmatprep.subr.mxu0 0.0
      %4361 = vmatpush1.msra.mxu0 %v4242
      %4362 = vmatprep.subr.mxu0 0.0
      %4363 = vmatpush1.msra.mxu0 %v4243
      %4364 = vmatprep.subr.mxu0 0.0
      %4365 = vmatpush1.msra.mxu0 %v4244
      %4366 = vmatprep.subr.mxu0 0.0
      %4367 = vmatpush1.msra.mxu0 %v4245
      %4368 = vmatprep.subr.mxu0 0.0
      %4369 = vmatpush1.msra.mxu0 %v4246
      %4370 = vmatprep.subr.mxu0 0.0
      %4371 = vmatpush1.msra.mxu0 %v4247
      %4372 = vmatprep.subr.mxu0 0.0
      %4373 = vmatpush1.msra.mxu0 %v4248
      %4374 = vmatprep.subr.mxu0 0.0
      %4375 = vmatpush1.msra.mxu0 %v4249
      %4376 = vmatprep.subr.mxu0 0.0
      %4377 = vmatpush1.msra.mxu0 %v4250
      %4378 = vmatprep.subr.mxu0 0.0
      %4379 = vmatpush1.msra.mxu0 %v4251
      %4380 = vmatprep.subr.mxu0 0.0
      %4381 = vmatpush1.msra.mxu0 %v4252
      %4382 = vmatprep.subr.mxu0 0.0
      %4383 = vmatpush1.msra.mxu0 %v4253
      %4384 = vmatprep.subr.mxu0 0.0
      %4385 = vmatpush1.msra.mxu0 %v4254
      %4386 = vmatprep.subr.mxu0 0.0
      %4387 = vmatpush1.msra.mxu0 %v4255
      %4388 = vmatprep.subr.mxu0 0.0
      %4389 = vmatpush1.msra.mxu0 %v4256
      %4390 = vmatprep.subr.mxu0 0.0
      %4391 = vmatpush1.msra.mxu0 %v4257
      %4392 = vmatprep.subr.mxu0 0.0
      %4393 = vmatpush1.msra.mxu0 %v4258
      %4394 = vmatprep.subr.mxu0 0.0
      %4395 = vmatpush1.msra.mxu0 %v4259
      %4396 = vmatprep.subr.mxu0 0.0
      %4397 = vmatpush1.msra.mxu0 %v4260
      %4398 = vmatprep.subr.mxu0 0.0
      %4399 = vmatpush1.msra.mxu0 %v4261
      %4400 = vmatprep.subr.mxu0 0.0
      %4401 = vmatpush1.msra.mxu0 %v4262
      %4402 = vmatprep.subr.mxu0 0.0
      %4403 = vmatpush1.msra.mxu0 %v4263
      %4404 = vmatprep.subr.mxu0 0.0
      %4405 = vmatpush1.msra.mxu0 %v4264
      %4406 = vmatprep.subr.mxu0 0.0
      %4407 = vmatpush1.msra.mxu0 %v4265
      %4408 = vmatprep.subr.mxu0 0.0
      %4409 = vmatpush1.msra.mxu0 %v4266
      %4410 = vmatprep.subr.mxu0 0.0
      %4411 = vmatpush1.msra.mxu0 %v4267
      %4412 = vmatprep.mubr.f32.mxu0 %v4124
      %4413 = vmatmul.mubr.f32.gmra.mrb[0].mxu0 %v4123
      %v4414 = vpop.f32.mrb[0].mxu0
      %v4415 = vadd.f32 0.0, %v4414
      %v4416 = vpop.f32.mrb[0].mxu0
      %4417 = vmatprep.mubr.f32.mxu0 %v4131
      %4418 = vmatmul.mubr.f32.gmra.mrb[0].mxu0 %v4130
      %v4419 = vpop.f32.mrb[0].mxu0
      %v4420 = vadd.f32 0.0, %v4419
      %v4421 = vpop.f32.mrb[0].mxu0
      %4422 = vmatprep.mubr.f32.mxu0 %v4138
      %4423 = vmatmul.mubr.f32.gmra.mrb[0].mxu0 %v4137
      %v4424 = vpop.f32.mrb[0].mxu0
      %v4425 = vadd.f32 0.0, %v4424
      %v4426 = vpop.f32.mrb[0].mxu0
      %4427 = vmatprep.mubr.f32.mxu0 %v4145
      %4428 = vmatmul.mubr.f32.gmra.mrb[0].mxu0 %v4144
      %v4429 = vpop.f32.mrb[0].mxu0
      %v4430 = vadd.f32 0.0, %v4429
      %v4431 = vpop.f32.mrb[0].mxu0
      %4432 = vmatprep.mubr.f32.mxu0 %v4152
      %4433 = vmatmul.mubr.f32.gmra.mrb[0].mxu0 %v4151
      %v4434 = vpop.f32.mrb[0].mxu0
      %v4435 = vadd.f32 0.0, %v4434
      %v4436 = vpop.f32.mrb[0].mxu0
      %4437 = vmatprep.mubr.f32.mxu0 %v4159
      %4438 = vmatmul.mubr.f32.gmra.mrb[0].mxu0 %v4158
      %v4439 = vpop.f32.mrb[0].mxu0
      %v4440 = vadd.f32 0.0, %v4439
      %v4441 = vpop.f32.mrb[0].mxu0
      %4442 = vmatprep.mubr.f32.mxu0 %v4166
      %4443 = vmatmul.mubr.f32.gmra.mrb[0].mxu0 %v4165
      %v4444 = vpop.f32.mrb[0].mxu0
      %v4445 = vadd.f32 0.0, %v4444
      %v4446 = vpop.f32.mrb[0].mxu0
      %4447 = vmatprep.mubr.f32.mxu0 %v4173
      %4448 = vmatmul.mubr.f32.gmra.mrb[0].mxu0 %v4172
      %v4449 = vpop.f32.mrb[0].mxu0
      %v4450 = vadd.f32 0.0, %v4449
      %v4451 = vpop.f32.mrb[0].mxu0
      %4452 = vmatprep.mubr.f32.mxu0 %v4180
      %4453 = vmatmul.mubr.f32.gmra.mrb[0].mxu0 %v4179
      %v4454 = vpop.f32.mrb[0].mxu0
      %v4455 = vadd.f32 0.0, %v4454
      %v4456 = vpop.f32.mrb[0].mxu0
      %4457 = vmatprep.mubr.f32.mxu0 %v4187
      %4458 = vmatmul.mubr.f32.gmra.mrb[0].mxu0 %v4186
      %v4459 = vpop.f32.mrb[0].mxu0
      %v4460 = vadd.f32 0.0, %v4459
      %v4461 = vpop.f32.mrb[0].mxu0
      %4462 = vmatprep.mubr.f32.mxu0 %v4194
      %4463 = vmatmul.mubr.f32.gmra.mrb[0].mxu0 %v4193
      %v4464 = vpop.f32.mrb[0].mxu0
      %v4465 = vadd.f32 0.0, %v4464
      %v4466 = vpop.f32.mrb[0].mxu0
      %4467 = vmatprep.mubr.f32.mxu0 %v4201
      %4468 = vmatmul.mubr.f32.gmra.mrb[0].mxu0 %v4200
      %v4469 = vpop.f32.mrb[0].mxu0
      %v4470 = vadd.f32 0.0, %v4469
      %v4471 = vpop.f32.mrb[0].mxu0
      %4472 = vmatprep.mubr.f32.mxu0 %v4208
      %4473 = vmatmul.mubr.f32.gmra.mrb[0].mxu0 %v4207
      %v4474 = vpop.f32.mrb[0].mxu0
      %v4475 = vadd.f32 0.0, %v4474
      %v4476 = vpop.f32.mrb[0].mxu0
      %4477 = vmatprep.mubr.f32.mxu0 %v4215
      %4478 = vmatmul.mubr.f32.gmra.mrb[0].mxu0 %v4214
      %v4479 = vpop.f32.mrb[0].mxu0
      %v4480 = vadd.f32 0.0, %v4479
      %v4481 = vpop.f32.mrb[0].mxu0
      %4482 = vmatprep.mubr.f32.mxu0 %v4222
      %4483 = vmatmul.mubr.f32.gmra.mrb[0].mxu0 %v4221
      %v4484 = vpop.f32.mrb[0].mxu0
      %v4485 = vadd.f32 0.0, %v4484
      %v4486 = vpop.f32.mrb[0].mxu0
      %4487 = vmatprep.mubr.f32.mxu0 %v4229
      %4488 = vmatmul.mubr.f32.gmra.mrb[0].mxu0 %v4228
      %v4489 = vpop.f32.mrb[0].mxu0
      %v4490 = vadd.f32 0.0, %v4489
      %v4491 = vpop.f32.mrb[0].mxu0
      %4492 = vdwg.mxu0
      %4493 = vmatprep.subr.mxu0 0.0
      %4494 = vmatpush1.msra.mxu0 %v4268
      %4495 = vmatprep.subr.mxu0 0.0
      %4496 = vmatpush1.msra.mxu0 %v4269
      %4497 = vmatprep.subr.mxu0 0.0
      %4498 = vmatpush1.msra.mxu0 %v4270
      %4499 = vmatprep.subr.mxu0 0.0
      %4500 = vmatpush1.msra.mxu0 %v4271
      %4501 = vmatprep.subr.mxu0 0.0
      %4502 = vmatpush1.msra.mxu0 %v4272
      %4503 = vmatprep.subr.mxu0 0.0
      %4504 = vmatpush1.msra.mxu0 %v4273
      %4505 = vmatprep.subr.mxu0 0.0
      %4506 = vmatpush1.msra.mxu0 %v4274
      %4507 = vmatprep.subr.mxu0 0.0
      %4508 = vmatpush1.msra.mxu0 %v4275
      %4509 = vmatprep.subr.mxu0 0.0
      %4510 = vmatpush1.msra.mxu0 %v4276
      %4511 = vmatprep.subr.mxu0 0.0
      %4512 = vmatpush1.msra.mxu0 %v4277
      %4513 = vmatprep.subr.mxu0 0.0
      %4514 = vmatpush1.msra.mxu0 %v4278
      %4515 = vmatprep.subr.mxu0 0.0
      %4516 = vmatpush1.msra.mxu0 %v4279
      %4517 = vmatprep.subr.mxu0 0.0
      %4518 = vmatpush1.msra.mxu0 %v4280
      %4519 = vmatprep.subr.mxu0 0.0
      %4520 = vmatpush1.msra.mxu0 %v4281
      %4521 = vmatprep.subr.mxu0 0.0
      %4522 = vmatpush1.msra.mxu0 %v4282
      %4523 = vmatprep.subr.mxu0 0.0
      %4524 = vmatpush1.msra.mxu0 %v4283
      %4525 = vmatprep.subr.mxu0 0.0
      %4526 = vmatpush1.msra.mxu0 %v4284
      %4527 = vmatprep.subr.mxu0 0.0
      %4528 = vmatpush1.msra.mxu0 %v4285
      %4529 = vmatprep.subr.mxu0 0.0
      %4530 = vmatpush1.msra.mxu0 %v4286
      %4531 = vmatprep.subr.mxu0 0.0
      %4532 = vmatpush1.msra.mxu0 %v4287
      %4533 = vmatprep.subr.mxu0 0.0
      %4534 = vmatpush1.msra.mxu0 %v4288
      %4535 = vmatprep.subr.mxu0 0.0
      %4536 = vmatpush1.msra.mxu0 %v4289
      %4537 = vmatprep.subr.mxu0 0.0
      %4538 = vmatpush1.msra.mxu0 %v4290
      %4539 = vmatprep.subr.mxu0 0.0
      %4540 = vmatpush1.msra.mxu0 %v4291
      %4541 = vmatprep.subr.mxu0 0.0
      %4542 = vmatpush1.msra.mxu0 %v4292
      %4543 = vmatprep.subr.mxu0 0.0
      %4544 = vmatpush1.msra.mxu0 %v4293
      %4545 = vmatprep.subr.mxu0 0.0
      %4546 = vmatpush1.msra.mxu0 %v4294
      %4547 = vmatprep.subr.mxu0 0.0
      %4548 = vmatpush1.msra.mxu0 %v4295
      %4549 = vmatprep.subr.mxu0 0.0
      %4550 = vmatpush1.msra.mxu0 %v4296
      %4551 = vmatprep.subr.mxu0 0.0
      %4552 = vmatpush1.msra.mxu0 %v4297
      %4553 = vmatprep.subr.mxu0 0.0
      %4554 = vmatpush1.msra.mxu0 %v4298
      %4555 = vmatprep.subr.mxu0 0.0
      %4556 = vmatpush1.msra.mxu0 %v4299
      %4557 = vmatprep.mubr.f32.mxu0 %v4126
      %4558 = vmatmul.mubr.f32.gmra.mrb[0].mxu0 %v4125
      %v4559 = vpop.f32.mrb[0].mxu0
      %v4560 = vadd.f32 %v4415, %v4559
      %v4561 = vpop.f32.mrb[0].mxu0
      %4562 = vmatprep.mubr.f32.mxu0 %v4133
      %4563 = vmatmul.mubr.f32.gmra.mrb[0].mxu0 %v4132
      %v4564 = vpop.f32.mrb[0].mxu0
      %v4565 = vadd.f32 %v4420, %v4564
      %v4566 = vpop.f32.mrb[0].mxu0
      %4567 = vmatprep.mubr.f32.mxu0 %v4140
      %4568 = vmatmul.mubr.f32.gmra.mrb[0].mxu0 %v4139
      %v4569 = vpop.f32.mrb[0].mxu0
      %v4570 = vadd.f32 %v4425, %v4569
      %v4571 = vpop.f32.mrb[0].mxu0
      %4572 = vmatprep.mubr.f32.mxu0 %v4147
      %4573 = vmatmul.mubr.f32.gmra.mrb[0].mxu0 %v4146
      %v4574 = vpop.f32.mrb[0].mxu0
      %v4575 = vadd.f32 %v4430, %v4574
      %v4576 = vpop.f32.mrb[0].mxu0
      %4577 = vmatprep.mubr.f32.mxu0 %v4154
      %4578 = vmatmul.mubr.f32.gmra.mrb[0].mxu0 %v4153
      %v4579 = vpop.f32.mrb[0].mxu0
      %v4580 = vadd.f32 %v4435, %v4579
      %v4581 = vpop.f32.mrb[0].mxu0
      %4582 = vmatprep.mubr.f32.mxu0 %v4161
      %4583 = vmatmul.mubr.f32.gmra.mrb[0].mxu0 %v4160
      %v4584 = vpop.f32.mrb[0].mxu0
      %v4585 = vadd.f32 %v4440, %v4584
      %v4586 = vpop.f32.mrb[0].mxu0
      %4587 = vmatprep.mubr.f32.mxu0 %v4168
      %4588 = vmatmul.mubr.f32.gmra.mrb[0].mxu0 %v4167
      %v4589 = vpop.f32.mrb[0].mxu0
      %v4590 = vadd.f32 %v4445, %v4589
      %v4591 = vpop.f32.mrb[0].mxu0
      %4592 = vmatprep.mubr.f32.mxu0 %v4175
      %4593 = vmatmul.mubr.f32.gmra.mrb[0].mxu0 %v4174
      %v4594 = vpop.f32.mrb[0].mxu0
      %v4595 = vadd.f32 %v4450, %v4594
      %v4596 = vpop.f32.mrb[0].mxu0
      %4597 = vmatprep.mubr.f32.mxu0 %v4182
      %4598 = vmatmul.mubr.f32.gmra.mrb[0].mxu0 %v4181
      %v4599 = vpop.f32.mrb[0].mxu0
      %v4600 = vadd.f32 %v4455, %v4599
      %v4601 = vpop.f32.mrb[0].mxu0
      %4602 = vmatprep.mubr.f32.mxu0 %v4189
      %4603 = vmatmul.mubr.f32.gmra.mrb[0].mxu0 %v4188
      %v4604 = vpop.f32.mrb[0].mxu0
      %v4605 = vadd.f32 %v4460, %v4604
      %v4606 = vpop.f32.mrb[0].mxu0
      %4607 = vmatprep.mubr.f32.mxu0 %v4196
      %4608 = vmatmul.mubr.f32.gmra.mrb[0].mxu0 %v4195
      %v4609 = vpop.f32.mrb[0].mxu0
      %v4610 = vadd.f32 %v4465, %v4609
      %v4611 = vpop.f32.mrb[0].mxu0
      %4612 = vmatprep.mubr.f32.mxu0 %v4203
      %4613 = vmatmul.mubr.f32.gmra.mrb[0].mxu0 %v4202
      %v4614 = vpop.f32.mrb[0].mxu0
      %v4615 = vadd.f32 %v4470, %v4614
      %v4616 = vpop.f32.mrb[0].mxu0
      %4617 = vmatprep.mubr.f32.mxu0 %v4210
      %4618 = vmatmul.mubr.f32.gmra.mrb[0].mxu0 %v4209
      %v4619 = vpop.f32.mrb[0].mxu0
      %v4620 = vadd.f32 %v4475, %v4619
      %v4621 = vpop.f32.mrb[0].mxu0
      %4622 = vmatprep.mubr.f32.mxu0 %v4217
      %4623 = vmatmul.mubr.f32.gmra.mrb[0].mxu0 %v4216
      %v4624 = vpop.f32.mrb[0].mxu0
      %v4625 = vadd.f32 %v4480, %v4624
      %v4626 = vpop.f32.mrb[0].mxu0
      %4627 = vmatprep.mubr.f32.mxu0 %v4224
      %4628 = vmatmul.mubr.f32.gmra.mrb[0].mxu0 %v4223
      %v4629 = vpop.f32.mrb[0].mxu0
      %v4630 = vadd.f32 %v4485, %v4629
      %v4631 = vpop.f32.mrb[0].mxu0
      %4632 = vmatprep.mubr.f32.mxu0 %v4231
      %4633 = vmatmul.mubr.f32.gmra.mrb[0].mxu0 %v4230
      %v4634 = vpop.f32.mrb[0].mxu0
      %v4635 = vadd.f32 %v4490, %v4634
      %v4636 = vpop.f32.mrb[0].mxu0
      %4637 = vdwg.mxu0
      %4638 = vmatprep.subr.mxu0 0.0
      %4639 = vmatpush1.msra.mxu0 %v4300
      %4640 = vmatprep.subr.mxu0 0.0
      %4641 = vmatpush1.msra.mxu0 %v4301
      %4642 = vmatprep.subr.mxu0 0.0
      %4643 = vmatpush1.msra.mxu0 %v4302
      %4644 = vmatprep.subr.mxu0 0.0
      %4645 = vmatpush1.msra.mxu0 %v4303
      %4646 = vmatprep.subr.mxu0 0.0
      %4647 = vmatpush1.msra.mxu0 %v4304
      %4648 = vmatprep.subr.mxu0 0.0
      %4649 = vmatpush1.msra.mxu0 %v4305
      %4650 = vmatprep.subr.mxu0 0.0
      %4651 = vmatpush1.msra.mxu0 %v4306
      %4652 = vmatprep.subr.mxu0 0.0
      %4653 = vmatpush1.msra.mxu0 %v4307
      %4654 = vmatprep.subr.mxu0 0.0
      %4655 = vmatpush1.msra.mxu0 %v4308
      %4656 = vmatprep.subr.mxu0 0.0
      %4657 = vmatpush1.msra.mxu0 %v4309
      %4658 = vmatprep.subr.mxu0 0.0
      %4659 = vmatpush1.msra.mxu0 %v4310
      %4660 = vmatprep.subr.mxu0 0.0
      %4661 = vmatpush1.msra.mxu0 %v4311
      %4662 = vmatprep.subr.mxu0 0.0
      %4663 = vmatpush1.msra.mxu0 %v4312
      %4664 = vmatprep.subr.mxu0 0.0
      %4665 = vmatpush1.msra.mxu0 %v4313
      %4666 = vmatprep.subr.mxu0 0.0
      %4667 = vmatpush1.msra.mxu0 %v4314
      %4668 = vmatprep.subr.mxu0 0.0
      %4669 = vmatpush1.msra.mxu0 %v4315
      %4670 = vmatprep.subr.mxu0 0.0
      %4671 = vmatpush1.msra.mxu0 %v4316
      %4672 = vmatprep.subr.mxu0 0.0
      %4673 = vmatpush1.msra.mxu0 %v4317
      %4674 = vmatprep.subr.mxu0 0.0
      %4675 = vmatpush1.msra.mxu0 %v4318
      %4676 = vmatprep.subr.mxu0 0.0
      %4677 = vmatpush1.msra.mxu0 %v4319
      %4678 = vmatprep.subr.mxu0 0.0
      %4679 = vmatpush1.msra.mxu0 %v4320
      %4680 = vmatprep.subr.mxu0 0.0
      %4681 = vmatpush1.msra.mxu0 %v4321
      %4682 = vmatprep.subr.mxu0 0.0
      %4683 = vmatpush1.msra.mxu0 %v4322
      %4684 = vmatprep.subr.mxu0 0.0
      %4685 = vmatpush1.msra.mxu0 %v4323
      %4686 = vmatprep.subr.mxu0 0.0
      %4687 = vmatpush1.msra.mxu0 %v4324
      %4688 = vmatprep.subr.mxu0 0.0
      %4689 = vmatpush1.msra.mxu0 %v4325
      %4690 = vmatprep.subr.mxu0 0.0
      %4691 = vmatpush1.msra.mxu0 %v4326
      %4692 = vmatprep.subr.mxu0 0.0
      %4693 = vmatpush1.msra.mxu0 %v4327
      %4694 = vmatprep.subr.mxu0 0.0
      %4695 = vmatpush1.msra.mxu0 %v4328
      %4696 = vmatprep.subr.mxu0 0.0
      %4697 = vmatpush1.msra.mxu0 %v4329
      %4698 = vmatprep.subr.mxu0 0.0
      %4699 = vmatpush1.msra.mxu0 %v4330
      %4700 = vmatprep.subr.mxu0 0.0
      %4701 = vmatpush1.msra.mxu0 %v4331
      %4702 = vmatprep.mubr.f32.mxu0 %v4128
      %4703 = vmatmul.mubr.f32.gmra.mrb[0].mxu0 %v4127
      %v4704 = vpop.f32.mrb[0].mxu0
      %v4705 = vadd.f32 %v4560, %v4704
      %v4706 = vpop.f32.mrb[0].mxu0
      %4707 = vmatprep.mubr.f32.mxu0 %v4135
      %4708 = vmatmul.mubr.f32.gmra.mrb[0].mxu0 %v4134
      %v4709 = vpop.f32.mrb[0].mxu0
      %v4710 = vadd.f32 %v4565, %v4709
      %v4711 = vpop.f32.mrb[0].mxu0
      %4712 = vmatprep.mubr.f32.mxu0 %v4142
      %4713 = vmatmul.mubr.f32.gmra.mrb[0].mxu0 %v4141
      %v4714 = vpop.f32.mrb[0].mxu0
      %v4715 = vadd.f32 %v4570, %v4714
      %v4716 = vpop.f32.mrb[0].mxu0
      %4717 = vmatprep.mubr.f32.mxu0 %v4149
      %4718 = vmatmul.mubr.f32.gmra.mrb[0].mxu0 %v4148
      %v4719 = vpop.f32.mrb[0].mxu0
      %v4720 = vadd.f32 %v4575, %v4719
      %v4721 = vpop.f32.mrb[0].mxu0
      %4722 = vmatprep.mubr.f32.mxu0 %v4156
      %4723 = vmatmul.mubr.f32.gmra.mrb[0].mxu0 %v4155
      %v4724 = vpop.f32.mrb[0].mxu0
      %v4725 = vadd.f32 %v4580, %v4724
      %v4726 = vpop.f32.mrb[0].mxu0
      %4727 = vmatprep.mubr.f32.mxu0 %v4163
      %4728 = vmatmul.mubr.f32.gmra.mrb[0].mxu0 %v4162
      %v4729 = vpop.f32.mrb[0].mxu0
      %v4730 = vadd.f32 %v4585, %v4729
      %v4731 = vpop.f32.mrb[0].mxu0
      %4732 = vmatprep.mubr.f32.mxu0 %v4170
      %4733 = vmatmul.mubr.f32.gmra.mrb[0].mxu0 %v4169
      %v4734 = vpop.f32.mrb[0].mxu0
      %v4735 = vadd.f32 %v4590, %v4734
      %v4736 = vpop.f32.mrb[0].mxu0
      %4737 = vmatprep.mubr.f32.mxu0 %v4177
      %4738 = vmatmul.mubr.f32.gmra.mrb[0].mxu0 %v4176
      %v4739 = vpop.f32.mrb[0].mxu0
      %v4740 = vadd.f32 %v4595, %v4739
      %v4741 = vpop.f32.mrb[0].mxu0
      %4742 = vmatprep.mubr.f32.mxu0 %v4184
      %4743 = vmatmul.mubr.f32.gmra.mrb[0].mxu0 %v4183
      %v4744 = vpop.f32.mrb[0].mxu0
      %v4745 = vadd.f32 %v4600, %v4744
      %v4746 = vpop.f32.mrb[0].mxu0
      %4747 = vmatprep.mubr.f32.mxu0 %v4191
      %4748 = vmatmul.mubr.f32.gmra.mrb[0].mxu0 %v4190
      %v4749 = vpop.f32.mrb[0].mxu0
      %v4750 = vadd.f32 %v4605, %v4749
      %v4751 = vpop.f32.mrb[0].mxu0
      %4752 = vmatprep.mubr.f32.mxu0 %v4198
      %4753 = vmatmul.mubr.f32.gmra.mrb[0].mxu0 %v4197
      %v4754 = vpop.f32.mrb[0].mxu0
      %v4755 = vadd.f32 %v4610, %v4754
      %v4756 = vpop.f32.mrb[0].mxu0
      %4757 = vmatprep.mubr.f32.mxu0 %v4205
      %4758 = vmatmul.mubr.f32.gmra.mrb[0].mxu0 %v4204
      %v4759 = vpop.f32.mrb[0].mxu0
      %v4760 = vadd.f32 %v4615, %v4759
      %v4761 = vpop.f32.mrb[0].mxu0
      %4762 = vmatprep.mubr.f32.mxu0 %v4212
      %4763 = vmatmul.mubr.f32.gmra.mrb[0].mxu0 %v4211
      %v4764 = vpop.f32.mrb[0].mxu0
      %v4765 = vadd.f32 %v4620, %v4764
      %v4766 = vpop.f32.mrb[0].mxu0
      %4767 = vmatprep.mubr.f32.mxu0 %v4219
      %4768 = vmatmul.mubr.f32.gmra.mrb[0].mxu0 %v4218
      %v4769 = vpop.f32.mrb[0].mxu0
      %v4770 = vadd.f32 %v4625, %v4769
      %v4771 = vpop.f32.mrb[0].mxu0
      %4772 = vmatprep.mubr.f32.mxu0 %v4226
      %4773 = vmatmul.mubr.f32.gmra.mrb[0].mxu0 %v4225
      %v4774 = vpop.f32.mrb[0].mxu0
      %v4775 = vadd.f32 %v4630, %v4774
      %v4776 = vpop.f32.mrb[0].mxu0
      %4777 = vmatprep.mubr.f32.mxu0 %v4233
      %4778 = vmatmul.mubr.f32.gmra.mrb[0].mxu0 %v4232
      %v4779 = vpop.f32.mrb[0].mxu0
      %v4780 = vadd.f32 %v4635, %v4779
      %v4781 = vpop.f32.mrb[0].mxu0
      %4782 = vdwg.mxu0
      %4783 = vmatprep.subr.mxu0 0.0
      %4784 = vmatpush1.msra.mxu0 %v4332
      %4785 = vmatprep.subr.mxu0 0.0
      %4786 = vmatpush1.msra.mxu0 %v4333
      %4787 = vmatprep.subr.mxu0 0.0
      %4788 = vmatpush1.msra.mxu0 %v4334
      %4789 = vmatprep.subr.mxu0 0.0
      %4790 = vmatpush1.msra.mxu0 %v4335
      %4791 = vmatprep.subr.mxu0 0.0
      %4792 = vmatpush1.msra.mxu0 %v4336
      %4793 = vmatprep.subr.mxu0 0.0
      %4794 = vmatpush1.msra.mxu0 %v4337
      %4795 = vmatprep.subr.mxu0 0.0
      %4796 = vmatpush1.msra.mxu0 %v4338
      %4797 = vmatprep.subr.mxu0 0.0
      %4798 = vmatpush1.msra.mxu0 %v4339
      %4799 = vmatprep.subr.mxu0 0.0
      %4800 = vmatpush1.msra.mxu0 %v4340
      %4801 = vmatprep.subr.mxu0 0.0
      %4802 = vmatpush1.msra.mxu0 %v4341
      %4803 = vmatprep.subr.mxu0 0.0
      %4804 = vmatpush1.msra.mxu0 %v4342
      %4805 = vmatprep.subr.mxu0 0.0
      %4806 = vmatpush1.msra.mxu0 %v4343
      %4807 = vmatprep.subr.mxu0 0.0
      %4808 = vmatpush1.msra.mxu0 %v4344
      %4809 = vmatprep.subr.mxu0 0.0
      %4810 = vmatpush1.msra.mxu0 %v4345
      %4811 = vmatprep.subr.mxu0 0.0
      %4812 = vmatpush1.msra.mxu0 %v4346
      %4813 = vmatprep.subr.mxu0 0.0
      %4814 = vmatpush1.msra.mxu0 %v4347
      %4815 = vmatprep.subr.mxu0 0.0
      %4816 = vmatpush1.msra.mxu0 0.0
      %4817 = vmatprep.subr.mxu0 0.0
      %4818 = vmatpush1.msra.mxu0 0.0
      %4819 = vmatprep.subr.mxu0 0.0
      %4820 = vmatpush1.msra.mxu0 0.0
      %4821 = vmatprep.subr.mxu0 0.0
      %4822 = vmatpush1.msra.mxu0 0.0
      %4823 = vmatprep.subr.mxu0 0.0
      %4824 = vmatpush1.msra.mxu0 0.0
      %4825 = vmatprep.subr.mxu0 0.0
      %4826 = vmatpush1.msra.mxu0 0.0
      %4827 = vmatprep.subr.mxu0 0.0
      %4828 = vmatpush1.msra.mxu0 0.0
      %4829 = vmatprep.subr.mxu0 0.0
      %4830 = vmatpush1.msra.mxu0 0.0
      %4831 = vmatprep.subr.mxu0 0.0
      %4832 = vmatpush1.msra.mxu0 0.0
      %4833 = vmatprep.subr.mxu0 0.0
      %4834 = vmatpush1.msra.mxu0 0.0
      %4835 = vmatprep.subr.mxu0 0.0
      %4836 = vmatpush1.msra.mxu0 0.0
      %4837 = vmatprep.subr.mxu0 0.0
      %4838 = vmatpush1.msra.mxu0 0.0
      %4839 = vmatprep.subr.mxu0 0.0
      %4840 = vmatpush1.msra.mxu0 0.0
      %4841 = vmatprep.subr.mxu0 0.0
      %4842 = vmatpush1.msra.mxu0 0.0
      %4843 = vmatprep.subr.mxu0 0.0
      %4844 = vmatpush1.msra.mxu0 0.0
      %4845 = vmatprep.subr.mxu0 0.0
      %4846 = vmatpush1.msra.mxu0 0.0
      %4847 = vmatprep.mubr.f32.mxu0 0.0
      %4848 = vmatmul.mubr.f32.gmra.mrb[0].mxu0 %v4129
      %v4849 = vpop.f32.mrb[0].mxu0
      %v4850 = vadd.f32 %v4705, %v4849
      %v4851 = vpop.f32.mrb[0].mxu0
      %4852 = vmatprep.mubr.f32.mxu0 0.0
      %4853 = vmatmul.mubr.f32.gmra.mrb[0].mxu0 %v4136
      %v4854 = vpop.f32.mrb[0].mxu0
      %v4855 = vadd.f32 %v4710, %v4854
      %v4856 = vpop.f32.mrb[0].mxu0
      %4857 = vmatprep.mubr.f32.mxu0 0.0
      %4858 = vmatmul.mubr.f32.gmra.mrb[0].mxu0 %v4143
      %v4859 = vpop.f32.mrb[0].mxu0
      %v4860 = vadd.f32 %v4715, %v4859
      %v4861 = vpop.f32.mrb[0].mxu0
      %4862 = vmatprep.mubr.f32.mxu0 0.0
      %4863 = vmatmul.mubr.f32.gmra.mrb[0].mxu0 %v4150
      %v4864 = vpop.f32.mrb[0].mxu0
      %v4865 = vadd.f32 %v4720, %v4864
      %v4866 = vpop.f32.mrb[0].mxu0
      %4867 = vmatprep.mubr.f32.mxu0 0.0
      %4868 = vmatmul.mubr.f32.gmra.mrb[0].mxu0 %v4157
      %v4869 = vpop.f32.mrb[0].mxu0
      %v4870 = vadd.f32 %v4725, %v4869
      %v4871 = vpop.f32.mrb[0].mxu0
      %4872 = vmatprep.mubr.f32.mxu0 0.0
      %4873 = vmatmul.mubr.f32.gmra.mrb[0].mxu0 %v4164
      %v4874 = vpop.f32.mrb[0].mxu0
      %v4875 = vadd.f32 %v4730, %v4874
      %v4876 = vpop.f32.mrb[0].mxu0
      %4877 = vmatprep.mubr.f32.mxu0 0.0
      %4878 = vmatmul.mubr.f32.gmra.mrb[0].mxu0 %v4171
      %v4879 = vpop.f32.mrb[0].mxu0
      %v4880 = vadd.f32 %v4735, %v4879
      %v4881 = vpop.f32.mrb[0].mxu0
      %4882 = vmatprep.mubr.f32.mxu0 0.0
      %4883 = vmatmul.mubr.f32.gmra.mrb[0].mxu0 %v4178
      %v4884 = vpop.f32.mrb[0].mxu0
      %v4885 = vadd.f32 %v4740, %v4884
      %v4886 = vpop.f32.mrb[0].mxu0
      %4887 = vmatprep.mubr.f32.mxu0 0.0
      %4888 = vmatmul.mubr.f32.gmra.mrb[0].mxu0 %v4185
      %v4889 = vpop.f32.mrb[0].mxu0
      %v4890 = vadd.f32 %v4745, %v4889
      %v4891 = vpop.f32.mrb[0].mxu0
      %4892 = vmatprep.mubr.f32.mxu0 0.0
      %4893 = vmatmul.mubr.f32.gmra.mrb[0].mxu0 %v4192
      %v4894 = vpop.f32.mrb[0].mxu0
      %v4895 = vadd.f32 %v4750, %v4894
      %v4896 = vpop.f32.mrb[0].mxu0
      %4897 = vmatprep.mubr.f32.mxu0 0.0
      %4898 = vmatmul.mubr.f32.gmra.mrb[0].mxu0 %v4199
      %v4899 = vpop.f32.mrb[0].mxu0
      %v4900 = vadd.f32 %v4755, %v4899
      %v4901 = vpop.f32.mrb[0].mxu0
      %4902 = vmatprep.mubr.f32.mxu0 0.0
      %4903 = vmatmul.mubr.f32.gmra.mrb[0].mxu0 %v4206
      %v4904 = vpop.f32.mrb[0].mxu0
      %v4905 = vadd.f32 %v4760, %v4904
      %v4906 = vpop.f32.mrb[0].mxu0
      %4907 = vmatprep.mubr.f32.mxu0 0.0
      %4908 = vmatmul.mubr.f32.gmra.mrb[0].mxu0 %v4213
      %v4909 = vpop.f32.mrb[0].mxu0
      %v4910 = vadd.f32 %v4765, %v4909
      %v4911 = vpop.f32.mrb[0].mxu0
      %4912 = vmatprep.mubr.f32.mxu0 0.0
      %4913 = vmatmul.mubr.f32.gmra.mrb[0].mxu0 %v4220
      %v4914 = vpop.f32.mrb[0].mxu0
      %v4915 = vadd.f32 %v4770, %v4914
      %v4916 = vpop.f32.mrb[0].mxu0
      %4917 = vmatprep.mubr.f32.mxu0 0.0
      %4918 = vmatmul.mubr.f32.gmra.mrb[0].mxu0 %v4227
      %v4919 = vpop.f32.mrb[0].mxu0
      %v4920 = vadd.f32 %v4775, %v4919
      %v4921 = vpop.f32.mrb[0].mxu0
      %4922 = vmatprep.mubr.f32.mxu0 0.0
      %4923 = vmatmul.mubr.f32.gmra.mrb[0].mxu0 %v4234
      %v4924 = vpop.f32.mrb[0].mxu0
      %v4925 = vadd.f32 %v4780, %v4924
      %v4926 = vpop.f32.mrb[0].mxu0
      %4927 = vdwg.mxu0
      %v4928 = vld [vmem:[#allocation5] sm:$0xff]
      %v4929 = vld [vmem:[#allocation5 + $0x8] sm:$0xff]
      %v4930 = vld [vmem:[#allocation5 + $0x10] sm:$0xff]
      %v4931 = vld [vmem:[#allocation5 + $0x18] sm:$0xff]
      %v4932 = vld [vmem:[#allocation5 + $0x20] sm:$0xff]
      %v4933 = vld [vmem:[#allocation5 + $0x28] sm:$0xff]
      %v4934 = vld [vmem:[#allocation5 + $0x30] sm:$0xff]
      %v4935 = vld [vmem:[#allocation5 + $0x38] sm:$0xff]
      %v4936 = vld [vmem:[#allocation5 + $0x40] sm:$0xff]
      %v4937 = vld [vmem:[#allocation5 + $0x48] sm:$0xff]
      %v4938 = vld [vmem:[#allocation5 + $0x50] sm:$0xff]
      %v4939 = vld [vmem:[#allocation5 + $0x58] sm:$0xff]
      %v4940 = vld [vmem:[#allocation5 + $0x60] sm:$0xff]
      %v4941 = vld [vmem:[#allocation5 + $0x68] sm:$0xff]
      %v4942 = vld [vmem:[#allocation5 + $0x70] sm:$0xff]
      %v4943 = vld [vmem:[#allocation5 + $0x78] sm:$0xff]
      %v4944 = vadd.f32 %v4928, %v4850
      %v4945 = vadd.f32 %v4929, %v4855
      %v4946 = vadd.f32 %v4930, %v4860
      %v4947 = vadd.f32 %v4931, %v4865
      %v4948 = vadd.f32 %v4932, %v4870
      %v4949 = vadd.f32 %v4933, %v4875
      %v4950 = vadd.f32 %v4934, %v4880
      %v4951 = vadd.f32 %v4935, %v4885
      %v4952 = vadd.f32 %v4936, %v4890
      %v4953 = vadd.f32 %v4937, %v4895
      %v4954 = vadd.f32 %v4938, %v4900
      %v4955 = vadd.f32 %v4939, %v4905
      %v4956 = vadd.f32 %v4940, %v4910
      %v4957 = vadd.f32 %v4941, %v4915
      %v4958 = vadd.f32 %v4942, %v4920
      %v4959 = vadd.f32 %v4943, %v4925
      %4960 = vst [vmem:[#allocation5] sm:$0xff] %v4944
      %4961 = vst [vmem:[#allocation5 + $0x8] sm:$0xff] %v4945
      %4962 = vst [vmem:[#allocation5 + $0x10] sm:$0xff] %v4946
      %4963 = vst [vmem:[#allocation5 + $0x18] sm:$0xff] %v4947
      %4964 = vst [vmem:[#allocation5 + $0x20] sm:$0xff] %v4948
      %4965 = vst [vmem:[#allocation5 + $0x28] sm:$0xff] %v4949
      %4966 = vst [vmem:[#allocation5 + $0x30] sm:$0xff] %v4950
      %4967 = vst [vmem:[#allocation5 + $0x38] sm:$0xff] %v4951
      %4968 = vst [vmem:[#allocation5 + $0x40] sm:$0xff] %v4952
      %4969 = vst [vmem:[#allocation5 + $0x48] sm:$0xff] %v4953
      %4970 = vst [vmem:[#allocation5 + $0x50] sm:$0xff] %v4954
      %4971 = vst [vmem:[#allocation5 + $0x58] sm:$0xff] %v4955
      %4972 = vst [vmem:[#allocation5 + $0x60] sm:$0xff] %v4956
      %4973 = vst [vmem:[#allocation5 + $0x68] sm:$0xff] %v4957
      %4974 = vst [vmem:[#allocation5 + $0x70] sm:$0xff] %v4958
      %4975 = vst [vmem:[#allocation5 + $0x78] sm:$0xff] %v4959
      %s4976 = scalar_lea.vmem [#allocation3], 336
      %v4977 = vld [vmem:[%s4976] sm:$0xff]
      %v4978 = vld [vmem:[%s4976 + $0x8] sm:$0xff]
      %v4979 = vld [vmem:[%s4976 + $0x10] sm:$0xff]
      %v4980 = vld [vmem:[%s4976 + $0x18] sm:$0xff]
      %v4981 = vld [vmem:[%s4976 + $0x20] sm:$0xff]
      %v4982 = vld [vmem:[%s4976 + $0x28] sm:$0xff]
      %v4983 = vld [vmem:[%s4976 + $0x30] sm:$0xff]
      %v4984 = vld [vmem:[%s4976 + $0x38] sm:$0xff]
      %v4985 = vld [vmem:[%s4976 + $0x40] sm:$0xff]
      %v4986 = vld [vmem:[%s4976 + $0x48] sm:$0xff]
      %v4987 = vld [vmem:[%s4976 + $0x50] sm:$0xff]
      %v4988 = vld [vmem:[%s4976 + $0x58] sm:$0xff]
      %v4989 = vld [vmem:[%s4976 + $0x60] sm:$0xff]
      %v4990 = vld [vmem:[%s4976 + $0x68] sm:$0xff]
      %v4991 = vld [vmem:[%s4976 + $0x70] sm:$0xff]
      %v4992 = vld [vmem:[%s4976 + $0x78] sm:$0xff]
      %v4993 = vld [vmem:[%s4976 + $0x80] sm:$0xff]
      %v4994 = vld [vmem:[%s4976 + $0x88] sm:$0xff]
      %v4995 = vld [vmem:[%s4976 + $0x90] sm:$0xff]
      %v4996 = vld [vmem:[%s4976 + $0x98] sm:$0xff]
      %v4997 = vld [vmem:[%s4976 + $0xa0] sm:$0xff]
      %v4998 = vld [vmem:[%s4976 + $0xa8] sm:$0xff]
      %v4999 = vld [vmem:[%s4976 + $0xb0] sm:$0xff]
      %v5000 = vld [vmem:[%s4976 + $0xb8] sm:$0xff]
      %v5001 = vld [vmem:[%s4976 + $0xc0] sm:$0xff]
      %v5002 = vld [vmem:[%s4976 + $0xc8] sm:$0xff]
      %v5003 = vld [vmem:[%s4976 + $0xd0] sm:$0xff]
      %v5004 = vld [vmem:[%s4976 + $0xd8] sm:$0xff]
      %v5005 = vld [vmem:[%s4976 + $0xe0] sm:$0xff]
      %v5006 = vld [vmem:[%s4976 + $0xe8] sm:$0xff]
      %v5007 = vld [vmem:[%s4976 + $0xf0] sm:$0xff]
      %v5008 = vld [vmem:[%s4976 + $0xf8] sm:$0xff]
      %v5009 = vld [vmem:[%s4976 + $0x100] sm:$0xff]
      %v5010 = vld [vmem:[%s4976 + $0x108] sm:$0xff]
      %v5011 = vld [vmem:[%s4976 + $0x110] sm:$0xff]
      %v5012 = vld [vmem:[%s4976 + $0x118] sm:$0xff]
      %v5013 = vld [vmem:[%s4976 + $0x120] sm:$0xff]
      %v5014 = vld [vmem:[%s4976 + $0x128] sm:$0xff]
      %v5015 = vld [vmem:[%s4976 + $0x130] sm:$0xff]
      %v5016 = vld [vmem:[%s4976 + $0x138] sm:$0xff]
      %v5017 = vld [vmem:[%s4976 + $0x140] sm:$0xff]
      %v5018 = vld [vmem:[%s4976 + $0x148] sm:$0xff]
      %v5019 = vld [vmem:[%s4976 + $0x150] sm:$0xff]
      %v5020 = vld [vmem:[%s4976 + $0x158] sm:$0xff]
      %v5021 = vld [vmem:[%s4976 + $0x160] sm:$0xff]
      %v5022 = vld [vmem:[%s4976 + $0x168] sm:$0xff]
      %v5023 = vld [vmem:[%s4976 + $0x170] sm:$0xff]
      %v5024 = vld [vmem:[%s4976 + $0x178] sm:$0xff]
      %v5025 = vld [vmem:[%s4976 + $0x180] sm:$0xff]
      %v5026 = vld [vmem:[%s4976 + $0x188] sm:$0xff]
      %v5027 = vld [vmem:[%s4976 + $0x190] sm:$0xff]
      %v5028 = vld [vmem:[%s4976 + $0x198] sm:$0xff]
      %v5029 = vld [vmem:[%s4976 + $0x1a0] sm:$0xff]
      %v5030 = vld [vmem:[%s4976 + $0x1a8] sm:$0xff]
      %v5031 = vld [vmem:[%s4976 + $0x1b0] sm:$0xff]
      %v5032 = vld [vmem:[%s4976 + $0x1b8] sm:$0xff]
      %v5033 = vld [vmem:[%s4976 + $0x1c0] sm:$0xff]
      %v5034 = vld [vmem:[%s4976 + $0x1c8] sm:$0xff]
      %v5035 = vld [vmem:[%s4976 + $0x1d0] sm:$0xff]
      %v5036 = vld [vmem:[%s4976 + $0x1d8] sm:$0xff]
      %v5037 = vld [vmem:[%s4976 + $0x1e0] sm:$0xff]
      %v5038 = vld [vmem:[%s4976 + $0x1e8] sm:$0xff]
      %v5039 = vld [vmem:[%s4976 + $0x1f0] sm:$0xff]
      %v5040 = vld [vmem:[%s4976 + $0x1f8] sm:$0xff]
      %v5041 = vld [vmem:[%s4976 + $0x200] sm:$0xff]
      %v5042 = vld [vmem:[%s4976 + $0x208] sm:$0xff]
      %v5043 = vld [vmem:[%s4976 + $0x210] sm:$0xff]
      %v5044 = vld [vmem:[%s4976 + $0x218] sm:$0xff]
      %v5045 = vld [vmem:[%s4976 + $0x220] sm:$0xff]
      %v5046 = vld [vmem:[%s4976 + $0x228] sm:$0xff]
      %v5047 = vld [vmem:[%s4976 + $0x230] sm:$0xff]
      %v5048 = vld [vmem:[%s4976 + $0x238] sm:$0xff]
      %v5049 = vld [vmem:[%s4976 + $0x240] sm:$0xff]
      %v5050 = vld [vmem:[%s4976 + $0x248] sm:$0xff]
      %v5051 = vld [vmem:[%s4976 + $0x250] sm:$0xff]
      %v5052 = vld [vmem:[%s4976 + $0x258] sm:$0xff]
      %v5053 = vld [vmem:[%s4976 + $0x260] sm:$0xff]
      %v5054 = vld [vmem:[%s4976 + $0x268] sm:$0xff]
      %v5055 = vld [vmem:[%s4976 + $0x270] sm:$0xff]
      %v5056 = vld [vmem:[%s4976 + $0x278] sm:$0xff]
      %v5057 = vld [vmem:[%s4976 + $0x280] sm:$0xff]
      %v5058 = vld [vmem:[%s4976 + $0x288] sm:$0xff]
      %v5059 = vld [vmem:[%s4976 + $0x290] sm:$0xff]
      %v5060 = vld [vmem:[%s4976 + $0x298] sm:$0xff]
      %v5061 = vld [vmem:[%s4976 + $0x2a0] sm:$0xff]
      %v5062 = vld [vmem:[%s4976 + $0x2a8] sm:$0xff]
      %v5063 = vld [vmem:[%s4976 + $0x2b0] sm:$0xff]
      %v5064 = vld [vmem:[%s4976 + $0x2b8] sm:$0xff]
      %v5065 = vld [vmem:[%s4976 + $0x2c0] sm:$0xff]
      %v5066 = vld [vmem:[%s4976 + $0x2c8] sm:$0xff]
      %v5067 = vld [vmem:[%s4976 + $0x2d0] sm:$0xff]
      %v5068 = vld [vmem:[%s4976 + $0x2d8] sm:$0xff]
      %v5069 = vld [vmem:[%s4976 + $0x2e0] sm:$0xff]
      %v5070 = vld [vmem:[%s4976 + $0x2e8] sm:$0xff]
      %v5071 = vld [vmem:[%s4976 + $0x2f0] sm:$0xff]
      %v5072 = vld [vmem:[%s4976 + $0x2f8] sm:$0xff]
      %v5073 = vld [vmem:[%s4976 + $0x300] sm:$0xff]
      %v5074 = vld [vmem:[%s4976 + $0x308] sm:$0xff]
      %v5075 = vld [vmem:[%s4976 + $0x310] sm:$0xff]
      %v5076 = vld [vmem:[%s4976 + $0x318] sm:$0xff]
      %v5077 = vld [vmem:[%s4976 + $0x320] sm:$0xff]
      %v5078 = vld [vmem:[%s4976 + $0x328] sm:$0xff]
      %v5079 = vld [vmem:[%s4976 + $0x330] sm:$0xff]
      %v5080 = vld [vmem:[%s4976 + $0x338] sm:$0xff]
      %v5081 = vld [vmem:[%s4976 + $0x340] sm:$0xff]
      %v5082 = vld [vmem:[%s4976 + $0x348] sm:$0xff]
      %v5083 = vld [vmem:[%s4976 + $0x350] sm:$0xff]
      %v5084 = vld [vmem:[%s4976 + $0x358] sm:$0xff]
      %v5085 = vld [vmem:[%s4976 + $0x360] sm:$0xff]
      %v5086 = vld [vmem:[%s4976 + $0x368] sm:$0xff]
      %v5087 = vld [vmem:[%s4976 + $0x370] sm:$0xff]
      %v5088 = vld [vmem:[%s4976 + $0x378] sm:$0xff]
      %s5089 = scalar_lea.vmem [#allocation4], 2688
      %v5090 = vld [vmem:[%s5089] sm:$0xff]
      %v5091 = vld [vmem:[%s5089 + $0x8] sm:$0xff]
      %v5092 = vld [vmem:[%s5089 + $0x10] sm:$0xff]
      %v5093 = vld [vmem:[%s5089 + $0x18] sm:$0xff]
      %v5094 = vld [vmem:[%s5089 + $0x20] sm:$0xff]
      %v5095 = vld [vmem:[%s5089 + $0x28] sm:$0xff]
      %v5096 = vld [vmem:[%s5089 + $0x30] sm:$0xff]
      %v5097 = vld [vmem:[%s5089 + $0x38] sm:$0xff]
      %v5098 = vld [vmem:[%s5089 + $0x40] sm:$0xff]
      %v5099 = vld [vmem:[%s5089 + $0x48] sm:$0xff]
      %v5100 = vld [vmem:[%s5089 + $0x50] sm:$0xff]
      %v5101 = vld [vmem:[%s5089 + $0x58] sm:$0xff]
      %v5102 = vld [vmem:[%s5089 + $0x60] sm:$0xff]
      %v5103 = vld [vmem:[%s5089 + $0x68] sm:$0xff]
      %v5104 = vld [vmem:[%s5089 + $0x70] sm:$0xff]
      %v5105 = vld [vmem:[%s5089 + $0x78] sm:$0xff]
      %v5106 = vld [vmem:[%s5089 + $0x80] sm:$0xff]
      %v5107 = vld [vmem:[%s5089 + $0x88] sm:$0xff]
      %v5108 = vld [vmem:[%s5089 + $0x90] sm:$0xff]
      %v5109 = vld [vmem:[%s5089 + $0x98] sm:$0xff]
      %v5110 = vld [vmem:[%s5089 + $0xa0] sm:$0xff]
      %v5111 = vld [vmem:[%s5089 + $0xa8] sm:$0xff]
      %v5112 = vld [vmem:[%s5089 + $0xb0] sm:$0xff]
      %v5113 = vld [vmem:[%s5089 + $0xb8] sm:$0xff]
      %v5114 = vld [vmem:[%s5089 + $0xc0] sm:$0xff]
      %v5115 = vld [vmem:[%s5089 + $0xc8] sm:$0xff]
      %v5116 = vld [vmem:[%s5089 + $0xd0] sm:$0xff]
      %v5117 = vld [vmem:[%s5089 + $0xd8] sm:$0xff]
      %v5118 = vld [vmem:[%s5089 + $0xe0] sm:$0xff]
      %v5119 = vld [vmem:[%s5089 + $0xe8] sm:$0xff]
      %v5120 = vld [vmem:[%s5089 + $0xf0] sm:$0xff]
      %v5121 = vld [vmem:[%s5089 + $0xf8] sm:$0xff]
      %v5122 = vld [vmem:[%s5089 + $0x100] sm:$0xff]
      %v5123 = vld [vmem:[%s5089 + $0x108] sm:$0xff]
      %v5124 = vld [vmem:[%s5089 + $0x110] sm:$0xff]
      %v5125 = vld [vmem:[%s5089 + $0x118] sm:$0xff]
      %v5126 = vld [vmem:[%s5089 + $0x120] sm:$0xff]
      %v5127 = vld [vmem:[%s5089 + $0x128] sm:$0xff]
      %v5128 = vld [vmem:[%s5089 + $0x130] sm:$0xff]
      %v5129 = vld [vmem:[%s5089 + $0x138] sm:$0xff]
      %v5130 = vld [vmem:[%s5089 + $0x140] sm:$0xff]
      %v5131 = vld [vmem:[%s5089 + $0x148] sm:$0xff]
      %v5132 = vld [vmem:[%s5089 + $0x150] sm:$0xff]
      %v5133 = vld [vmem:[%s5089 + $0x158] sm:$0xff]
      %v5134 = vld [vmem:[%s5089 + $0x160] sm:$0xff]
      %v5135 = vld [vmem:[%s5089 + $0x168] sm:$0xff]
      %v5136 = vld [vmem:[%s5089 + $0x170] sm:$0xff]
      %v5137 = vld [vmem:[%s5089 + $0x178] sm:$0xff]
      %v5138 = vld [vmem:[%s5089 + $0x180] sm:$0xff]
      %v5139 = vld [vmem:[%s5089 + $0x188] sm:$0xff]
      %v5140 = vld [vmem:[%s5089 + $0x190] sm:$0xff]
      %v5141 = vld [vmem:[%s5089 + $0x198] sm:$0xff]
      %v5142 = vld [vmem:[%s5089 + $0x1a0] sm:$0xff]
      %v5143 = vld [vmem:[%s5089 + $0x1a8] sm:$0xff]
      %v5144 = vld [vmem:[%s5089 + $0x1b0] sm:$0xff]
      %v5145 = vld [vmem:[%s5089 + $0x1b8] sm:$0xff]
      %v5146 = vld [vmem:[%s5089 + $0x1c0] sm:$0xff]
      %v5147 = vld [vmem:[%s5089 + $0x1c8] sm:$0xff]
      %v5148 = vld [vmem:[%s5089 + $0x1d0] sm:$0xff]
      %v5149 = vld [vmem:[%s5089 + $0x1d8] sm:$0xff]
      %v5150 = vld [vmem:[%s5089 + $0x1e0] sm:$0xff]
      %v5151 = vld [vmem:[%s5089 + $0x1e8] sm:$0xff]
      %v5152 = vld [vmem:[%s5089 + $0x1f0] sm:$0xff]
      %v5153 = vld [vmem:[%s5089 + $0x1f8] sm:$0xff]
      %v5154 = vld [vmem:[%s5089 + $0x200] sm:$0xff]
      %v5155 = vld [vmem:[%s5089 + $0x208] sm:$0xff]
      %v5156 = vld [vmem:[%s5089 + $0x210] sm:$0xff]
      %v5157 = vld [vmem:[%s5089 + $0x218] sm:$0xff]
      %v5158 = vld [vmem:[%s5089 + $0x220] sm:$0xff]
      %v5159 = vld [vmem:[%s5089 + $0x228] sm:$0xff]
      %v5160 = vld [vmem:[%s5089 + $0x230] sm:$0xff]
      %v5161 = vld [vmem:[%s5089 + $0x238] sm:$0xff]
      %v5162 = vld [vmem:[%s5089 + $0x240] sm:$0xff]
      %v5163 = vld [vmem:[%s5089 + $0x248] sm:$0xff]
      %v5164 = vld [vmem:[%s5089 + $0x250] sm:$0xff]
      %v5165 = vld [vmem:[%s5089 + $0x258] sm:$0xff]
      %v5166 = vld [vmem:[%s5089 + $0x260] sm:$0xff]
      %v5167 = vld [vmem:[%s5089 + $0x268] sm:$0xff]
      %v5168 = vld [vmem:[%s5089 + $0x270] sm:$0xff]
      %v5169 = vld [vmem:[%s5089 + $0x278] sm:$0xff]
      %v5170 = vld [vmem:[%s5089 + $0x280] sm:$0xff]
      %v5171 = vld [vmem:[%s5089 + $0x288] sm:$0xff]
      %v5172 = vld [vmem:[%s5089 + $0x290] sm:$0xff]
      %v5173 = vld [vmem:[%s5089 + $0x298] sm:$0xff]
      %v5174 = vld [vmem:[%s5089 + $0x2a0] sm:$0xff]
      %v5175 = vld [vmem:[%s5089 + $0x2a8] sm:$0xff]
      %v5176 = vld [vmem:[%s5089 + $0x2b0] sm:$0xff]
      %v5177 = vld [vmem:[%s5089 + $0x2b8] sm:$0xff]
      %v5178 = vld [vmem:[%s5089 + $0x2c0] sm:$0xff]
      %v5179 = vld [vmem:[%s5089 + $0x2c8] sm:$0xff]
      %v5180 = vld [vmem:[%s5089 + $0x2d0] sm:$0xff]
      %v5181 = vld [vmem:[%s5089 + $0x2d8] sm:$0xff]
      %v5182 = vld [vmem:[%s5089 + $0x2e0] sm:$0xff]
      %v5183 = vld [vmem:[%s5089 + $0x2e8] sm:$0xff]
      %v5184 = vld [vmem:[%s5089 + $0x2f0] sm:$0xff]
      %v5185 = vld [vmem:[%s5089 + $0x2f8] sm:$0xff]
      %v5186 = vld [vmem:[%s5089 + $0x300] sm:$0xff]
      %v5187 = vld [vmem:[%s5089 + $0x308] sm:$0xff]
      %v5188 = vld [vmem:[%s5089 + $0x310] sm:$0xff]
      %v5189 = vld [vmem:[%s5089 + $0x318] sm:$0xff]
      %v5190 = vld [vmem:[%s5089 + $0x320] sm:$0xff]
      %v5191 = vld [vmem:[%s5089 + $0x328] sm:$0xff]
      %v5192 = vld [vmem:[%s5089 + $0x330] sm:$0xff]
      %v5193 = vld [vmem:[%s5089 + $0x338] sm:$0xff]
      %v5194 = vld [vmem:[%s5089 + $0x340] sm:$0xff]
      %v5195 = vld [vmem:[%s5089 + $0x348] sm:$0xff]
      %v5196 = vld [vmem:[%s5089 + $0x350] sm:$0xff]
      %v5197 = vld [vmem:[%s5089 + $0x358] sm:$0xff]
      %v5198 = vld [vmem:[%s5089 + $0x360] sm:$0xff]
      %v5199 = vld [vmem:[%s5089 + $0x368] sm:$0xff]
      %v5200 = vld [vmem:[%s5089 + $0x370] sm:$0xff]
      %v5201 = vld [vmem:[%s5089 + $0x378] sm:$0xff]
      %5202 = vmatprep.subr.mxu0 0.0
      %5203 = vmatpush1.msra.mxu0 %v5090
      %5204 = vmatprep.subr.mxu0 0.0
      %5205 = vmatpush1.msra.mxu0 %v5091
      %5206 = vmatprep.subr.mxu0 0.0
      %5207 = vmatpush1.msra.mxu0 %v5092
      %5208 = vmatprep.subr.mxu0 0.0
      %5209 = vmatpush1.msra.mxu0 %v5093
      %5210 = vmatprep.subr.mxu0 0.0
      %5211 = vmatpush1.msra.mxu0 %v5094
      %5212 = vmatprep.subr.mxu0 0.0
      %5213 = vmatpush1.msra.mxu0 %v5095
      %5214 = vmatprep.subr.mxu0 0.0
      %5215 = vmatpush1.msra.mxu0 %v5096
      %5216 = vmatprep.subr.mxu0 0.0
      %5217 = vmatpush1.msra.mxu0 %v5097
      %5218 = vmatprep.subr.mxu0 0.0
      %5219 = vmatpush1.msra.mxu0 %v5098
      %5220 = vmatprep.subr.mxu0 0.0
      %5221 = vmatpush1.msra.mxu0 %v5099
      %5222 = vmatprep.subr.mxu0 0.0
      %5223 = vmatpush1.msra.mxu0 %v5100
      %5224 = vmatprep.subr.mxu0 0.0
      %5225 = vmatpush1.msra.mxu0 %v5101
      %5226 = vmatprep.subr.mxu0 0.0
      %5227 = vmatpush1.msra.mxu0 %v5102
      %5228 = vmatprep.subr.mxu0 0.0
      %5229 = vmatpush1.msra.mxu0 %v5103
      %5230 = vmatprep.subr.mxu0 0.0
      %5231 = vmatpush1.msra.mxu0 %v5104
      %5232 = vmatprep.subr.mxu0 0.0
      %5233 = vmatpush1.msra.mxu0 %v5105
      %5234 = vmatprep.subr.mxu0 0.0
      %5235 = vmatpush1.msra.mxu0 %v5106
      %5236 = vmatprep.subr.mxu0 0.0
      %5237 = vmatpush1.msra.mxu0 %v5107
      %5238 = vmatprep.subr.mxu0 0.0
      %5239 = vmatpush1.msra.mxu0 %v5108
      %5240 = vmatprep.subr.mxu0 0.0
      %5241 = vmatpush1.msra.mxu0 %v5109
      %5242 = vmatprep.subr.mxu0 0.0
      %5243 = vmatpush1.msra.mxu0 %v5110
      %5244 = vmatprep.subr.mxu0 0.0
      %5245 = vmatpush1.msra.mxu0 %v5111
      %5246 = vmatprep.subr.mxu0 0.0
      %5247 = vmatpush1.msra.mxu0 %v5112
      %5248 = vmatprep.subr.mxu0 0.0
      %5249 = vmatpush1.msra.mxu0 %v5113
      %5250 = vmatprep.subr.mxu0 0.0
      %5251 = vmatpush1.msra.mxu0 %v5114
      %5252 = vmatprep.subr.mxu0 0.0
      %5253 = vmatpush1.msra.mxu0 %v5115
      %5254 = vmatprep.subr.mxu0 0.0
      %5255 = vmatpush1.msra.mxu0 %v5116
      %5256 = vmatprep.subr.mxu0 0.0
      %5257 = vmatpush1.msra.mxu0 %v5117
      %5258 = vmatprep.subr.mxu0 0.0
      %5259 = vmatpush1.msra.mxu0 %v5118
      %5260 = vmatprep.subr.mxu0 0.0
      %5261 = vmatpush1.msra.mxu0 %v5119
      %5262 = vmatprep.subr.mxu0 0.0
      %5263 = vmatpush1.msra.mxu0 %v5120
      %5264 = vmatprep.subr.mxu0 0.0
      %5265 = vmatpush1.msra.mxu0 %v5121
      %5266 = vmatprep.mubr.f32.mxu0 %v4978
      %5267 = vmatmul.mubr.f32.gmra.mrb[0].mxu0 %v4977
      %v5268 = vpop.f32.mrb[0].mxu0
      %v5269 = vadd.f32 0.0, %v5268
      %v5270 = vpop.f32.mrb[0].mxu0
      %5271 = vmatprep.mubr.f32.mxu0 %v4985
      %5272 = vmatmul.mubr.f32.gmra.mrb[0].mxu0 %v4984
      %v5273 = vpop.f32.mrb[0].mxu0
      %v5274 = vadd.f32 0.0, %v5273
      %v5275 = vpop.f32.mrb[0].mxu0
      %5276 = vmatprep.mubr.f32.mxu0 %v4992
      %5277 = vmatmul.mubr.f32.gmra.mrb[0].mxu0 %v4991
      %v5278 = vpop.f32.mrb[0].mxu0
      %v5279 = vadd.f32 0.0, %v5278
      %v5280 = vpop.f32.mrb[0].mxu0
      %5281 = vmatprep.mubr.f32.mxu0 %v4999
      %5282 = vmatmul.mubr.f32.gmra.mrb[0].mxu0 %v4998
      %v5283 = vpop.f32.mrb[0].mxu0
      %v5284 = vadd.f32 0.0, %v5283
      %v5285 = vpop.f32.mrb[0].mxu0
      %5286 = vmatprep.mubr.f32.mxu0 %v5006
      %5287 = vmatmul.mubr.f32.gmra.mrb[0].mxu0 %v5005
      %v5288 = vpop.f32.mrb[0].mxu0
      %v5289 = vadd.f32 0.0, %v5288
      %v5290 = vpop.f32.mrb[0].mxu0
      %5291 = vmatprep.mubr.f32.mxu0 %v5013
      %5292 = vmatmul.mubr.f32.gmra.mrb[0].mxu0 %v5012
      %v5293 = vpop.f32.mrb[0].mxu0
      %v5294 = vadd.f32 0.0, %v5293
      %v5295 = vpop.f32.mrb[0].mxu0
      %5296 = vmatprep.mubr.f32.mxu0 %v5020
      %5297 = vmatmul.mubr.f32.gmra.mrb[0].mxu0 %v5019
      %v5298 = vpop.f32.mrb[0].mxu0
      %v5299 = vadd.f32 0.0, %v5298
      %v5300 = vpop.f32.mrb[0].mxu0
      %5301 = vmatprep.mubr.f32.mxu0 %v5027
      %5302 = vmatmul.mubr.f32.gmra.mrb[0].mxu0 %v5026
      %v5303 = vpop.f32.mrb[0].mxu0
      %v5304 = vadd.f32 0.0, %v5303
      %v5305 = vpop.f32.mrb[0].mxu0
      %5306 = vmatprep.mubr.f32.mxu0 %v5034
      %5307 = vmatmul.mubr.f32.gmra.mrb[0].mxu0 %v5033
      %v5308 = vpop.f32.mrb[0].mxu0
      %v5309 = vadd.f32 0.0, %v5308
      %v5310 = vpop.f32.mrb[0].mxu0
      %5311 = vmatprep.mubr.f32.mxu0 %v5041
      %5312 = vmatmul.mubr.f32.gmra.mrb[0].mxu0 %v5040
      %v5313 = vpop.f32.mrb[0].mxu0
      %v5314 = vadd.f32 0.0, %v5313
      %v5315 = vpop.f32.mrb[0].mxu0
      %5316 = vmatprep.mubr.f32.mxu0 %v5048
      %5317 = vmatmul.mubr.f32.gmra.mrb[0].mxu0 %v5047
      %v5318 = vpop.f32.mrb[0].mxu0
      %v5319 = vadd.f32 0.0, %v5318
      %v5320 = vpop.f32.mrb[0].mxu0
      %5321 = vmatprep.mubr.f32.mxu0 %v5055
      %5322 = vmatmul.mubr.f32.gmra.mrb[0].mxu0 %v5054
      %v5323 = vpop.f32.mrb[0].mxu0
      %v5324 = vadd.f32 0.0, %v5323
      %v5325 = vpop.f32.mrb[0].mxu0
      %5326 = vmatprep.mubr.f32.mxu0 %v5062
      %5327 = vmatmul.mubr.f32.gmra.mrb[0].mxu0 %v5061
      %v5328 = vpop.f32.mrb[0].mxu0
      %v5329 = vadd.f32 0.0, %v5328
      %v5330 = vpop.f32.mrb[0].mxu0
      %5331 = vmatprep.mubr.f32.mxu0 %v5069
      %5332 = vmatmul.mubr.f32.gmra.mrb[0].mxu0 %v5068
      %v5333 = vpop.f32.mrb[0].mxu0
      %v5334 = vadd.f32 0.0, %v5333
      %v5335 = vpop.f32.mrb[0].mxu0
      %5336 = vmatprep.mubr.f32.mxu0 %v5076
      %5337 = vmatmul.mubr.f32.gmra.mrb[0].mxu0 %v5075
      %v5338 = vpop.f32.mrb[0].mxu0
      %v5339 = vadd.f32 0.0, %v5338
      %v5340 = vpop.f32.mrb[0].mxu0
      %5341 = vmatprep.mubr.f32.mxu0 %v5083
      %5342 = vmatmul.mubr.f32.gmra.mrb[0].mxu0 %v5082
      %v5343 = vpop.f32.mrb[0].mxu0
      %v5344 = vadd.f32 0.0, %v5343
      %v5345 = vpop.f32.mrb[0].mxu0
      %5346 = vdwg.mxu0
      %5347 = vmatprep.subr.mxu0 0.0
      %5348 = vmatpush1.msra.mxu0 %v5122
      %5349 = vmatprep.subr.mxu0 0.0
      %5350 = vmatpush1.msra.mxu0 %v5123
      %5351 = vmatprep.subr.mxu0 0.0
      %5352 = vmatpush1.msra.mxu0 %v5124
      %5353 = vmatprep.subr.mxu0 0.0
      %5354 = vmatpush1.msra.mxu0 %v5125
      %5355 = vmatprep.subr.mxu0 0.0
      %5356 = vmatpush1.msra.mxu0 %v5126
      %5357 = vmatprep.subr.mxu0 0.0
      %5358 = vmatpush1.msra.mxu0 %v5127
      %5359 = vmatprep.subr.mxu0 0.0
      %5360 = vmatpush1.msra.mxu0 %v5128
      %5361 = vmatprep.subr.mxu0 0.0
      %5362 = vmatpush1.msra.mxu0 %v5129
      %5363 = vmatprep.subr.mxu0 0.0
      %5364 = vmatpush1.msra.mxu0 %v5130
      %5365 = vmatprep.subr.mxu0 0.0
      %5366 = vmatpush1.msra.mxu0 %v5131
      %5367 = vmatprep.subr.mxu0 0.0
      %5368 = vmatpush1.msra.mxu0 %v5132
      %5369 = vmatprep.subr.mxu0 0.0
      %5370 = vmatpush1.msra.mxu0 %v5133
      %5371 = vmatprep.subr.mxu0 0.0
      %5372 = vmatpush1.msra.mxu0 %v5134
      %5373 = vmatprep.subr.mxu0 0.0
      %5374 = vmatpush1.msra.mxu0 %v5135
      %5375 = vmatprep.subr.mxu0 0.0
      %5376 = vmatpush1.msra.mxu0 %v5136
      %5377 = vmatprep.subr.mxu0 0.0
      %5378 = vmatpush1.msra.mxu0 %v5137
      %5379 = vmatprep.subr.mxu0 0.0
      %5380 = vmatpush1.msra.mxu0 %v5138
      %5381 = vmatprep.subr.mxu0 0.0
      %5382 = vmatpush1.msra.mxu0 %v5139
      %5383 = vmatprep.subr.mxu0 0.0
      %5384 = vmatpush1.msra.mxu0 %v5140
      %5385 = vmatprep.subr.mxu0 0.0
      %5386 = vmatpush1.msra.mxu0 %v5141
      %5387 = vmatprep.subr.mxu0 0.0
      %5388 = vmatpush1.msra.mxu0 %v5142
      %5389 = vmatprep.subr.mxu0 0.0
      %5390 = vmatpush1.msra.mxu0 %v5143
      %5391 = vmatprep.subr.mxu0 0.0
      %5392 = vmatpush1.msra.mxu0 %v5144
      %5393 = vmatprep.subr.mxu0 0.0
      %5394 = vmatpush1.msra.mxu0 %v5145
      %5395 = vmatprep.subr.mxu0 0.0
      %5396 = vmatpush1.msra.mxu0 %v5146
      %5397 = vmatprep.subr.mxu0 0.0
      %5398 = vmatpush1.msra.mxu0 %v5147
      %5399 = vmatprep.subr.mxu0 0.0
      %5400 = vmatpush1.msra.mxu0 %v5148
      %5401 = vmatprep.subr.mxu0 0.0
      %5402 = vmatpush1.msra.mxu0 %v5149
      %5403 = vmatprep.subr.mxu0 0.0
      %5404 = vmatpush1.msra.mxu0 %v5150
      %5405 = vmatprep.subr.mxu0 0.0
      %5406 = vmatpush1.msra.mxu0 %v5151
      %5407 = vmatprep.subr.mxu0 0.0
      %5408 = vmatpush1.msra.mxu0 %v5152
      %5409 = vmatprep.subr.mxu0 0.0
      %5410 = vmatpush1.msra.mxu0 %v5153
      %5411 = vmatprep.mubr.f32.mxu0 %v4980
      %5412 = vmatmul.mubr.f32.gmra.mrb[0].mxu0 %v4979
      %v5413 = vpop.f32.mrb[0].mxu0
      %v5414 = vadd.f32 %v5269, %v5413
      %v5415 = vpop.f32.mrb[0].mxu0
      %5416 = vmatprep.mubr.f32.mxu0 %v4987
      %5417 = vmatmul.mubr.f32.gmra.mrb[0].mxu0 %v4986
      %v5418 = vpop.f32.mrb[0].mxu0
      %v5419 = vadd.f32 %v5274, %v5418
      %v5420 = vpop.f32.mrb[0].mxu0
      %5421 = vmatprep.mubr.f32.mxu0 %v4994
      %5422 = vmatmul.mubr.f32.gmra.mrb[0].mxu0 %v4993
      %v5423 = vpop.f32.mrb[0].mxu0
      %v5424 = vadd.f32 %v5279, %v5423
      %v5425 = vpop.f32.mrb[0].mxu0
      %5426 = vmatprep.mubr.f32.mxu0 %v5001
      %5427 = vmatmul.mubr.f32.gmra.mrb[0].mxu0 %v5000
      %v5428 = vpop.f32.mrb[0].mxu0
      %v5429 = vadd.f32 %v5284, %v5428
      %v5430 = vpop.f32.mrb[0].mxu0
      %5431 = vmatprep.mubr.f32.mxu0 %v5008
      %5432 = vmatmul.mubr.f32.gmra.mrb[0].mxu0 %v5007
      %v5433 = vpop.f32.mrb[0].mxu0
      %v5434 = vadd.f32 %v5289, %v5433
      %v5435 = vpop.f32.mrb[0].mxu0
      %5436 = vmatprep.mubr.f32.mxu0 %v5015
      %5437 = vmatmul.mubr.f32.gmra.mrb[0].mxu0 %v5014
      %v5438 = vpop.f32.mrb[0].mxu0
      %v5439 = vadd.f32 %v5294, %v5438
      %v5440 = vpop.f32.mrb[0].mxu0
      %5441 = vmatprep.mubr.f32.mxu0 %v5022
      %5442 = vmatmul.mubr.f32.gmra.mrb[0].mxu0 %v5021
      %v5443 = vpop.f32.mrb[0].mxu0
      %v5444 = vadd.f32 %v5299, %v5443
      %v5445 = vpop.f32.mrb[0].mxu0
      %5446 = vmatprep.mubr.f32.mxu0 %v5029
      %5447 = vmatmul.mubr.f32.gmra.mrb[0].mxu0 %v5028
      %v5448 = vpop.f32.mrb[0].mxu0
      %v5449 = vadd.f32 %v5304, %v5448
      %v5450 = vpop.f32.mrb[0].mxu0
      %5451 = vmatprep.mubr.f32.mxu0 %v5036
      %5452 = vmatmul.mubr.f32.gmra.mrb[0].mxu0 %v5035
      %v5453 = vpop.f32.mrb[0].mxu0
      %v5454 = vadd.f32 %v5309, %v5453
      %v5455 = vpop.f32.mrb[0].mxu0
      %5456 = vmatprep.mubr.f32.mxu0 %v5043
      %5457 = vmatmul.mubr.f32.gmra.mrb[0].mxu0 %v5042
      %v5458 = vpop.f32.mrb[0].mxu0
      %v5459 = vadd.f32 %v5314, %v5458
      %v5460 = vpop.f32.mrb[0].mxu0
      %5461 = vmatprep.mubr.f32.mxu0 %v5050
      %5462 = vmatmul.mubr.f32.gmra.mrb[0].mxu0 %v5049
      %v5463 = vpop.f32.mrb[0].mxu0
      %v5464 = vadd.f32 %v5319, %v5463
      %v5465 = vpop.f32.mrb[0].mxu0
      %5466 = vmatprep.mubr.f32.mxu0 %v5057
      %5467 = vmatmul.mubr.f32.gmra.mrb[0].mxu0 %v5056
      %v5468 = vpop.f32.mrb[0].mxu0
      %v5469 = vadd.f32 %v5324, %v5468
      %v5470 = vpop.f32.mrb[0].mxu0
      %5471 = vmatprep.mubr.f32.mxu0 %v5064
      %5472 = vmatmul.mubr.f32.gmra.mrb[0].mxu0 %v5063
      %v5473 = vpop.f32.mrb[0].mxu0
      %v5474 = vadd.f32 %v5329, %v5473
      %v5475 = vpop.f32.mrb[0].mxu0
      %5476 = vmatprep.mubr.f32.mxu0 %v5071
      %5477 = vmatmul.mubr.f32.gmra.mrb[0].mxu0 %v5070
      %v5478 = vpop.f32.mrb[0].mxu0
      %v5479 = vadd.f32 %v5334, %v5478
      %v5480 = vpop.f32.mrb[0].mxu0
      %5481 = vmatprep.mubr.f32.mxu0 %v5078
      %5482 = vmatmul.mubr.f32.gmra.mrb[0].mxu0 %v5077
      %v5483 = vpop.f32.mrb[0].mxu0
      %v5484 = vadd.f32 %v5339, %v5483
      %v5485 = vpop.f32.mrb[0].mxu0
      %5486 = vmatprep.mubr.f32.mxu0 %v5085
      %5487 = vmatmul.mubr.f32.gmra.mrb[0].mxu0 %v5084
      %v5488 = vpop.f32.mrb[0].mxu0
      %v5489 = vadd.f32 %v5344, %v5488
      %v5490 = vpop.f32.mrb[0].mxu0
      %5491 = vdwg.mxu0
      %5492 = vmatprep.subr.mxu0 0.0
      %5493 = vmatpush1.msra.mxu0 %v5154
      %5494 = vmatprep.subr.mxu0 0.0
      %5495 = vmatpush1.msra.mxu0 %v5155
      %5496 = vmatprep.subr.mxu0 0.0
      %5497 = vmatpush1.msra.mxu0 %v5156
      %5498 = vmatprep.subr.mxu0 0.0
      %5499 = vmatpush1.msra.mxu0 %v5157
      %5500 = vmatprep.subr.mxu0 0.0
      %5501 = vmatpush1.msra.mxu0 %v5158
      %5502 = vmatprep.subr.mxu0 0.0
      %5503 = vmatpush1.msra.mxu0 %v5159
      %5504 = vmatprep.subr.mxu0 0.0
      %5505 = vmatpush1.msra.mxu0 %v5160
      %5506 = vmatprep.subr.mxu0 0.0
      %5507 = vmatpush1.msra.mxu0 %v5161
      %5508 = vmatprep.subr.mxu0 0.0
      %5509 = vmatpush1.msra.mxu0 %v5162
      %5510 = vmatprep.subr.mxu0 0.0
      %5511 = vmatpush1.msra.mxu0 %v5163
      %5512 = vmatprep.subr.mxu0 0.0
      %5513 = vmatpush1.msra.mxu0 %v5164
      %5514 = vmatprep.subr.mxu0 0.0
      %5515 = vmatpush1.msra.mxu0 %v5165
      %5516 = vmatprep.subr.mxu0 0.0
      %5517 = vmatpush1.msra.mxu0 %v5166
      %5518 = vmatprep.subr.mxu0 0.0
      %5519 = vmatpush1.msra.mxu0 %v5167
      %5520 = vmatprep.subr.mxu0 0.0
      %5521 = vmatpush1.msra.mxu0 %v5168
      %5522 = vmatprep.subr.mxu0 0.0
      %5523 = vmatpush1.msra.mxu0 %v5169
      %5524 = vmatprep.subr.mxu0 0.0
      %5525 = vmatpush1.msra.mxu0 %v5170
      %5526 = vmatprep.subr.mxu0 0.0
      %5527 = vmatpush1.msra.mxu0 %v5171
      %5528 = vmatprep.subr.mxu0 0.0
      %5529 = vmatpush1.msra.mxu0 %v5172
      %5530 = vmatprep.subr.mxu0 0.0
      %5531 = vmatpush1.msra.mxu0 %v5173
      %5532 = vmatprep.subr.mxu0 0.0
      %5533 = vmatpush1.msra.mxu0 %v5174
      %5534 = vmatprep.subr.mxu0 0.0
      %5535 = vmatpush1.msra.mxu0 %v5175
      %5536 = vmatprep.subr.mxu0 0.0
      %5537 = vmatpush1.msra.mxu0 %v5176
      %5538 = vmatprep.subr.mxu0 0.0
      %5539 = vmatpush1.msra.mxu0 %v5177
      %5540 = vmatprep.subr.mxu0 0.0
      %5541 = vmatpush1.msra.mxu0 %v5178
      %5542 = vmatprep.subr.mxu0 0.0
      %5543 = vmatpush1.msra.mxu0 %v5179
      %5544 = vmatprep.subr.mxu0 0.0
      %5545 = vmatpush1.msra.mxu0 %v5180
      %5546 = vmatprep.subr.mxu0 0.0
      %5547 = vmatpush1.msra.mxu0 %v5181
      %5548 = vmatprep.subr.mxu0 0.0
      %5549 = vmatpush1.msra.mxu0 %v5182
      %5550 = vmatprep.subr.mxu0 0.0
      %5551 = vmatpush1.msra.mxu0 %v5183
      %5552 = vmatprep.subr.mxu0 0.0
      %5553 = vmatpush1.msra.mxu0 %v5184
      %5554 = vmatprep.subr.mxu0 0.0
      %5555 = vmatpush1.msra.mxu0 %v5185
      %5556 = vmatprep.mubr.f32.mxu0 %v4982
      %5557 = vmatmul.mubr.f32.gmra.mrb[0].mxu0 %v4981
      %v5558 = vpop.f32.mrb[0].mxu0
      %v5559 = vadd.f32 %v5414, %v5558
      %v5560 = vpop.f32.mrb[0].mxu0
      %5561 = vmatprep.mubr.f32.mxu0 %v4989
      %5562 = vmatmul.mubr.f32.gmra.mrb[0].mxu0 %v4988
      %v5563 = vpop.f32.mrb[0].mxu0
      %v5564 = vadd.f32 %v5419, %v5563
      %v5565 = vpop.f32.mrb[0].mxu0
      %5566 = vmatprep.mubr.f32.mxu0 %v4996
      %5567 = vmatmul.mubr.f32.gmra.mrb[0].mxu0 %v4995
      %v5568 = vpop.f32.mrb[0].mxu0
      %v5569 = vadd.f32 %v5424, %v5568
      %v5570 = vpop.f32.mrb[0].mxu0
      %5571 = vmatprep.mubr.f32.mxu0 %v5003
      %5572 = vmatmul.mubr.f32.gmra.mrb[0].mxu0 %v5002
      %v5573 = vpop.f32.mrb[0].mxu0
      %v5574 = vadd.f32 %v5429, %v5573
      %v5575 = vpop.f32.mrb[0].mxu0
      %5576 = vmatprep.mubr.f32.mxu0 %v5010
      %5577 = vmatmul.mubr.f32.gmra.mrb[0].mxu0 %v5009
      %v5578 = vpop.f32.mrb[0].mxu0
      %v5579 = vadd.f32 %v5434, %v5578
      %v5580 = vpop.f32.mrb[0].mxu0
      %5581 = vmatprep.mubr.f32.mxu0 %v5017
      %5582 = vmatmul.mubr.f32.gmra.mrb[0].mxu0 %v5016
      %v5583 = vpop.f32.mrb[0].mxu0
      %v5584 = vadd.f32 %v5439, %v5583
      %v5585 = vpop.f32.mrb[0].mxu0
      %5586 = vmatprep.mubr.f32.mxu0 %v5024
      %5587 = vmatmul.mubr.f32.gmra.mrb[0].mxu0 %v5023
      %v5588 = vpop.f32.mrb[0].mxu0
      %v5589 = vadd.f32 %v5444, %v5588
      %v5590 = vpop.f32.mrb[0].mxu0
      %5591 = vmatprep.mubr.f32.mxu0 %v5031
      %5592 = vmatmul.mubr.f32.gmra.mrb[0].mxu0 %v5030
      %v5593 = vpop.f32.mrb[0].mxu0
      %v5594 = vadd.f32 %v5449, %v5593
      %v5595 = vpop.f32.mrb[0].mxu0
      %5596 = vmatprep.mubr.f32.mxu0 %v5038
      %5597 = vmatmul.mubr.f32.gmra.mrb[0].mxu0 %v5037
      %v5598 = vpop.f32.mrb[0].mxu0
      %v5599 = vadd.f32 %v5454, %v5598
      %v5600 = vpop.f32.mrb[0].mxu0
      %5601 = vmatprep.mubr.f32.mxu0 %v5045
      %5602 = vmatmul.mubr.f32.gmra.mrb[0].mxu0 %v5044
      %v5603 = vpop.f32.mrb[0].mxu0
      %v5604 = vadd.f32 %v5459, %v5603
      %v5605 = vpop.f32.mrb[0].mxu0
      %5606 = vmatprep.mubr.f32.mxu0 %v5052
      %5607 = vmatmul.mubr.f32.gmra.mrb[0].mxu0 %v5051
      %v5608 = vpop.f32.mrb[0].mxu0
      %v5609 = vadd.f32 %v5464, %v5608
      %v5610 = vpop.f32.mrb[0].mxu0
      %5611 = vmatprep.mubr.f32.mxu0 %v5059
      %5612 = vmatmul.mubr.f32.gmra.mrb[0].mxu0 %v5058
      %v5613 = vpop.f32.mrb[0].mxu0
      %v5614 = vadd.f32 %v5469, %v5613
      %v5615 = vpop.f32.mrb[0].mxu0
      %5616 = vmatprep.mubr.f32.mxu0 %v5066
      %5617 = vmatmul.mubr.f32.gmra.mrb[0].mxu0 %v5065
      %v5618 = vpop.f32.mrb[0].mxu0
      %v5619 = vadd.f32 %v5474, %v5618
      %v5620 = vpop.f32.mrb[0].mxu0
      %5621 = vmatprep.mubr.f32.mxu0 %v5073
      %5622 = vmatmul.mubr.f32.gmra.mrb[0].mxu0 %v5072
      %v5623 = vpop.f32.mrb[0].mxu0
      %v5624 = vadd.f32 %v5479, %v5623
      %v5625 = vpop.f32.mrb[0].mxu0
      %5626 = vmatprep.mubr.f32.mxu0 %v5080
      %5627 = vmatmul.mubr.f32.gmra.mrb[0].mxu0 %v5079
      %v5628 = vpop.f32.mrb[0].mxu0
      %v5629 = vadd.f32 %v5484, %v5628
      %v5630 = vpop.f32.mrb[0].mxu0
      %5631 = vmatprep.mubr.f32.mxu0 %v5087
      %5632 = vmatmul.mubr.f32.gmra.mrb[0].mxu0 %v5086
      %v5633 = vpop.f32.mrb[0].mxu0
      %v5634 = vadd.f32 %v5489, %v5633
      %v5635 = vpop.f32.mrb[0].mxu0
      %5636 = vdwg.mxu0
      %5637 = vmatprep.subr.mxu0 0.0
      %5638 = vmatpush1.msra.mxu0 %v5186
      %5639 = vmatprep.subr.mxu0 0.0
      %5640 = vmatpush1.msra.mxu0 %v5187
      %5641 = vmatprep.subr.mxu0 0.0
      %5642 = vmatpush1.msra.mxu0 %v5188
      %5643 = vmatprep.subr.mxu0 0.0
      %5644 = vmatpush1.msra.mxu0 %v5189
      %5645 = vmatprep.subr.mxu0 0.0
      %5646 = vmatpush1.msra.mxu0 %v5190
      %5647 = vmatprep.subr.mxu0 0.0
      %5648 = vmatpush1.msra.mxu0 %v5191
      %5649 = vmatprep.subr.mxu0 0.0
      %5650 = vmatpush1.msra.mxu0 %v5192
      %5651 = vmatprep.subr.mxu0 0.0
      %5652 = vmatpush1.msra.mxu0 %v5193
      %5653 = vmatprep.subr.mxu0 0.0
      %5654 = vmatpush1.msra.mxu0 %v5194
      %5655 = vmatprep.subr.mxu0 0.0
      %5656 = vmatpush1.msra.mxu0 %v5195
      %5657 = vmatprep.subr.mxu0 0.0
      %5658 = vmatpush1.msra.mxu0 %v5196
      %5659 = vmatprep.subr.mxu0 0.0
      %5660 = vmatpush1.msra.mxu0 %v5197
      %5661 = vmatprep.subr.mxu0 0.0
      %5662 = vmatpush1.msra.mxu0 %v5198
      %5663 = vmatprep.subr.mxu0 0.0
      %5664 = vmatpush1.msra.mxu0 %v5199
      %5665 = vmatprep.subr.mxu0 0.0
      %5666 = vmatpush1.msra.mxu0 %v5200
      %5667 = vmatprep.subr.mxu0 0.0
      %5668 = vmatpush1.msra.mxu0 %v5201
      %5669 = vmatprep.subr.mxu0 0.0
      %5670 = vmatpush1.msra.mxu0 0.0
      %5671 = vmatprep.subr.mxu0 0.0
      %5672 = vmatpush1.msra.mxu0 0.0
      %5673 = vmatprep.subr.mxu0 0.0
      %5674 = vmatpush1.msra.mxu0 0.0
      %5675 = vmatprep.subr.mxu0 0.0
      %5676 = vmatpush1.msra.mxu0 0.0
      %5677 = vmatprep.subr.mxu0 0.0
      %5678 = vmatpush1.msra.mxu0 0.0
      %5679 = vmatprep.subr.mxu0 0.0
      %5680 = vmatpush1.msra.mxu0 0.0
      %5681 = vmatprep.subr.mxu0 0.0
      %5682 = vmatpush1.msra.mxu0 0.0
      %5683 = vmatprep.subr.mxu0 0.0
      %5684 = vmatpush1.msra.mxu0 0.0
      %5685 = vmatprep.subr.mxu0 0.0
      %5686 = vmatpush1.msra.mxu0 0.0
      %5687 = vmatprep.subr.mxu0 0.0
      %5688 = vmatpush1.msra.mxu0 0.0
      %5689 = vmatprep.subr.mxu0 0.0
      %5690 = vmatpush1.msra.mxu0 0.0
      %5691 = vmatprep.subr.mxu0 0.0
      %5692 = vmatpush1.msra.mxu0 0.0
      %5693 = vmatprep.subr.mxu0 0.0
      %5694 = vmatpush1.msra.mxu0 0.0
      %5695 = vmatprep.subr.mxu0 0.0
      %5696 = vmatpush1.msra.mxu0 0.0
      %5697 = vmatprep.subr.mxu0 0.0
      %5698 = vmatpush1.msra.mxu0 0.0
      %5699 = vmatprep.subr.mxu0 0.0
      %5700 = vmatpush1.msra.mxu0 0.0
      %5701 = vmatprep.mubr.f32.mxu0 0.0
      %5702 = vmatmul.mubr.f32.gmra.mrb[0].mxu0 %v4983
      %v5703 = vpop.f32.mrb[0].mxu0
      %v5704 = vadd.f32 %v5559, %v5703
      %v5705 = vpop.f32.mrb[0].mxu0
      %5706 = vmatprep.mubr.f32.mxu0 0.0
      %5707 = vmatmul.mubr.f32.gmra.mrb[0].mxu0 %v4990
      %v5708 = vpop.f32.mrb[0].mxu0
      %v5709 = vadd.f32 %v5564, %v5708
      %v5710 = vpop.f32.mrb[0].mxu0
      %5711 = vmatprep.mubr.f32.mxu0 0.0
      %5712 = vmatmul.mubr.f32.gmra.mrb[0].mxu0 %v4997
      %v5713 = vpop.f32.mrb[0].mxu0
      %v5714 = vadd.f32 %v5569, %v5713
      %v5715 = vpop.f32.mrb[0].mxu0
      %5716 = vmatprep.mubr.f32.mxu0 0.0
      %5717 = vmatmul.mubr.f32.gmra.mrb[0].mxu0 %v5004
      %v5718 = vpop.f32.mrb[0].mxu0
      %v5719 = vadd.f32 %v5574, %v5718
      %v5720 = vpop.f32.mrb[0].mxu0
      %5721 = vmatprep.mubr.f32.mxu0 0.0
      %5722 = vmatmul.mubr.f32.gmra.mrb[0].mxu0 %v5011
      %v5723 = vpop.f32.mrb[0].mxu0
      %v5724 = vadd.f32 %v5579, %v5723
      %v5725 = vpop.f32.mrb[0].mxu0
      %5726 = vmatprep.mubr.f32.mxu0 0.0
      %5727 = vmatmul.mubr.f32.gmra.mrb[0].mxu0 %v5018
      %v5728 = vpop.f32.mrb[0].mxu0
      %v5729 = vadd.f32 %v5584, %v5728
      %v5730 = vpop.f32.mrb[0].mxu0
      %5731 = vmatprep.mubr.f32.mxu0 0.0
      %5732 = vmatmul.mubr.f32.gmra.mrb[0].mxu0 %v5025
      %v5733 = vpop.f32.mrb[0].mxu0
      %v5734 = vadd.f32 %v5589, %v5733
      %v5735 = vpop.f32.mrb[0].mxu0
      %5736 = vmatprep.mubr.f32.mxu0 0.0
      %5737 = vmatmul.mubr.f32.gmra.mrb[0].mxu0 %v5032
      %v5738 = vpop.f32.mrb[0].mxu0
      %v5739 = vadd.f32 %v5594, %v5738
      %v5740 = vpop.f32.mrb[0].mxu0
      %5741 = vmatprep.mubr.f32.mxu0 0.0
      %5742 = vmatmul.mubr.f32.gmra.mrb[0].mxu0 %v5039
      %v5743 = vpop.f32.mrb[0].mxu0
      %v5744 = vadd.f32 %v5599, %v5743
      %v5745 = vpop.f32.mrb[0].mxu0
      %5746 = vmatprep.mubr.f32.mxu0 0.0
      %5747 = vmatmul.mubr.f32.gmra.mrb[0].mxu0 %v5046
      %v5748 = vpop.f32.mrb[0].mxu0
      %v5749 = vadd.f32 %v5604, %v5748
      %v5750 = vpop.f32.mrb[0].mxu0
      %5751 = vmatprep.mubr.f32.mxu0 0.0
      %5752 = vmatmul.mubr.f32.gmra.mrb[0].mxu0 %v5053
      %v5753 = vpop.f32.mrb[0].mxu0
      %v5754 = vadd.f32 %v5609, %v5753
      %v5755 = vpop.f32.mrb[0].mxu0
      %5756 = vmatprep.mubr.f32.mxu0 0.0
      %5757 = vmatmul.mubr.f32.gmra.mrb[0].mxu0 %v5060
      %v5758 = vpop.f32.mrb[0].mxu0
      %v5759 = vadd.f32 %v5614, %v5758
      %v5760 = vpop.f32.mrb[0].mxu0
      %5761 = vmatprep.mubr.f32.mxu0 0.0
      %5762 = vmatmul.mubr.f32.gmra.mrb[0].mxu0 %v5067
      %v5763 = vpop.f32.mrb[0].mxu0
      %v5764 = vadd.f32 %v5619, %v5763
      %v5765 = vpop.f32.mrb[0].mxu0
      %5766 = vmatprep.mubr.f32.mxu0 0.0
      %5767 = vmatmul.mubr.f32.gmra.mrb[0].mxu0 %v5074
      %v5768 = vpop.f32.mrb[0].mxu0
      %v5769 = vadd.f32 %v5624, %v5768
      %v5770 = vpop.f32.mrb[0].mxu0
      %5771 = vmatprep.mubr.f32.mxu0 0.0
      %5772 = vmatmul.mubr.f32.gmra.mrb[0].mxu0 %v5081
      %v5773 = vpop.f32.mrb[0].mxu0
      %v5774 = vadd.f32 %v5629, %v5773
      %v5775 = vpop.f32.mrb[0].mxu0
      %5776 = vmatprep.mubr.f32.mxu0 0.0
      %5777 = vmatmul.mubr.f32.gmra.mrb[0].mxu0 %v5088
      %v5778 = vpop.f32.mrb[0].mxu0
      %v5779 = vadd.f32 %v5634, %v5778
      %v5780 = vpop.f32.mrb[0].mxu0
      %5781 = vdwg.mxu0
      %v5782 = vld [vmem:[#allocation5] sm:$0xff]
      %v5783 = vld [vmem:[#allocation5 + $0x8] sm:$0xff]
      %v5784 = vld [vmem:[#allocation5 + $0x10] sm:$0xff]
      %v5785 = vld [vmem:[#allocation5 + $0x18] sm:$0xff]
      %v5786 = vld [vmem:[#allocation5 + $0x20] sm:$0xff]
      %v5787 = vld [vmem:[#allocation5 + $0x28] sm:$0xff]
      %v5788 = vld [vmem:[#allocation5 + $0x30] sm:$0xff]
      %v5789 = vld [vmem:[#allocation5 + $0x38] sm:$0xff]
      %v5790 = vld [vmem:[#allocation5 + $0x40] sm:$0xff]
      %v5791 = vld [vmem:[#allocation5 + $0x48] sm:$0xff]
      %v5792 = vld [vmem:[#allocation5 + $0x50] sm:$0xff]
      %v5793 = vld [vmem:[#allocation5 + $0x58] sm:$0xff]
      %v5794 = vld [vmem:[#allocation5 + $0x60] sm:$0xff]
      %v5795 = vld [vmem:[#allocation5 + $0x68] sm:$0xff]
      %v5796 = vld [vmem:[#allocation5 + $0x70] sm:$0xff]
      %v5797 = vld [vmem:[#allocation5 + $0x78] sm:$0xff]
      %v5798 = vadd.f32 %v5782, %v5704
      %v5799 = vadd.f32 %v5783, %v5709
      %v5800 = vadd.f32 %v5784, %v5714
      %v5801 = vadd.f32 %v5785, %v5719
      %v5802 = vadd.f32 %v5786, %v5724
      %v5803 = vadd.f32 %v5787, %v5729
      %v5804 = vadd.f32 %v5788, %v5734
      %v5805 = vadd.f32 %v5789, %v5739
      %v5806 = vadd.f32 %v5790, %v5744
      %v5807 = vadd.f32 %v5791, %v5749
      %v5808 = vadd.f32 %v5792, %v5754
      %v5809 = vadd.f32 %v5793, %v5759
      %v5810 = vadd.f32 %v5794, %v5764
      %v5811 = vadd.f32 %v5795, %v5769
      %v5812 = vadd.f32 %v5796, %v5774
      %v5813 = vadd.f32 %v5797, %v5779
      %5814 = vst [vmem:[#allocation5] sm:$0xff] %v5798
      %5815 = vst [vmem:[#allocation5 + $0x8] sm:$0xff] %v5799
      %5816 = vst [vmem:[#allocation5 + $0x10] sm:$0xff] %v5800
      %5817 = vst [vmem:[#allocation5 + $0x18] sm:$0xff] %v5801
      %5818 = vst [vmem:[#allocation5 + $0x20] sm:$0xff] %v5802
      %5819 = vst [vmem:[#allocation5 + $0x28] sm:$0xff] %v5803
      %5820 = vst [vmem:[#allocation5 + $0x30] sm:$0xff] %v5804
      %5821 = vst [vmem:[#allocation5 + $0x38] sm:$0xff] %v5805
      %5822 = vst [vmem:[#allocation5 + $0x40] sm:$0xff] %v5806
      %5823 = vst [vmem:[#allocation5 + $0x48] sm:$0xff] %v5807
      %5824 = vst [vmem:[#allocation5 + $0x50] sm:$0xff] %v5808
      %5825 = vst [vmem:[#allocation5 + $0x58] sm:$0xff] %v5809
      %5826 = vst [vmem:[#allocation5 + $0x60] sm:$0xff] %v5810
      %5827 = vst [vmem:[#allocation5 + $0x68] sm:$0xff] %v5811
      %5828 = vst [vmem:[#allocation5 + $0x70] sm:$0xff] %v5812
      %5829 = vst [vmem:[#allocation5 + $0x78] sm:$0xff] %v5813
      %s5830 = scalar_lea.vmem [#allocation3], 448
      %v5831 = vld [vmem:[%s5830] sm:$0xff]
      %v5832 = vld [vmem:[%s5830 + $0x8] sm:$0xff]
      %v5833 = vld [vmem:[%s5830 + $0x10] sm:$0xff]
      %v5834 = vld [vmem:[%s5830 + $0x18] sm:$0xff]
      %v5835 = vld [vmem:[%s5830 + $0x20] sm:$0xff]
      %v5836 = vld [vmem:[%s5830 + $0x28] sm:$0xff]
      %v5837 = vld [vmem:[%s5830 + $0x30] sm:$0xff]
      %v5838 = vld [vmem:[%s5830 + $0x38] sm:$0xff]
      %v5839 = vld [vmem:[%s5830 + $0x40] sm:$0xff]
      %v5840 = vld [vmem:[%s5830 + $0x48] sm:$0xff]
      %v5841 = vld [vmem:[%s5830 + $0x50] sm:$0xff]
      %v5842 = vld [vmem:[%s5830 + $0x58] sm:$0xff]
      %v5843 = vld [vmem:[%s5830 + $0x60] sm:$0xff]
      %v5844 = vld [vmem:[%s5830 + $0x68] sm:$0xff]
      %v5845 = vld [vmem:[%s5830 + $0x70] sm:$0xff]
      %v5846 = vld [vmem:[%s5830 + $0x78] sm:$0xff]
      %v5847 = vld [vmem:[%s5830 + $0x80] sm:$0xff]
      %v5848 = vld [vmem:[%s5830 + $0x88] sm:$0xff]
      %v5849 = vld [vmem:[%s5830 + $0x90] sm:$0xff]
      %v5850 = vld [vmem:[%s5830 + $0x98] sm:$0xff]
      %v5851 = vld [vmem:[%s5830 + $0xa0] sm:$0xff]
      %v5852 = vld [vmem:[%s5830 + $0xa8] sm:$0xff]
      %v5853 = vld [vmem:[%s5830 + $0xb0] sm:$0xff]
      %v5854 = vld [vmem:[%s5830 + $0xb8] sm:$0xff]
      %v5855 = vld [vmem:[%s5830 + $0xc0] sm:$0xff]
      %v5856 = vld [vmem:[%s5830 + $0xc8] sm:$0xff]
      %v5857 = vld [vmem:[%s5830 + $0xd0] sm:$0xff]
      %v5858 = vld [vmem:[%s5830 + $0xd8] sm:$0xff]
      %v5859 = vld [vmem:[%s5830 + $0xe0] sm:$0xff]
      %v5860 = vld [vmem:[%s5830 + $0xe8] sm:$0xff]
      %v5861 = vld [vmem:[%s5830 + $0xf0] sm:$0xff]
      %v5862 = vld [vmem:[%s5830 + $0xf8] sm:$0xff]
      %v5863 = vld [vmem:[%s5830 + $0x100] sm:$0xff]
      %v5864 = vld [vmem:[%s5830 + $0x108] sm:$0xff]
      %v5865 = vld [vmem:[%s5830 + $0x110] sm:$0xff]
      %v5866 = vld [vmem:[%s5830 + $0x118] sm:$0xff]
      %v5867 = vld [vmem:[%s5830 + $0x120] sm:$0xff]
      %v5868 = vld [vmem:[%s5830 + $0x128] sm:$0xff]
      %v5869 = vld [vmem:[%s5830 + $0x130] sm:$0xff]
      %v5870 = vld [vmem:[%s5830 + $0x138] sm:$0xff]
      %v5871 = vld [vmem:[%s5830 + $0x140] sm:$0xff]
      %v5872 = vld [vmem:[%s5830 + $0x148] sm:$0xff]
      %v5873 = vld [vmem:[%s5830 + $0x150] sm:$0xff]
      %v5874 = vld [vmem:[%s5830 + $0x158] sm:$0xff]
      %v5875 = vld [vmem:[%s5830 + $0x160] sm:$0xff]
      %v5876 = vld [vmem:[%s5830 + $0x168] sm:$0xff]
      %v5877 = vld [vmem:[%s5830 + $0x170] sm:$0xff]
      %v5878 = vld [vmem:[%s5830 + $0x178] sm:$0xff]
      %v5879 = vld [vmem:[%s5830 + $0x180] sm:$0xff]
      %v5880 = vld [vmem:[%s5830 + $0x188] sm:$0xff]
      %v5881 = vld [vmem:[%s5830 + $0x190] sm:$0xff]
      %v5882 = vld [vmem:[%s5830 + $0x198] sm:$0xff]
      %v5883 = vld [vmem:[%s5830 + $0x1a0] sm:$0xff]
      %v5884 = vld [vmem:[%s5830 + $0x1a8] sm:$0xff]
      %v5885 = vld [vmem:[%s5830 + $0x1b0] sm:$0xff]
      %v5886 = vld [vmem:[%s5830 + $0x1b8] sm:$0xff]
      %v5887 = vld [vmem:[%s5830 + $0x1c0] sm:$0xff]
      %v5888 = vld [vmem:[%s5830 + $0x1c8] sm:$0xff]
      %v5889 = vld [vmem:[%s5830 + $0x1d0] sm:$0xff]
      %v5890 = vld [vmem:[%s5830 + $0x1d8] sm:$0xff]
      %v5891 = vld [vmem:[%s5830 + $0x1e0] sm:$0xff]
      %v5892 = vld [vmem:[%s5830 + $0x1e8] sm:$0xff]
      %v5893 = vld [vmem:[%s5830 + $0x1f0] sm:$0xff]
      %v5894 = vld [vmem:[%s5830 + $0x1f8] sm:$0xff]
      %v5895 = vld [vmem:[%s5830 + $0x200] sm:$0xff]
      %v5896 = vld [vmem:[%s5830 + $0x208] sm:$0xff]
      %v5897 = vld [vmem:[%s5830 + $0x210] sm:$0xff]
      %v5898 = vld [vmem:[%s5830 + $0x218] sm:$0xff]
      %v5899 = vld [vmem:[%s5830 + $0x220] sm:$0xff]
      %v5900 = vld [vmem:[%s5830 + $0x228] sm:$0xff]
      %v5901 = vld [vmem:[%s5830 + $0x230] sm:$0xff]
      %v5902 = vld [vmem:[%s5830 + $0x238] sm:$0xff]
      %v5903 = vld [vmem:[%s5830 + $0x240] sm:$0xff]
      %v5904 = vld [vmem:[%s5830 + $0x248] sm:$0xff]
      %v5905 = vld [vmem:[%s5830 + $0x250] sm:$0xff]
      %v5906 = vld [vmem:[%s5830 + $0x258] sm:$0xff]
      %v5907 = vld [vmem:[%s5830 + $0x260] sm:$0xff]
      %v5908 = vld [vmem:[%s5830 + $0x268] sm:$0xff]
      %v5909 = vld [vmem:[%s5830 + $0x270] sm:$0xff]
      %v5910 = vld [vmem:[%s5830 + $0x278] sm:$0xff]
      %v5911 = vld [vmem:[%s5830 + $0x280] sm:$0xff]
      %v5912 = vld [vmem:[%s5830 + $0x288] sm:$0xff]
      %v5913 = vld [vmem:[%s5830 + $0x290] sm:$0xff]
      %v5914 = vld [vmem:[%s5830 + $0x298] sm:$0xff]
      %v5915 = vld [vmem:[%s5830 + $0x2a0] sm:$0xff]
      %v5916 = vld [vmem:[%s5830 + $0x2a8] sm:$0xff]
      %v5917 = vld [vmem:[%s5830 + $0x2b0] sm:$0xff]
      %v5918 = vld [vmem:[%s5830 + $0x2b8] sm:$0xff]
      %v5919 = vld [vmem:[%s5830 + $0x2c0] sm:$0xff]
      %v5920 = vld [vmem:[%s5830 + $0x2c8] sm:$0xff]
      %v5921 = vld [vmem:[%s5830 + $0x2d0] sm:$0xff]
      %v5922 = vld [vmem:[%s5830 + $0x2d8] sm:$0xff]
      %v5923 = vld [vmem:[%s5830 + $0x2e0] sm:$0xff]
      %v5924 = vld [vmem:[%s5830 + $0x2e8] sm:$0xff]
      %v5925 = vld [vmem:[%s5830 + $0x2f0] sm:$0xff]
      %v5926 = vld [vmem:[%s5830 + $0x2f8] sm:$0xff]
      %v5927 = vld [vmem:[%s5830 + $0x300] sm:$0xff]
      %v5928 = vld [vmem:[%s5830 + $0x308] sm:$0xff]
      %v5929 = vld [vmem:[%s5830 + $0x310] sm:$0xff]
      %v5930 = vld [vmem:[%s5830 + $0x318] sm:$0xff]
      %v5931 = vld [vmem:[%s5830 + $0x320] sm:$0xff]
      %v5932 = vld [vmem:[%s5830 + $0x328] sm:$0xff]
      %v5933 = vld [vmem:[%s5830 + $0x330] sm:$0xff]
      %v5934 = vld [vmem:[%s5830 + $0x338] sm:$0xff]
      %v5935 = vld [vmem:[%s5830 + $0x340] sm:$0xff]
      %v5936 = vld [vmem:[%s5830 + $0x348] sm:$0xff]
      %v5937 = vld [vmem:[%s5830 + $0x350] sm:$0xff]
      %v5938 = vld [vmem:[%s5830 + $0x358] sm:$0xff]
      %v5939 = vld [vmem:[%s5830 + $0x360] sm:$0xff]
      %v5940 = vld [vmem:[%s5830 + $0x368] sm:$0xff]
      %v5941 = vld [vmem:[%s5830 + $0x370] sm:$0xff]
      %v5942 = vld [vmem:[%s5830 + $0x378] sm:$0xff]
      %s5943 = scalar_lea.vmem [#allocation4], 3584
      %v5944 = vld [vmem:[%s5943] sm:$0xff]
      %v5945 = vld [vmem:[%s5943 + $0x8] sm:$0xff]
      %v5946 = vld [vmem:[%s5943 + $0x10] sm:$0xff]
      %v5947 = vld [vmem:[%s5943 + $0x18] sm:$0xff]
      %v5948 = vld [vmem:[%s5943 + $0x20] sm:$0xff]
      %v5949 = vld [vmem:[%s5943 + $0x28] sm:$0xff]
      %v5950 = vld [vmem:[%s5943 + $0x30] sm:$0xff]
      %v5951 = vld [vmem:[%s5943 + $0x38] sm:$0xff]
      %v5952 = vld [vmem:[%s5943 + $0x40] sm:$0xff]
      %v5953 = vld [vmem:[%s5943 + $0x48] sm:$0xff]
      %v5954 = vld [vmem:[%s5943 + $0x50] sm:$0xff]
      %v5955 = vld [vmem:[%s5943 + $0x58] sm:$0xff]
      %v5956 = vld [vmem:[%s5943 + $0x60] sm:$0xff]
      %v5957 = vld [vmem:[%s5943 + $0x68] sm:$0xff]
      %v5958 = vld [vmem:[%s5943 + $0x70] sm:$0xff]
      %v5959 = vld [vmem:[%s5943 + $0x78] sm:$0xff]
      %v5960 = vld [vmem:[%s5943 + $0x80] sm:$0xff]
      %v5961 = vld [vmem:[%s5943 + $0x88] sm:$0xff]
      %v5962 = vld [vmem:[%s5943 + $0x90] sm:$0xff]
      %v5963 = vld [vmem:[%s5943 + $0x98] sm:$0xff]
      %v5964 = vld [vmem:[%s5943 + $0xa0] sm:$0xff]
      %v5965 = vld [vmem:[%s5943 + $0xa8] sm:$0xff]
      %v5966 = vld [vmem:[%s5943 + $0xb0] sm:$0xff]
      %v5967 = vld [vmem:[%s5943 + $0xb8] sm:$0xff]
      %v5968 = vld [vmem:[%s5943 + $0xc0] sm:$0xff]
      %v5969 = vld [vmem:[%s5943 + $0xc8] sm:$0xff]
      %v5970 = vld [vmem:[%s5943 + $0xd0] sm:$0xff]
      %v5971 = vld [vmem:[%s5943 + $0xd8] sm:$0xff]
      %v5972 = vld [vmem:[%s5943 + $0xe0] sm:$0xff]
      %v5973 = vld [vmem:[%s5943 + $0xe8] sm:$0xff]
      %v5974 = vld [vmem:[%s5943 + $0xf0] sm:$0xff]
      %v5975 = vld [vmem:[%s5943 + $0xf8] sm:$0xff]
      %v5976 = vld [vmem:[%s5943 + $0x100] sm:$0xff]
      %v5977 = vld [vmem:[%s5943 + $0x108] sm:$0xff]
      %v5978 = vld [vmem:[%s5943 + $0x110] sm:$0xff]
      %v5979 = vld [vmem:[%s5943 + $0x118] sm:$0xff]
      %v5980 = vld [vmem:[%s5943 + $0x120] sm:$0xff]
      %v5981 = vld [vmem:[%s5943 + $0x128] sm:$0xff]
      %v5982 = vld [vmem:[%s5943 + $0x130] sm:$0xff]
      %v5983 = vld [vmem:[%s5943 + $0x138] sm:$0xff]
      %v5984 = vld [vmem:[%s5943 + $0x140] sm:$0xff]
      %v5985 = vld [vmem:[%s5943 + $0x148] sm:$0xff]
      %v5986 = vld [vmem:[%s5943 + $0x150] sm:$0xff]
      %v5987 = vld [vmem:[%s5943 + $0x158] sm:$0xff]
      %v5988 = vld [vmem:[%s5943 + $0x160] sm:$0xff]
      %v5989 = vld [vmem:[%s5943 + $0x168] sm:$0xff]
      %v5990 = vld [vmem:[%s5943 + $0x170] sm:$0xff]
      %v5991 = vld [vmem:[%s5943 + $0x178] sm:$0xff]
      %v5992 = vld [vmem:[%s5943 + $0x180] sm:$0xff]
      %v5993 = vld [vmem:[%s5943 + $0x188] sm:$0xff]
      %v5994 = vld [vmem:[%s5943 + $0x190] sm:$0xff]
      %v5995 = vld [vmem:[%s5943 + $0x198] sm:$0xff]
      %v5996 = vld [vmem:[%s5943 + $0x1a0] sm:$0xff]
      %v5997 = vld [vmem:[%s5943 + $0x1a8] sm:$0xff]
      %v5998 = vld [vmem:[%s5943 + $0x1b0] sm:$0xff]
      %v5999 = vld [vmem:[%s5943 + $0x1b8] sm:$0xff]
      %v6000 = vld [vmem:[%s5943 + $0x1c0] sm:$0xff]
      %v6001 = vld [vmem:[%s5943 + $0x1c8] sm:$0xff]
      %v6002 = vld [vmem:[%s5943 + $0x1d0] sm:$0xff]
      %v6003 = vld [vmem:[%s5943 + $0x1d8] sm:$0xff]
      %v6004 = vld [vmem:[%s5943 + $0x1e0] sm:$0xff]
      %v6005 = vld [vmem:[%s5943 + $0x1e8] sm:$0xff]
      %v6006 = vld [vmem:[%s5943 + $0x1f0] sm:$0xff]
      %v6007 = vld [vmem:[%s5943 + $0x1f8] sm:$0xff]
      %v6008 = vld [vmem:[%s5943 + $0x200] sm:$0xff]
      %v6009 = vld [vmem:[%s5943 + $0x208] sm:$0xff]
      %v6010 = vld [vmem:[%s5943 + $0x210] sm:$0xff]
      %v6011 = vld [vmem:[%s5943 + $0x218] sm:$0xff]
      %v6012 = vld [vmem:[%s5943 + $0x220] sm:$0xff]
      %v6013 = vld [vmem:[%s5943 + $0x228] sm:$0xff]
      %v6014 = vld [vmem:[%s5943 + $0x230] sm:$0xff]
      %v6015 = vld [vmem:[%s5943 + $0x238] sm:$0xff]
      %v6016 = vld [vmem:[%s5943 + $0x240] sm:$0xff]
      %v6017 = vld [vmem:[%s5943 + $0x248] sm:$0xff]
      %v6018 = vld [vmem:[%s5943 + $0x250] sm:$0xff]
      %v6019 = vld [vmem:[%s5943 + $0x258] sm:$0xff]
      %v6020 = vld [vmem:[%s5943 + $0x260] sm:$0xff]
      %v6021 = vld [vmem:[%s5943 + $0x268] sm:$0xff]
      %v6022 = vld [vmem:[%s5943 + $0x270] sm:$0xff]
      %v6023 = vld [vmem:[%s5943 + $0x278] sm:$0xff]
      %v6024 = vld [vmem:[%s5943 + $0x280] sm:$0xff]
      %v6025 = vld [vmem:[%s5943 + $0x288] sm:$0xff]
      %v6026 = vld [vmem:[%s5943 + $0x290] sm:$0xff]
      %v6027 = vld [vmem:[%s5943 + $0x298] sm:$0xff]
      %v6028 = vld [vmem:[%s5943 + $0x2a0] sm:$0xff]
      %v6029 = vld [vmem:[%s5943 + $0x2a8] sm:$0xff]
      %v6030 = vld [vmem:[%s5943 + $0x2b0] sm:$0xff]
      %v6031 = vld [vmem:[%s5943 + $0x2b8] sm:$0xff]
      %v6032 = vld [vmem:[%s5943 + $0x2c0] sm:$0xff]
      %v6033 = vld [vmem:[%s5943 + $0x2c8] sm:$0xff]
      %v6034 = vld [vmem:[%s5943 + $0x2d0] sm:$0xff]
      %v6035 = vld [vmem:[%s5943 + $0x2d8] sm:$0xff]
      %v6036 = vld [vmem:[%s5943 + $0x2e0] sm:$0xff]
      %v6037 = vld [vmem:[%s5943 + $0x2e8] sm:$0xff]
      %v6038 = vld [vmem:[%s5943 + $0x2f0] sm:$0xff]
      %v6039 = vld [vmem:[%s5943 + $0x2f8] sm:$0xff]
      %v6040 = vld [vmem:[%s5943 + $0x300] sm:$0xff]
      %v6041 = vld [vmem:[%s5943 + $0x308] sm:$0xff]
      %v6042 = vld [vmem:[%s5943 + $0x310] sm:$0xff]
      %v6043 = vld [vmem:[%s5943 + $0x318] sm:$0xff]
      %v6044 = vld [vmem:[%s5943 + $0x320] sm:$0xff]
      %v6045 = vld [vmem:[%s5943 + $0x328] sm:$0xff]
      %v6046 = vld [vmem:[%s5943 + $0x330] sm:$0xff]
      %v6047 = vld [vmem:[%s5943 + $0x338] sm:$0xff]
      %v6048 = vld [vmem:[%s5943 + $0x340] sm:$0xff]
      %v6049 = vld [vmem:[%s5943 + $0x348] sm:$0xff]
      %v6050 = vld [vmem:[%s5943 + $0x350] sm:$0xff]
      %v6051 = vld [vmem:[%s5943 + $0x358] sm:$0xff]
      %v6052 = vld [vmem:[%s5943 + $0x360] sm:$0xff]
      %v6053 = vld [vmem:[%s5943 + $0x368] sm:$0xff]
      %v6054 = vld [vmem:[%s5943 + $0x370] sm:$0xff]
      %v6055 = vld [vmem:[%s5943 + $0x378] sm:$0xff]
      %6056 = vmatprep.subr.mxu0 0.0
      %6057 = vmatpush1.msra.mxu0 %v5944
      %6058 = vmatprep.subr.mxu0 0.0
      %6059 = vmatpush1.msra.mxu0 %v5945
      %6060 = vmatprep.subr.mxu0 0.0
      %6061 = vmatpush1.msra.mxu0 %v5946
      %6062 = vmatprep.subr.mxu0 0.0
      %6063 = vmatpush1.msra.mxu0 %v5947
      %6064 = vmatprep.subr.mxu0 0.0
      %6065 = vmatpush1.msra.mxu0 %v5948
      %6066 = vmatprep.subr.mxu0 0.0
      %6067 = vmatpush1.msra.mxu0 %v5949
      %6068 = vmatprep.subr.mxu0 0.0
      %6069 = vmatpush1.msra.mxu0 %v5950
      %6070 = vmatprep.subr.mxu0 0.0
      %6071 = vmatpush1.msra.mxu0 %v5951
      %6072 = vmatprep.subr.mxu0 0.0
      %6073 = vmatpush1.msra.mxu0 %v5952
      %6074 = vmatprep.subr.mxu0 0.0
      %6075 = vmatpush1.msra.mxu0 %v5953
      %6076 = vmatprep.subr.mxu0 0.0
      %6077 = vmatpush1.msra.mxu0 %v5954
      %6078 = vmatprep.subr.mxu0 0.0
      %6079 = vmatpush1.msra.mxu0 %v5955
      %6080 = vmatprep.subr.mxu0 0.0
      %6081 = vmatpush1.msra.mxu0 %v5956
      %6082 = vmatprep.subr.mxu0 0.0
      %6083 = vmatpush1.msra.mxu0 %v5957
      %6084 = vmatprep.subr.mxu0 0.0
      %6085 = vmatpush1.msra.mxu0 %v5958
      %6086 = vmatprep.subr.mxu0 0.0
      %6087 = vmatpush1.msra.mxu0 %v5959
      %6088 = vmatprep.subr.mxu0 0.0
      %6089 = vmatpush1.msra.mxu0 %v5960
      %6090 = vmatprep.subr.mxu0 0.0
      %6091 = vmatpush1.msra.mxu0 %v5961
      %6092 = vmatprep.subr.mxu0 0.0
      %6093 = vmatpush1.msra.mxu0 %v5962
      %6094 = vmatprep.subr.mxu0 0.0
      %6095 = vmatpush1.msra.mxu0 %v5963
      %6096 = vmatprep.subr.mxu0 0.0
      %6097 = vmatpush1.msra.mxu0 %v5964
      %6098 = vmatprep.subr.mxu0 0.0
      %6099 = vmatpush1.msra.mxu0 %v5965
      %6100 = vmatprep.subr.mxu0 0.0
      %6101 = vmatpush1.msra.mxu0 %v5966
      %6102 = vmatprep.subr.mxu0 0.0
      %6103 = vmatpush1.msra.mxu0 %v5967
      %6104 = vmatprep.subr.mxu0 0.0
      %6105 = vmatpush1.msra.mxu0 %v5968
      %6106 = vmatprep.subr.mxu0 0.0
      %6107 = vmatpush1.msra.mxu0 %v5969
      %6108 = vmatprep.subr.mxu0 0.0
      %6109 = vmatpush1.msra.mxu0 %v5970
      %6110 = vmatprep.subr.mxu0 0.0
      %6111 = vmatpush1.msra.mxu0 %v5971
      %6112 = vmatprep.subr.mxu0 0.0
      %6113 = vmatpush1.msra.mxu0 %v5972
      %6114 = vmatprep.subr.mxu0 0.0
      %6115 = vmatpush1.msra.mxu0 %v5973
      %6116 = vmatprep.subr.mxu0 0.0
      %6117 = vmatpush1.msra.mxu0 %v5974
      %6118 = vmatprep.subr.mxu0 0.0
      %6119 = vmatpush1.msra.mxu0 %v5975
      %6120 = vmatprep.mubr.f32.mxu0 %v5832
      %6121 = vmatmul.mubr.f32.gmra.mrb[0].mxu0 %v5831
      %v6122 = vpop.f32.mrb[0].mxu0
      %v6123 = vadd.f32 0.0, %v6122
      %v6124 = vpop.f32.mrb[0].mxu0
      %6125 = vmatprep.mubr.f32.mxu0 %v5839
      %6126 = vmatmul.mubr.f32.gmra.mrb[0].mxu0 %v5838
      %v6127 = vpop.f32.mrb[0].mxu0
      %v6128 = vadd.f32 0.0, %v6127
      %v6129 = vpop.f32.mrb[0].mxu0
      %6130 = vmatprep.mubr.f32.mxu0 %v5846
      %6131 = vmatmul.mubr.f32.gmra.mrb[0].mxu0 %v5845
      %v6132 = vpop.f32.mrb[0].mxu0
      %v6133 = vadd.f32 0.0, %v6132
      %v6134 = vpop.f32.mrb[0].mxu0
      %6135 = vmatprep.mubr.f32.mxu0 %v5853
      %6136 = vmatmul.mubr.f32.gmra.mrb[0].mxu0 %v5852
      %v6137 = vpop.f32.mrb[0].mxu0
      %v6138 = vadd.f32 0.0, %v6137
      %v6139 = vpop.f32.mrb[0].mxu0
      %6140 = vmatprep.mubr.f32.mxu0 %v5860
      %6141 = vmatmul.mubr.f32.gmra.mrb[0].mxu0 %v5859
      %v6142 = vpop.f32.mrb[0].mxu0
      %v6143 = vadd.f32 0.0, %v6142
      %v6144 = vpop.f32.mrb[0].mxu0
      %6145 = vmatprep.mubr.f32.mxu0 %v5867
      %6146 = vmatmul.mubr.f32.gmra.mrb[0].mxu0 %v5866
      %v6147 = vpop.f32.mrb[0].mxu0
      %v6148 = vadd.f32 0.0, %v6147
      %v6149 = vpop.f32.mrb[0].mxu0
      %6150 = vmatprep.mubr.f32.mxu0 %v5874
      %6151 = vmatmul.mubr.f32.gmra.mrb[0].mxu0 %v5873
      %v6152 = vpop.f32.mrb[0].mxu0
      %v6153 = vadd.f32 0.0, %v6152
      %v6154 = vpop.f32.mrb[0].mxu0
      %6155 = vmatprep.mubr.f32.mxu0 %v5881
      %6156 = vmatmul.mubr.f32.gmra.mrb[0].mxu0 %v5880
      %v6157 = vpop.f32.mrb[0].mxu0
      %v6158 = vadd.f32 0.0, %v6157
      %v6159 = vpop.f32.mrb[0].mxu0
      %6160 = vmatprep.mubr.f32.mxu0 %v5888
      %6161 = vmatmul.mubr.f32.gmra.mrb[0].mxu0 %v5887
      %v6162 = vpop.f32.mrb[0].mxu0
      %v6163 = vadd.f32 0.0, %v6162
      %v6164 = vpop.f32.mrb[0].mxu0
      %6165 = vmatprep.mubr.f32.mxu0 %v5895
      %6166 = vmatmul.mubr.f32.gmra.mrb[0].mxu0 %v5894
      %v6167 = vpop.f32.mrb[0].mxu0
      %v6168 = vadd.f32 0.0, %v6167
      %v6169 = vpop.f32.mrb[0].mxu0
      %6170 = vmatprep.mubr.f32.mxu0 %v5902
      %6171 = vmatmul.mubr.f32.gmra.mrb[0].mxu0 %v5901
      %v6172 = vpop.f32.mrb[0].mxu0
      %v6173 = vadd.f32 0.0, %v6172
      %v6174 = vpop.f32.mrb[0].mxu0
      %6175 = vmatprep.mubr.f32.mxu0 %v5909
      %6176 = vmatmul.mubr.f32.gmra.mrb[0].mxu0 %v5908
      %v6177 = vpop.f32.mrb[0].mxu0
      %v6178 = vadd.f32 0.0, %v6177
      %v6179 = vpop.f32.mrb[0].mxu0
      %6180 = vmatprep.mubr.f32.mxu0 %v5916
      %6181 = vmatmul.mubr.f32.gmra.mrb[0].mxu0 %v5915
      %v6182 = vpop.f32.mrb[0].mxu0
      %v6183 = vadd.f32 0.0, %v6182
      %v6184 = vpop.f32.mrb[0].mxu0
      %6185 = vmatprep.mubr.f32.mxu0 %v5923
      %6186 = vmatmul.mubr.f32.gmra.mrb[0].mxu0 %v5922
      %v6187 = vpop.f32.mrb[0].mxu0
      %v6188 = vadd.f32 0.0, %v6187
      %v6189 = vpop.f32.mrb[0].mxu0
      %6190 = vmatprep.mubr.f32.mxu0 %v5930
      %6191 = vmatmul.mubr.f32.gmra.mrb[0].mxu0 %v5929
      %v6192 = vpop.f32.mrb[0].mxu0
      %v6193 = vadd.f32 0.0, %v6192
      %v6194 = vpop.f32.mrb[0].mxu0
      %6195 = vmatprep.mubr.f32.mxu0 %v5937
      %6196 = vmatmul.mubr.f32.gmra.mrb[0].mxu0 %v5936
      %v6197 = vpop.f32.mrb[0].mxu0
      %v6198 = vadd.f32 0.0, %v6197
      %v6199 = vpop.f32.mrb[0].mxu0
      %6200 = vdwg.mxu0
      %6201 = vmatprep.subr.mxu0 0.0
      %6202 = vmatpush1.msra.mxu0 %v5976
      %6203 = vmatprep.subr.mxu0 0.0
      %6204 = vmatpush1.msra.mxu0 %v5977
      %6205 = vmatprep.subr.mxu0 0.0
      %6206 = vmatpush1.msra.mxu0 %v5978
      %6207 = vmatprep.subr.mxu0 0.0
      %6208 = vmatpush1.msra.mxu0 %v5979
      %6209 = vmatprep.subr.mxu0 0.0
      %6210 = vmatpush1.msra.mxu0 %v5980
      %6211 = vmatprep.subr.mxu0 0.0
      %6212 = vmatpush1.msra.mxu0 %v5981
      %6213 = vmatprep.subr.mxu0 0.0
      %6214 = vmatpush1.msra.mxu0 %v5982
      %6215 = vmatprep.subr.mxu0 0.0
      %6216 = vmatpush1.msra.mxu0 %v5983
      %6217 = vmatprep.subr.mxu0 0.0
      %6218 = vmatpush1.msra.mxu0 %v5984
      %6219 = vmatprep.subr.mxu0 0.0
      %6220 = vmatpush1.msra.mxu0 %v5985
      %6221 = vmatprep.subr.mxu0 0.0
      %6222 = vmatpush1.msra.mxu0 %v5986
      %6223 = vmatprep.subr.mxu0 0.0
      %6224 = vmatpush1.msra.mxu0 %v5987
      %6225 = vmatprep.subr.mxu0 0.0
      %6226 = vmatpush1.msra.mxu0 %v5988
      %6227 = vmatprep.subr.mxu0 0.0
      %6228 = vmatpush1.msra.mxu0 %v5989
      %6229 = vmatprep.subr.mxu0 0.0
      %6230 = vmatpush1.msra.mxu0 %v5990
      %6231 = vmatprep.subr.mxu0 0.0
      %6232 = vmatpush1.msra.mxu0 %v5991
      %6233 = vmatprep.subr.mxu0 0.0
      %6234 = vmatpush1.msra.mxu0 %v5992
      %6235 = vmatprep.subr.mxu0 0.0
      %6236 = vmatpush1.msra.mxu0 %v5993
      %6237 = vmatprep.subr.mxu0 0.0
      %6238 = vmatpush1.msra.mxu0 %v5994
      %6239 = vmatprep.subr.mxu0 0.0
      %6240 = vmatpush1.msra.mxu0 %v5995
      %6241 = vmatprep.subr.mxu0 0.0
      %6242 = vmatpush1.msra.mxu0 %v5996
      %6243 = vmatprep.subr.mxu0 0.0
      %6244 = vmatpush1.msra.mxu0 %v5997
      %6245 = vmatprep.subr.mxu0 0.0
      %6246 = vmatpush1.msra.mxu0 %v5998
      %6247 = vmatprep.subr.mxu0 0.0
      %6248 = vmatpush1.msra.mxu0 %v5999
      %6249 = vmatprep.subr.mxu0 0.0
      %6250 = vmatpush1.msra.mxu0 %v6000
      %6251 = vmatprep.subr.mxu0 0.0
      %6252 = vmatpush1.msra.mxu0 %v6001
      %6253 = vmatprep.subr.mxu0 0.0
      %6254 = vmatpush1.msra.mxu0 %v6002
      %6255 = vmatprep.subr.mxu0 0.0
      %6256 = vmatpush1.msra.mxu0 %v6003
      %6257 = vmatprep.subr.mxu0 0.0
      %6258 = vmatpush1.msra.mxu0 %v6004
      %6259 = vmatprep.subr.mxu0 0.0
      %6260 = vmatpush1.msra.mxu0 %v6005
      %6261 = vmatprep.subr.mxu0 0.0
      %6262 = vmatpush1.msra.mxu0 %v6006
      %6263 = vmatprep.subr.mxu0 0.0
      %6264 = vmatpush1.msra.mxu0 %v6007
      %6265 = vmatprep.mubr.f32.mxu0 %v5834
      %6266 = vmatmul.mubr.f32.gmra.mrb[0].mxu0 %v5833
      %v6267 = vpop.f32.mrb[0].mxu0
      %v6268 = vadd.f32 %v6123, %v6267
      %v6269 = vpop.f32.mrb[0].mxu0
      %6270 = vmatprep.mubr.f32.mxu0 %v5841
      %6271 = vmatmul.mubr.f32.gmra.mrb[0].mxu0 %v5840
      %v6272 = vpop.f32.mrb[0].mxu0
      %v6273 = vadd.f32 %v6128, %v6272
      %v6274 = vpop.f32.mrb[0].mxu0
      %6275 = vmatprep.mubr.f32.mxu0 %v5848
      %6276 = vmatmul.mubr.f32.gmra.mrb[0].mxu0 %v5847
      %v6277 = vpop.f32.mrb[0].mxu0
      %v6278 = vadd.f32 %v6133, %v6277
      %v6279 = vpop.f32.mrb[0].mxu0
      %6280 = vmatprep.mubr.f32.mxu0 %v5855
      %6281 = vmatmul.mubr.f32.gmra.mrb[0].mxu0 %v5854
      %v6282 = vpop.f32.mrb[0].mxu0
      %v6283 = vadd.f32 %v6138, %v6282
      %v6284 = vpop.f32.mrb[0].mxu0
      %6285 = vmatprep.mubr.f32.mxu0 %v5862
      %6286 = vmatmul.mubr.f32.gmra.mrb[0].mxu0 %v5861
      %v6287 = vpop.f32.mrb[0].mxu0
      %v6288 = vadd.f32 %v6143, %v6287
      %v6289 = vpop.f32.mrb[0].mxu0
      %6290 = vmatprep.mubr.f32.mxu0 %v5869
      %6291 = vmatmul.mubr.f32.gmra.mrb[0].mxu0 %v5868
      %v6292 = vpop.f32.mrb[0].mxu0
      %v6293 = vadd.f32 %v6148, %v6292
      %v6294 = vpop.f32.mrb[0].mxu0
      %6295 = vmatprep.mubr.f32.mxu0 %v5876
      %6296 = vmatmul.mubr.f32.gmra.mrb[0].mxu0 %v5875
      %v6297 = vpop.f32.mrb[0].mxu0
      %v6298 = vadd.f32 %v6153, %v6297
      %v6299 = vpop.f32.mrb[0].mxu0
      %6300 = vmatprep.mubr.f32.mxu0 %v5883
      %6301 = vmatmul.mubr.f32.gmra.mrb[0].mxu0 %v5882
      %v6302 = vpop.f32.mrb[0].mxu0
      %v6303 = vadd.f32 %v6158, %v6302
      %v6304 = vpop.f32.mrb[0].mxu0
      %6305 = vmatprep.mubr.f32.mxu0 %v5890
      %6306 = vmatmul.mubr.f32.gmra.mrb[0].mxu0 %v5889
      %v6307 = vpop.f32.mrb[0].mxu0
      %v6308 = vadd.f32 %v6163, %v6307
      %v6309 = vpop.f32.mrb[0].mxu0
      %6310 = vmatprep.mubr.f32.mxu0 %v5897
      %6311 = vmatmul.mubr.f32.gmra.mrb[0].mxu0 %v5896
      %v6312 = vpop.f32.mrb[0].mxu0
      %v6313 = vadd.f32 %v6168, %v6312
      %v6314 = vpop.f32.mrb[0].mxu0
      %6315 = vmatprep.mubr.f32.mxu0 %v5904
      %6316 = vmatmul.mubr.f32.gmra.mrb[0].mxu0 %v5903
      %v6317 = vpop.f32.mrb[0].mxu0
      %v6318 = vadd.f32 %v6173, %v6317
      %v6319 = vpop.f32.mrb[0].mxu0
      %6320 = vmatprep.mubr.f32.mxu0 %v5911
      %6321 = vmatmul.mubr.f32.gmra.mrb[0].mxu0 %v5910
      %v6322 = vpop.f32.mrb[0].mxu0
      %v6323 = vadd.f32 %v6178, %v6322
      %v6324 = vpop.f32.mrb[0].mxu0
      %6325 = vmatprep.mubr.f32.mxu0 %v5918
      %6326 = vmatmul.mubr.f32.gmra.mrb[0].mxu0 %v5917
      %v6327 = vpop.f32.mrb[0].mxu0
      %v6328 = vadd.f32 %v6183, %v6327
      %v6329 = vpop.f32.mrb[0].mxu0
      %6330 = vmatprep.mubr.f32.mxu0 %v5925
      %6331 = vmatmul.mubr.f32.gmra.mrb[0].mxu0 %v5924
      %v6332 = vpop.f32.mrb[0].mxu0
      %v6333 = vadd.f32 %v6188, %v6332
      %v6334 = vpop.f32.mrb[0].mxu0
      %6335 = vmatprep.mubr.f32.mxu0 %v5932
      %6336 = vmatmul.mubr.f32.gmra.mrb[0].mxu0 %v5931
      %v6337 = vpop.f32.mrb[0].mxu0
      %v6338 = vadd.f32 %v6193, %v6337
      %v6339 = vpop.f32.mrb[0].mxu0
      %6340 = vmatprep.mubr.f32.mxu0 %v5939
      %6341 = vmatmul.mubr.f32.gmra.mrb[0].mxu0 %v5938
      %v6342 = vpop.f32.mrb[0].mxu0
      %v6343 = vadd.f32 %v6198, %v6342
      %v6344 = vpop.f32.mrb[0].mxu0
      %6345 = vdwg.mxu0
      %6346 = vmatprep.subr.mxu0 0.0
      %6347 = vmatpush1.msra.mxu0 %v6008
      %6348 = vmatprep.subr.mxu0 0.0
      %6349 = vmatpush1.msra.mxu0 %v6009
      %6350 = vmatprep.subr.mxu0 0.0
      %6351 = vmatpush1.msra.mxu0 %v6010
      %6352 = vmatprep.subr.mxu0 0.0
      %6353 = vmatpush1.msra.mxu0 %v6011
      %6354 = vmatprep.subr.mxu0 0.0
      %6355 = vmatpush1.msra.mxu0 %v6012
      %6356 = vmatprep.subr.mxu0 0.0
      %6357 = vmatpush1.msra.mxu0 %v6013
      %6358 = vmatprep.subr.mxu0 0.0
      %6359 = vmatpush1.msra.mxu0 %v6014
      %6360 = vmatprep.subr.mxu0 0.0
      %6361 = vmatpush1.msra.mxu0 %v6015
      %6362 = vmatprep.subr.mxu0 0.0
      %6363 = vmatpush1.msra.mxu0 %v6016
      %6364 = vmatprep.subr.mxu0 0.0
      %6365 = vmatpush1.msra.mxu0 %v6017
      %6366 = vmatprep.subr.mxu0 0.0
      %6367 = vmatpush1.msra.mxu0 %v6018
      %6368 = vmatprep.subr.mxu0 0.0
      %6369 = vmatpush1.msra.mxu0 %v6019
      %6370 = vmatprep.subr.mxu0 0.0
      %6371 = vmatpush1.msra.mxu0 %v6020
      %6372 = vmatprep.subr.mxu0 0.0
      %6373 = vmatpush1.msra.mxu0 %v6021
      %6374 = vmatprep.subr.mxu0 0.0
      %6375 = vmatpush1.msra.mxu0 %v6022
      %6376 = vmatprep.subr.mxu0 0.0
      %6377 = vmatpush1.msra.mxu0 %v6023
      %6378 = vmatprep.subr.mxu0 0.0
      %6379 = vmatpush1.msra.mxu0 %v6024
      %6380 = vmatprep.subr.mxu0 0.0
      %6381 = vmatpush1.msra.mxu0 %v6025
      %6382 = vmatprep.subr.mxu0 0.0
      %6383 = vmatpush1.msra.mxu0 %v6026
      %6384 = vmatprep.subr.mxu0 0.0
      %6385 = vmatpush1.msra.mxu0 %v6027
      %6386 = vmatprep.subr.mxu0 0.0
      %6387 = vmatpush1.msra.mxu0 %v6028
      %6388 = vmatprep.subr.mxu0 0.0
      %6389 = vmatpush1.msra.mxu0 %v6029
      %6390 = vmatprep.subr.mxu0 0.0
      %6391 = vmatpush1.msra.mxu0 %v6030
      %6392 = vmatprep.subr.mxu0 0.0
      %6393 = vmatpush1.msra.mxu0 %v6031
      %6394 = vmatprep.subr.mxu0 0.0
      %6395 = vmatpush1.msra.mxu0 %v6032
      %6396 = vmatprep.subr.mxu0 0.0
      %6397 = vmatpush1.msra.mxu0 %v6033
      %6398 = vmatprep.subr.mxu0 0.0
      %6399 = vmatpush1.msra.mxu0 %v6034
      %6400 = vmatprep.subr.mxu0 0.0
      %6401 = vmatpush1.msra.mxu0 %v6035
      %6402 = vmatprep.subr.mxu0 0.0
      %6403 = vmatpush1.msra.mxu0 %v6036
      %6404 = vmatprep.subr.mxu0 0.0
      %6405 = vmatpush1.msra.mxu0 %v6037
      %6406 = vmatprep.subr.mxu0 0.0
      %6407 = vmatpush1.msra.mxu0 %v6038
      %6408 = vmatprep.subr.mxu0 0.0
      %6409 = vmatpush1.msra.mxu0 %v6039
      %6410 = vmatprep.mubr.f32.mxu0 %v5836
      %6411 = vmatmul.mubr.f32.gmra.mrb[0].mxu0 %v5835
      %v6412 = vpop.f32.mrb[0].mxu0
      %v6413 = vadd.f32 %v6268, %v6412
      %v6414 = vpop.f32.mrb[0].mxu0
      %6415 = vmatprep.mubr.f32.mxu0 %v5843
      %6416 = vmatmul.mubr.f32.gmra.mrb[0].mxu0 %v5842
      %v6417 = vpop.f32.mrb[0].mxu0
      %v6418 = vadd.f32 %v6273, %v6417
      %v6419 = vpop.f32.mrb[0].mxu0
      %6420 = vmatprep.mubr.f32.mxu0 %v5850
      %6421 = vmatmul.mubr.f32.gmra.mrb[0].mxu0 %v5849
      %v6422 = vpop.f32.mrb[0].mxu0
      %v6423 = vadd.f32 %v6278, %v6422
      %v6424 = vpop.f32.mrb[0].mxu0
      %6425 = vmatprep.mubr.f32.mxu0 %v5857
      %6426 = vmatmul.mubr.f32.gmra.mrb[0].mxu0 %v5856
      %v6427 = vpop.f32.mrb[0].mxu0
      %v6428 = vadd.f32 %v6283, %v6427
      %v6429 = vpop.f32.mrb[0].mxu0
      %6430 = vmatprep.mubr.f32.mxu0 %v5864
      %6431 = vmatmul.mubr.f32.gmra.mrb[0].mxu0 %v5863
      %v6432 = vpop.f32.mrb[0].mxu0
      %v6433 = vadd.f32 %v6288, %v6432
      %v6434 = vpop.f32.mrb[0].mxu0
      %6435 = vmatprep.mubr.f32.mxu0 %v5871
      %6436 = vmatmul.mubr.f32.gmra.mrb[0].mxu0 %v5870
      %v6437 = vpop.f32.mrb[0].mxu0
      %v6438 = vadd.f32 %v6293, %v6437
      %v6439 = vpop.f32.mrb[0].mxu0
      %6440 = vmatprep.mubr.f32.mxu0 %v5878
      %6441 = vmatmul.mubr.f32.gmra.mrb[0].mxu0 %v5877
      %v6442 = vpop.f32.mrb[0].mxu0
      %v6443 = vadd.f32 %v6298, %v6442
      %v6444 = vpop.f32.mrb[0].mxu0
      %6445 = vmatprep.mubr.f32.mxu0 %v5885
      %6446 = vmatmul.mubr.f32.gmra.mrb[0].mxu0 %v5884
      %v6447 = vpop.f32.mrb[0].mxu0
      %v6448 = vadd.f32 %v6303, %v6447
      %v6449 = vpop.f32.mrb[0].mxu0
      %6450 = vmatprep.mubr.f32.mxu0 %v5892
      %6451 = vmatmul.mubr.f32.gmra.mrb[0].mxu0 %v5891
      %v6452 = vpop.f32.mrb[0].mxu0
      %v6453 = vadd.f32 %v6308, %v6452
      %v6454 = vpop.f32.mrb[0].mxu0
      %6455 = vmatprep.mubr.f32.mxu0 %v5899
      %6456 = vmatmul.mubr.f32.gmra.mrb[0].mxu0 %v5898
      %v6457 = vpop.f32.mrb[0].mxu0
      %v6458 = vadd.f32 %v6313, %v6457
      %v6459 = vpop.f32.mrb[0].mxu0
      %6460 = vmatprep.mubr.f32.mxu0 %v5906
      %6461 = vmatmul.mubr.f32.gmra.mrb[0].mxu0 %v5905
      %v6462 = vpop.f32.mrb[0].mxu0
      %v6463 = vadd.f32 %v6318, %v6462
      %v6464 = vpop.f32.mrb[0].mxu0
      %6465 = vmatprep.mubr.f32.mxu0 %v5913
      %6466 = vmatmul.mubr.f32.gmra.mrb[0].mxu0 %v5912
      %v6467 = vpop.f32.mrb[0].mxu0
      %v6468 = vadd.f32 %v6323, %v6467
      %v6469 = vpop.f32.mrb[0].mxu0
      %6470 = vmatprep.mubr.f32.mxu0 %v5920
      %6471 = vmatmul.mubr.f32.gmra.mrb[0].mxu0 %v5919
      %v6472 = vpop.f32.mrb[0].mxu0
      %v6473 = vadd.f32 %v6328, %v6472
      %v6474 = vpop.f32.mrb[0].mxu0
      %6475 = vmatprep.mubr.f32.mxu0 %v5927
      %6476 = vmatmul.mubr.f32.gmra.mrb[0].mxu0 %v5926
      %v6477 = vpop.f32.mrb[0].mxu0
      %v6478 = vadd.f32 %v6333, %v6477
      %v6479 = vpop.f32.mrb[0].mxu0
      %6480 = vmatprep.mubr.f32.mxu0 %v5934
      %6481 = vmatmul.mubr.f32.gmra.mrb[0].mxu0 %v5933
      %v6482 = vpop.f32.mrb[0].mxu0
      %v6483 = vadd.f32 %v6338, %v6482
      %v6484 = vpop.f32.mrb[0].mxu0
      %6485 = vmatprep.mubr.f32.mxu0 %v5941
      %6486 = vmatmul.mubr.f32.gmra.mrb[0].mxu0 %v5940
      %v6487 = vpop.f32.mrb[0].mxu0
      %v6488 = vadd.f32 %v6343, %v6487
      %v6489 = vpop.f32.mrb[0].mxu0
      %6490 = vdwg.mxu0
      %6491 = vmatprep.subr.mxu0 0.0
      %6492 = vmatpush1.msra.mxu0 %v6040
      %6493 = vmatprep.subr.mxu0 0.0
      %6494 = vmatpush1.msra.mxu0 %v6041
      %6495 = vmatprep.subr.mxu0 0.0
      %6496 = vmatpush1.msra.mxu0 %v6042
      %6497 = vmatprep.subr.mxu0 0.0
      %6498 = vmatpush1.msra.mxu0 %v6043
      %6499 = vmatprep.subr.mxu0 0.0
      %6500 = vmatpush1.msra.mxu0 %v6044
      %6501 = vmatprep.subr.mxu0 0.0
      %6502 = vmatpush1.msra.mxu0 %v6045
      %6503 = vmatprep.subr.mxu0 0.0
      %6504 = vmatpush1.msra.mxu0 %v6046
      %6505 = vmatprep.subr.mxu0 0.0
      %6506 = vmatpush1.msra.mxu0 %v6047
      %6507 = vmatprep.subr.mxu0 0.0
      %6508 = vmatpush1.msra.mxu0 %v6048
      %6509 = vmatprep.subr.mxu0 0.0
      %6510 = vmatpush1.msra.mxu0 %v6049
      %6511 = vmatprep.subr.mxu0 0.0
      %6512 = vmatpush1.msra.mxu0 %v6050
      %6513 = vmatprep.subr.mxu0 0.0
      %6514 = vmatpush1.msra.mxu0 %v6051
      %6515 = vmatprep.subr.mxu0 0.0
      %6516 = vmatpush1.msra.mxu0 %v6052
      %6517 = vmatprep.subr.mxu0 0.0
      %6518 = vmatpush1.msra.mxu0 %v6053
      %6519 = vmatprep.subr.mxu0 0.0
      %6520 = vmatpush1.msra.mxu0 %v6054
      %6521 = vmatprep.subr.mxu0 0.0
      %6522 = vmatpush1.msra.mxu0 %v6055
      %6523 = vmatprep.subr.mxu0 0.0
      %6524 = vmatpush1.msra.mxu0 0.0
      %6525 = vmatprep.subr.mxu0 0.0
      %6526 = vmatpush1.msra.mxu0 0.0
      %6527 = vmatprep.subr.mxu0 0.0
      %6528 = vmatpush1.msra.mxu0 0.0
      %6529 = vmatprep.subr.mxu0 0.0
      %6530 = vmatpush1.msra.mxu0 0.0
      %6531 = vmatprep.subr.mxu0 0.0
      %6532 = vmatpush1.msra.mxu0 0.0
      %6533 = vmatprep.subr.mxu0 0.0
      %6534 = vmatpush1.msra.mxu0 0.0
      %6535 = vmatprep.subr.mxu0 0.0
      %6536 = vmatpush1.msra.mxu0 0.0
      %6537 = vmatprep.subr.mxu0 0.0
      %6538 = vmatpush1.msra.mxu0 0.0
      %6539 = vmatprep.subr.mxu0 0.0
      %6540 = vmatpush1.msra.mxu0 0.0
      %6541 = vmatprep.subr.mxu0 0.0
      %6542 = vmatpush1.msra.mxu0 0.0
      %6543 = vmatprep.subr.mxu0 0.0
      %6544 = vmatpush1.msra.mxu0 0.0
      %6545 = vmatprep.subr.mxu0 0.0
      %6546 = vmatpush1.msra.mxu0 0.0
      %6547 = vmatprep.subr.mxu0 0.0
      %6548 = vmatpush1.msra.mxu0 0.0
      %6549 = vmatprep.subr.mxu0 0.0
      %6550 = vmatpush1.msra.mxu0 0.0
      %6551 = vmatprep.subr.mxu0 0.0
      %6552 = vmatpush1.msra.mxu0 0.0
      %6553 = vmatprep.subr.mxu0 0.0
      %6554 = vmatpush1.msra.mxu0 0.0
      %6555 = vmatprep.mubr.f32.mxu0 0.0
      %6556 = vmatmul.mubr.f32.gmra.mrb[0].mxu0 %v5837
      %v6557 = vpop.f32.mrb[0].mxu0
      %v6558 = vadd.f32 %v6413, %v6557
      %v6559 = vpop.f32.mrb[0].mxu0
      %6560 = vmatprep.mubr.f32.mxu0 0.0
      %6561 = vmatmul.mubr.f32.gmra.mrb[0].mxu0 %v5844
      %v6562 = vpop.f32.mrb[0].mxu0
      %v6563 = vadd.f32 %v6418, %v6562
      %v6564 = vpop.f32.mrb[0].mxu0
      %6565 = vmatprep.mubr.f32.mxu0 0.0
      %6566 = vmatmul.mubr.f32.gmra.mrb[0].mxu0 %v5851
      %v6567 = vpop.f32.mrb[0].mxu0
      %v6568 = vadd.f32 %v6423, %v6567
      %v6569 = vpop.f32.mrb[0].mxu0
      %6570 = vmatprep.mubr.f32.mxu0 0.0
      %6571 = vmatmul.mubr.f32.gmra.mrb[0].mxu0 %v5858
      %v6572 = vpop.f32.mrb[0].mxu0
      %v6573 = vadd.f32 %v6428, %v6572
      %v6574 = vpop.f32.mrb[0].mxu0
      %6575 = vmatprep.mubr.f32.mxu0 0.0
      %6576 = vmatmul.mubr.f32.gmra.mrb[0].mxu0 %v5865
      %v6577 = vpop.f32.mrb[0].mxu0
      %v6578 = vadd.f32 %v6433, %v6577
      %v6579 = vpop.f32.mrb[0].mxu0
      %6580 = vmatprep.mubr.f32.mxu0 0.0
      %6581 = vmatmul.mubr.f32.gmra.mrb[0].mxu0 %v5872
      %v6582 = vpop.f32.mrb[0].mxu0
      %v6583 = vadd.f32 %v6438, %v6582
      %v6584 = vpop.f32.mrb[0].mxu0
      %6585 = vmatprep.mubr.f32.mxu0 0.0
      %6586 = vmatmul.mubr.f32.gmra.mrb[0].mxu0 %v5879
      %v6587 = vpop.f32.mrb[0].mxu0
      %v6588 = vadd.f32 %v6443, %v6587
      %v6589 = vpop.f32.mrb[0].mxu0
      %6590 = vmatprep.mubr.f32.mxu0 0.0
      %6591 = vmatmul.mubr.f32.gmra.mrb[0].mxu0 %v5886
      %v6592 = vpop.f32.mrb[0].mxu0
      %v6593 = vadd.f32 %v6448, %v6592
      %v6594 = vpop.f32.mrb[0].mxu0
      %6595 = vmatprep.mubr.f32.mxu0 0.0
      %6596 = vmatmul.mubr.f32.gmra.mrb[0].mxu0 %v5893
      %v6597 = vpop.f32.mrb[0].mxu0
      %v6598 = vadd.f32 %v6453, %v6597
      %v6599 = vpop.f32.mrb[0].mxu0
      %6600 = vmatprep.mubr.f32.mxu0 0.0
      %6601 = vmatmul.mubr.f32.gmra.mrb[0].mxu0 %v5900
      %v6602 = vpop.f32.mrb[0].mxu0
      %v6603 = vadd.f32 %v6458, %v6602
      %v6604 = vpop.f32.mrb[0].mxu0
      %6605 = vmatprep.mubr.f32.mxu0 0.0
      %6606 = vmatmul.mubr.f32.gmra.mrb[0].mxu0 %v5907
      %v6607 = vpop.f32.mrb[0].mxu0
      %v6608 = vadd.f32 %v6463, %v6607
      %v6609 = vpop.f32.mrb[0].mxu0
      %6610 = vmatprep.mubr.f32.mxu0 0.0
      %6611 = vmatmul.mubr.f32.gmra.mrb[0].mxu0 %v5914
      %v6612 = vpop.f32.mrb[0].mxu0
      %v6613 = vadd.f32 %v6468, %v6612
      %v6614 = vpop.f32.mrb[0].mxu0
      %6615 = vmatprep.mubr.f32.mxu0 0.0
      %6616 = vmatmul.mubr.f32.gmra.mrb[0].mxu0 %v5921
      %v6617 = vpop.f32.mrb[0].mxu0
      %v6618 = vadd.f32 %v6473, %v6617
      %v6619 = vpop.f32.mrb[0].mxu0
      %6620 = vmatprep.mubr.f32.mxu0 0.0
      %6621 = vmatmul.mubr.f32.gmra.mrb[0].mxu0 %v5928
      %v6622 = vpop.f32.mrb[0].mxu0
      %v6623 = vadd.f32 %v6478, %v6622
      %v6624 = vpop.f32.mrb[0].mxu0
      %6625 = vmatprep.mubr.f32.mxu0 0.0
      %6626 = vmatmul.mubr.f32.gmra.mrb[0].mxu0 %v5935
      %v6627 = vpop.f32.mrb[0].mxu0
      %v6628 = vadd.f32 %v6483, %v6627
      %v6629 = vpop.f32.mrb[0].mxu0
      %6630 = vmatprep.mubr.f32.mxu0 0.0
      %6631 = vmatmul.mubr.f32.gmra.mrb[0].mxu0 %v5942
      %v6632 = vpop.f32.mrb[0].mxu0
      %v6633 = vadd.f32 %v6488, %v6632
      %v6634 = vpop.f32.mrb[0].mxu0
      %6635 = vdwg.mxu0
      %v6636 = vld [vmem:[#allocation5] sm:$0xff]
      %v6637 = vld [vmem:[#allocation5 + $0x8] sm:$0xff]
      %v6638 = vld [vmem:[#allocation5 + $0x10] sm:$0xff]
      %v6639 = vld [vmem:[#allocation5 + $0x18] sm:$0xff]
      %v6640 = vld [vmem:[#allocation5 + $0x20] sm:$0xff]
      %v6641 = vld [vmem:[#allocation5 + $0x28] sm:$0xff]
      %v6642 = vld [vmem:[#allocation5 + $0x30] sm:$0xff]
      %v6643 = vld [vmem:[#allocation5 + $0x38] sm:$0xff]
      %v6644 = vld [vmem:[#allocation5 + $0x40] sm:$0xff]
      %v6645 = vld [vmem:[#allocation5 + $0x48] sm:$0xff]
      %v6646 = vld [vmem:[#allocation5 + $0x50] sm:$0xff]
      %v6647 = vld [vmem:[#allocation5 + $0x58] sm:$0xff]
      %v6648 = vld [vmem:[#allocation5 + $0x60] sm:$0xff]
      %v6649 = vld [vmem:[#allocation5 + $0x68] sm:$0xff]
      %v6650 = vld [vmem:[#allocation5 + $0x70] sm:$0xff]
      %v6651 = vld [vmem:[#allocation5 + $0x78] sm:$0xff]
      %v6652 = vadd.f32 %v6636, %v6558
      %v6653 = vadd.f32 %v6637, %v6563
      %v6654 = vadd.f32 %v6638, %v6568
      %v6655 = vadd.f32 %v6639, %v6573
      %v6656 = vadd.f32 %v6640, %v6578
      %v6657 = vadd.f32 %v6641, %v6583
      %v6658 = vadd.f32 %v6642, %v6588
      %v6659 = vadd.f32 %v6643, %v6593
      %v6660 = vadd.f32 %v6644, %v6598
      %v6661 = vadd.f32 %v6645, %v6603
      %v6662 = vadd.f32 %v6646, %v6608
      %v6663 = vadd.f32 %v6647, %v6613
      %v6664 = vadd.f32 %v6648, %v6618
      %v6665 = vadd.f32 %v6649, %v6623
      %v6666 = vadd.f32 %v6650, %v6628
      %v6667 = vadd.f32 %v6651, %v6633
      %6668 = vst [vmem:[#allocation5] sm:$0xff] %v6652
      %6669 = vst [vmem:[#allocation5 + $0x8] sm:$0xff] %v6653
      %6670 = vst [vmem:[#allocation5 + $0x10] sm:$0xff] %v6654
      %6671 = vst [vmem:[#allocation5 + $0x18] sm:$0xff] %v6655
      %6672 = vst [vmem:[#allocation5 + $0x20] sm:$0xff] %v6656
      %6673 = vst [vmem:[#allocation5 + $0x28] sm:$0xff] %v6657
      %6674 = vst [vmem:[#allocation5 + $0x30] sm:$0xff] %v6658
      %6675 = vst [vmem:[#allocation5 + $0x38] sm:$0xff] %v6659
      %6676 = vst [vmem:[#allocation5 + $0x40] sm:$0xff] %v6660
      %6677 = vst [vmem:[#allocation5 + $0x48] sm:$0xff] %v6661
      %6678 = vst [vmem:[#allocation5 + $0x50] sm:$0xff] %v6662
      %6679 = vst [vmem:[#allocation5 + $0x58] sm:$0xff] %v6663
      %6680 = vst [vmem:[#allocation5 + $0x60] sm:$0xff] %v6664
      %6681 = vst [vmem:[#allocation5 + $0x68] sm:$0xff] %v6665
      %6682 = vst [vmem:[#allocation5 + $0x70] sm:$0xff] %v6666
      %6683 = vst [vmem:[#allocation5 + $0x78] sm:$0xff] %v6667
      %s6684 = scalar_lea.vmem [#allocation3], 560
      %v6685 = vld [vmem:[%s6684] sm:$0xff]
      %v6686 = vld [vmem:[%s6684 + $0x8] sm:$0xff]
      %v6687 = vld [vmem:[%s6684 + $0x10] sm:$0xff]
      %v6688 = vld [vmem:[%s6684 + $0x18] sm:$0xff]
      %v6689 = vld [vmem:[%s6684 + $0x20] sm:$0xff]
      %v6690 = vld [vmem:[%s6684 + $0x28] sm:$0xff]
      %v6691 = vld [vmem:[%s6684 + $0x30] sm:$0xff]
      %v6692 = vld [vmem:[%s6684 + $0x38] sm:$0xff]
      %v6693 = vld [vmem:[%s6684 + $0x40] sm:$0xff]
      %v6694 = vld [vmem:[%s6684 + $0x48] sm:$0xff]
      %v6695 = vld [vmem:[%s6684 + $0x50] sm:$0xff]
      %v6696 = vld [vmem:[%s6684 + $0x58] sm:$0xff]
      %v6697 = vld [vmem:[%s6684 + $0x60] sm:$0xff]
      %v6698 = vld [vmem:[%s6684 + $0x68] sm:$0xff]
      %v6699 = vld [vmem:[%s6684 + $0x70] sm:$0xff]
      %v6700 = vld [vmem:[%s6684 + $0x78] sm:$0xff]
      %v6701 = vld [vmem:[%s6684 + $0x80] sm:$0xff]
      %v6702 = vld [vmem:[%s6684 + $0x88] sm:$0xff]
      %v6703 = vld [vmem:[%s6684 + $0x90] sm:$0xff]
      %v6704 = vld [vmem:[%s6684 + $0x98] sm:$0xff]
      %v6705 = vld [vmem:[%s6684 + $0xa0] sm:$0xff]
      %v6706 = vld [vmem:[%s6684 + $0xa8] sm:$0xff]
      %v6707 = vld [vmem:[%s6684 + $0xb0] sm:$0xff]
      %v6708 = vld [vmem:[%s6684 + $0xb8] sm:$0xff]
      %v6709 = vld [vmem:[%s6684 + $0xc0] sm:$0xff]
      %v6710 = vld [vmem:[%s6684 + $0xc8] sm:$0xff]
      %v6711 = vld [vmem:[%s6684 + $0xd0] sm:$0xff]
      %v6712 = vld [vmem:[%s6684 + $0xd8] sm:$0xff]
      %v6713 = vld [vmem:[%s6684 + $0xe0] sm:$0xff]
      %v6714 = vld [vmem:[%s6684 + $0xe8] sm:$0xff]
      %v6715 = vld [vmem:[%s6684 + $0xf0] sm:$0xff]
      %v6716 = vld [vmem:[%s6684 + $0xf8] sm:$0xff]
      %v6717 = vld [vmem:[%s6684 + $0x100] sm:$0xff]
      %v6718 = vld [vmem:[%s6684 + $0x108] sm:$0xff]
      %v6719 = vld [vmem:[%s6684 + $0x110] sm:$0xff]
      %v6720 = vld [vmem:[%s6684 + $0x118] sm:$0xff]
      %v6721 = vld [vmem:[%s6684 + $0x120] sm:$0xff]
      %v6722 = vld [vmem:[%s6684 + $0x128] sm:$0xff]
      %v6723 = vld [vmem:[%s6684 + $0x130] sm:$0xff]
      %v6724 = vld [vmem:[%s6684 + $0x138] sm:$0xff]
      %v6725 = vld [vmem:[%s6684 + $0x140] sm:$0xff]
      %v6726 = vld [vmem:[%s6684 + $0x148] sm:$0xff]
      %v6727 = vld [vmem:[%s6684 + $0x150] sm:$0xff]
      %v6728 = vld [vmem:[%s6684 + $0x158] sm:$0xff]
      %v6729 = vld [vmem:[%s6684 + $0x160] sm:$0xff]
      %v6730 = vld [vmem:[%s6684 + $0x168] sm:$0xff]
      %v6731 = vld [vmem:[%s6684 + $0x170] sm:$0xff]
      %v6732 = vld [vmem:[%s6684 + $0x178] sm:$0xff]
      %v6733 = vld [vmem:[%s6684 + $0x180] sm:$0xff]
      %v6734 = vld [vmem:[%s6684 + $0x188] sm:$0xff]
      %v6735 = vld [vmem:[%s6684 + $0x190] sm:$0xff]
      %v6736 = vld [vmem:[%s6684 + $0x198] sm:$0xff]
      %v6737 = vld [vmem:[%s6684 + $0x1a0] sm:$0xff]
      %v6738 = vld [vmem:[%s6684 + $0x1a8] sm:$0xff]
      %v6739 = vld [vmem:[%s6684 + $0x1b0] sm:$0xff]
      %v6740 = vld [vmem:[%s6684 + $0x1b8] sm:$0xff]
      %v6741 = vld [vmem:[%s6684 + $0x1c0] sm:$0xff]
      %v6742 = vld [vmem:[%s6684 + $0x1c8] sm:$0xff]
      %v6743 = vld [vmem:[%s6684 + $0x1d0] sm:$0xff]
      %v6744 = vld [vmem:[%s6684 + $0x1d8] sm:$0xff]
      %v6745 = vld [vmem:[%s6684 + $0x1e0] sm:$0xff]
      %v6746 = vld [vmem:[%s6684 + $0x1e8] sm:$0xff]
      %v6747 = vld [vmem:[%s6684 + $0x1f0] sm:$0xff]
      %v6748 = vld [vmem:[%s6684 + $0x1f8] sm:$0xff]
      %v6749 = vld [vmem:[%s6684 + $0x200] sm:$0xff]
      %v6750 = vld [vmem:[%s6684 + $0x208] sm:$0xff]
      %v6751 = vld [vmem:[%s6684 + $0x210] sm:$0xff]
      %v6752 = vld [vmem:[%s6684 + $0x218] sm:$0xff]
      %v6753 = vld [vmem:[%s6684 + $0x220] sm:$0xff]
      %v6754 = vld [vmem:[%s6684 + $0x228] sm:$0xff]
      %v6755 = vld [vmem:[%s6684 + $0x230] sm:$0xff]
      %v6756 = vld [vmem:[%s6684 + $0x238] sm:$0xff]
      %v6757 = vld [vmem:[%s6684 + $0x240] sm:$0xff]
      %v6758 = vld [vmem:[%s6684 + $0x248] sm:$0xff]
      %v6759 = vld [vmem:[%s6684 + $0x250] sm:$0xff]
      %v6760 = vld [vmem:[%s6684 + $0x258] sm:$0xff]
      %v6761 = vld [vmem:[%s6684 + $0x260] sm:$0xff]
      %v6762 = vld [vmem:[%s6684 + $0x268] sm:$0xff]
      %v6763 = vld [vmem:[%s6684 + $0x270] sm:$0xff]
      %v6764 = vld [vmem:[%s6684 + $0x278] sm:$0xff]
      %v6765 = vld [vmem:[%s6684 + $0x280] sm:$0xff]
      %v6766 = vld [vmem:[%s6684 + $0x288] sm:$0xff]
      %v6767 = vld [vmem:[%s6684 + $0x290] sm:$0xff]
      %v6768 = vld [vmem:[%s6684 + $0x298] sm:$0xff]
      %v6769 = vld [vmem:[%s6684 + $0x2a0] sm:$0xff]
      %v6770 = vld [vmem:[%s6684 + $0x2a8] sm:$0xff]
      %v6771 = vld [vmem:[%s6684 + $0x2b0] sm:$0xff]
      %v6772 = vld [vmem:[%s6684 + $0x2b8] sm:$0xff]
      %v6773 = vld [vmem:[%s6684 + $0x2c0] sm:$0xff]
      %v6774 = vld [vmem:[%s6684 + $0x2c8] sm:$0xff]
      %v6775 = vld [vmem:[%s6684 + $0x2d0] sm:$0xff]
      %v6776 = vld [vmem:[%s6684 + $0x2d8] sm:$0xff]
      %v6777 = vld [vmem:[%s6684 + $0x2e0] sm:$0xff]
      %v6778 = vld [vmem:[%s6684 + $0x2e8] sm:$0xff]
      %v6779 = vld [vmem:[%s6684 + $0x2f0] sm:$0xff]
      %v6780 = vld [vmem:[%s6684 + $0x2f8] sm:$0xff]
      %v6781 = vld [vmem:[%s6684 + $0x300] sm:$0xff]
      %v6782 = vld [vmem:[%s6684 + $0x308] sm:$0xff]
      %v6783 = vld [vmem:[%s6684 + $0x310] sm:$0xff]
      %v6784 = vld [vmem:[%s6684 + $0x318] sm:$0xff]
      %v6785 = vld [vmem:[%s6684 + $0x320] sm:$0xff]
      %v6786 = vld [vmem:[%s6684 + $0x328] sm:$0xff]
      %v6787 = vld [vmem:[%s6684 + $0x330] sm:$0xff]
      %v6788 = vld [vmem:[%s6684 + $0x338] sm:$0xff]
      %v6789 = vld [vmem:[%s6684 + $0x340] sm:$0xff]
      %v6790 = vld [vmem:[%s6684 + $0x348] sm:$0xff]
      %v6791 = vld [vmem:[%s6684 + $0x350] sm:$0xff]
      %v6792 = vld [vmem:[%s6684 + $0x358] sm:$0xff]
      %v6793 = vld [vmem:[%s6684 + $0x360] sm:$0xff]
      %v6794 = vld [vmem:[%s6684 + $0x368] sm:$0xff]
      %v6795 = vld [vmem:[%s6684 + $0x370] sm:$0xff]
      %v6796 = vld [vmem:[%s6684 + $0x378] sm:$0xff]
      %s6797 = scalar_lea.vmem [#allocation4], 4480
      %v6798 = vld [vmem:[%s6797] sm:$0xff]
      %v6799 = vld [vmem:[%s6797 + $0x8] sm:$0xff]
      %v6800 = vld [vmem:[%s6797 + $0x10] sm:$0xff]
      %v6801 = vld [vmem:[%s6797 + $0x18] sm:$0xff]
      %v6802 = vld [vmem:[%s6797 + $0x20] sm:$0xff]
      %v6803 = vld [vmem:[%s6797 + $0x28] sm:$0xff]
      %v6804 = vld [vmem:[%s6797 + $0x30] sm:$0xff]
      %v6805 = vld [vmem:[%s6797 + $0x38] sm:$0xff]
      %v6806 = vld [vmem:[%s6797 + $0x40] sm:$0xff]
      %v6807 = vld [vmem:[%s6797 + $0x48] sm:$0xff]
      %v6808 = vld [vmem:[%s6797 + $0x50] sm:$0xff]
      %v6809 = vld [vmem:[%s6797 + $0x58] sm:$0xff]
      %v6810 = vld [vmem:[%s6797 + $0x60] sm:$0xff]
      %v6811 = vld [vmem:[%s6797 + $0x68] sm:$0xff]
      %v6812 = vld [vmem:[%s6797 + $0x70] sm:$0xff]
      %v6813 = vld [vmem:[%s6797 + $0x78] sm:$0xff]
      %v6814 = vld [vmem:[%s6797 + $0x80] sm:$0xff]
      %v6815 = vld [vmem:[%s6797 + $0x88] sm:$0xff]
      %v6816 = vld [vmem:[%s6797 + $0x90] sm:$0xff]
      %v6817 = vld [vmem:[%s6797 + $0x98] sm:$0xff]
      %v6818 = vld [vmem:[%s6797 + $0xa0] sm:$0xff]
      %v6819 = vld [vmem:[%s6797 + $0xa8] sm:$0xff]
      %v6820 = vld [vmem:[%s6797 + $0xb0] sm:$0xff]
      %v6821 = vld [vmem:[%s6797 + $0xb8] sm:$0xff]
      %v6822 = vld [vmem:[%s6797 + $0xc0] sm:$0xff]
      %v6823 = vld [vmem:[%s6797 + $0xc8] sm:$0xff]
      %v6824 = vld [vmem:[%s6797 + $0xd0] sm:$0xff]
      %v6825 = vld [vmem:[%s6797 + $0xd8] sm:$0xff]
      %v6826 = vld [vmem:[%s6797 + $0xe0] sm:$0xff]
      %v6827 = vld [vmem:[%s6797 + $0xe8] sm:$0xff]
      %v6828 = vld [vmem:[%s6797 + $0xf0] sm:$0xff]
      %v6829 = vld [vmem:[%s6797 + $0xf8] sm:$0xff]
      %v6830 = vld [vmem:[%s6797 + $0x100] sm:$0xff]
      %v6831 = vld [vmem:[%s6797 + $0x108] sm:$0xff]
      %v6832 = vld [vmem:[%s6797 + $0x110] sm:$0xff]
      %v6833 = vld [vmem:[%s6797 + $0x118] sm:$0xff]
      %v6834 = vld [vmem:[%s6797 + $0x120] sm:$0xff]
      %v6835 = vld [vmem:[%s6797 + $0x128] sm:$0xff]
      %v6836 = vld [vmem:[%s6797 + $0x130] sm:$0xff]
      %v6837 = vld [vmem:[%s6797 + $0x138] sm:$0xff]
      %v6838 = vld [vmem:[%s6797 + $0x140] sm:$0xff]
      %v6839 = vld [vmem:[%s6797 + $0x148] sm:$0xff]
      %v6840 = vld [vmem:[%s6797 + $0x150] sm:$0xff]
      %v6841 = vld [vmem:[%s6797 + $0x158] sm:$0xff]
      %v6842 = vld [vmem:[%s6797 + $0x160] sm:$0xff]
      %v6843 = vld [vmem:[%s6797 + $0x168] sm:$0xff]
      %v6844 = vld [vmem:[%s6797 + $0x170] sm:$0xff]
      %v6845 = vld [vmem:[%s6797 + $0x178] sm:$0xff]
      %v6846 = vld [vmem:[%s6797 + $0x180] sm:$0xff]
      %v6847 = vld [vmem:[%s6797 + $0x188] sm:$0xff]
      %v6848 = vld [vmem:[%s6797 + $0x190] sm:$0xff]
      %v6849 = vld [vmem:[%s6797 + $0x198] sm:$0xff]
      %v6850 = vld [vmem:[%s6797 + $0x1a0] sm:$0xff]
      %v6851 = vld [vmem:[%s6797 + $0x1a8] sm:$0xff]
      %v6852 = vld [vmem:[%s6797 + $0x1b0] sm:$0xff]
      %v6853 = vld [vmem:[%s6797 + $0x1b8] sm:$0xff]
      %v6854 = vld [vmem:[%s6797 + $0x1c0] sm:$0xff]
      %v6855 = vld [vmem:[%s6797 + $0x1c8] sm:$0xff]
      %v6856 = vld [vmem:[%s6797 + $0x1d0] sm:$0xff]
      %v6857 = vld [vmem:[%s6797 + $0x1d8] sm:$0xff]
      %v6858 = vld [vmem:[%s6797 + $0x1e0] sm:$0xff]
      %v6859 = vld [vmem:[%s6797 + $0x1e8] sm:$0xff]
      %v6860 = vld [vmem:[%s6797 + $0x1f0] sm:$0xff]
      %v6861 = vld [vmem:[%s6797 + $0x1f8] sm:$0xff]
      %v6862 = vld [vmem:[%s6797 + $0x200] sm:$0xff]
      %v6863 = vld [vmem:[%s6797 + $0x208] sm:$0xff]
      %v6864 = vld [vmem:[%s6797 + $0x210] sm:$0xff]
      %v6865 = vld [vmem:[%s6797 + $0x218] sm:$0xff]
      %v6866 = vld [vmem:[%s6797 + $0x220] sm:$0xff]
      %v6867 = vld [vmem:[%s6797 + $0x228] sm:$0xff]
      %v6868 = vld [vmem:[%s6797 + $0x230] sm:$0xff]
      %v6869 = vld [vmem:[%s6797 + $0x238] sm:$0xff]
      %v6870 = vld [vmem:[%s6797 + $0x240] sm:$0xff]
      %v6871 = vld [vmem:[%s6797 + $0x248] sm:$0xff]
      %v6872 = vld [vmem:[%s6797 + $0x250] sm:$0xff]
      %v6873 = vld [vmem:[%s6797 + $0x258] sm:$0xff]
      %v6874 = vld [vmem:[%s6797 + $0x260] sm:$0xff]
      %v6875 = vld [vmem:[%s6797 + $0x268] sm:$0xff]
      %v6876 = vld [vmem:[%s6797 + $0x270] sm:$0xff]
      %v6877 = vld [vmem:[%s6797 + $0x278] sm:$0xff]
      %v6878 = vld [vmem:[%s6797 + $0x280] sm:$0xff]
      %v6879 = vld [vmem:[%s6797 + $0x288] sm:$0xff]
      %v6880 = vld [vmem:[%s6797 + $0x290] sm:$0xff]
      %v6881 = vld [vmem:[%s6797 + $0x298] sm:$0xff]
      %v6882 = vld [vmem:[%s6797 + $0x2a0] sm:$0xff]
      %v6883 = vld [vmem:[%s6797 + $0x2a8] sm:$0xff]
      %v6884 = vld [vmem:[%s6797 + $0x2b0] sm:$0xff]
      %v6885 = vld [vmem:[%s6797 + $0x2b8] sm:$0xff]
      %v6886 = vld [vmem:[%s6797 + $0x2c0] sm:$0xff]
      %v6887 = vld [vmem:[%s6797 + $0x2c8] sm:$0xff]
      %v6888 = vld [vmem:[%s6797 + $0x2d0] sm:$0xff]
      %v6889 = vld [vmem:[%s6797 + $0x2d8] sm:$0xff]
      %v6890 = vld [vmem:[%s6797 + $0x2e0] sm:$0xff]
      %v6891 = vld [vmem:[%s6797 + $0x2e8] sm:$0xff]
      %v6892 = vld [vmem:[%s6797 + $0x2f0] sm:$0xff]
      %v6893 = vld [vmem:[%s6797 + $0x2f8] sm:$0xff]
      %v6894 = vld [vmem:[%s6797 + $0x300] sm:$0xff]
      %v6895 = vld [vmem:[%s6797 + $0x308] sm:$0xff]
      %v6896 = vld [vmem:[%s6797 + $0x310] sm:$0xff]
      %v6897 = vld [vmem:[%s6797 + $0x318] sm:$0xff]
      %v6898 = vld [vmem:[%s6797 + $0x320] sm:$0xff]
      %v6899 = vld [vmem:[%s6797 + $0x328] sm:$0xff]
      %v6900 = vld [vmem:[%s6797 + $0x330] sm:$0xff]
      %v6901 = vld [vmem:[%s6797 + $0x338] sm:$0xff]
      %v6902 = vld [vmem:[%s6797 + $0x340] sm:$0xff]
      %v6903 = vld [vmem:[%s6797 + $0x348] sm:$0xff]
      %v6904 = vld [vmem:[%s6797 + $0x350] sm:$0xff]
      %v6905 = vld [vmem:[%s6797 + $0x358] sm:$0xff]
      %v6906 = vld [vmem:[%s6797 + $0x360] sm:$0xff]
      %v6907 = vld [vmem:[%s6797 + $0x368] sm:$0xff]
      %v6908 = vld [vmem:[%s6797 + $0x370] sm:$0xff]
      %v6909 = vld [vmem:[%s6797 + $0x378] sm:$0xff]
      %6910 = vmatprep.subr.mxu0 0.0
      %6911 = vmatpush1.msra.mxu0 %v6798
      %6912 = vmatprep.subr.mxu0 0.0
      %6913 = vmatpush1.msra.mxu0 %v6799
      %6914 = vmatprep.subr.mxu0 0.0
      %6915 = vmatpush1.msra.mxu0 %v6800
      %6916 = vmatprep.subr.mxu0 0.0
      %6917 = vmatpush1.msra.mxu0 %v6801
      %6918 = vmatprep.subr.mxu0 0.0
      %6919 = vmatpush1.msra.mxu0 %v6802
      %6920 = vmatprep.subr.mxu0 0.0
      %6921 = vmatpush1.msra.mxu0 %v6803
      %6922 = vmatprep.subr.mxu0 0.0
      %6923 = vmatpush1.msra.mxu0 %v6804
      %6924 = vmatprep.subr.mxu0 0.0
      %6925 = vmatpush1.msra.mxu0 %v6805
      %6926 = vmatprep.subr.mxu0 0.0
      %6927 = vmatpush1.msra.mxu0 %v6806
      %6928 = vmatprep.subr.mxu0 0.0
      %6929 = vmatpush1.msra.mxu0 %v6807
      %6930 = vmatprep.subr.mxu0 0.0
      %6931 = vmatpush1.msra.mxu0 %v6808
      %6932 = vmatprep.subr.mxu0 0.0
      %6933 = vmatpush1.msra.mxu0 %v6809
      %6934 = vmatprep.subr.mxu0 0.0
      %6935 = vmatpush1.msra.mxu0 %v6810
      %6936 = vmatprep.subr.mxu0 0.0
      %6937 = vmatpush1.msra.mxu0 %v6811
      %6938 = vmatprep.subr.mxu0 0.0
      %6939 = vmatpush1.msra.mxu0 %v6812
      %6940 = vmatprep.subr.mxu0 0.0
      %6941 = vmatpush1.msra.mxu0 %v6813
      %6942 = vmatprep.subr.mxu0 0.0
      %6943 = vmatpush1.msra.mxu0 %v6814
      %6944 = vmatprep.subr.mxu0 0.0
      %6945 = vmatpush1.msra.mxu0 %v6815
      %6946 = vmatprep.subr.mxu0 0.0
      %6947 = vmatpush1.msra.mxu0 %v6816
      %6948 = vmatprep.subr.mxu0 0.0
      %6949 = vmatpush1.msra.mxu0 %v6817
      %6950 = vmatprep.subr.mxu0 0.0
      %6951 = vmatpush1.msra.mxu0 %v6818
      %6952 = vmatprep.subr.mxu0 0.0
      %6953 = vmatpush1.msra.mxu0 %v6819
      %6954 = vmatprep.subr.mxu0 0.0
      %6955 = vmatpush1.msra.mxu0 %v6820
      %6956 = vmatprep.subr.mxu0 0.0
      %6957 = vmatpush1.msra.mxu0 %v6821
      %6958 = vmatprep.subr.mxu0 0.0
      %6959 = vmatpush1.msra.mxu0 %v6822
      %6960 = vmatprep.subr.mxu0 0.0
      %6961 = vmatpush1.msra.mxu0 %v6823
      %6962 = vmatprep.subr.mxu0 0.0
      %6963 = vmatpush1.msra.mxu0 %v6824
      %6964 = vmatprep.subr.mxu0 0.0
      %6965 = vmatpush1.msra.mxu0 %v6825
      %6966 = vmatprep.subr.mxu0 0.0
      %6967 = vmatpush1.msra.mxu0 %v6826
      %6968 = vmatprep.subr.mxu0 0.0
      %6969 = vmatpush1.msra.mxu0 %v6827
      %6970 = vmatprep.subr.mxu0 0.0
      %6971 = vmatpush1.msra.mxu0 %v6828
      %6972 = vmatprep.subr.mxu0 0.0
      %6973 = vmatpush1.msra.mxu0 %v6829
      %6974 = vmatprep.mubr.f32.mxu0 %v6686
      %6975 = vmatmul.mubr.f32.gmra.mrb[0].mxu0 %v6685
      %v6976 = vpop.f32.mrb[0].mxu0
      %v6977 = vadd.f32 0.0, %v6976
      %v6978 = vpop.f32.mrb[0].mxu0
      %6979 = vmatprep.mubr.f32.mxu0 %v6693
      %6980 = vmatmul.mubr.f32.gmra.mrb[0].mxu0 %v6692
      %v6981 = vpop.f32.mrb[0].mxu0
      %v6982 = vadd.f32 0.0, %v6981
      %v6983 = vpop.f32.mrb[0].mxu0
      %6984 = vmatprep.mubr.f32.mxu0 %v6700
      %6985 = vmatmul.mubr.f32.gmra.mrb[0].mxu0 %v6699
      %v6986 = vpop.f32.mrb[0].mxu0
      %v6987 = vadd.f32 0.0, %v6986
      %v6988 = vpop.f32.mrb[0].mxu0
      %6989 = vmatprep.mubr.f32.mxu0 %v6707
      %6990 = vmatmul.mubr.f32.gmra.mrb[0].mxu0 %v6706
      %v6991 = vpop.f32.mrb[0].mxu0
      %v6992 = vadd.f32 0.0, %v6991
      %v6993 = vpop.f32.mrb[0].mxu0
      %6994 = vmatprep.mubr.f32.mxu0 %v6714
      %6995 = vmatmul.mubr.f32.gmra.mrb[0].mxu0 %v6713
      %v6996 = vpop.f32.mrb[0].mxu0
      %v6997 = vadd.f32 0.0, %v6996
      %v6998 = vpop.f32.mrb[0].mxu0
      %6999 = vmatprep.mubr.f32.mxu0 %v6721
      %7000 = vmatmul.mubr.f32.gmra.mrb[0].mxu0 %v6720
      %v7001 = vpop.f32.mrb[0].mxu0
      %v7002 = vadd.f32 0.0, %v7001
      %v7003 = vpop.f32.mrb[0].mxu0
      %7004 = vmatprep.mubr.f32.mxu0 %v6728
      %7005 = vmatmul.mubr.f32.gmra.mrb[0].mxu0 %v6727
      %v7006 = vpop.f32.mrb[0].mxu0
      %v7007 = vadd.f32 0.0, %v7006
      %v7008 = vpop.f32.mrb[0].mxu0
      %7009 = vmatprep.mubr.f32.mxu0 %v6735
      %7010 = vmatmul.mubr.f32.gmra.mrb[0].mxu0 %v6734
      %v7011 = vpop.f32.mrb[0].mxu0
      %v7012 = vadd.f32 0.0, %v7011
      %v7013 = vpop.f32.mrb[0].mxu0
      %7014 = vmatprep.mubr.f32.mxu0 %v6742
      %7015 = vmatmul.mubr.f32.gmra.mrb[0].mxu0 %v6741
      %v7016 = vpop.f32.mrb[0].mxu0
      %v7017 = vadd.f32 0.0, %v7016
      %v7018 = vpop.f32.mrb[0].mxu0
      %7019 = vmatprep.mubr.f32.mxu0 %v6749
      %7020 = vmatmul.mubr.f32.gmra.mrb[0].mxu0 %v6748
      %v7021 = vpop.f32.mrb[0].mxu0
      %v7022 = vadd.f32 0.0, %v7021
      %v7023 = vpop.f32.mrb[0].mxu0
      %7024 = vmatprep.mubr.f32.mxu0 %v6756
      %7025 = vmatmul.mubr.f32.gmra.mrb[0].mxu0 %v6755
      %v7026 = vpop.f32.mrb[0].mxu0
      %v7027 = vadd.f32 0.0, %v7026
      %v7028 = vpop.f32.mrb[0].mxu0
      %7029 = vmatprep.mubr.f32.mxu0 %v6763
      %7030 = vmatmul.mubr.f32.gmra.mrb[0].mxu0 %v6762
      %v7031 = vpop.f32.mrb[0].mxu0
      %v7032 = vadd.f32 0.0, %v7031
      %v7033 = vpop.f32.mrb[0].mxu0
      %7034 = vmatprep.mubr.f32.mxu0 %v6770
      %7035 = vmatmul.mubr.f32.gmra.mrb[0].mxu0 %v6769
      %v7036 = vpop.f32.mrb[0].mxu0
      %v7037 = vadd.f32 0.0, %v7036
      %v7038 = vpop.f32.mrb[0].mxu0
      %7039 = vmatprep.mubr.f32.mxu0 %v6777
      %7040 = vmatmul.mubr.f32.gmra.mrb[0].mxu0 %v6776
      %v7041 = vpop.f32.mrb[0].mxu0
      %v7042 = vadd.f32 0.0, %v7041
      %v7043 = vpop.f32.mrb[0].mxu0
      %7044 = vmatprep.mubr.f32.mxu0 %v6784
      %7045 = vmatmul.mubr.f32.gmra.mrb[0].mxu0 %v6783
      %v7046 = vpop.f32.mrb[0].mxu0
      %v7047 = vadd.f32 0.0, %v7046
      %v7048 = vpop.f32.mrb[0].mxu0
      %7049 = vmatprep.mubr.f32.mxu0 %v6791
      %7050 = vmatmul.mubr.f32.gmra.mrb[0].mxu0 %v6790
      %v7051 = vpop.f32.mrb[0].mxu0
      %v7052 = vadd.f32 0.0, %v7051
      %v7053 = vpop.f32.mrb[0].mxu0
      %7054 = vdwg.mxu0
      %7055 = vmatprep.subr.mxu0 0.0
      %7056 = vmatpush1.msra.mxu0 %v6830
      %7057 = vmatprep.subr.mxu0 0.0
      %7058 = vmatpush1.msra.mxu0 %v6831
      %7059 = vmatprep.subr.mxu0 0.0
      %7060 = vmatpush1.msra.mxu0 %v6832
      %7061 = vmatprep.subr.mxu0 0.0
      %7062 = vmatpush1.msra.mxu0 %v6833
      %7063 = vmatprep.subr.mxu0 0.0
      %7064 = vmatpush1.msra.mxu0 %v6834
      %7065 = vmatprep.subr.mxu0 0.0
      %7066 = vmatpush1.msra.mxu0 %v6835
      %7067 = vmatprep.subr.mxu0 0.0
      %7068 = vmatpush1.msra.mxu0 %v6836
      %7069 = vmatprep.subr.mxu0 0.0
      %7070 = vmatpush1.msra.mxu0 %v6837
      %7071 = vmatprep.subr.mxu0 0.0
      %7072 = vmatpush1.msra.mxu0 %v6838
      %7073 = vmatprep.subr.mxu0 0.0
      %7074 = vmatpush1.msra.mxu0 %v6839
      %7075 = vmatprep.subr.mxu0 0.0
      %7076 = vmatpush1.msra.mxu0 %v6840
      %7077 = vmatprep.subr.mxu0 0.0
      %7078 = vmatpush1.msra.mxu0 %v6841
      %7079 = vmatprep.subr.mxu0 0.0
      %7080 = vmatpush1.msra.mxu0 %v6842
      %7081 = vmatprep.subr.mxu0 0.0
      %7082 = vmatpush1.msra.mxu0 %v6843
      %7083 = vmatprep.subr.mxu0 0.0
      %7084 = vmatpush1.msra.mxu0 %v6844
      %7085 = vmatprep.subr.mxu0 0.0
      %7086 = vmatpush1.msra.mxu0 %v6845
      %7087 = vmatprep.subr.mxu0 0.0
      %7088 = vmatpush1.msra.mxu0 %v6846
      %7089 = vmatprep.subr.mxu0 0.0
      %7090 = vmatpush1.msra.mxu0 %v6847
      %7091 = vmatprep.subr.mxu0 0.0
      %7092 = vmatpush1.msra.mxu0 %v6848
      %7093 = vmatprep.subr.mxu0 0.0
      %7094 = vmatpush1.msra.mxu0 %v6849
      %7095 = vmatprep.subr.mxu0 0.0
      %7096 = vmatpush1.msra.mxu0 %v6850
      %7097 = vmatprep.subr.mxu0 0.0
      %7098 = vmatpush1.msra.mxu0 %v6851
      %7099 = vmatprep.subr.mxu0 0.0
      %7100 = vmatpush1.msra.mxu0 %v6852
      %7101 = vmatprep.subr.mxu0 0.0
      %7102 = vmatpush1.msra.mxu0 %v6853
      %7103 = vmatprep.subr.mxu0 0.0
      %7104 = vmatpush1.msra.mxu0 %v6854
      %7105 = vmatprep.subr.mxu0 0.0
      %7106 = vmatpush1.msra.mxu0 %v6855
      %7107 = vmatprep.subr.mxu0 0.0
      %7108 = vmatpush1.msra.mxu0 %v6856
      %7109 = vmatprep.subr.mxu0 0.0
      %7110 = vmatpush1.msra.mxu0 %v6857
      %7111 = vmatprep.subr.mxu0 0.0
      %7112 = vmatpush1.msra.mxu0 %v6858
      %7113 = vmatprep.subr.mxu0 0.0
      %7114 = vmatpush1.msra.mxu0 %v6859
      %7115 = vmatprep.subr.mxu0 0.0
      %7116 = vmatpush1.msra.mxu0 %v6860
      %7117 = vmatprep.subr.mxu0 0.0
      %7118 = vmatpush1.msra.mxu0 %v6861
      %7119 = vmatprep.mubr.f32.mxu0 %v6688
      %7120 = vmatmul.mubr.f32.gmra.mrb[0].mxu0 %v6687
      %v7121 = vpop.f32.mrb[0].mxu0
      %v7122 = vadd.f32 %v6977, %v7121
      %v7123 = vpop.f32.mrb[0].mxu0
      %7124 = vmatprep.mubr.f32.mxu0 %v6695
      %7125 = vmatmul.mubr.f32.gmra.mrb[0].mxu0 %v6694
      %v7126 = vpop.f32.mrb[0].mxu0
      %v7127 = vadd.f32 %v6982, %v7126
      %v7128 = vpop.f32.mrb[0].mxu0
      %7129 = vmatprep.mubr.f32.mxu0 %v6702
      %7130 = vmatmul.mubr.f32.gmra.mrb[0].mxu0 %v6701
      %v7131 = vpop.f32.mrb[0].mxu0
      %v7132 = vadd.f32 %v6987, %v7131
      %v7133 = vpop.f32.mrb[0].mxu0
      %7134 = vmatprep.mubr.f32.mxu0 %v6709
      %7135 = vmatmul.mubr.f32.gmra.mrb[0].mxu0 %v6708
      %v7136 = vpop.f32.mrb[0].mxu0
      %v7137 = vadd.f32 %v6992, %v7136
      %v7138 = vpop.f32.mrb[0].mxu0
      %7139 = vmatprep.mubr.f32.mxu0 %v6716
      %7140 = vmatmul.mubr.f32.gmra.mrb[0].mxu0 %v6715
      %v7141 = vpop.f32.mrb[0].mxu0
      %v7142 = vadd.f32 %v6997, %v7141
      %v7143 = vpop.f32.mrb[0].mxu0
      %7144 = vmatprep.mubr.f32.mxu0 %v6723
      %7145 = vmatmul.mubr.f32.gmra.mrb[0].mxu0 %v6722
      %v7146 = vpop.f32.mrb[0].mxu0
      %v7147 = vadd.f32 %v7002, %v7146
      %v7148 = vpop.f32.mrb[0].mxu0
      %7149 = vmatprep.mubr.f32.mxu0 %v6730
      %7150 = vmatmul.mubr.f32.gmra.mrb[0].mxu0 %v6729
      %v7151 = vpop.f32.mrb[0].mxu0
      %v7152 = vadd.f32 %v7007, %v7151
      %v7153 = vpop.f32.mrb[0].mxu0
      %7154 = vmatprep.mubr.f32.mxu0 %v6737
      %7155 = vmatmul.mubr.f32.gmra.mrb[0].mxu0 %v6736
      %v7156 = vpop.f32.mrb[0].mxu0
      %v7157 = vadd.f32 %v7012, %v7156
      %v7158 = vpop.f32.mrb[0].mxu0
      %7159 = vmatprep.mubr.f32.mxu0 %v6744
      %7160 = vmatmul.mubr.f32.gmra.mrb[0].mxu0 %v6743
      %v7161 = vpop.f32.mrb[0].mxu0
      %v7162 = vadd.f32 %v7017, %v7161
      %v7163 = vpop.f32.mrb[0].mxu0
      %7164 = vmatprep.mubr.f32.mxu0 %v6751
      %7165 = vmatmul.mubr.f32.gmra.mrb[0].mxu0 %v6750
      %v7166 = vpop.f32.mrb[0].mxu0
      %v7167 = vadd.f32 %v7022, %v7166
      %v7168 = vpop.f32.mrb[0].mxu0
      %7169 = vmatprep.mubr.f32.mxu0 %v6758
      %7170 = vmatmul.mubr.f32.gmra.mrb[0].mxu0 %v6757
      %v7171 = vpop.f32.mrb[0].mxu0
      %v7172 = vadd.f32 %v7027, %v7171
      %v7173 = vpop.f32.mrb[0].mxu0
      %7174 = vmatprep.mubr.f32.mxu0 %v6765
      %7175 = vmatmul.mubr.f32.gmra.mrb[0].mxu0 %v6764
      %v7176 = vpop.f32.mrb[0].mxu0
      %v7177 = vadd.f32 %v7032, %v7176
      %v7178 = vpop.f32.mrb[0].mxu0
      %7179 = vmatprep.mubr.f32.mxu0 %v6772
      %7180 = vmatmul.mubr.f32.gmra.mrb[0].mxu0 %v6771
      %v7181 = vpop.f32.mrb[0].mxu0
      %v7182 = vadd.f32 %v7037, %v7181
      %v7183 = vpop.f32.mrb[0].mxu0
      %7184 = vmatprep.mubr.f32.mxu0 %v6779
      %7185 = vmatmul.mubr.f32.gmra.mrb[0].mxu0 %v6778
      %v7186 = vpop.f32.mrb[0].mxu0
      %v7187 = vadd.f32 %v7042, %v7186
      %v7188 = vpop.f32.mrb[0].mxu0
      %7189 = vmatprep.mubr.f32.mxu0 %v6786
      %7190 = vmatmul.mubr.f32.gmra.mrb[0].mxu0 %v6785
      %v7191 = vpop.f32.mrb[0].mxu0
      %v7192 = vadd.f32 %v7047, %v7191
      %v7193 = vpop.f32.mrb[0].mxu0
      %7194 = vmatprep.mubr.f32.mxu0 %v6793
      %7195 = vmatmul.mubr.f32.gmra.mrb[0].mxu0 %v6792
      %v7196 = vpop.f32.mrb[0].mxu0
      %v7197 = vadd.f32 %v7052, %v7196
      %v7198 = vpop.f32.mrb[0].mxu0
      %7199 = vdwg.mxu0
      %7200 = vmatprep.subr.mxu0 0.0
      %7201 = vmatpush1.msra.mxu0 %v6862
      %7202 = vmatprep.subr.mxu0 0.0
      %7203 = vmatpush1.msra.mxu0 %v6863
      %7204 = vmatprep.subr.mxu0 0.0
      %7205 = vmatpush1.msra.mxu0 %v6864
      %7206 = vmatprep.subr.mxu0 0.0
      %7207 = vmatpush1.msra.mxu0 %v6865
      %7208 = vmatprep.subr.mxu0 0.0
      %7209 = vmatpush1.msra.mxu0 %v6866
      %7210 = vmatprep.subr.mxu0 0.0
      %7211 = vmatpush1.msra.mxu0 %v6867
      %7212 = vmatprep.subr.mxu0 0.0
      %7213 = vmatpush1.msra.mxu0 %v6868
      %7214 = vmatprep.subr.mxu0 0.0
      %7215 = vmatpush1.msra.mxu0 %v6869
      %7216 = vmatprep.subr.mxu0 0.0
      %7217 = vmatpush1.msra.mxu0 %v6870
      %7218 = vmatprep.subr.mxu0 0.0
      %7219 = vmatpush1.msra.mxu0 %v6871
      %7220 = vmatprep.subr.mxu0 0.0
      %7221 = vmatpush1.msra.mxu0 %v6872
      %7222 = vmatprep.subr.mxu0 0.0
      %7223 = vmatpush1.msra.mxu0 %v6873
      %7224 = vmatprep.subr.mxu0 0.0
      %7225 = vmatpush1.msra.mxu0 %v6874
      %7226 = vmatprep.subr.mxu0 0.0
      %7227 = vmatpush1.msra.mxu0 %v6875
      %7228 = vmatprep.subr.mxu0 0.0
      %7229 = vmatpush1.msra.mxu0 %v6876
      %7230 = vmatprep.subr.mxu0 0.0
      %7231 = vmatpush1.msra.mxu0 %v6877
      %7232 = vmatprep.subr.mxu0 0.0
      %7233 = vmatpush1.msra.mxu0 %v6878
      %7234 = vmatprep.subr.mxu0 0.0
      %7235 = vmatpush1.msra.mxu0 %v6879
      %7236 = vmatprep.subr.mxu0 0.0
      %7237 = vmatpush1.msra.mxu0 %v6880
      %7238 = vmatprep.subr.mxu0 0.0
      %7239 = vmatpush1.msra.mxu0 %v6881
      %7240 = vmatprep.subr.mxu0 0.0
      %7241 = vmatpush1.msra.mxu0 %v6882
      %7242 = vmatprep.subr.mxu0 0.0
      %7243 = vmatpush1.msra.mxu0 %v6883
      %7244 = vmatprep.subr.mxu0 0.0
      %7245 = vmatpush1.msra.mxu0 %v6884
      %7246 = vmatprep.subr.mxu0 0.0
      %7247 = vmatpush1.msra.mxu0 %v6885
      %7248 = vmatprep.subr.mxu0 0.0
      %7249 = vmatpush1.msra.mxu0 %v6886
      %7250 = vmatprep.subr.mxu0 0.0
      %7251 = vmatpush1.msra.mxu0 %v6887
      %7252 = vmatprep.subr.mxu0 0.0
      %7253 = vmatpush1.msra.mxu0 %v6888
      %7254 = vmatprep.subr.mxu0 0.0
      %7255 = vmatpush1.msra.mxu0 %v6889
      %7256 = vmatprep.subr.mxu0 0.0
      %7257 = vmatpush1.msra.mxu0 %v6890
      %7258 = vmatprep.subr.mxu0 0.0
      %7259 = vmatpush1.msra.mxu0 %v6891
      %7260 = vmatprep.subr.mxu0 0.0
      %7261 = vmatpush1.msra.mxu0 %v6892
      %7262 = vmatprep.subr.mxu0 0.0
      %7263 = vmatpush1.msra.mxu0 %v6893
      %7264 = vmatprep.mubr.f32.mxu0 %v6690
      %7265 = vmatmul.mubr.f32.gmra.mrb[0].mxu0 %v6689
      %v7266 = vpop.f32.mrb[0].mxu0
      %v7267 = vadd.f32 %v7122, %v7266
      %v7268 = vpop.f32.mrb[0].mxu0
      %7269 = vmatprep.mubr.f32.mxu0 %v6697
      %7270 = vmatmul.mubr.f32.gmra.mrb[0].mxu0 %v6696
      %v7271 = vpop.f32.mrb[0].mxu0
      %v7272 = vadd.f32 %v7127, %v7271
      %v7273 = vpop.f32.mrb[0].mxu0
      %7274 = vmatprep.mubr.f32.mxu0 %v6704
      %7275 = vmatmul.mubr.f32.gmra.mrb[0].mxu0 %v6703
      %v7276 = vpop.f32.mrb[0].mxu0
      %v7277 = vadd.f32 %v7132, %v7276
      %v7278 = vpop.f32.mrb[0].mxu0
      %7279 = vmatprep.mubr.f32.mxu0 %v6711
      %7280 = vmatmul.mubr.f32.gmra.mrb[0].mxu0 %v6710
      %v7281 = vpop.f32.mrb[0].mxu0
      %v7282 = vadd.f32 %v7137, %v7281
      %v7283 = vpop.f32.mrb[0].mxu0
      %7284 = vmatprep.mubr.f32.mxu0 %v6718
      %7285 = vmatmul.mubr.f32.gmra.mrb[0].mxu0 %v6717
      %v7286 = vpop.f32.mrb[0].mxu0
      %v7287 = vadd.f32 %v7142, %v7286
      %v7288 = vpop.f32.mrb[0].mxu0
      %7289 = vmatprep.mubr.f32.mxu0 %v6725
      %7290 = vmatmul.mubr.f32.gmra.mrb[0].mxu0 %v6724
      %v7291 = vpop.f32.mrb[0].mxu0
      %v7292 = vadd.f32 %v7147, %v7291
      %v7293 = vpop.f32.mrb[0].mxu0
      %7294 = vmatprep.mubr.f32.mxu0 %v6732
      %7295 = vmatmul.mubr.f32.gmra.mrb[0].mxu0 %v6731
      %v7296 = vpop.f32.mrb[0].mxu0
      %v7297 = vadd.f32 %v7152, %v7296
      %v7298 = vpop.f32.mrb[0].mxu0
      %7299 = vmatprep.mubr.f32.mxu0 %v6739
      %7300 = vmatmul.mubr.f32.gmra.mrb[0].mxu0 %v6738
      %v7301 = vpop.f32.mrb[0].mxu0
      %v7302 = vadd.f32 %v7157, %v7301
      %v7303 = vpop.f32.mrb[0].mxu0
      %7304 = vmatprep.mubr.f32.mxu0 %v6746
      %7305 = vmatmul.mubr.f32.gmra.mrb[0].mxu0 %v6745
      %v7306 = vpop.f32.mrb[0].mxu0
      %v7307 = vadd.f32 %v7162, %v7306
      %v7308 = vpop.f32.mrb[0].mxu0
      %7309 = vmatprep.mubr.f32.mxu0 %v6753
      %7310 = vmatmul.mubr.f32.gmra.mrb[0].mxu0 %v6752
      %v7311 = vpop.f32.mrb[0].mxu0
      %v7312 = vadd.f32 %v7167, %v7311
      %v7313 = vpop.f32.mrb[0].mxu0
      %7314 = vmatprep.mubr.f32.mxu0 %v6760
      %7315 = vmatmul.mubr.f32.gmra.mrb[0].mxu0 %v6759
      %v7316 = vpop.f32.mrb[0].mxu0
      %v7317 = vadd.f32 %v7172, %v7316
      %v7318 = vpop.f32.mrb[0].mxu0
      %7319 = vmatprep.mubr.f32.mxu0 %v6767
      %7320 = vmatmul.mubr.f32.gmra.mrb[0].mxu0 %v6766
      %v7321 = vpop.f32.mrb[0].mxu0
      %v7322 = vadd.f32 %v7177, %v7321
      %v7323 = vpop.f32.mrb[0].mxu0
      %7324 = vmatprep.mubr.f32.mxu0 %v6774
      %7325 = vmatmul.mubr.f32.gmra.mrb[0].mxu0 %v6773
      %v7326 = vpop.f32.mrb[0].mxu0
      %v7327 = vadd.f32 %v7182, %v7326
      %v7328 = vpop.f32.mrb[0].mxu0
      %7329 = vmatprep.mubr.f32.mxu0 %v6781
      %7330 = vmatmul.mubr.f32.gmra.mrb[0].mxu0 %v6780
      %v7331 = vpop.f32.mrb[0].mxu0
      %v7332 = vadd.f32 %v7187, %v7331
      %v7333 = vpop.f32.mrb[0].mxu0
      %7334 = vmatprep.mubr.f32.mxu0 %v6788
      %7335 = vmatmul.mubr.f32.gmra.mrb[0].mxu0 %v6787
      %v7336 = vpop.f32.mrb[0].mxu0
      %v7337 = vadd.f32 %v7192, %v7336
      %v7338 = vpop.f32.mrb[0].mxu0
      %7339 = vmatprep.mubr.f32.mxu0 %v6795
      %7340 = vmatmul.mubr.f32.gmra.mrb[0].mxu0 %v6794
      %v7341 = vpop.f32.mrb[0].mxu0
      %v7342 = vadd.f32 %v7197, %v7341
      %v7343 = vpop.f32.mrb[0].mxu0
      %7344 = vdwg.mxu0
      %7345 = vmatprep.subr.mxu0 0.0
      %7346 = vmatpush1.msra.mxu0 %v6894
      %7347 = vmatprep.subr.mxu0 0.0
      %7348 = vmatpush1.msra.mxu0 %v6895
      %7349 = vmatprep.subr.mxu0 0.0
      %7350 = vmatpush1.msra.mxu0 %v6896
      %7351 = vmatprep.subr.mxu0 0.0
      %7352 = vmatpush1.msra.mxu0 %v6897
      %7353 = vmatprep.subr.mxu0 0.0
      %7354 = vmatpush1.msra.mxu0 %v6898
      %7355 = vmatprep.subr.mxu0 0.0
      %7356 = vmatpush1.msra.mxu0 %v6899
      %7357 = vmatprep.subr.mxu0 0.0
      %7358 = vmatpush1.msra.mxu0 %v6900
      %7359 = vmatprep.subr.mxu0 0.0
      %7360 = vmatpush1.msra.mxu0 %v6901
      %7361 = vmatprep.subr.mxu0 0.0
      %7362 = vmatpush1.msra.mxu0 %v6902
      %7363 = vmatprep.subr.mxu0 0.0
      %7364 = vmatpush1.msra.mxu0 %v6903
      %7365 = vmatprep.subr.mxu0 0.0
      %7366 = vmatpush1.msra.mxu0 %v6904
      %7367 = vmatprep.subr.mxu0 0.0
      %7368 = vmatpush1.msra.mxu0 %v6905
      %7369 = vmatprep.subr.mxu0 0.0
      %7370 = vmatpush1.msra.mxu0 %v6906
      %7371 = vmatprep.subr.mxu0 0.0
      %7372 = vmatpush1.msra.mxu0 %v6907
      %7373 = vmatprep.subr.mxu0 0.0
      %7374 = vmatpush1.msra.mxu0 %v6908
      %7375 = vmatprep.subr.mxu0 0.0
      %7376 = vmatpush1.msra.mxu0 %v6909
      %7377 = vmatprep.subr.mxu0 0.0
      %7378 = vmatpush1.msra.mxu0 0.0
      %7379 = vmatprep.subr.mxu0 0.0
      %7380 = vmatpush1.msra.mxu0 0.0
      %7381 = vmatprep.subr.mxu0 0.0
      %7382 = vmatpush1.msra.mxu0 0.0
      %7383 = vmatprep.subr.mxu0 0.0
      %7384 = vmatpush1.msra.mxu0 0.0
      %7385 = vmatprep.subr.mxu0 0.0
      %7386 = vmatpush1.msra.mxu0 0.0
      %7387 = vmatprep.subr.mxu0 0.0
      %7388 = vmatpush1.msra.mxu0 0.0
      %7389 = vmatprep.subr.mxu0 0.0
      %7390 = vmatpush1.msra.mxu0 0.0
      %7391 = vmatprep.subr.mxu0 0.0
      %7392 = vmatpush1.msra.mxu0 0.0
      %7393 = vmatprep.subr.mxu0 0.0
      %7394 = vmatpush1.msra.mxu0 0.0
      %7395 = vmatprep.subr.mxu0 0.0
      %7396 = vmatpush1.msra.mxu0 0.0
      %7397 = vmatprep.subr.mxu0 0.0
      %7398 = vmatpush1.msra.mxu0 0.0
      %7399 = vmatprep.subr.mxu0 0.0
      %7400 = vmatpush1.msra.mxu0 0.0
      %7401 = vmatprep.subr.mxu0 0.0
      %7402 = vmatpush1.msra.mxu0 0.0
      %7403 = vmatprep.subr.mxu0 0.0
      %7404 = vmatpush1.msra.mxu0 0.0
      %7405 = vmatprep.subr.mxu0 0.0
      %7406 = vmatpush1.msra.mxu0 0.0
      %7407 = vmatprep.subr.mxu0 0.0
      %7408 = vmatpush1.msra.mxu0 0.0
      %7409 = vmatprep.mubr.f32.mxu0 0.0
      %7410 = vmatmul.mubr.f32.gmra.mrb[0].mxu0 %v6691
      %v7411 = vpop.f32.mrb[0].mxu0
      %v7412 = vadd.f32 %v7267, %v7411
      %v7413 = vpop.f32.mrb[0].mxu0
      %7414 = vmatprep.mubr.f32.mxu0 0.0
      %7415 = vmatmul.mubr.f32.gmra.mrb[0].mxu0 %v6698
      %v7416 = vpop.f32.mrb[0].mxu0
      %v7417 = vadd.f32 %v7272, %v7416
      %v7418 = vpop.f32.mrb[0].mxu0
      %7419 = vmatprep.mubr.f32.mxu0 0.0
      %7420 = vmatmul.mubr.f32.gmra.mrb[0].mxu0 %v6705
      %v7421 = vpop.f32.mrb[0].mxu0
      %v7422 = vadd.f32 %v7277, %v7421
      %v7423 = vpop.f32.mrb[0].mxu0
      %7424 = vmatprep.mubr.f32.mxu0 0.0
      %7425 = vmatmul.mubr.f32.gmra.mrb[0].mxu0 %v6712
      %v7426 = vpop.f32.mrb[0].mxu0
      %v7427 = vadd.f32 %v7282, %v7426
      %v7428 = vpop.f32.mrb[0].mxu0
      %7429 = vmatprep.mubr.f32.mxu0 0.0
      %7430 = vmatmul.mubr.f32.gmra.mrb[0].mxu0 %v6719
      %v7431 = vpop.f32.mrb[0].mxu0
      %v7432 = vadd.f32 %v7287, %v7431
      %v7433 = vpop.f32.mrb[0].mxu0
      %7434 = vmatprep.mubr.f32.mxu0 0.0
      %7435 = vmatmul.mubr.f32.gmra.mrb[0].mxu0 %v6726
      %v7436 = vpop.f32.mrb[0].mxu0
      %v7437 = vadd.f32 %v7292, %v7436
      %v7438 = vpop.f32.mrb[0].mxu0
      %7439 = vmatprep.mubr.f32.mxu0 0.0
      %7440 = vmatmul.mubr.f32.gmra.mrb[0].mxu0 %v6733
      %v7441 = vpop.f32.mrb[0].mxu0
      %v7442 = vadd.f32 %v7297, %v7441
      %v7443 = vpop.f32.mrb[0].mxu0
      %7444 = vmatprep.mubr.f32.mxu0 0.0
      %7445 = vmatmul.mubr.f32.gmra.mrb[0].mxu0 %v6740
      %v7446 = vpop.f32.mrb[0].mxu0
      %v7447 = vadd.f32 %v7302, %v7446
      %v7448 = vpop.f32.mrb[0].mxu0
      %7449 = vmatprep.mubr.f32.mxu0 0.0
      %7450 = vmatmul.mubr.f32.gmra.mrb[0].mxu0 %v6747
      %v7451 = vpop.f32.mrb[0].mxu0
      %v7452 = vadd.f32 %v7307, %v7451
      %v7453 = vpop.f32.mrb[0].mxu0
      %7454 = vmatprep.mubr.f32.mxu0 0.0
      %7455 = vmatmul.mubr.f32.gmra.mrb[0].mxu0 %v6754
      %v7456 = vpop.f32.mrb[0].mxu0
      %v7457 = vadd.f32 %v7312, %v7456
      %v7458 = vpop.f32.mrb[0].mxu0
      %7459 = vmatprep.mubr.f32.mxu0 0.0
      %7460 = vmatmul.mubr.f32.gmra.mrb[0].mxu0 %v6761
      %v7461 = vpop.f32.mrb[0].mxu0
      %v7462 = vadd.f32 %v7317, %v7461
      %v7463 = vpop.f32.mrb[0].mxu0
      %7464 = vmatprep.mubr.f32.mxu0 0.0
      %7465 = vmatmul.mubr.f32.gmra.mrb[0].mxu0 %v6768
      %v7466 = vpop.f32.mrb[0].mxu0
      %v7467 = vadd.f32 %v7322, %v7466
      %v7468 = vpop.f32.mrb[0].mxu0
      %7469 = vmatprep.mubr.f32.mxu0 0.0
      %7470 = vmatmul.mubr.f32.gmra.mrb[0].mxu0 %v6775
      %v7471 = vpop.f32.mrb[0].mxu0
      %v7472 = vadd.f32 %v7327, %v7471
      %v7473 = vpop.f32.mrb[0].mxu0
      %7474 = vmatprep.mubr.f32.mxu0 0.0
      %7475 = vmatmul.mubr.f32.gmra.mrb[0].mxu0 %v6782
      %v7476 = vpop.f32.mrb[0].mxu0
      %v7477 = vadd.f32 %v7332, %v7476
      %v7478 = vpop.f32.mrb[0].mxu0
      %7479 = vmatprep.mubr.f32.mxu0 0.0
      %7480 = vmatmul.mubr.f32.gmra.mrb[0].mxu0 %v6789
      %v7481 = vpop.f32.mrb[0].mxu0
      %v7482 = vadd.f32 %v7337, %v7481
      %v7483 = vpop.f32.mrb[0].mxu0
      %7484 = vmatprep.mubr.f32.mxu0 0.0
      %7485 = vmatmul.mubr.f32.gmra.mrb[0].mxu0 %v6796
      %v7486 = vpop.f32.mrb[0].mxu0
      %v7487 = vadd.f32 %v7342, %v7486
      %v7488 = vpop.f32.mrb[0].mxu0
      %7489 = vdwg.mxu0
      %v7490 = vld [vmem:[#allocation5] sm:$0xff]
      %v7491 = vld [vmem:[#allocation5 + $0x8] sm:$0xff]
      %v7492 = vld [vmem:[#allocation5 + $0x10] sm:$0xff]
      %v7493 = vld [vmem:[#allocation5 + $0x18] sm:$0xff]
      %v7494 = vld [vmem:[#allocation5 + $0x20] sm:$0xff]
      %v7495 = vld [vmem:[#allocation5 + $0x28] sm:$0xff]
      %v7496 = vld [vmem:[#allocation5 + $0x30] sm:$0xff]
      %v7497 = vld [vmem:[#allocation5 + $0x38] sm:$0xff]
      %v7498 = vld [vmem:[#allocation5 + $0x40] sm:$0xff]
      %v7499 = vld [vmem:[#allocation5 + $0x48] sm:$0xff]
      %v7500 = vld [vmem:[#allocation5 + $0x50] sm:$0xff]
      %v7501 = vld [vmem:[#allocation5 + $0x58] sm:$0xff]
      %v7502 = vld [vmem:[#allocation5 + $0x60] sm:$0xff]
      %v7503 = vld [vmem:[#allocation5 + $0x68] sm:$0xff]
      %v7504 = vld [vmem:[#allocation5 + $0x70] sm:$0xff]
      %v7505 = vld [vmem:[#allocation5 + $0x78] sm:$0xff]
      %v7506 = vadd.f32 %v7490, %v7412
      %v7507 = vadd.f32 %v7491, %v7417
      %v7508 = vadd.f32 %v7492, %v7422
      %v7509 = vadd.f32 %v7493, %v7427
      %v7510 = vadd.f32 %v7494, %v7432
      %v7511 = vadd.f32 %v7495, %v7437
      %v7512 = vadd.f32 %v7496, %v7442
      %v7513 = vadd.f32 %v7497, %v7447
      %v7514 = vadd.f32 %v7498, %v7452
      %v7515 = vadd.f32 %v7499, %v7457
      %v7516 = vadd.f32 %v7500, %v7462
      %v7517 = vadd.f32 %v7501, %v7467
      %v7518 = vadd.f32 %v7502, %v7472
      %v7519 = vadd.f32 %v7503, %v7477
      %v7520 = vadd.f32 %v7504, %v7482
      %v7521 = vadd.f32 %v7505, %v7487
      %7522 = vst [vmem:[#allocation5] sm:$0xff] %v7506
      %7523 = vst [vmem:[#allocation5 + $0x8] sm:$0xff] %v7507
      %7524 = vst [vmem:[#allocation5 + $0x10] sm:$0xff] %v7508
      %7525 = vst [vmem:[#allocation5 + $0x18] sm:$0xff] %v7509
      %7526 = vst [vmem:[#allocation5 + $0x20] sm:$0xff] %v7510
      %7527 = vst [vmem:[#allocation5 + $0x28] sm:$0xff] %v7511
      %7528 = vst [vmem:[#allocation5 + $0x30] sm:$0xff] %v7512
      %7529 = vst [vmem:[#allocation5 + $0x38] sm:$0xff] %v7513
      %7530 = vst [vmem:[#allocation5 + $0x40] sm:$0xff] %v7514
      %7531 = vst [vmem:[#allocation5 + $0x48] sm:$0xff] %v7515
      %7532 = vst [vmem:[#allocation5 + $0x50] sm:$0xff] %v7516
      %7533 = vst [vmem:[#allocation5 + $0x58] sm:$0xff] %v7517
      %7534 = vst [vmem:[#allocation5 + $0x60] sm:$0xff] %v7518
      %7535 = vst [vmem:[#allocation5 + $0x68] sm:$0xff] %v7519
      %7536 = vst [vmem:[#allocation5 + $0x70] sm:$0xff] %v7520
      %7537 = vst [vmem:[#allocation5 + $0x78] sm:$0xff] %v7521
      %s7538 = scalar_lea.vmem [#allocation3], 672
      %v7539 = vld [vmem:[%s7538] sm:$0xff]
      %v7540 = vld [vmem:[%s7538 + $0x8] sm:$0xff]
      %v7541 = vld [vmem:[%s7538 + $0x10] sm:$0xff]
      %v7542 = vld [vmem:[%s7538 + $0x18] sm:$0xff]
      %v7543 = vld [vmem:[%s7538 + $0x20] sm:$0xff]
      %v7544 = vld [vmem:[%s7538 + $0x28] sm:$0xff]
      %v7545 = vld [vmem:[%s7538 + $0x30] sm:$0xff]
      %v7546 = vld [vmem:[%s7538 + $0x38] sm:$0xff]
      %v7547 = vld [vmem:[%s7538 + $0x40] sm:$0xff]
      %v7548 = vld [vmem:[%s7538 + $0x48] sm:$0xff]
      %v7549 = vld [vmem:[%s7538 + $0x50] sm:$0xff]
      %v7550 = vld [vmem:[%s7538 + $0x58] sm:$0xff]
      %v7551 = vld [vmem:[%s7538 + $0x60] sm:$0xff]
      %v7552 = vld [vmem:[%s7538 + $0x68] sm:$0xff]
      %v7553 = vld [vmem:[%s7538 + $0x70] sm:$0xff]
      %v7554 = vld [vmem:[%s7538 + $0x78] sm:$0xff]
      %v7555 = vld [vmem:[%s7538 + $0x80] sm:$0xff]
      %v7556 = vld [vmem:[%s7538 + $0x88] sm:$0xff]
      %v7557 = vld [vmem:[%s7538 + $0x90] sm:$0xff]
      %v7558 = vld [vmem:[%s7538 + $0x98] sm:$0xff]
      %v7559 = vld [vmem:[%s7538 + $0xa0] sm:$0xff]
      %v7560 = vld [vmem:[%s7538 + $0xa8] sm:$0xff]
      %v7561 = vld [vmem:[%s7538 + $0xb0] sm:$0xff]
      %v7562 = vld [vmem:[%s7538 + $0xb8] sm:$0xff]
      %v7563 = vld [vmem:[%s7538 + $0xc0] sm:$0xff]
      %v7564 = vld [vmem:[%s7538 + $0xc8] sm:$0xff]
      %v7565 = vld [vmem:[%s7538 + $0xd0] sm:$0xff]
      %v7566 = vld [vmem:[%s7538 + $0xd8] sm:$0xff]
      %v7567 = vld [vmem:[%s7538 + $0xe0] sm:$0xff]
      %v7568 = vld [vmem:[%s7538 + $0xe8] sm:$0xff]
      %v7569 = vld [vmem:[%s7538 + $0xf0] sm:$0xff]
      %v7570 = vld [vmem:[%s7538 + $0xf8] sm:$0xff]
      %v7571 = vld [vmem:[%s7538 + $0x100] sm:$0xff]
      %v7572 = vld [vmem:[%s7538 + $0x108] sm:$0xff]
      %v7573 = vld [vmem:[%s7538 + $0x110] sm:$0xff]
      %v7574 = vld [vmem:[%s7538 + $0x118] sm:$0xff]
      %v7575 = vld [vmem:[%s7538 + $0x120] sm:$0xff]
      %v7576 = vld [vmem:[%s7538 + $0x128] sm:$0xff]
      %v7577 = vld [vmem:[%s7538 + $0x130] sm:$0xff]
      %v7578 = vld [vmem:[%s7538 + $0x138] sm:$0xff]
      %v7579 = vld [vmem:[%s7538 + $0x140] sm:$0xff]
      %v7580 = vld [vmem:[%s7538 + $0x148] sm:$0xff]
      %v7581 = vld [vmem:[%s7538 + $0x150] sm:$0xff]
      %v7582 = vld [vmem:[%s7538 + $0x158] sm:$0xff]
      %v7583 = vld [vmem:[%s7538 + $0x160] sm:$0xff]
      %v7584 = vld [vmem:[%s7538 + $0x168] sm:$0xff]
      %v7585 = vld [vmem:[%s7538 + $0x170] sm:$0xff]
      %v7586 = vld [vmem:[%s7538 + $0x178] sm:$0xff]
      %v7587 = vld [vmem:[%s7538 + $0x180] sm:$0xff]
      %v7588 = vld [vmem:[%s7538 + $0x188] sm:$0xff]
      %v7589 = vld [vmem:[%s7538 + $0x190] sm:$0xff]
      %v7590 = vld [vmem:[%s7538 + $0x198] sm:$0xff]
      %v7591 = vld [vmem:[%s7538 + $0x1a0] sm:$0xff]
      %v7592 = vld [vmem:[%s7538 + $0x1a8] sm:$0xff]
      %v7593 = vld [vmem:[%s7538 + $0x1b0] sm:$0xff]
      %v7594 = vld [vmem:[%s7538 + $0x1b8] sm:$0xff]
      %v7595 = vld [vmem:[%s7538 + $0x1c0] sm:$0xff]
      %v7596 = vld [vmem:[%s7538 + $0x1c8] sm:$0xff]
      %v7597 = vld [vmem:[%s7538 + $0x1d0] sm:$0xff]
      %v7598 = vld [vmem:[%s7538 + $0x1d8] sm:$0xff]
      %v7599 = vld [vmem:[%s7538 + $0x1e0] sm:$0xff]
      %v7600 = vld [vmem:[%s7538 + $0x1e8] sm:$0xff]
      %v7601 = vld [vmem:[%s7538 + $0x1f0] sm:$0xff]
      %v7602 = vld [vmem:[%s7538 + $0x1f8] sm:$0xff]
      %v7603 = vld [vmem:[%s7538 + $0x200] sm:$0xff]
      %v7604 = vld [vmem:[%s7538 + $0x208] sm:$0xff]
      %v7605 = vld [vmem:[%s7538 + $0x210] sm:$0xff]
      %v7606 = vld [vmem:[%s7538 + $0x218] sm:$0xff]
      %v7607 = vld [vmem:[%s7538 + $0x220] sm:$0xff]
      %v7608 = vld [vmem:[%s7538 + $0x228] sm:$0xff]
      %v7609 = vld [vmem:[%s7538 + $0x230] sm:$0xff]
      %v7610 = vld [vmem:[%s7538 + $0x238] sm:$0xff]
      %v7611 = vld [vmem:[%s7538 + $0x240] sm:$0xff]
      %v7612 = vld [vmem:[%s7538 + $0x248] sm:$0xff]
      %v7613 = vld [vmem:[%s7538 + $0x250] sm:$0xff]
      %v7614 = vld [vmem:[%s7538 + $0x258] sm:$0xff]
      %v7615 = vld [vmem:[%s7538 + $0x260] sm:$0xff]
      %v7616 = vld [vmem:[%s7538 + $0x268] sm:$0xff]
      %v7617 = vld [vmem:[%s7538 + $0x270] sm:$0xff]
      %v7618 = vld [vmem:[%s7538 + $0x278] sm:$0xff]
      %v7619 = vld [vmem:[%s7538 + $0x280] sm:$0xff]
      %v7620 = vld [vmem:[%s7538 + $0x288] sm:$0xff]
      %v7621 = vld [vmem:[%s7538 + $0x290] sm:$0xff]
      %v7622 = vld [vmem:[%s7538 + $0x298] sm:$0xff]
      %v7623 = vld [vmem:[%s7538 + $0x2a0] sm:$0xff]
      %v7624 = vld [vmem:[%s7538 + $0x2a8] sm:$0xff]
      %v7625 = vld [vmem:[%s7538 + $0x2b0] sm:$0xff]
      %v7626 = vld [vmem:[%s7538 + $0x2b8] sm:$0xff]
      %v7627 = vld [vmem:[%s7538 + $0x2c0] sm:$0xff]
      %v7628 = vld [vmem:[%s7538 + $0x2c8] sm:$0xff]
      %v7629 = vld [vmem:[%s7538 + $0x2d0] sm:$0xff]
      %v7630 = vld [vmem:[%s7538 + $0x2d8] sm:$0xff]
      %v7631 = vld [vmem:[%s7538 + $0x2e0] sm:$0xff]
      %v7632 = vld [vmem:[%s7538 + $0x2e8] sm:$0xff]
      %v7633 = vld [vmem:[%s7538 + $0x2f0] sm:$0xff]
      %v7634 = vld [vmem:[%s7538 + $0x2f8] sm:$0xff]
      %v7635 = vld [vmem:[%s7538 + $0x300] sm:$0xff]
      %v7636 = vld [vmem:[%s7538 + $0x308] sm:$0xff]
      %v7637 = vld [vmem:[%s7538 + $0x310] sm:$0xff]
      %v7638 = vld [vmem:[%s7538 + $0x318] sm:$0xff]
      %v7639 = vld [vmem:[%s7538 + $0x320] sm:$0xff]
      %v7640 = vld [vmem:[%s7538 + $0x328] sm:$0xff]
      %v7641 = vld [vmem:[%s7538 + $0x330] sm:$0xff]
      %v7642 = vld [vmem:[%s7538 + $0x338] sm:$0xff]
      %v7643 = vld [vmem:[%s7538 + $0x340] sm:$0xff]
      %v7644 = vld [vmem:[%s7538 + $0x348] sm:$0xff]
      %v7645 = vld [vmem:[%s7538 + $0x350] sm:$0xff]
      %v7646 = vld [vmem:[%s7538 + $0x358] sm:$0xff]
      %v7647 = vld [vmem:[%s7538 + $0x360] sm:$0xff]
      %v7648 = vld [vmem:[%s7538 + $0x368] sm:$0xff]
      %v7649 = vld [vmem:[%s7538 + $0x370] sm:$0xff]
      %v7650 = vld [vmem:[%s7538 + $0x378] sm:$0xff]
      %s7651 = scalar_lea.vmem [#allocation4], 5376
      %v7652 = vld [vmem:[%s7651] sm:$0xff]
      %v7653 = vld [vmem:[%s7651 + $0x8] sm:$0xff]
      %v7654 = vld [vmem:[%s7651 + $0x10] sm:$0xff]
      %v7655 = vld [vmem:[%s7651 + $0x18] sm:$0xff]
      %v7656 = vld [vmem:[%s7651 + $0x20] sm:$0xff]
      %v7657 = vld [vmem:[%s7651 + $0x28] sm:$0xff]
      %v7658 = vld [vmem:[%s7651 + $0x30] sm:$0xff]
      %v7659 = vld [vmem:[%s7651 + $0x38] sm:$0xff]
      %v7660 = vld [vmem:[%s7651 + $0x40] sm:$0xff]
      %v7661 = vld [vmem:[%s7651 + $0x48] sm:$0xff]
      %v7662 = vld [vmem:[%s7651 + $0x50] sm:$0xff]
      %v7663 = vld [vmem:[%s7651 + $0x58] sm:$0xff]
      %v7664 = vld [vmem:[%s7651 + $0x60] sm:$0xff]
      %v7665 = vld [vmem:[%s7651 + $0x68] sm:$0xff]
      %v7666 = vld [vmem:[%s7651 + $0x70] sm:$0xff]
      %v7667 = vld [vmem:[%s7651 + $0x78] sm:$0xff]
      %v7668 = vld [vmem:[%s7651 + $0x80] sm:$0xff]
      %v7669 = vld [vmem:[%s7651 + $0x88] sm:$0xff]
      %v7670 = vld [vmem:[%s7651 + $0x90] sm:$0xff]
      %v7671 = vld [vmem:[%s7651 + $0x98] sm:$0xff]
      %v7672 = vld [vmem:[%s7651 + $0xa0] sm:$0xff]
      %v7673 = vld [vmem:[%s7651 + $0xa8] sm:$0xff]
      %v7674 = vld [vmem:[%s7651 + $0xb0] sm:$0xff]
      %v7675 = vld [vmem:[%s7651 + $0xb8] sm:$0xff]
      %v7676 = vld [vmem:[%s7651 + $0xc0] sm:$0xff]
      %v7677 = vld [vmem:[%s7651 + $0xc8] sm:$0xff]
      %v7678 = vld [vmem:[%s7651 + $0xd0] sm:$0xff]
      %v7679 = vld [vmem:[%s7651 + $0xd8] sm:$0xff]
      %v7680 = vld [vmem:[%s7651 + $0xe0] sm:$0xff]
      %v7681 = vld [vmem:[%s7651 + $0xe8] sm:$0xff]
      %v7682 = vld [vmem:[%s7651 + $0xf0] sm:$0xff]
      %v7683 = vld [vmem:[%s7651 + $0xf8] sm:$0xff]
      %v7684 = vld [vmem:[%s7651 + $0x100] sm:$0xff]
      %v7685 = vld [vmem:[%s7651 + $0x108] sm:$0xff]
      %v7686 = vld [vmem:[%s7651 + $0x110] sm:$0xff]
      %v7687 = vld [vmem:[%s7651 + $0x118] sm:$0xff]
      %v7688 = vld [vmem:[%s7651 + $0x120] sm:$0xff]
      %v7689 = vld [vmem:[%s7651 + $0x128] sm:$0xff]
      %v7690 = vld [vmem:[%s7651 + $0x130] sm:$0xff]
      %v7691 = vld [vmem:[%s7651 + $0x138] sm:$0xff]
      %v7692 = vld [vmem:[%s7651 + $0x140] sm:$0xff]
      %v7693 = vld [vmem:[%s7651 + $0x148] sm:$0xff]
      %v7694 = vld [vmem:[%s7651 + $0x150] sm:$0xff]
      %v7695 = vld [vmem:[%s7651 + $0x158] sm:$0xff]
      %v7696 = vld [vmem:[%s7651 + $0x160] sm:$0xff]
      %v7697 = vld [vmem:[%s7651 + $0x168] sm:$0xff]
      %v7698 = vld [vmem:[%s7651 + $0x170] sm:$0xff]
      %v7699 = vld [vmem:[%s7651 + $0x178] sm:$0xff]
      %v7700 = vld [vmem:[%s7651 + $0x180] sm:$0xff]
      %v7701 = vld [vmem:[%s7651 + $0x188] sm:$0xff]
      %v7702 = vld [vmem:[%s7651 + $0x190] sm:$0xff]
      %v7703 = vld [vmem:[%s7651 + $0x198] sm:$0xff]
      %v7704 = vld [vmem:[%s7651 + $0x1a0] sm:$0xff]
      %v7705 = vld [vmem:[%s7651 + $0x1a8] sm:$0xff]
      %v7706 = vld [vmem:[%s7651 + $0x1b0] sm:$0xff]
      %v7707 = vld [vmem:[%s7651 + $0x1b8] sm:$0xff]
      %v7708 = vld [vmem:[%s7651 + $0x1c0] sm:$0xff]
      %v7709 = vld [vmem:[%s7651 + $0x1c8] sm:$0xff]
      %v7710 = vld [vmem:[%s7651 + $0x1d0] sm:$0xff]
      %v7711 = vld [vmem:[%s7651 + $0x1d8] sm:$0xff]
      %v7712 = vld [vmem:[%s7651 + $0x1e0] sm:$0xff]
      %v7713 = vld [vmem:[%s7651 + $0x1e8] sm:$0xff]
      %v7714 = vld [vmem:[%s7651 + $0x1f0] sm:$0xff]
      %v7715 = vld [vmem:[%s7651 + $0x1f8] sm:$0xff]
      %v7716 = vld [vmem:[%s7651 + $0x200] sm:$0xff]
      %v7717 = vld [vmem:[%s7651 + $0x208] sm:$0xff]
      %v7718 = vld [vmem:[%s7651 + $0x210] sm:$0xff]
      %v7719 = vld [vmem:[%s7651 + $0x218] sm:$0xff]
      %v7720 = vld [vmem:[%s7651 + $0x220] sm:$0xff]
      %v7721 = vld [vmem:[%s7651 + $0x228] sm:$0xff]
      %v7722 = vld [vmem:[%s7651 + $0x230] sm:$0xff]
      %v7723 = vld [vmem:[%s7651 + $0x238] sm:$0xff]
      %v7724 = vld [vmem:[%s7651 + $0x240] sm:$0xff]
      %v7725 = vld [vmem:[%s7651 + $0x248] sm:$0xff]
      %v7726 = vld [vmem:[%s7651 + $0x250] sm:$0xff]
      %v7727 = vld [vmem:[%s7651 + $0x258] sm:$0xff]
      %v7728 = vld [vmem:[%s7651 + $0x260] sm:$0xff]
      %v7729 = vld [vmem:[%s7651 + $0x268] sm:$0xff]
      %v7730 = vld [vmem:[%s7651 + $0x270] sm:$0xff]
      %v7731 = vld [vmem:[%s7651 + $0x278] sm:$0xff]
      %v7732 = vld [vmem:[%s7651 + $0x280] sm:$0xff]
      %v7733 = vld [vmem:[%s7651 + $0x288] sm:$0xff]
      %v7734 = vld [vmem:[%s7651 + $0x290] sm:$0xff]
      %v7735 = vld [vmem:[%s7651 + $0x298] sm:$0xff]
      %v7736 = vld [vmem:[%s7651 + $0x2a0] sm:$0xff]
      %v7737 = vld [vmem:[%s7651 + $0x2a8] sm:$0xff]
      %v7738 = vld [vmem:[%s7651 + $0x2b0] sm:$0xff]
      %v7739 = vld [vmem:[%s7651 + $0x2b8] sm:$0xff]
      %v7740 = vld [vmem:[%s7651 + $0x2c0] sm:$0xff]
      %v7741 = vld [vmem:[%s7651 + $0x2c8] sm:$0xff]
      %v7742 = vld [vmem:[%s7651 + $0x2d0] sm:$0xff]
      %v7743 = vld [vmem:[%s7651 + $0x2d8] sm:$0xff]
      %v7744 = vld [vmem:[%s7651 + $0x2e0] sm:$0xff]
      %v7745 = vld [vmem:[%s7651 + $0x2e8] sm:$0xff]
      %v7746 = vld [vmem:[%s7651 + $0x2f0] sm:$0xff]
      %v7747 = vld [vmem:[%s7651 + $0x2f8] sm:$0xff]
      %v7748 = vld [vmem:[%s7651 + $0x300] sm:$0xff]
      %v7749 = vld [vmem:[%s7651 + $0x308] sm:$0xff]
      %v7750 = vld [vmem:[%s7651 + $0x310] sm:$0xff]
      %v7751 = vld [vmem:[%s7651 + $0x318] sm:$0xff]
      %v7752 = vld [vmem:[%s7651 + $0x320] sm:$0xff]
      %v7753 = vld [vmem:[%s7651 + $0x328] sm:$0xff]
      %v7754 = vld [vmem:[%s7651 + $0x330] sm:$0xff]
      %v7755 = vld [vmem:[%s7651 + $0x338] sm:$0xff]
      %v7756 = vld [vmem:[%s7651 + $0x340] sm:$0xff]
      %v7757 = vld [vmem:[%s7651 + $0x348] sm:$0xff]
      %v7758 = vld [vmem:[%s7651 + $0x350] sm:$0xff]
      %v7759 = vld [vmem:[%s7651 + $0x358] sm:$0xff]
      %v7760 = vld [vmem:[%s7651 + $0x360] sm:$0xff]
      %v7761 = vld [vmem:[%s7651 + $0x368] sm:$0xff]
      %v7762 = vld [vmem:[%s7651 + $0x370] sm:$0xff]
      %v7763 = vld [vmem:[%s7651 + $0x378] sm:$0xff]
      %7764 = vmatprep.subr.mxu0 0.0
      %7765 = vmatpush1.msra.mxu0 %v7652
      %7766 = vmatprep.subr.mxu0 0.0
      %7767 = vmatpush1.msra.mxu0 %v7653
      %7768 = vmatprep.subr.mxu0 0.0
      %7769 = vmatpush1.msra.mxu0 %v7654
      %7770 = vmatprep.subr.mxu0 0.0
      %7771 = vmatpush1.msra.mxu0 %v7655
      %7772 = vmatprep.subr.mxu0 0.0
      %7773 = vmatpush1.msra.mxu0 %v7656
      %7774 = vmatprep.subr.mxu0 0.0
      %7775 = vmatpush1.msra.mxu0 %v7657
      %7776 = vmatprep.subr.mxu0 0.0
      %7777 = vmatpush1.msra.mxu0 %v7658
      %7778 = vmatprep.subr.mxu0 0.0
      %7779 = vmatpush1.msra.mxu0 %v7659
      %7780 = vmatprep.subr.mxu0 0.0
      %7781 = vmatpush1.msra.mxu0 %v7660
      %7782 = vmatprep.subr.mxu0 0.0
      %7783 = vmatpush1.msra.mxu0 %v7661
      %7784 = vmatprep.subr.mxu0 0.0
      %7785 = vmatpush1.msra.mxu0 %v7662
      %7786 = vmatprep.subr.mxu0 0.0
      %7787 = vmatpush1.msra.mxu0 %v7663
      %7788 = vmatprep.subr.mxu0 0.0
      %7789 = vmatpush1.msra.mxu0 %v7664
      %7790 = vmatprep.subr.mxu0 0.0
      %7791 = vmatpush1.msra.mxu0 %v7665
      %7792 = vmatprep.subr.mxu0 0.0
      %7793 = vmatpush1.msra.mxu0 %v7666
      %7794 = vmatprep.subr.mxu0 0.0
      %7795 = vmatpush1.msra.mxu0 %v7667
      %7796 = vmatprep.subr.mxu0 0.0
      %7797 = vmatpush1.msra.mxu0 %v7668
      %7798 = vmatprep.subr.mxu0 0.0
      %7799 = vmatpush1.msra.mxu0 %v7669
      %7800 = vmatprep.subr.mxu0 0.0
      %7801 = vmatpush1.msra.mxu0 %v7670
      %7802 = vmatprep.subr.mxu0 0.0
      %7803 = vmatpush1.msra.mxu0 %v7671
      %7804 = vmatprep.subr.mxu0 0.0
      %7805 = vmatpush1.msra.mxu0 %v7672
      %7806 = vmatprep.subr.mxu0 0.0
      %7807 = vmatpush1.msra.mxu0 %v7673
      %7808 = vmatprep.subr.mxu0 0.0
      %7809 = vmatpush1.msra.mxu0 %v7674
      %7810 = vmatprep.subr.mxu0 0.0
      %7811 = vmatpush1.msra.mxu0 %v7675
      %7812 = vmatprep.subr.mxu0 0.0
      %7813 = vmatpush1.msra.mxu0 %v7676
      %7814 = vmatprep.subr.mxu0 0.0
      %7815 = vmatpush1.msra.mxu0 %v7677
      %7816 = vmatprep.subr.mxu0 0.0
      %7817 = vmatpush1.msra.mxu0 %v7678
      %7818 = vmatprep.subr.mxu0 0.0
      %7819 = vmatpush1.msra.mxu0 %v7679
      %7820 = vmatprep.subr.mxu0 0.0
      %7821 = vmatpush1.msra.mxu0 %v7680
      %7822 = vmatprep.subr.mxu0 0.0
      %7823 = vmatpush1.msra.mxu0 %v7681
      %7824 = vmatprep.subr.mxu0 0.0
      %7825 = vmatpush1.msra.mxu0 %v7682
      %7826 = vmatprep.subr.mxu0 0.0
      %7827 = vmatpush1.msra.mxu0 %v7683
      %7828 = vmatprep.mubr.f32.mxu0 %v7540
      %7829 = vmatmul.mubr.f32.gmra.mrb[0].mxu0 %v7539
      %v7830 = vpop.f32.mrb[0].mxu0
      %v7831 = vadd.f32 0.0, %v7830
      %v7832 = vpop.f32.mrb[0].mxu0
      %7833 = vmatprep.mubr.f32.mxu0 %v7547
      %7834 = vmatmul.mubr.f32.gmra.mrb[0].mxu0 %v7546
      %v7835 = vpop.f32.mrb[0].mxu0
      %v7836 = vadd.f32 0.0, %v7835
      %v7837 = vpop.f32.mrb[0].mxu0
      %7838 = vmatprep.mubr.f32.mxu0 %v7554
      %7839 = vmatmul.mubr.f32.gmra.mrb[0].mxu0 %v7553
      %v7840 = vpop.f32.mrb[0].mxu0
      %v7841 = vadd.f32 0.0, %v7840
      %v7842 = vpop.f32.mrb[0].mxu0
      %7843 = vmatprep.mubr.f32.mxu0 %v7561
      %7844 = vmatmul.mubr.f32.gmra.mrb[0].mxu0 %v7560
      %v7845 = vpop.f32.mrb[0].mxu0
      %v7846 = vadd.f32 0.0, %v7845
      %v7847 = vpop.f32.mrb[0].mxu0
      %7848 = vmatprep.mubr.f32.mxu0 %v7568
      %7849 = vmatmul.mubr.f32.gmra.mrb[0].mxu0 %v7567
      %v7850 = vpop.f32.mrb[0].mxu0
      %v7851 = vadd.f32 0.0, %v7850
      %v7852 = vpop.f32.mrb[0].mxu0
      %7853 = vmatprep.mubr.f32.mxu0 %v7575
      %7854 = vmatmul.mubr.f32.gmra.mrb[0].mxu0 %v7574
      %v7855 = vpop.f32.mrb[0].mxu0
      %v7856 = vadd.f32 0.0, %v7855
      %v7857 = vpop.f32.mrb[0].mxu0
      %7858 = vmatprep.mubr.f32.mxu0 %v7582
      %7859 = vmatmul.mubr.f32.gmra.mrb[0].mxu0 %v7581
      %v7860 = vpop.f32.mrb[0].mxu0
      %v7861 = vadd.f32 0.0, %v7860
      %v7862 = vpop.f32.mrb[0].mxu0
      %7863 = vmatprep.mubr.f32.mxu0 %v7589
      %7864 = vmatmul.mubr.f32.gmra.mrb[0].mxu0 %v7588
      %v7865 = vpop.f32.mrb[0].mxu0
      %v7866 = vadd.f32 0.0, %v7865
      %v7867 = vpop.f32.mrb[0].mxu0
      %7868 = vmatprep.mubr.f32.mxu0 %v7596
      %7869 = vmatmul.mubr.f32.gmra.mrb[0].mxu0 %v7595
      %v7870 = vpop.f32.mrb[0].mxu0
      %v7871 = vadd.f32 0.0, %v7870
      %v7872 = vpop.f32.mrb[0].mxu0
      %7873 = vmatprep.mubr.f32.mxu0 %v7603
      %7874 = vmatmul.mubr.f32.gmra.mrb[0].mxu0 %v7602
      %v7875 = vpop.f32.mrb[0].mxu0
      %v7876 = vadd.f32 0.0, %v7875
      %v7877 = vpop.f32.mrb[0].mxu0
      %7878 = vmatprep.mubr.f32.mxu0 %v7610
      %7879 = vmatmul.mubr.f32.gmra.mrb[0].mxu0 %v7609
      %v7880 = vpop.f32.mrb[0].mxu0
      %v7881 = vadd.f32 0.0, %v7880
      %v7882 = vpop.f32.mrb[0].mxu0
      %7883 = vmatprep.mubr.f32.mxu0 %v7617
      %7884 = vmatmul.mubr.f32.gmra.mrb[0].mxu0 %v7616
      %v7885 = vpop.f32.mrb[0].mxu0
      %v7886 = vadd.f32 0.0, %v7885
      %v7887 = vpop.f32.mrb[0].mxu0
      %7888 = vmatprep.mubr.f32.mxu0 %v7624
      %7889 = vmatmul.mubr.f32.gmra.mrb[0].mxu0 %v7623
      %v7890 = vpop.f32.mrb[0].mxu0
      %v7891 = vadd.f32 0.0, %v7890
      %v7892 = vpop.f32.mrb[0].mxu0
      %7893 = vmatprep.mubr.f32.mxu0 %v7631
      %7894 = vmatmul.mubr.f32.gmra.mrb[0].mxu0 %v7630
      %v7895 = vpop.f32.mrb[0].mxu0
      %v7896 = vadd.f32 0.0, %v7895
      %v7897 = vpop.f32.mrb[0].mxu0
      %7898 = vmatprep.mubr.f32.mxu0 %v7638
      %7899 = vmatmul.mubr.f32.gmra.mrb[0].mxu0 %v7637
      %v7900 = vpop.f32.mrb[0].mxu0
      %v7901 = vadd.f32 0.0, %v7900
      %v7902 = vpop.f32.mrb[0].mxu0
      %7903 = vmatprep.mubr.f32.mxu0 %v7645
      %7904 = vmatmul.mubr.f32.gmra.mrb[0].mxu0 %v7644
      %v7905 = vpop.f32.mrb[0].mxu0
      %v7906 = vadd.f32 0.0, %v7905
      %v7907 = vpop.f32.mrb[0].mxu0
      %7908 = vdwg.mxu0
      %7909 = vmatprep.subr.mxu0 0.0
      %7910 = vmatpush1.msra.mxu0 %v7684
      %7911 = vmatprep.subr.mxu0 0.0
      %7912 = vmatpush1.msra.mxu0 %v7685
      %7913 = vmatprep.subr.mxu0 0.0
      %7914 = vmatpush1.msra.mxu0 %v7686
      %7915 = vmatprep.subr.mxu0 0.0
      %7916 = vmatpush1.msra.mxu0 %v7687
      %7917 = vmatprep.subr.mxu0 0.0
      %7918 = vmatpush1.msra.mxu0 %v7688
      %7919 = vmatprep.subr.mxu0 0.0
      %7920 = vmatpush1.msra.mxu0 %v7689
      %7921 = vmatprep.subr.mxu0 0.0
      %7922 = vmatpush1.msra.mxu0 %v7690
      %7923 = vmatprep.subr.mxu0 0.0
      %7924 = vmatpush1.msra.mxu0 %v7691
      %7925 = vmatprep.subr.mxu0 0.0
      %7926 = vmatpush1.msra.mxu0 %v7692
      %7927 = vmatprep.subr.mxu0 0.0
      %7928 = vmatpush1.msra.mxu0 %v7693
      %7929 = vmatprep.subr.mxu0 0.0
      %7930 = vmatpush1.msra.mxu0 %v7694
      %7931 = vmatprep.subr.mxu0 0.0
      %7932 = vmatpush1.msra.mxu0 %v7695
      %7933 = vmatprep.subr.mxu0 0.0
      %7934 = vmatpush1.msra.mxu0 %v7696
      %7935 = vmatprep.subr.mxu0 0.0
      %7936 = vmatpush1.msra.mxu0 %v7697
      %7937 = vmatprep.subr.mxu0 0.0
      %7938 = vmatpush1.msra.mxu0 %v7698
      %7939 = vmatprep.subr.mxu0 0.0
      %7940 = vmatpush1.msra.mxu0 %v7699
      %7941 = vmatprep.subr.mxu0 0.0
      %7942 = vmatpush1.msra.mxu0 %v7700
      %7943 = vmatprep.subr.mxu0 0.0
      %7944 = vmatpush1.msra.mxu0 %v7701
      %7945 = vmatprep.subr.mxu0 0.0
      %7946 = vmatpush1.msra.mxu0 %v7702
      %7947 = vmatprep.subr.mxu0 0.0
      %7948 = vmatpush1.msra.mxu0 %v7703
      %7949 = vmatprep.subr.mxu0 0.0
      %7950 = vmatpush1.msra.mxu0 %v7704
      %7951 = vmatprep.subr.mxu0 0.0
      %7952 = vmatpush1.msra.mxu0 %v7705
      %7953 = vmatprep.subr.mxu0 0.0
      %7954 = vmatpush1.msra.mxu0 %v7706
      %7955 = vmatprep.subr.mxu0 0.0
      %7956 = vmatpush1.msra.mxu0 %v7707
      %7957 = vmatprep.subr.mxu0 0.0
      %7958 = vmatpush1.msra.mxu0 %v7708
      %7959 = vmatprep.subr.mxu0 0.0
      %7960 = vmatpush1.msra.mxu0 %v7709
      %7961 = vmatprep.subr.mxu0 0.0
      %7962 = vmatpush1.msra.mxu0 %v7710
      %7963 = vmatprep.subr.mxu0 0.0
      %7964 = vmatpush1.msra.mxu0 %v7711
      %7965 = vmatprep.subr.mxu0 0.0
      %7966 = vmatpush1.msra.mxu0 %v7712
      %7967 = vmatprep.subr.mxu0 0.0
      %7968 = vmatpush1.msra.mxu0 %v7713
      %7969 = vmatprep.subr.mxu0 0.0
      %7970 = vmatpush1.msra.mxu0 %v7714
      %7971 = vmatprep.subr.mxu0 0.0
      %7972 = vmatpush1.msra.mxu0 %v7715
      %7973 = vmatprep.mubr.f32.mxu0 %v7542
      %7974 = vmatmul.mubr.f32.gmra.mrb[0].mxu0 %v7541
      %v7975 = vpop.f32.mrb[0].mxu0
      %v7976 = vadd.f32 %v7831, %v7975
      %v7977 = vpop.f32.mrb[0].mxu0
      %7978 = vmatprep.mubr.f32.mxu0 %v7549
      %7979 = vmatmul.mubr.f32.gmra.mrb[0].mxu0 %v7548
      %v7980 = vpop.f32.mrb[0].mxu0
      %v7981 = vadd.f32 %v7836, %v7980
      %v7982 = vpop.f32.mrb[0].mxu0
      %7983 = vmatprep.mubr.f32.mxu0 %v7556
      %7984 = vmatmul.mubr.f32.gmra.mrb[0].mxu0 %v7555
      %v7985 = vpop.f32.mrb[0].mxu0
      %v7986 = vadd.f32 %v7841, %v7985
      %v7987 = vpop.f32.mrb[0].mxu0
      %7988 = vmatprep.mubr.f32.mxu0 %v7563
      %7989 = vmatmul.mubr.f32.gmra.mrb[0].mxu0 %v7562
      %v7990 = vpop.f32.mrb[0].mxu0
      %v7991 = vadd.f32 %v7846, %v7990
      %v7992 = vpop.f32.mrb[0].mxu0
      %7993 = vmatprep.mubr.f32.mxu0 %v7570
      %7994 = vmatmul.mubr.f32.gmra.mrb[0].mxu0 %v7569
      %v7995 = vpop.f32.mrb[0].mxu0
      %v7996 = vadd.f32 %v7851, %v7995
      %v7997 = vpop.f32.mrb[0].mxu0
      %7998 = vmatprep.mubr.f32.mxu0 %v7577
      %7999 = vmatmul.mubr.f32.gmra.mrb[0].mxu0 %v7576
      %v8000 = vpop.f32.mrb[0].mxu0
      %v8001 = vadd.f32 %v7856, %v8000
      %v8002 = vpop.f32.mrb[0].mxu0
      %8003 = vmatprep.mubr.f32.mxu0 %v7584
      %8004 = vmatmul.mubr.f32.gmra.mrb[0].mxu0 %v7583
      %v8005 = vpop.f32.mrb[0].mxu0
      %v8006 = vadd.f32 %v7861, %v8005
      %v8007 = vpop.f32.mrb[0].mxu0
      %8008 = vmatprep.mubr.f32.mxu0 %v7591
      %8009 = vmatmul.mubr.f32.gmra.mrb[0].mxu0 %v7590
      %v8010 = vpop.f32.mrb[0].mxu0
      %v8011 = vadd.f32 %v7866, %v8010
      %v8012 = vpop.f32.mrb[0].mxu0
      %8013 = vmatprep.mubr.f32.mxu0 %v7598
      %8014 = vmatmul.mubr.f32.gmra.mrb[0].mxu0 %v7597
      %v8015 = vpop.f32.mrb[0].mxu0
      %v8016 = vadd.f32 %v7871, %v8015
      %v8017 = vpop.f32.mrb[0].mxu0
      %8018 = vmatprep.mubr.f32.mxu0 %v7605
      %8019 = vmatmul.mubr.f32.gmra.mrb[0].mxu0 %v7604
      %v8020 = vpop.f32.mrb[0].mxu0
      %v8021 = vadd.f32 %v7876, %v8020
      %v8022 = vpop.f32.mrb[0].mxu0
      %8023 = vmatprep.mubr.f32.mxu0 %v7612
      %8024 = vmatmul.mubr.f32.gmra.mrb[0].mxu0 %v7611
      %v8025 = vpop.f32.mrb[0].mxu0
      %v8026 = vadd.f32 %v7881, %v8025
      %v8027 = vpop.f32.mrb[0].mxu0
      %8028 = vmatprep.mubr.f32.mxu0 %v7619
      %8029 = vmatmul.mubr.f32.gmra.mrb[0].mxu0 %v7618
      %v8030 = vpop.f32.mrb[0].mxu0
      %v8031 = vadd.f32 %v7886, %v8030
      %v8032 = vpop.f32.mrb[0].mxu0
      %8033 = vmatprep.mubr.f32.mxu0 %v7626
      %8034 = vmatmul.mubr.f32.gmra.mrb[0].mxu0 %v7625
      %v8035 = vpop.f32.mrb[0].mxu0
      %v8036 = vadd.f32 %v7891, %v8035
      %v8037 = vpop.f32.mrb[0].mxu0
      %8038 = vmatprep.mubr.f32.mxu0 %v7633
      %8039 = vmatmul.mubr.f32.gmra.mrb[0].mxu0 %v7632
      %v8040 = vpop.f32.mrb[0].mxu0
      %v8041 = vadd.f32 %v7896, %v8040
      %v8042 = vpop.f32.mrb[0].mxu0
      %8043 = vmatprep.mubr.f32.mxu0 %v7640
      %8044 = vmatmul.mubr.f32.gmra.mrb[0].mxu0 %v7639
      %v8045 = vpop.f32.mrb[0].mxu0
      %v8046 = vadd.f32 %v7901, %v8045
      %v8047 = vpop.f32.mrb[0].mxu0
      %8048 = vmatprep.mubr.f32.mxu0 %v7647
      %8049 = vmatmul.mubr.f32.gmra.mrb[0].mxu0 %v7646
      %v8050 = vpop.f32.mrb[0].mxu0
      %v8051 = vadd.f32 %v7906, %v8050
      %v8052 = vpop.f32.mrb[0].mxu0
      %8053 = vdwg.mxu0
      %8054 = vmatprep.subr.mxu0 0.0
      %8055 = vmatpush1.msra.mxu0 %v7716
      %8056 = vmatprep.subr.mxu0 0.0
      %8057 = vmatpush1.msra.mxu0 %v7717
      %8058 = vmatprep.subr.mxu0 0.0
      %8059 = vmatpush1.msra.mxu0 %v7718
      %8060 = vmatprep.subr.mxu0 0.0
      %8061 = vmatpush1.msra.mxu0 %v7719
      %8062 = vmatprep.subr.mxu0 0.0
      %8063 = vmatpush1.msra.mxu0 %v7720
      %8064 = vmatprep.subr.mxu0 0.0
      %8065 = vmatpush1.msra.mxu0 %v7721
      %8066 = vmatprep.subr.mxu0 0.0
      %8067 = vmatpush1.msra.mxu0 %v7722
      %8068 = vmatprep.subr.mxu0 0.0
      %8069 = vmatpush1.msra.mxu0 %v7723
      %8070 = vmatprep.subr.mxu0 0.0
      %8071 = vmatpush1.msra.mxu0 %v7724
      %8072 = vmatprep.subr.mxu0 0.0
      %8073 = vmatpush1.msra.mxu0 %v7725
      %8074 = vmatprep.subr.mxu0 0.0
      %8075 = vmatpush1.msra.mxu0 %v7726
      %8076 = vmatprep.subr.mxu0 0.0
      %8077 = vmatpush1.msra.mxu0 %v7727
      %8078 = vmatprep.subr.mxu0 0.0
      %8079 = vmatpush1.msra.mxu0 %v7728
      %8080 = vmatprep.subr.mxu0 0.0
      %8081 = vmatpush1.msra.mxu0 %v7729
      %8082 = vmatprep.subr.mxu0 0.0
      %8083 = vmatpush1.msra.mxu0 %v7730
      %8084 = vmatprep.subr.mxu0 0.0
      %8085 = vmatpush1.msra.mxu0 %v7731
      %8086 = vmatprep.subr.mxu0 0.0
      %8087 = vmatpush1.msra.mxu0 %v7732
      %8088 = vmatprep.subr.mxu0 0.0
      %8089 = vmatpush1.msra.mxu0 %v7733
      %8090 = vmatprep.subr.mxu0 0.0
      %8091 = vmatpush1.msra.mxu0 %v7734
      %8092 = vmatprep.subr.mxu0 0.0
      %8093 = vmatpush1.msra.mxu0 %v7735
      %8094 = vmatprep.subr.mxu0 0.0
      %8095 = vmatpush1.msra.mxu0 %v7736
      %8096 = vmatprep.subr.mxu0 0.0
      %8097 = vmatpush1.msra.mxu0 %v7737
      %8098 = vmatprep.subr.mxu0 0.0
      %8099 = vmatpush1.msra.mxu0 %v7738
      %8100 = vmatprep.subr.mxu0 0.0
      %8101 = vmatpush1.msra.mxu0 %v7739
      %8102 = vmatprep.subr.mxu0 0.0
      %8103 = vmatpush1.msra.mxu0 %v7740
      %8104 = vmatprep.subr.mxu0 0.0
      %8105 = vmatpush1.msra.mxu0 %v7741
      %8106 = vmatprep.subr.mxu0 0.0
      %8107 = vmatpush1.msra.mxu0 %v7742
      %8108 = vmatprep.subr.mxu0 0.0
      %8109 = vmatpush1.msra.mxu0 %v7743
      %8110 = vmatprep.subr.mxu0 0.0
      %8111 = vmatpush1.msra.mxu0 %v7744
      %8112 = vmatprep.subr.mxu0 0.0
      %8113 = vmatpush1.msra.mxu0 %v7745
      %8114 = vmatprep.subr.mxu0 0.0
      %8115 = vmatpush1.msra.mxu0 %v7746
      %8116 = vmatprep.subr.mxu0 0.0
      %8117 = vmatpush1.msra.mxu0 %v7747
      %8118 = vmatprep.mubr.f32.mxu0 %v7544
      %8119 = vmatmul.mubr.f32.gmra.mrb[0].mxu0 %v7543
      %v8120 = vpop.f32.mrb[0].mxu0
      %v8121 = vadd.f32 %v7976, %v8120
      %v8122 = vpop.f32.mrb[0].mxu0
      %8123 = vmatprep.mubr.f32.mxu0 %v7551
      %8124 = vmatmul.mubr.f32.gmra.mrb[0].mxu0 %v7550
      %v8125 = vpop.f32.mrb[0].mxu0
      %v8126 = vadd.f32 %v7981, %v8125
      %v8127 = vpop.f32.mrb[0].mxu0
      %8128 = vmatprep.mubr.f32.mxu0 %v7558
      %8129 = vmatmul.mubr.f32.gmra.mrb[0].mxu0 %v7557
      %v8130 = vpop.f32.mrb[0].mxu0
      %v8131 = vadd.f32 %v7986, %v8130
      %v8132 = vpop.f32.mrb[0].mxu0
      %8133 = vmatprep.mubr.f32.mxu0 %v7565
      %8134 = vmatmul.mubr.f32.gmra.mrb[0].mxu0 %v7564
      %v8135 = vpop.f32.mrb[0].mxu0
      %v8136 = vadd.f32 %v7991, %v8135
      %v8137 = vpop.f32.mrb[0].mxu0
      %8138 = vmatprep.mubr.f32.mxu0 %v7572
      %8139 = vmatmul.mubr.f32.gmra.mrb[0].mxu0 %v7571
      %v8140 = vpop.f32.mrb[0].mxu0
      %v8141 = vadd.f32 %v7996, %v8140
      %v8142 = vpop.f32.mrb[0].mxu0
      %8143 = vmatprep.mubr.f32.mxu0 %v7579
      %8144 = vmatmul.mubr.f32.gmra.mrb[0].mxu0 %v7578
      %v8145 = vpop.f32.mrb[0].mxu0
      %v8146 = vadd.f32 %v8001, %v8145
      %v8147 = vpop.f32.mrb[0].mxu0
      %8148 = vmatprep.mubr.f32.mxu0 %v7586
      %8149 = vmatmul.mubr.f32.gmra.mrb[0].mxu0 %v7585
      %v8150 = vpop.f32.mrb[0].mxu0
      %v8151 = vadd.f32 %v8006, %v8150
      %v8152 = vpop.f32.mrb[0].mxu0
      %8153 = vmatprep.mubr.f32.mxu0 %v7593
      %8154 = vmatmul.mubr.f32.gmra.mrb[0].mxu0 %v7592
      %v8155 = vpop.f32.mrb[0].mxu0
      %v8156 = vadd.f32 %v8011, %v8155
      %v8157 = vpop.f32.mrb[0].mxu0
      %8158 = vmatprep.mubr.f32.mxu0 %v7600
      %8159 = vmatmul.mubr.f32.gmra.mrb[0].mxu0 %v7599
      %v8160 = vpop.f32.mrb[0].mxu0
      %v8161 = vadd.f32 %v8016, %v8160
      %v8162 = vpop.f32.mrb[0].mxu0
      %8163 = vmatprep.mubr.f32.mxu0 %v7607
      %8164 = vmatmul.mubr.f32.gmra.mrb[0].mxu0 %v7606
      %v8165 = vpop.f32.mrb[0].mxu0
      %v8166 = vadd.f32 %v8021, %v8165
      %v8167 = vpop.f32.mrb[0].mxu0
      %8168 = vmatprep.mubr.f32.mxu0 %v7614
      %8169 = vmatmul.mubr.f32.gmra.mrb[0].mxu0 %v7613
      %v8170 = vpop.f32.mrb[0].mxu0
      %v8171 = vadd.f32 %v8026, %v8170
      %v8172 = vpop.f32.mrb[0].mxu0
      %8173 = vmatprep.mubr.f32.mxu0 %v7621
      %8174 = vmatmul.mubr.f32.gmra.mrb[0].mxu0 %v7620
      %v8175 = vpop.f32.mrb[0].mxu0
      %v8176 = vadd.f32 %v8031, %v8175
      %v8177 = vpop.f32.mrb[0].mxu0
      %8178 = vmatprep.mubr.f32.mxu0 %v7628
      %8179 = vmatmul.mubr.f32.gmra.mrb[0].mxu0 %v7627
      %v8180 = vpop.f32.mrb[0].mxu0
      %v8181 = vadd.f32 %v8036, %v8180
      %v8182 = vpop.f32.mrb[0].mxu0
      %8183 = vmatprep.mubr.f32.mxu0 %v7635
      %8184 = vmatmul.mubr.f32.gmra.mrb[0].mxu0 %v7634
      %v8185 = vpop.f32.mrb[0].mxu0
      %v8186 = vadd.f32 %v8041, %v8185
      %v8187 = vpop.f32.mrb[0].mxu0
      %8188 = vmatprep.mubr.f32.mxu0 %v7642
      %8189 = vmatmul.mubr.f32.gmra.mrb[0].mxu0 %v7641
      %v8190 = vpop.f32.mrb[0].mxu0
      %v8191 = vadd.f32 %v8046, %v8190
      %v8192 = vpop.f32.mrb[0].mxu0
      %8193 = vmatprep.mubr.f32.mxu0 %v7649
      %8194 = vmatmul.mubr.f32.gmra.mrb[0].mxu0 %v7648
      %v8195 = vpop.f32.mrb[0].mxu0
      %v8196 = vadd.f32 %v8051, %v8195
      %v8197 = vpop.f32.mrb[0].mxu0
      %8198 = vdwg.mxu0
      %8199 = vmatprep.subr.mxu0 0.0
      %8200 = vmatpush1.msra.mxu0 %v7748
      %8201 = vmatprep.subr.mxu0 0.0
      %8202 = vmatpush1.msra.mxu0 %v7749
      %8203 = vmatprep.subr.mxu0 0.0
      %8204 = vmatpush1.msra.mxu0 %v7750
      %8205 = vmatprep.subr.mxu0 0.0
      %8206 = vmatpush1.msra.mxu0 %v7751
      %8207 = vmatprep.subr.mxu0 0.0
      %8208 = vmatpush1.msra.mxu0 %v7752
      %8209 = vmatprep.subr.mxu0 0.0
      %8210 = vmatpush1.msra.mxu0 %v7753
      %8211 = vmatprep.subr.mxu0 0.0
      %8212 = vmatpush1.msra.mxu0 %v7754
      %8213 = vmatprep.subr.mxu0 0.0
      %8214 = vmatpush1.msra.mxu0 %v7755
      %8215 = vmatprep.subr.mxu0 0.0
      %8216 = vmatpush1.msra.mxu0 %v7756
      %8217 = vmatprep.subr.mxu0 0.0
      %8218 = vmatpush1.msra.mxu0 %v7757
      %8219 = vmatprep.subr.mxu0 0.0
      %8220 = vmatpush1.msra.mxu0 %v7758
      %8221 = vmatprep.subr.mxu0 0.0
      %8222 = vmatpush1.msra.mxu0 %v7759
      %8223 = vmatprep.subr.mxu0 0.0
      %8224 = vmatpush1.msra.mxu0 %v7760
      %8225 = vmatprep.subr.mxu0 0.0
      %8226 = vmatpush1.msra.mxu0 %v7761
      %8227 = vmatprep.subr.mxu0 0.0
      %8228 = vmatpush1.msra.mxu0 %v7762
      %8229 = vmatprep.subr.mxu0 0.0
      %8230 = vmatpush1.msra.mxu0 %v7763
      %8231 = vmatprep.subr.mxu0 0.0
      %8232 = vmatpush1.msra.mxu0 0.0
      %8233 = vmatprep.subr.mxu0 0.0
      %8234 = vmatpush1.msra.mxu0 0.0
      %8235 = vmatprep.subr.mxu0 0.0
      %8236 = vmatpush1.msra.mxu0 0.0
      %8237 = vmatprep.subr.mxu0 0.0
      %8238 = vmatpush1.msra.mxu0 0.0
      %8239 = vmatprep.subr.mxu0 0.0
      %8240 = vmatpush1.msra.mxu0 0.0
      %8241 = vmatprep.subr.mxu0 0.0
      %8242 = vmatpush1.msra.mxu0 0.0
      %8243 = vmatprep.subr.mxu0 0.0
      %8244 = vmatpush1.msra.mxu0 0.0
      %8245 = vmatprep.subr.mxu0 0.0
      %8246 = vmatpush1.msra.mxu0 0.0
      %8247 = vmatprep.subr.mxu0 0.0
      %8248 = vmatpush1.msra.mxu0 0.0
      %8249 = vmatprep.subr.mxu0 0.0
      %8250 = vmatpush1.msra.mxu0 0.0
      %8251 = vmatprep.subr.mxu0 0.0
      %8252 = vmatpush1.msra.mxu0 0.0
      %8253 = vmatprep.subr.mxu0 0.0
      %8254 = vmatpush1.msra.mxu0 0.0
      %8255 = vmatprep.subr.mxu0 0.0
      %8256 = vmatpush1.msra.mxu0 0.0
      %8257 = vmatprep.subr.mxu0 0.0
      %8258 = vmatpush1.msra.mxu0 0.0
      %8259 = vmatprep.subr.mxu0 0.0
      %8260 = vmatpush1.msra.mxu0 0.0
      %8261 = vmatprep.subr.mxu0 0.0
      %8262 = vmatpush1.msra.mxu0 0.0
      %8263 = vmatprep.mubr.f32.mxu0 0.0
      %8264 = vmatmul.mubr.f32.gmra.mrb[0].mxu0 %v7545
      %v8265 = vpop.f32.mrb[0].mxu0
      %v8266 = vadd.f32 %v8121, %v8265
      %v8267 = vpop.f32.mrb[0].mxu0
      %8268 = vmatprep.mubr.f32.mxu0 0.0
      %8269 = vmatmul.mubr.f32.gmra.mrb[0].mxu0 %v7552
      %v8270 = vpop.f32.mrb[0].mxu0
      %v8271 = vadd.f32 %v8126, %v8270
      %v8272 = vpop.f32.mrb[0].mxu0
      %8273 = vmatprep.mubr.f32.mxu0 0.0
      %8274 = vmatmul.mubr.f32.gmra.mrb[0].mxu0 %v7559
      %v8275 = vpop.f32.mrb[0].mxu0
      %v8276 = vadd.f32 %v8131, %v8275
      %v8277 = vpop.f32.mrb[0].mxu0
      %8278 = vmatprep.mubr.f32.mxu0 0.0
      %8279 = vmatmul.mubr.f32.gmra.mrb[0].mxu0 %v7566
      %v8280 = vpop.f32.mrb[0].mxu0
      %v8281 = vadd.f32 %v8136, %v8280
      %v8282 = vpop.f32.mrb[0].mxu0
      %8283 = vmatprep.mubr.f32.mxu0 0.0
      %8284 = vmatmul.mubr.f32.gmra.mrb[0].mxu0 %v7573
      %v8285 = vpop.f32.mrb[0].mxu0
      %v8286 = vadd.f32 %v8141, %v8285
      %v8287 = vpop.f32.mrb[0].mxu0
      %8288 = vmatprep.mubr.f32.mxu0 0.0
      %8289 = vmatmul.mubr.f32.gmra.mrb[0].mxu0 %v7580
      %v8290 = vpop.f32.mrb[0].mxu0
      %v8291 = vadd.f32 %v8146, %v8290
      %v8292 = vpop.f32.mrb[0].mxu0
      %8293 = vmatprep.mubr.f32.mxu0 0.0
      %8294 = vmatmul.mubr.f32.gmra.mrb[0].mxu0 %v7587
      %v8295 = vpop.f32.mrb[0].mxu0
      %v8296 = vadd.f32 %v8151, %v8295
      %v8297 = vpop.f32.mrb[0].mxu0
      %8298 = vmatprep.mubr.f32.mxu0 0.0
      %8299 = vmatmul.mubr.f32.gmra.mrb[0].mxu0 %v7594
      %v8300 = vpop.f32.mrb[0].mxu0
      %v8301 = vadd.f32 %v8156, %v8300
      %v8302 = vpop.f32.mrb[0].mxu0
      %8303 = vmatprep.mubr.f32.mxu0 0.0
      %8304 = vmatmul.mubr.f32.gmra.mrb[0].mxu0 %v7601
      %v8305 = vpop.f32.mrb[0].mxu0
      %v8306 = vadd.f32 %v8161, %v8305
      %v8307 = vpop.f32.mrb[0].mxu0
      %8308 = vmatprep.mubr.f32.mxu0 0.0
      %8309 = vmatmul.mubr.f32.gmra.mrb[0].mxu0 %v7608
      %v8310 = vpop.f32.mrb[0].mxu0
      %v8311 = vadd.f32 %v8166, %v8310
      %v8312 = vpop.f32.mrb[0].mxu0
      %8313 = vmatprep.mubr.f32.mxu0 0.0
      %8314 = vmatmul.mubr.f32.gmra.mrb[0].mxu0 %v7615
      %v8315 = vpop.f32.mrb[0].mxu0
      %v8316 = vadd.f32 %v8171, %v8315
      %v8317 = vpop.f32.mrb[0].mxu0
      %8318 = vmatprep.mubr.f32.mxu0 0.0
      %8319 = vmatmul.mubr.f32.gmra.mrb[0].mxu0 %v7622
      %v8320 = vpop.f32.mrb[0].mxu0
      %v8321 = vadd.f32 %v8176, %v8320
      %v8322 = vpop.f32.mrb[0].mxu0
      %8323 = vmatprep.mubr.f32.mxu0 0.0
      %8324 = vmatmul.mubr.f32.gmra.mrb[0].mxu0 %v7629
      %v8325 = vpop.f32.mrb[0].mxu0
      %v8326 = vadd.f32 %v8181, %v8325
      %v8327 = vpop.f32.mrb[0].mxu0
      %8328 = vmatprep.mubr.f32.mxu0 0.0
      %8329 = vmatmul.mubr.f32.gmra.mrb[0].mxu0 %v7636
      %v8330 = vpop.f32.mrb[0].mxu0
      %v8331 = vadd.f32 %v8186, %v8330
      %v8332 = vpop.f32.mrb[0].mxu0
      %8333 = vmatprep.mubr.f32.mxu0 0.0
      %8334 = vmatmul.mubr.f32.gmra.mrb[0].mxu0 %v7643
      %v8335 = vpop.f32.mrb[0].mxu0
      %v8336 = vadd.f32 %v8191, %v8335
      %v8337 = vpop.f32.mrb[0].mxu0
      %8338 = vmatprep.mubr.f32.mxu0 0.0
      %8339 = vmatmul.mubr.f32.gmra.mrb[0].mxu0 %v7650
      %v8340 = vpop.f32.mrb[0].mxu0
      %v8341 = vadd.f32 %v8196, %v8340
      %v8342 = vpop.f32.mrb[0].mxu0
      %8343 = vdwg.mxu0
      %v8344 = vld [vmem:[#allocation5] sm:$0xff]
      %v8345 = vld [vmem:[#allocation5 + $0x8] sm:$0xff]
      %v8346 = vld [vmem:[#allocation5 + $0x10] sm:$0xff]
      %v8347 = vld [vmem:[#allocation5 + $0x18] sm:$0xff]
      %v8348 = vld [vmem:[#allocation5 + $0x20] sm:$0xff]
      %v8349 = vld [vmem:[#allocation5 + $0x28] sm:$0xff]
      %v8350 = vld [vmem:[#allocation5 + $0x30] sm:$0xff]
      %v8351 = vld [vmem:[#allocation5 + $0x38] sm:$0xff]
      %v8352 = vld [vmem:[#allocation5 + $0x40] sm:$0xff]
      %v8353 = vld [vmem:[#allocation5 + $0x48] sm:$0xff]
      %v8354 = vld [vmem:[#allocation5 + $0x50] sm:$0xff]
      %v8355 = vld [vmem:[#allocation5 + $0x58] sm:$0xff]
      %v8356 = vld [vmem:[#allocation5 + $0x60] sm:$0xff]
      %v8357 = vld [vmem:[#allocation5 + $0x68] sm:$0xff]
      %v8358 = vld [vmem:[#allocation5 + $0x70] sm:$0xff]
      %v8359 = vld [vmem:[#allocation5 + $0x78] sm:$0xff]
      %v8360 = vadd.f32 %v8344, %v8266
      %v8361 = vadd.f32 %v8345, %v8271
      %v8362 = vadd.f32 %v8346, %v8276
      %v8363 = vadd.f32 %v8347, %v8281
      %v8364 = vadd.f32 %v8348, %v8286
      %v8365 = vadd.f32 %v8349, %v8291
      %v8366 = vadd.f32 %v8350, %v8296
      %v8367 = vadd.f32 %v8351, %v8301
      %v8368 = vadd.f32 %v8352, %v8306
      %v8369 = vadd.f32 %v8353, %v8311
      %v8370 = vadd.f32 %v8354, %v8316
      %v8371 = vadd.f32 %v8355, %v8321
      %v8372 = vadd.f32 %v8356, %v8326
      %v8373 = vadd.f32 %v8357, %v8331
      %v8374 = vadd.f32 %v8358, %v8336
      %v8375 = vadd.f32 %v8359, %v8341
      %8376 = vst [vmem:[#allocation5] sm:$0xff] %v8360
      %8377 = vst [vmem:[#allocation5 + $0x8] sm:$0xff] %v8361
      %8378 = vst [vmem:[#allocation5 + $0x10] sm:$0xff] %v8362
      %8379 = vst [vmem:[#allocation5 + $0x18] sm:$0xff] %v8363
      %8380 = vst [vmem:[#allocation5 + $0x20] sm:$0xff] %v8364
      %8381 = vst [vmem:[#allocation5 + $0x28] sm:$0xff] %v8365
      %8382 = vst [vmem:[#allocation5 + $0x30] sm:$0xff] %v8366
      %8383 = vst [vmem:[#allocation5 + $0x38] sm:$0xff] %v8367
      %8384 = vst [vmem:[#allocation5 + $0x40] sm:$0xff] %v8368
      %8385 = vst [vmem:[#allocation5 + $0x48] sm:$0xff] %v8369
      %8386 = vst [vmem:[#allocation5 + $0x50] sm:$0xff] %v8370
      %8387 = vst [vmem:[#allocation5 + $0x58] sm:$0xff] %v8371
      %8388 = vst [vmem:[#allocation5 + $0x60] sm:$0xff] %v8372
      %8389 = vst [vmem:[#allocation5 + $0x68] sm:$0xff] %v8373
      %8390 = vst [vmem:[#allocation5 + $0x70] sm:$0xff] %v8374
      %8391 = vst [vmem:[#allocation5 + $0x78] sm:$0xff] %v8375
      %v8392 = vld [vmem:[#allocation5] sm:$0xff]
      %v8393 = vld [vmem:[#allocation5 + $0x8] sm:$0xff]
      %v8394 = vld [vmem:[#allocation5 + $0x10] sm:$0xff]
      %v8395 = vld [vmem:[#allocation5 + $0x18] sm:$0xff]
      %v8396 = vld [vmem:[#allocation5 + $0x20] sm:$0xff]
      %v8397 = vld [vmem:[#allocation5 + $0x28] sm:$0xff]
      %v8398 = vld [vmem:[#allocation5 + $0x30] sm:$0xff]
      %v8399 = vld [vmem:[#allocation5 + $0x38] sm:$0xff]
      %v8400 = vld [vmem:[#allocation5 + $0x40] sm:$0xff]
      %v8401 = vld [vmem:[#allocation5 + $0x48] sm:$0xff]
      %v8402 = vld [vmem:[#allocation5 + $0x50] sm:$0xff]
      %v8403 = vld [vmem:[#allocation5 + $0x58] sm:$0xff]
      %v8404 = vld [vmem:[#allocation5 + $0x60] sm:$0xff]
      %v8405 = vld [vmem:[#allocation5 + $0x68] sm:$0xff]
      %v8406 = vld [vmem:[#allocation5 + $0x70] sm:$0xff]
      %v8407 = vld [vmem:[#allocation5 + $0x78] sm:$0xff]
      %8408 = vst [vmem:[%s71] sm:$0xff] %v8392
      %8409 = vst [vmem:[%s71 + $0x8] sm:$0xff] %v8393
      %8410 = vst [vmem:[%s71 + $0x10] sm:$0xff] %v8394
      %8411 = vst [vmem:[%s71 + $0x18] sm:$0xff] %v8395
      %8412 = vst [vmem:[%s71 + $0x20] sm:$0xff] %v8396
      %8413 = vst [vmem:[%s71 + $0x28] sm:$0xff] %v8397
      %8414 = vst [vmem:[%s71 + $0x30] sm:$0xff] %v8398
      %8415 = vst [vmem:[%s71 + $0x38] sm:$0xff] %v8399
      %8416 = vst [vmem:[%s71 + $0x40] sm:$0xff] %v8400
      %8417 = vst [vmem:[%s71 + $0x48] sm:$0xff] %v8401
      %8418 = vst [vmem:[%s71 + $0x50] sm:$0xff] %v8402
      %8419 = vst [vmem:[%s71 + $0x58] sm:$0xff] %v8403
      %8420 = vst [vmem:[%s71 + $0x60] sm:$0xff] %v8404
      %8421 = vst [vmem:[%s71 + $0x68] sm:$0xff] %v8405
      %8422 = vst [vmem:[%s71 + $0x70] sm:$0xff] %v8406
      %8423 = vst [vmem:[%s71 + $0x78] sm:$0xff] %v8407
      %s8424 = smul.u32 8, %s15
      %p8425 = scmp.lt.s32.totalorder %s14, 1
      %s8426 = scalar_select %p8425, %s14, 1
      %p8427 = scmp.lt.s32.totalorder %s8424, 15
      %s8428 = scalar_select %p8427, %s8424, 15
      %s8429 = smul.addr %s8428, 2
      %s8430 = smul.addr %s8426, 32
      %s8431 = sadd.s32 %s8429, %s8430
      %s8432 = smul.addr %s8431, 8
      %s8433 = scalar_lea.vmem %s2, %s8432
      // Predicated region
      $region133: #{multiscale_conv.1} parent=11 // pred_check
        %p8434 = pneg %p35
      $region134: #{multiscale_conv.1} parent=11 // pred_check_branch
        %8436 = sbr.rel (%p8434) target = $region136
      $region135: #{multiscale_conv.1} parent=11 // pred_region
        %s8437 = smul.u32 8, %s15
      $region136: #{multiscale_conv.1} parent=11 // pred_fallthru
        _
    $region12: #{multiscale_conv.1} parent=5 // pred_fallthru
      _
    %p8438 = scmp.le.s32.totalorder 1, %s8
    // Predicated region
    $region137: #{multiscale_conv.1} parent=5 // pred_check
      %p8439 = pneg %p8438
    $region138: #{multiscale_conv.1} parent=5 // pred_check_branch
      %8441 = sbr.rel (%p8439) target = $region140
    $region139: #{multiscale_conv.1} parent=5 // pred_region
      %s8442 = ssub.s32 %s8, 1
      // Predicated region
      $region141: #{multiscale_conv.1} parent=139 // pred_check
        %p8443 = pneg %p41
      $region142: #{multiscale_conv.1} parent=139 // pred_check_branch
        %8445 = sbr.rel (%p8443) target = $region144
      $region143: #{multiscale_conv.1} parent=139 // pred_region
        %s8446 = smul.u32 8, %s17
        %p8447 = scmp.lt.s32.totalorder %s16, 1
        %s8448 = scalar_select %p8447, %s16, 1
        %p8449 = scmp.lt.s32.totalorder %s8446, 15
        %s8450 = scalar_select %p8449, %s8446, 15
        %s8451 = smul.addr %s8450, 2
        %s8452 = smul.addr %s8448, 32
        %s8453 = sadd.s32 %s8451, %s8452
        %s8454 = smul.addr %s8453, 8
        %s8455 = scalar_lea.vmem %s2, %s8454
      $region144: #{multiscale_conv.1} parent=139 // pred_fallthru
        _
    $region140: #{multiscale_conv.1} parent=5 // pred_fallthru
      _
  $region6: #{multiscale_conv.1} parent=0 // loop_footer
    %s12 = sadd.s32 1, %s8
  $region7: #{multiscale_conv.1} parent=0 // loop_footer_branch
    %7 = sbr.rel target = $region3
  $region8: #{multiscale_conv.1} parent=0 // loop_exit
    _
  %8456 = vsyncmov [#allocation6]
  %s8457 = vpop.sfrf %8456
  %p8458 = scmp.eq.s32.totalorder %s8457, 0
  %p8459 = pneg %p8458
  %8461 = shalt.err (%p8459)
  %s8462 = scalar_lea.sflag [#allocation6], 1
  %8463 = vsyncmov %s8462
  %s8464 = vpop.sfrf %8463
  %p8465 = scmp.eq.s32.totalorder %s8464, 0
  %p8466 = pneg %p8465
  %8468 = shalt.err (%p8466)
  %s8469 = scalar_lea.sflag [#allocation6], 2
  %8470 = vsyncmov %s8469
  %s8471 = vpop.sfrf %8470
  %p8472 = scmp.eq.s32.totalorder %s8471, 0
  %p8473 = pneg %p8472
  %8475 = shalt.err (%p8473)

</llo_original>
